<compile_context>
chip_gen: v7x
topology: tpu7x:2x2x1
jax: 0.10.0
libtpu: 0.0.40
codegen_flags: <defaults>
</compile_context>

<pallas_src>
import jax
import jax.numpy as jnp
from jax import lax
from jax.experimental import pallas as pl
from jax.experimental.pallas import tpu as pltpu


def _leaky(y):
    # nn.LeakyReLU(0.3)
    return jnp.where(y > 0, y, 0.3 * y)


def _conv3x3(inp, w_taps_ref):
    """3x3 VALID conv over a reflect-H / circular-W padded image.

    inp:        (H, W, Cin) value
    w_taps_ref: (9, Cin, Cout) ref, tap index = dy*3 + dx (HWIO flattened)
    returns:    (H*W, Cout) float32 accumulator (9 whole-image MXU matmuls)
    """
    H, W, _ = inp.shape
    Cout = w_taps_ref.shape[2]
    # Reflect-pad H by 1 on each side: row -1 := row 1, row H := row H-2.
    ext = jnp.concatenate([inp[1:2], inp, inp[H - 2:H - 1]], axis=0)   # (H+2, W, Cin)
    acc = jnp.zeros((H * W, Cout), jnp.float32)
    # Circular-W padding == rotation along W: tap dx reads column (w + dx - 1) mod W.
    for dx in range(3):
        shift = 1 - dx
        shifted = ext if shift == 0 else jnp.roll(ext, shift, axis=1)
        for dy in range(3):
            lhs = shifted[dy:dy + H].reshape(H * W, -1)                # (H*W, Cin)
            acc = acc + jnp.dot(lhs, w_taps_ref[dy * 3 + dx],
                                preferred_element_type=jnp.float32)
    return acc


def _coord_resnet_block_kernel(
        x_ref,                                      # (1, H, W, Cin)
        w1_ref, s1_ref, t1_ref,                     # conv1 taps (9,Cin,Cout), folded BN1 (1,Cout)
        w2_ref, s2_ref, t2_ref,                     # conv2 taps (9,Cout,Cout), folded BN2 (1,Cout)
        whc1_ref, bhc1_ref, whc2_ref, bhc2_ref,     # coord-attn fc_h 1x1 convs
        wwc1_ref, bwc1_ref, wwc2_ref, bwc2_ref,     # coord-attn fc_w 1x1 convs
        ws_ref, ss_ref, ts_ref,                     # shortcut 1x1 conv (Cin,Cout) + folded BN
        o_ref):                                     # (1, H, W, Cout)
    x = x_ref[0]                                    # (H, W, Cin)
    H, W, Cin = x.shape
    Cout = o_ref.shape[-1]

    # ---------- conv1 (3x3, reflect-H/circular-W pad) + BN1 + LeakyReLU ----------
    h1 = _leaky(_conv3x3(x, w1_ref) * s1_ref[...] + t1_ref[...])      # (H*W, Cout)
    h1 = h1.reshape(H, W, Cout)

    # ---------- conv2 (3x3, same padding scheme) + BN2 + LeakyReLU ----------
    h2 = _leaky(_conv3x3(h1, w2_ref) * s2_ref[...] + t2_ref[...])     # (H*W, Cout)
    h2 = h2.reshape(H, W, Cout)

    # ---------- coordinate attention ----------
    pool_h = jnp.mean(h2, axis=0)                   # AdaptiveAvgPool2d((1, None)) -> (W, Cout)
    pool_w = jnp.mean(h2, axis=1)                   # AdaptiveAvgPool2d((None, 1)) -> (H, Cout)

    def squeeze_excite(p, wa, ba, wb, bb):
        z = jnp.dot(p, wa[...], preferred_element_type=jnp.float32) + ba[...]
        z = jnp.maximum(z, 0.0)                     # ReLU
        z = jnp.dot(z, wb[...], preferred_element_type=jnp.float32) + bb[...]
        return jax.nn.sigmoid(z)

    att_h = squeeze_excite(pool_h, whc1_ref, bhc1_ref, whc2_ref, bhc2_ref)   # (W, Cout)
    att_w = squeeze_excite(pool_w, wwc1_ref, bwc1_ref, wwc2_ref, bwc2_ref)   # (H, Cout)

    # ---------- shortcut: 1x1 conv + folded BN (one whole-image matmul) ----------
    sc = (jnp.dot(x.reshape(H * W, Cin), ws_ref[...],
                  preferred_element_type=jnp.float32) * ss_ref[...] + ts_ref[...])
    sc = sc.reshape(H, W, Cout)

    # dropout == identity in inference mode; attention gate + residual add
    o_ref[0] = h2 * att_h[None, :, :] * att_w[:, None, :] + sc


def coord_attention_resnet_block(x_nhwc, params):
    B, H, W, Cin = x_nhwc.shape
    Cout = params["w1"].shape[-1]

    weights = [
        params["w1"], params["s1"], params["t1"],
        params["w2"], params["s2"], params["t2"],
        params["whc1"], params["bhc1"], params["whc2"], params["bhc2"],
        params["wwc1"], params["bwc1"], params["wwc2"], params["bwc2"],
        params["ws"], params["ss"], params["ts"],
    ]

    def full_spec(arr):
        nd = arr.ndim
        return pl.BlockSpec(arr.shape, lambda b, _nd=nd: (0,) * _nd)

    return pl.pallas_call(
        _coord_resnet_block_kernel,
        out_shape=jax.ShapeDtypeStruct((B, H, W, Cout), jnp.float32),
        grid=(B,),
        in_specs=[pl.BlockSpec((1, H, W, Cin), lambda b: (b, 0, 0, 0))]
                 + [full_spec(a) for a in weights],
        out_specs=pl.BlockSpec((1, H, W, Cout), lambda b: (b, 0, 0, 0)),
        compiler_params=pltpu.CompilerParams(
            dimension_semantics=("parallel",)),      # batch elems independent -> use both v7x TCs
    )(x_nhwc, *weights)


def init_params(key, in_channels, out_channels, reduction=16, eps=1e-5):
    """Deterministic synthetic params matching the PyTorch module's shapes (eval-mode BN folded)."""
    cr = max(1, out_channels // reduction)
    keys = jax.random.split(key, 12)
    r = lambda k, s: (0.1 * jax.random.normal(k, s)).astype(jnp.float32)

    # conv1 / conv2 weights in HWIO (= torch (Cout,Cin,3,3) transposed), plus biases
    w1_hwio = r(keys[0], (3, 3, in_channels, out_channels))
    b1 = r(keys[1], (out_channels,))
    w2_hwio = r(keys[2], (3, 3, out_channels, out_channels))
    b2 = r(keys[3], (out_channels,))

    # BatchNorm2d freshly initialised (gamma=1, beta=0, running_mean=0, running_var=1), eval mode.
    def fold_bn(bias):
        s = (1.0 / jnp.sqrt(1.0 + eps)) * jnp.ones((out_channels,), jnp.float32)
        t = bias * s
        return s.reshape(1, -1), t.reshape(1, -1)

    s1, t1 = fold_bn(b1)
    s2, t2 = fold_bn(b2)

    # coordinate attention 1x1 convs, stored as right-multiply matrices (Cout,cr)/(cr,Cout)
    whc1 = r(keys[4], (out_channels, cr)); bhc1 = r(keys[5], (1, cr))
    whc2 = r(keys[6], (cr, out_channels)); bhc2 = r(keys[7], (1, out_channels))
    wwc1 = r(keys[8], (out_channels, cr)); bwc1 = r(keys[9], (1, cr))
    wwc2 = r(keys[10], (cr, out_channels)); bwc2 = r(keys[11], (1, out_channels))

    # shortcut: 1x1 conv + BN (in_channels != out_channels branch)
    k_ws, k_bs = jax.random.split(jax.random.fold_in(key, 123), 2)
    ws = r(k_ws, (in_channels, out_channels))
    bs = r(k_bs, (out_channels,))
    ss, ts = fold_bn(bs)

    return dict(
        w1_hwio=w1_hwio, w1=w1_hwio.reshape(9, in_channels, out_channels), s1=s1, t1=t1,
        w2_hwio=w2_hwio, w2=w2_hwio.reshape(9, out_channels, out_channels), s2=s2, t2=t2,
        whc1=whc1, bhc1=bhc1, whc2=whc2, bhc2=bhc2,
        wwc1=wwc1, bwc1=bwc1, wwc2=wwc2, bwc2=bwc2,
        ws=ws, ss=ss, ts=ts,
    )


def ref_forward(x, p):
    """Pure-JAX reference (NHWC) for numerical verification."""
    def pad_rc(t):
        t = jnp.pad(t, ((0, 0), (1, 1), (0, 0), (0, 0)), mode='reflect')   # reflect H
        t = jnp.pad(t, ((0, 0), (0, 0), (1, 1), (0, 0)), mode='wrap')      # circular W
        return t

    def conv3(t, w_hwio):
        return lax.conv_general_dilated(t, w_hwio, (1, 1), 'VALID',
                                        dimension_numbers=('NHWC', 'HWIO', 'NHWC'))

    def leaky(y):
        return jnp.where(y > 0, y, 0.3 * y)

    h = leaky(conv3(pad_rc(x), p["w1_hwio"]) * p["s1"] + p["t1"])
    h = leaky(conv3(pad_rc(h), p["w2_hwio"]) * p["s2"] + p["t2"])

    ph = h.mean(axis=1)   # (B, W, C)
    pw = h.mean(axis=2)   # (B, H, C)

    def mlp(q, wa, ba, wb, bb):
        return jax.nn.sigmoid(jnp.maximum(q @ wa + ba, 0.0) @ wb + bb)

    ah = mlp(ph, p["whc1"], p["bhc1"], p["whc2"], p["bhc2"])
    aw = mlp(pw, p["wwc1"], p["bwc1"], p["wwc2"], p["bwc2"])

    h = h * ah[:, None, :, :] * aw[:, :, None, :]
    shortcut = (x @ p["ws"]) * p["ss"] + p["ts"]
    return h + shortcut


if __name__ == "__main__":
    key = jax.random.PRNGKey(0)
    kx, kp = jax.random.split(key)

    B, Cin, H, W = 2, 4, 16, 16
    Cout = 8   # != Cin, so the conv+BN shortcut branch is exercised

    x_nchw = jax.random.normal(kx, (B, Cin, H, W), dtype=jnp.float32)
    x_nhwc = jnp.transpose(x_nchw, (0, 2, 3, 1))   # layout: NCHW -> NHWC

    params = init_params(kp, Cin, Cout, reduction=16)

    out = coord_attention_resnet_block(x_nhwc, params)
    out = jax.block_until_ready(out)

    ref = jax.block_until_ready(ref_forward(x_nhwc, params))
    err = float(jnp.max(jnp.abs(out - ref)))
    assert out.shape == (B, H, W, Cout), out.shape
    assert err < 1e-3, f"max abs error vs reference: {err}"

    print("KERNEL_OK")
</pallas_src>

<mosaic_0001>
module attributes {stable_mosaic.version = 11 : i64} {
  func.func @_coord_resnet_block_kernel(%arg0: i32, %arg1: memref<1x16x16x4xf32, #tpu.memory_space<vmem>>, %arg2: memref<9x4x8xf32, #tpu.memory_space<vmem>>, %arg3: memref<1x8xf32, #tpu.memory_space<vmem>>, %arg4: memref<1x8xf32, #tpu.memory_space<vmem>>, %arg5: memref<9x8x8xf32, #tpu.memory_space<vmem>>, %arg6: memref<1x8xf32, #tpu.memory_space<vmem>>, %arg7: memref<1x8xf32, #tpu.memory_space<vmem>>, %arg8: memref<8x1xf32, #tpu.memory_space<vmem>>, %arg9: memref<1x1xf32, #tpu.memory_space<vmem>>, %arg10: memref<1x8xf32, #tpu.memory_space<vmem>>, %arg11: memref<1x8xf32, #tpu.memory_space<vmem>>, %arg12: memref<8x1xf32, #tpu.memory_space<vmem>>, %arg13: memref<1x1xf32, #tpu.memory_space<vmem>>, %arg14: memref<1x8xf32, #tpu.memory_space<vmem>>, %arg15: memref<1x8xf32, #tpu.memory_space<vmem>>, %arg16: memref<4x8xf32, #tpu.memory_space<vmem>>, %arg17: memref<1x8xf32, #tpu.memory_space<vmem>>, %arg18: memref<1x8xf32, #tpu.memory_space<vmem>>, %arg19: memref<1x16x16x8xf32, #tpu.memory_space<vmem>>) attributes {dimension_semantics = [#tpu.dimension_semantics<parallel>], iteration_bounds = array<i64: 2>, scalar_prefetch = 0 : i64, scratch_operands = 0 : i64, tpu.core_type = #tpu.core_type<tc>, window_params = [{transform_indices = @transform_0, window_bounds = array<i64: 1, 16, 16, 4>}, {pipeline_mode = #tpu.pipeline_mode<synchronous>, transform_indices = @transform_1, window_bounds = array<i64: 9, 4, 8>}, {pipeline_mode = #tpu.pipeline_mode<synchronous>, transform_indices = @transform_2, window_bounds = array<i64: 1, 8>}, {pipeline_mode = #tpu.pipeline_mode<synchronous>, transform_indices = @transform_3, window_bounds = array<i64: 1, 8>}, {pipeline_mode = #tpu.pipeline_mode<synchronous>, transform_indices = @transform_4, window_bounds = array<i64: 9, 8, 8>}, {pipeline_mode = #tpu.pipeline_mode<synchronous>, transform_indices = @transform_5, window_bounds = array<i64: 1, 8>}, {pipeline_mode = #tpu.pipeline_mode<synchronous>, transform_indices = @transform_6, window_bounds = array<i64: 1, 8>}, {pipeline_mode = #tpu.pipeline_mode<synchronous>, transform_indices = @transform_7, window_bounds = array<i64: 8, 1>}, {pipeline_mode = #tpu.pipeline_mode<synchronous>, transform_indices = @transform_8, window_bounds = array<i64: 1, 1>}, {pipeline_mode = #tpu.pipeline_mode<synchronous>, transform_indices = @transform_9, window_bounds = array<i64: 1, 8>}, {pipeline_mode = #tpu.pipeline_mode<synchronous>, transform_indices = @transform_10, window_bounds = array<i64: 1, 8>}, {pipeline_mode = #tpu.pipeline_mode<synchronous>, transform_indices = @transform_11, window_bounds = array<i64: 8, 1>}, {pipeline_mode = #tpu.pipeline_mode<synchronous>, transform_indices = @transform_12, window_bounds = array<i64: 1, 1>}, {pipeline_mode = #tpu.pipeline_mode<synchronous>, transform_indices = @transform_13, window_bounds = array<i64: 1, 8>}, {pipeline_mode = #tpu.pipeline_mode<synchronous>, transform_indices = @transform_14, window_bounds = array<i64: 1, 8>}, {pipeline_mode = #tpu.pipeline_mode<synchronous>, transform_indices = @transform_15, window_bounds = array<i64: 4, 8>}, {pipeline_mode = #tpu.pipeline_mode<synchronous>, transform_indices = @transform_16, window_bounds = array<i64: 1, 8>}, {pipeline_mode = #tpu.pipeline_mode<synchronous>, transform_indices = @transform_17, window_bounds = array<i64: 1, 8>}, {transform_indices = @transform_18, window_bounds = array<i64: 1, 16, 16, 8>}]} {
    %c0 = arith.constant 0 : index
    %c0_0 = arith.constant 0 : index
    %c0_1 = arith.constant 0 : index
    %c0_2 = arith.constant 0 : index
    %0 = vector.load %arg1[%c0, %c0_0, %c0_1, %c0_2] : memref<1x16x16x4xf32, #tpu.memory_space<vmem>>, vector<1x16x16x4xf32>
    %1 = vector.shape_cast %0 : vector<1x16x16x4xf32> to vector<16x16x4xf32>
    %2 = vector.extract_strided_slice %1 {offsets = [1, 0, 0], sizes = [1, 16, 4], strides = [1, 1, 1]} : vector<16x16x4xf32> to vector<1x16x4xf32>
    %3 = vector.extract_strided_slice %1 {offsets = [14, 0, 0], sizes = [1, 16, 4], strides = [1, 1, 1]} : vector<16x16x4xf32> to vector<1x16x4xf32>
    %4 = tpu.concatenate %2, %1, %3 in 0 : vector<1x16x4xf32>, vector<16x16x4xf32>, vector<1x16x4xf32> -> vector<18x16x4xf32>
    %cst = arith.constant 0.000000e+00 : f32
    %5 = vector.broadcast %cst : f32 to vector<256x8xf32>
    %6 = vector.extract_strided_slice %4 {offsets = [0, 15, 0], sizes = [18, 1, 4], strides = [1, 1, 1]} : vector<18x16x4xf32> to vector<18x1x4xf32>
    %7 = vector.extract_strided_slice %4 {offsets = [0, 0, 0], sizes = [18, 15, 4], strides = [1, 1, 1]} : vector<18x16x4xf32> to vector<18x15x4xf32>
    %8 = tpu.concatenate %6, %7 in 1 : vector<18x1x4xf32>, vector<18x15x4xf32> -> vector<18x16x4xf32>
    %9 = vector.extract_strided_slice %8 {offsets = [0, 0, 0], sizes = [16, 16, 4], strides = [1, 1, 1]} : vector<18x16x4xf32> to vector<16x16x4xf32>
    %10 = vector.shape_cast %9 : vector<16x16x4xf32> to vector<256x4xf32>
    %c0_3 = arith.constant 0 : index
    %c0_4 = arith.constant 0 : index
    %c0_5 = arith.constant 0 : index
    %11 = vector.load %arg2[%c0_3, %c0_4, %c0_5] : memref<9x4x8xf32, #tpu.memory_space<vmem>>, vector<1x4x8xf32>
    %12 = vector.shape_cast %11 : vector<1x4x8xf32> to vector<4x8xf32>
    %cst_6 = arith.constant dense<0.000000e+00> : vector<256x8xf32>
    %13 = tpu.matmul %10, %12, %cst_6 {dimension_numbers = #tpu.dot_dimension_numbers<[1], [0], [0], [1], [0, 0, 1, 1], [], []>} : vector<256x4xf32>, vector<4x8xf32>, vector<256x8xf32> -> vector<256x8xf32>
    %14 = arith.addf %5, %13 : vector<256x8xf32>
    %15 = vector.extract_strided_slice %8 {offsets = [1, 0, 0], sizes = [16, 16, 4], strides = [1, 1, 1]} : vector<18x16x4xf32> to vector<16x16x4xf32>
    %16 = vector.shape_cast %15 : vector<16x16x4xf32> to vector<256x4xf32>
    %c3 = arith.constant 3 : index
    %c0_7 = arith.constant 0 : index
    %c0_8 = arith.constant 0 : index
    %17 = vector.load %arg2[%c3, %c0_7, %c0_8] : memref<9x4x8xf32, #tpu.memory_space<vmem>>, vector<1x4x8xf32>
    %18 = vector.shape_cast %17 : vector<1x4x8xf32> to vector<4x8xf32>
    %cst_9 = arith.constant dense<0.000000e+00> : vector<256x8xf32>
    %19 = tpu.matmul %16, %18, %cst_9 {dimension_numbers = #tpu.dot_dimension_numbers<[1], [0], [0], [1], [0, 0, 1, 1], [], []>} : vector<256x4xf32>, vector<4x8xf32>, vector<256x8xf32> -> vector<256x8xf32>
    %20 = arith.addf %14, %19 : vector<256x8xf32>
    %21 = vector.extract_strided_slice %8 {offsets = [2, 0, 0], sizes = [16, 16, 4], strides = [1, 1, 1]} : vector<18x16x4xf32> to vector<16x16x4xf32>
    %22 = vector.shape_cast %21 : vector<16x16x4xf32> to vector<256x4xf32>
    %c6 = arith.constant 6 : index
    %c0_10 = arith.constant 0 : index
    %c0_11 = arith.constant 0 : index
    %23 = vector.load %arg2[%c6, %c0_10, %c0_11] : memref<9x4x8xf32, #tpu.memory_space<vmem>>, vector<1x4x8xf32>
    %24 = vector.shape_cast %23 : vector<1x4x8xf32> to vector<4x8xf32>
    %cst_12 = arith.constant dense<0.000000e+00> : vector<256x8xf32>
    %25 = tpu.matmul %22, %24, %cst_12 {dimension_numbers = #tpu.dot_dimension_numbers<[1], [0], [0], [1], [0, 0, 1, 1], [], []>} : vector<256x4xf32>, vector<4x8xf32>, vector<256x8xf32> -> vector<256x8xf32>
    %26 = arith.addf %20, %25 : vector<256x8xf32>
    %27 = vector.extract_strided_slice %4 {offsets = [0, 0, 0], sizes = [16, 16, 4], strides = [1, 1, 1]} : vector<18x16x4xf32> to vector<16x16x4xf32>
    %28 = vector.shape_cast %27 : vector<16x16x4xf32> to vector<256x4xf32>
    %c1 = arith.constant 1 : index
    %c0_13 = arith.constant 0 : index
    %c0_14 = arith.constant 0 : index
    %29 = vector.load %arg2[%c1, %c0_13, %c0_14] : memref<9x4x8xf32, #tpu.memory_space<vmem>>, vector<1x4x8xf32>
    %30 = vector.shape_cast %29 : vector<1x4x8xf32> to vector<4x8xf32>
    %cst_15 = arith.constant dense<0.000000e+00> : vector<256x8xf32>
    %31 = tpu.matmul %28, %30, %cst_15 {dimension_numbers = #tpu.dot_dimension_numbers<[1], [0], [0], [1], [0, 0, 1, 1], [], []>} : vector<256x4xf32>, vector<4x8xf32>, vector<256x8xf32> -> vector<256x8xf32>
    %32 = arith.addf %26, %31 : vector<256x8xf32>
    %33 = vector.extract_strided_slice %4 {offsets = [1, 0, 0], sizes = [16, 16, 4], strides = [1, 1, 1]} : vector<18x16x4xf32> to vector<16x16x4xf32>
    %34 = vector.shape_cast %33 : vector<16x16x4xf32> to vector<256x4xf32>
    %c4 = arith.constant 4 : index
    %c0_16 = arith.constant 0 : index
    %c0_17 = arith.constant 0 : index
    %35 = vector.load %arg2[%c4, %c0_16, %c0_17] : memref<9x4x8xf32, #tpu.memory_space<vmem>>, vector<1x4x8xf32>
    %36 = vector.shape_cast %35 : vector<1x4x8xf32> to vector<4x8xf32>
    %cst_18 = arith.constant dense<0.000000e+00> : vector<256x8xf32>
    %37 = tpu.matmul %34, %36, %cst_18 {dimension_numbers = #tpu.dot_dimension_numbers<[1], [0], [0], [1], [0, 0, 1, 1], [], []>} : vector<256x4xf32>, vector<4x8xf32>, vector<256x8xf32> -> vector<256x8xf32>
    %38 = arith.addf %32, %37 : vector<256x8xf32>
    %39 = vector.extract_strided_slice %4 {offsets = [2, 0, 0], sizes = [16, 16, 4], strides = [1, 1, 1]} : vector<18x16x4xf32> to vector<16x16x4xf32>
    %40 = vector.shape_cast %39 : vector<16x16x4xf32> to vector<256x4xf32>
    %c7 = arith.constant 7 : index
    %c0_19 = arith.constant 0 : index
    %c0_20 = arith.constant 0 : index
    %41 = vector.load %arg2[%c7, %c0_19, %c0_20] : memref<9x4x8xf32, #tpu.memory_space<vmem>>, vector<1x4x8xf32>
    %42 = vector.shape_cast %41 : vector<1x4x8xf32> to vector<4x8xf32>
    %cst_21 = arith.constant dense<0.000000e+00> : vector<256x8xf32>
    %43 = tpu.matmul %40, %42, %cst_21 {dimension_numbers = #tpu.dot_dimension_numbers<[1], [0], [0], [1], [0, 0, 1, 1], [], []>} : vector<256x4xf32>, vector<4x8xf32>, vector<256x8xf32> -> vector<256x8xf32>
    %44 = arith.addf %38, %43 : vector<256x8xf32>
    %45 = vector.extract_strided_slice %4 {offsets = [0, 1, 0], sizes = [18, 15, 4], strides = [1, 1, 1]} : vector<18x16x4xf32> to vector<18x15x4xf32>
    %46 = vector.extract_strided_slice %4 {offsets = [0, 0, 0], sizes = [18, 1, 4], strides = [1, 1, 1]} : vector<18x16x4xf32> to vector<18x1x4xf32>
    %47 = tpu.concatenate %45, %46 in 1 : vector<18x15x4xf32>, vector<18x1x4xf32> -> vector<18x16x4xf32>
    %48 = vector.extract_strided_slice %47 {offsets = [0, 0, 0], sizes = [16, 16, 4], strides = [1, 1, 1]} : vector<18x16x4xf32> to vector<16x16x4xf32>
    %49 = vector.shape_cast %48 : vector<16x16x4xf32> to vector<256x4xf32>
    %c2 = arith.constant 2 : index
    %c0_22 = arith.constant 0 : index
    %c0_23 = arith.constant 0 : index
    %50 = vector.load %arg2[%c2, %c0_22, %c0_23] : memref<9x4x8xf32, #tpu.memory_space<vmem>>, vector<1x4x8xf32>
    %51 = vector.shape_cast %50 : vector<1x4x8xf32> to vector<4x8xf32>
    %cst_24 = arith.constant dense<0.000000e+00> : vector<256x8xf32>
    %52 = tpu.matmul %49, %51, %cst_24 {dimension_numbers = #tpu.dot_dimension_numbers<[1], [0], [0], [1], [0, 0, 1, 1], [], []>} : vector<256x4xf32>, vector<4x8xf32>, vector<256x8xf32> -> vector<256x8xf32>
    %53 = arith.addf %44, %52 : vector<256x8xf32>
    %54 = vector.extract_strided_slice %47 {offsets = [1, 0, 0], sizes = [16, 16, 4], strides = [1, 1, 1]} : vector<18x16x4xf32> to vector<16x16x4xf32>
    %55 = vector.shape_cast %54 : vector<16x16x4xf32> to vector<256x4xf32>
    %c5 = arith.constant 5 : index
    %c0_25 = arith.constant 0 : index
    %c0_26 = arith.constant 0 : index
    %56 = vector.load %arg2[%c5, %c0_25, %c0_26] : memref<9x4x8xf32, #tpu.memory_space<vmem>>, vector<1x4x8xf32>
    %57 = vector.shape_cast %56 : vector<1x4x8xf32> to vector<4x8xf32>
    %cst_27 = arith.constant dense<0.000000e+00> : vector<256x8xf32>
    %58 = tpu.matmul %55, %57, %cst_27 {dimension_numbers = #tpu.dot_dimension_numbers<[1], [0], [0], [1], [0, 0, 1, 1], [], []>} : vector<256x4xf32>, vector<4x8xf32>, vector<256x8xf32> -> vector<256x8xf32>
    %59 = arith.addf %53, %58 : vector<256x8xf32>
    %60 = vector.extract_strided_slice %47 {offsets = [2, 0, 0], sizes = [16, 16, 4], strides = [1, 1, 1]} : vector<18x16x4xf32> to vector<16x16x4xf32>
    %61 = vector.shape_cast %60 : vector<16x16x4xf32> to vector<256x4xf32>
    %c8 = arith.constant 8 : index
    %c0_28 = arith.constant 0 : index
    %c0_29 = arith.constant 0 : index
    %62 = vector.load %arg2[%c8, %c0_28, %c0_29] : memref<9x4x8xf32, #tpu.memory_space<vmem>>, vector<1x4x8xf32>
    %63 = vector.shape_cast %62 : vector<1x4x8xf32> to vector<4x8xf32>
    %cst_30 = arith.constant dense<0.000000e+00> : vector<256x8xf32>
    %64 = tpu.matmul %61, %63, %cst_30 {dimension_numbers = #tpu.dot_dimension_numbers<[1], [0], [0], [1], [0, 0, 1, 1], [], []>} : vector<256x4xf32>, vector<4x8xf32>, vector<256x8xf32> -> vector<256x8xf32>
    %65 = arith.addf %59, %64 : vector<256x8xf32>
    %c0_31 = arith.constant 0 : index
    %c0_32 = arith.constant 0 : index
    %66 = vector.load %arg3[%c0_31, %c0_32] : memref<1x8xf32, #tpu.memory_space<vmem>>, vector<1x8xf32>
    %67 = vector.broadcast %66 : vector<1x8xf32> to vector<256x8xf32>
    %68 = arith.mulf %65, %67 : vector<256x8xf32>
    %c0_33 = arith.constant 0 : index
    %c0_34 = arith.constant 0 : index
    %69 = vector.load %arg4[%c0_33, %c0_34] : memref<1x8xf32, #tpu.memory_space<vmem>>, vector<1x8xf32>
    %70 = vector.broadcast %69 : vector<1x8xf32> to vector<256x8xf32>
    %71 = arith.addf %68, %70 : vector<256x8xf32>
    %cst_35 = arith.constant 0.000000e+00 : f32
    %72 = vector.broadcast %cst_35 : f32 to vector<256x8xf32>
    %73 = arith.cmpf ogt, %71, %72 : vector<256x8xf32>
    %cst_36 = arith.constant 3.000000e-01 : f32
    %74 = vector.broadcast %cst_36 : f32 to vector<256x8xf32>
    %75 = arith.mulf %74, %71 : vector<256x8xf32>
    %76 = arith.select %73, %71, %75 : vector<256x8xi1>, vector<256x8xf32>
    %77 = vector.shape_cast %76 : vector<256x8xf32> to vector<16x16x8xf32>
    %78 = vector.extract_strided_slice %77 {offsets = [1, 0, 0], sizes = [1, 16, 8], strides = [1, 1, 1]} : vector<16x16x8xf32> to vector<1x16x8xf32>
    %79 = vector.extract_strided_slice %77 {offsets = [14, 0, 0], sizes = [1, 16, 8], strides = [1, 1, 1]} : vector<16x16x8xf32> to vector<1x16x8xf32>
    %80 = tpu.concatenate %78, %77, %79 in 0 : vector<1x16x8xf32>, vector<16x16x8xf32>, vector<1x16x8xf32> -> vector<18x16x8xf32>
    %cst_37 = arith.constant 0.000000e+00 : f32
    %81 = vector.broadcast %cst_37 : f32 to vector<256x8xf32>
    %82 = vector.extract_strided_slice %80 {offsets = [0, 15, 0], sizes = [18, 1, 8], strides = [1, 1, 1]} : vector<18x16x8xf32> to vector<18x1x8xf32>
    %83 = vector.extract_strided_slice %80 {offsets = [0, 0, 0], sizes = [18, 15, 8], strides = [1, 1, 1]} : vector<18x16x8xf32> to vector<18x15x8xf32>
    %84 = tpu.concatenate %82, %83 in 1 : vector<18x1x8xf32>, vector<18x15x8xf32> -> vector<18x16x8xf32>
    %85 = vector.extract_strided_slice %84 {offsets = [0, 0, 0], sizes = [16, 16, 8], strides = [1, 1, 1]} : vector<18x16x8xf32> to vector<16x16x8xf32>
    %86 = vector.shape_cast %85 : vector<16x16x8xf32> to vector<256x8xf32>
    %c0_38 = arith.constant 0 : index
    %c0_39 = arith.constant 0 : index
    %c0_40 = arith.constant 0 : index
    %87 = vector.load %arg5[%c0_38, %c0_39, %c0_40] : memref<9x8x8xf32, #tpu.memory_space<vmem>>, vector<1x8x8xf32>
    %88 = vector.shape_cast %87 : vector<1x8x8xf32> to vector<8x8xf32>
    %cst_41 = arith.constant dense<0.000000e+00> : vector<256x8xf32>
    %89 = tpu.matmul %86, %88, %cst_41 {dimension_numbers = #tpu.dot_dimension_numbers<[1], [0], [0], [1], [0, 0, 1, 1], [], []>} : vector<256x8xf32>, vector<8x8xf32>, vector<256x8xf32> -> vector<256x8xf32>
    %90 = arith.addf %81, %89 : vector<256x8xf32>
    %91 = vector.extract_strided_slice %84 {offsets = [1, 0, 0], sizes = [16, 16, 8], strides = [1, 1, 1]} : vector<18x16x8xf32> to vector<16x16x8xf32>
    %92 = vector.shape_cast %91 : vector<16x16x8xf32> to vector<256x8xf32>
    %c3_42 = arith.constant 3 : index
    %c0_43 = arith.constant 0 : index
    %c0_44 = arith.constant 0 : index
    %93 = vector.load %arg5[%c3_42, %c0_43, %c0_44] : memref<9x8x8xf32, #tpu.memory_space<vmem>>, vector<1x8x8xf32>
    %94 = vector.shape_cast %93 : vector<1x8x8xf32> to vector<8x8xf32>
    %cst_45 = arith.constant dense<0.000000e+00> : vector<256x8xf32>
    %95 = tpu.matmul %92, %94, %cst_45 {dimension_numbers = #tpu.dot_dimension_numbers<[1], [0], [0], [1], [0, 0, 1, 1], [], []>} : vector<256x8xf32>, vector<8x8xf32>, vector<256x8xf32> -> vector<256x8xf32>
    %96 = arith.addf %90, %95 : vector<256x8xf32>
    %97 = vector.extract_strided_slice %84 {offsets = [2, 0, 0], sizes = [16, 16, 8], strides = [1, 1, 1]} : vector<18x16x8xf32> to vector<16x16x8xf32>
    %98 = vector.shape_cast %97 : vector<16x16x8xf32> to vector<256x8xf32>
    %c6_46 = arith.constant 6 : index
    %c0_47 = arith.constant 0 : index
    %c0_48 = arith.constant 0 : index
    %99 = vector.load %arg5[%c6_46, %c0_47, %c0_48] : memref<9x8x8xf32, #tpu.memory_space<vmem>>, vector<1x8x8xf32>
    %100 = vector.shape_cast %99 : vector<1x8x8xf32> to vector<8x8xf32>
    %cst_49 = arith.constant dense<0.000000e+00> : vector<256x8xf32>
    %101 = tpu.matmul %98, %100, %cst_49 {dimension_numbers = #tpu.dot_dimension_numbers<[1], [0], [0], [1], [0, 0, 1, 1], [], []>} : vector<256x8xf32>, vector<8x8xf32>, vector<256x8xf32> -> vector<256x8xf32>
    %102 = arith.addf %96, %101 : vector<256x8xf32>
    %103 = vector.extract_strided_slice %80 {offsets = [0, 0, 0], sizes = [16, 16, 8], strides = [1, 1, 1]} : vector<18x16x8xf32> to vector<16x16x8xf32>
    %104 = vector.shape_cast %103 : vector<16x16x8xf32> to vector<256x8xf32>
    %c1_50 = arith.constant 1 : index
    %c0_51 = arith.constant 0 : index
    %c0_52 = arith.constant 0 : index
    %105 = vector.load %arg5[%c1_50, %c0_51, %c0_52] : memref<9x8x8xf32, #tpu.memory_space<vmem>>, vector<1x8x8xf32>
    %106 = vector.shape_cast %105 : vector<1x8x8xf32> to vector<8x8xf32>
    %cst_53 = arith.constant dense<0.000000e+00> : vector<256x8xf32>
    %107 = tpu.matmul %104, %106, %cst_53 {dimension_numbers = #tpu.dot_dimension_numbers<[1], [0], [0], [1], [0, 0, 1, 1], [], []>} : vector<256x8xf32>, vector<8x8xf32>, vector<256x8xf32> -> vector<256x8xf32>
    %108 = arith.addf %102, %107 : vector<256x8xf32>
    %109 = vector.extract_strided_slice %80 {offsets = [1, 0, 0], sizes = [16, 16, 8], strides = [1, 1, 1]} : vector<18x16x8xf32> to vector<16x16x8xf32>
    %110 = vector.shape_cast %109 : vector<16x16x8xf32> to vector<256x8xf32>
    %c4_54 = arith.constant 4 : index
    %c0_55 = arith.constant 0 : index
    %c0_56 = arith.constant 0 : index
    %111 = vector.load %arg5[%c4_54, %c0_55, %c0_56] : memref<9x8x8xf32, #tpu.memory_space<vmem>>, vector<1x8x8xf32>
    %112 = vector.shape_cast %111 : vector<1x8x8xf32> to vector<8x8xf32>
    %cst_57 = arith.constant dense<0.000000e+00> : vector<256x8xf32>
    %113 = tpu.matmul %110, %112, %cst_57 {dimension_numbers = #tpu.dot_dimension_numbers<[1], [0], [0], [1], [0, 0, 1, 1], [], []>} : vector<256x8xf32>, vector<8x8xf32>, vector<256x8xf32> -> vector<256x8xf32>
    %114 = arith.addf %108, %113 : vector<256x8xf32>
    %115 = vector.extract_strided_slice %80 {offsets = [2, 0, 0], sizes = [16, 16, 8], strides = [1, 1, 1]} : vector<18x16x8xf32> to vector<16x16x8xf32>
    %116 = vector.shape_cast %115 : vector<16x16x8xf32> to vector<256x8xf32>
    %c7_58 = arith.constant 7 : index
    %c0_59 = arith.constant 0 : index
    %c0_60 = arith.constant 0 : index
    %117 = vector.load %arg5[%c7_58, %c0_59, %c0_60] : memref<9x8x8xf32, #tpu.memory_space<vmem>>, vector<1x8x8xf32>
    %118 = vector.shape_cast %117 : vector<1x8x8xf32> to vector<8x8xf32>
    %cst_61 = arith.constant dense<0.000000e+00> : vector<256x8xf32>
    %119 = tpu.matmul %116, %118, %cst_61 {dimension_numbers = #tpu.dot_dimension_numbers<[1], [0], [0], [1], [0, 0, 1, 1], [], []>} : vector<256x8xf32>, vector<8x8xf32>, vector<256x8xf32> -> vector<256x8xf32>
    %120 = arith.addf %114, %119 : vector<256x8xf32>
    %121 = vector.extract_strided_slice %80 {offsets = [0, 1, 0], sizes = [18, 15, 8], strides = [1, 1, 1]} : vector<18x16x8xf32> to vector<18x15x8xf32>
    %122 = vector.extract_strided_slice %80 {offsets = [0, 0, 0], sizes = [18, 1, 8], strides = [1, 1, 1]} : vector<18x16x8xf32> to vector<18x1x8xf32>
    %123 = tpu.concatenate %121, %122 in 1 : vector<18x15x8xf32>, vector<18x1x8xf32> -> vector<18x16x8xf32>
    %124 = vector.extract_strided_slice %123 {offsets = [0, 0, 0], sizes = [16, 16, 8], strides = [1, 1, 1]} : vector<18x16x8xf32> to vector<16x16x8xf32>
    %125 = vector.shape_cast %124 : vector<16x16x8xf32> to vector<256x8xf32>
    %c2_62 = arith.constant 2 : index
    %c0_63 = arith.constant 0 : index
    %c0_64 = arith.constant 0 : index
    %126 = vector.load %arg5[%c2_62, %c0_63, %c0_64] : memref<9x8x8xf32, #tpu.memory_space<vmem>>, vector<1x8x8xf32>
    %127 = vector.shape_cast %126 : vector<1x8x8xf32> to vector<8x8xf32>
    %cst_65 = arith.constant dense<0.000000e+00> : vector<256x8xf32>
    %128 = tpu.matmul %125, %127, %cst_65 {dimension_numbers = #tpu.dot_dimension_numbers<[1], [0], [0], [1], [0, 0, 1, 1], [], []>} : vector<256x8xf32>, vector<8x8xf32>, vector<256x8xf32> -> vector<256x8xf32>
    %129 = arith.addf %120, %128 : vector<256x8xf32>
    %130 = vector.extract_strided_slice %123 {offsets = [1, 0, 0], sizes = [16, 16, 8], strides = [1, 1, 1]} : vector<18x16x8xf32> to vector<16x16x8xf32>
    %131 = vector.shape_cast %130 : vector<16x16x8xf32> to vector<256x8xf32>
    %c5_66 = arith.constant 5 : index
    %c0_67 = arith.constant 0 : index
    %c0_68 = arith.constant 0 : index
    %132 = vector.load %arg5[%c5_66, %c0_67, %c0_68] : memref<9x8x8xf32, #tpu.memory_space<vmem>>, vector<1x8x8xf32>
    %133 = vector.shape_cast %132 : vector<1x8x8xf32> to vector<8x8xf32>
    %cst_69 = arith.constant dense<0.000000e+00> : vector<256x8xf32>
    %134 = tpu.matmul %131, %133, %cst_69 {dimension_numbers = #tpu.dot_dimension_numbers<[1], [0], [0], [1], [0, 0, 1, 1], [], []>} : vector<256x8xf32>, vector<8x8xf32>, vector<256x8xf32> -> vector<256x8xf32>
    %135 = arith.addf %129, %134 : vector<256x8xf32>
    %136 = vector.extract_strided_slice %123 {offsets = [2, 0, 0], sizes = [16, 16, 8], strides = [1, 1, 1]} : vector<18x16x8xf32> to vector<16x16x8xf32>
    %137 = vector.shape_cast %136 : vector<16x16x8xf32> to vector<256x8xf32>
    %c8_70 = arith.constant 8 : index
    %c0_71 = arith.constant 0 : index
    %c0_72 = arith.constant 0 : index
    %138 = vector.load %arg5[%c8_70, %c0_71, %c0_72] : memref<9x8x8xf32, #tpu.memory_space<vmem>>, vector<1x8x8xf32>
    %139 = vector.shape_cast %138 : vector<1x8x8xf32> to vector<8x8xf32>
    %cst_73 = arith.constant dense<0.000000e+00> : vector<256x8xf32>
    %140 = tpu.matmul %137, %139, %cst_73 {dimension_numbers = #tpu.dot_dimension_numbers<[1], [0], [0], [1], [0, 0, 1, 1], [], []>} : vector<256x8xf32>, vector<8x8xf32>, vector<256x8xf32> -> vector<256x8xf32>
    %141 = arith.addf %135, %140 : vector<256x8xf32>
    %c0_74 = arith.constant 0 : index
    %c0_75 = arith.constant 0 : index
    %142 = vector.load %arg6[%c0_74, %c0_75] : memref<1x8xf32, #tpu.memory_space<vmem>>, vector<1x8xf32>
    %143 = vector.broadcast %142 : vector<1x8xf32> to vector<256x8xf32>
    %144 = arith.mulf %141, %143 : vector<256x8xf32>
    %c0_76 = arith.constant 0 : index
    %c0_77 = arith.constant 0 : index
    %145 = vector.load %arg7[%c0_76, %c0_77] : memref<1x8xf32, #tpu.memory_space<vmem>>, vector<1x8xf32>
    %146 = vector.broadcast %145 : vector<1x8xf32> to vector<256x8xf32>
    %147 = arith.addf %144, %146 : vector<256x8xf32>
    %cst_78 = arith.constant 0.000000e+00 : f32
    %148 = vector.broadcast %cst_78 : f32 to vector<256x8xf32>
    %149 = arith.cmpf ogt, %147, %148 : vector<256x8xf32>
    %cst_79 = arith.constant 3.000000e-01 : f32
    %150 = vector.broadcast %cst_79 : f32 to vector<256x8xf32>
    %151 = arith.mulf %150, %147 : vector<256x8xf32>
    %152 = arith.select %149, %147, %151 : vector<256x8xi1>, vector<256x8xf32>
    %153 = vector.shape_cast %152 : vector<256x8xf32> to vector<16x16x8xf32>
    %cst_80 = arith.constant dense<0.000000e+00> : vector<16x8xf32>
    %154 = vector.multi_reduction <add>, %153, %cst_80 [0] : vector<16x16x8xf32> to vector<16x8xf32>
    %cst_81 = arith.constant 1.600000e+01 : f32
    %155 = vector.broadcast %cst_81 : f32 to vector<16x8xf32>
    %156 = arith.divf %154, %155 : vector<16x8xf32>
    %cst_82 = arith.constant dense<0.000000e+00> : vector<16x8xf32>
    %157 = vector.multi_reduction <add>, %153, %cst_82 [1] : vector<16x16x8xf32> to vector<16x8xf32>
    %cst_83 = arith.constant 1.600000e+01 : f32
    %158 = vector.broadcast %cst_83 : f32 to vector<16x8xf32>
    %159 = arith.divf %157, %158 : vector<16x8xf32>
    %c0_84 = arith.constant 0 : index
    %c0_85 = arith.constant 0 : index
    %160 = vector.load %arg8[%c0_84, %c0_85] : memref<8x1xf32, #tpu.memory_space<vmem>>, vector<8x1xf32>
    %cst_86 = arith.constant dense<0.000000e+00> : vector<16x1xf32>
    %161 = tpu.matmul %156, %160, %cst_86 {dimension_numbers = #tpu.dot_dimension_numbers<[1], [0], [0], [1], [0, 0, 1, 1], [], []>} : vector<16x8xf32>, vector<8x1xf32>, vector<16x1xf32> -> vector<16x1xf32>
    %c0_87 = arith.constant 0 : index
    %c0_88 = arith.constant 0 : index
    %162 = vector.load %arg9[%c0_87, %c0_88] : memref<1x1xf32, #tpu.memory_space<vmem>>, vector<1x1xf32>
    %163 = vector.broadcast %162 : vector<1x1xf32> to vector<16x1xf32>
    %164 = arith.addf %161, %163 : vector<16x1xf32>
    %cst_89 = arith.constant 0.000000e+00 : f32
    %165 = vector.broadcast %cst_89 : f32 to vector<16x1xf32>
    %166 = arith.maximumf %164, %165 : vector<16x1xf32>
    %c0_90 = arith.constant 0 : index
    %c0_91 = arith.constant 0 : index
    %167 = vector.load %arg10[%c0_90, %c0_91] : memref<1x8xf32, #tpu.memory_space<vmem>>, vector<1x8xf32>
    %cst_92 = arith.constant dense<0.000000e+00> : vector<16x8xf32>
    %168 = tpu.matmul %166, %167, %cst_92 {dimension_numbers = #tpu.dot_dimension_numbers<[1], [0], [0], [1], [0, 0, 1, 1], [], []>} : vector<16x1xf32>, vector<1x8xf32>, vector<16x8xf32> -> vector<16x8xf32>
    %c0_93 = arith.constant 0 : index
    %c0_94 = arith.constant 0 : index
    %169 = vector.load %arg11[%c0_93, %c0_94] : memref<1x8xf32, #tpu.memory_space<vmem>>, vector<1x8xf32>
    %170 = vector.broadcast %169 : vector<1x8xf32> to vector<16x8xf32>
    %171 = arith.addf %168, %170 : vector<16x8xf32>
    %172 = arith.negf %171 : vector<16x8xf32>
    %173 = math.exp %172 : vector<16x8xf32>
    %cst_95 = arith.constant 1.000000e+00 : f32
    %174 = vector.broadcast %cst_95 : f32 to vector<16x8xf32>
    %175 = arith.addf %174, %173 : vector<16x8xf32>
    %176 = arith.divf %174, %175 : vector<16x8xf32>
    %c0_96 = arith.constant 0 : index
    %c0_97 = arith.constant 0 : index
    %177 = vector.load %arg12[%c0_96, %c0_97] : memref<8x1xf32, #tpu.memory_space<vmem>>, vector<8x1xf32>
    %cst_98 = arith.constant dense<0.000000e+00> : vector<16x1xf32>
    %178 = tpu.matmul %159, %177, %cst_98 {dimension_numbers = #tpu.dot_dimension_numbers<[1], [0], [0], [1], [0, 0, 1, 1], [], []>} : vector<16x8xf32>, vector<8x1xf32>, vector<16x1xf32> -> vector<16x1xf32>
    %c0_99 = arith.constant 0 : index
    %c0_100 = arith.constant 0 : index
    %179 = vector.load %arg13[%c0_99, %c0_100] : memref<1x1xf32, #tpu.memory_space<vmem>>, vector<1x1xf32>
    %180 = vector.broadcast %179 : vector<1x1xf32> to vector<16x1xf32>
    %181 = arith.addf %178, %180 : vector<16x1xf32>
    %cst_101 = arith.constant 0.000000e+00 : f32
    %182 = vector.broadcast %cst_101 : f32 to vector<16x1xf32>
    %183 = arith.maximumf %181, %182 : vector<16x1xf32>
    %c0_102 = arith.constant 0 : index
    %c0_103 = arith.constant 0 : index
    %184 = vector.load %arg14[%c0_102, %c0_103] : memref<1x8xf32, #tpu.memory_space<vmem>>, vector<1x8xf32>
    %cst_104 = arith.constant dense<0.000000e+00> : vector<16x8xf32>
    %185 = tpu.matmul %183, %184, %cst_104 {dimension_numbers = #tpu.dot_dimension_numbers<[1], [0], [0], [1], [0, 0, 1, 1], [], []>} : vector<16x1xf32>, vector<1x8xf32>, vector<16x8xf32> -> vector<16x8xf32>
    %c0_105 = arith.constant 0 : index
    %c0_106 = arith.constant 0 : index
    %186 = vector.load %arg15[%c0_105, %c0_106] : memref<1x8xf32, #tpu.memory_space<vmem>>, vector<1x8xf32>
    %187 = vector.broadcast %186 : vector<1x8xf32> to vector<16x8xf32>
    %188 = arith.addf %185, %187 : vector<16x8xf32>
    %189 = arith.negf %188 : vector<16x8xf32>
    %190 = math.exp %189 : vector<16x8xf32>
    %cst_107 = arith.constant 1.000000e+00 : f32
    %191 = vector.broadcast %cst_107 : f32 to vector<16x8xf32>
    %192 = arith.addf %191, %190 : vector<16x8xf32>
    %193 = arith.divf %191, %192 : vector<16x8xf32>
    %194 = vector.shape_cast %1 : vector<16x16x4xf32> to vector<256x4xf32>
    %c0_108 = arith.constant 0 : index
    %c0_109 = arith.constant 0 : index
    %195 = vector.load %arg16[%c0_108, %c0_109] : memref<4x8xf32, #tpu.memory_space<vmem>>, vector<4x8xf32>
    %cst_110 = arith.constant dense<0.000000e+00> : vector<256x8xf32>
    %196 = tpu.matmul %194, %195, %cst_110 {dimension_numbers = #tpu.dot_dimension_numbers<[1], [0], [0], [1], [0, 0, 1, 1], [], []>} : vector<256x4xf32>, vector<4x8xf32>, vector<256x8xf32> -> vector<256x8xf32>
    %c0_111 = arith.constant 0 : index
    %c0_112 = arith.constant 0 : index
    %197 = vector.load %arg17[%c0_111, %c0_112] : memref<1x8xf32, #tpu.memory_space<vmem>>, vector<1x8xf32>
    %198 = vector.broadcast %197 : vector<1x8xf32> to vector<256x8xf32>
    %199 = arith.mulf %196, %198 : vector<256x8xf32>
    %c0_113 = arith.constant 0 : index
    %c0_114 = arith.constant 0 : index
    %200 = vector.load %arg18[%c0_113, %c0_114] : memref<1x8xf32, #tpu.memory_space<vmem>>, vector<1x8xf32>
    %201 = vector.broadcast %200 : vector<1x8xf32> to vector<256x8xf32>
    %202 = arith.addf %199, %201 : vector<256x8xf32>
    %203 = vector.shape_cast %202 : vector<256x8xf32> to vector<16x16x8xf32>
    %204 = vector.shape_cast %176 : vector<16x8xf32> to vector<1x16x8xf32>
    %205 = vector.broadcast %204 : vector<1x16x8xf32> to vector<16x16x8xf32>
    %206 = arith.mulf %153, %205 : vector<16x16x8xf32>
    %207 = vector.shape_cast %193 : vector<16x8xf32> to vector<16x1x8xf32>
    %208 = vector.broadcast %207 : vector<16x1x8xf32> to vector<16x16x8xf32>
    %209 = arith.mulf %206, %208 : vector<16x16x8xf32>
    %210 = arith.addf %209, %203 : vector<16x16x8xf32>
    %c0_115 = arith.constant 0 : index
    %c0_116 = arith.constant 0 : index
    %c0_117 = arith.constant 0 : index
    %c0_118 = arith.constant 0 : index
    %211 = vector.load %arg19[%c0_115, %c0_116, %c0_117, %c0_118] : memref<1x16x16x8xf32, #tpu.memory_space<vmem>>, vector<1x16x16x8xf32>
    %212 = vector.shape_cast %211 : vector<1x16x16x8xf32> to vector<16x16x8xf32>
    %213 = vector.shape_cast %210 : vector<16x16x8xf32> to vector<1x16x16x8xf32>
    tpu.vector_store %arg19[%c0_115, %c0_116, %c0_117, %c0_118], %213 {strides = array<i32>} : memref<1x16x16x8xf32, #tpu.memory_space<vmem>>, vector<1x16x16x8xf32>,
    return
  }
  func.func @transform_0(%arg0: i32) -> (i32, i32, i32, i32) {
    %c0_i32 = arith.constant 0 : i32
    %c0_i32_0 = arith.constant 0 : i32
    %c0_i32_1 = arith.constant 0 : i32
    %c0_i32_2 = arith.constant 0 : i32
    return %arg0, %c0_i32, %c0_i32_0, %c0_i32_1 : i32, i32, i32, i32
  }
  func.func @transform_1(%arg0: i32) -> (i32, i32, i32) {
    %c0_i32 = arith.constant 0 : i32
    %c0_i32_0 = arith.constant 0 : i32
    %c0_i32_1 = arith.constant 0 : i32
    %c0_i32_2 = arith.constant 0 : i32
    return %c0_i32, %c0_i32_0, %c0_i32_1 : i32, i32, i32
  }
  func.func @transform_2(%arg0: i32) -> (i32, i32) {
    %c0_i32 = arith.constant 0 : i32
    %c0_i32_0 = arith.constant 0 : i32
    %c0_i32_1 = arith.constant 0 : i32
    return %c0_i32, %c0_i32_0 : i32, i32
  }
  func.func @transform_3(%arg0: i32) -> (i32, i32) {
    %c0_i32 = arith.constant 0 : i32
    %c0_i32_0 = arith.constant 0 : i32
    %c0_i32_1 = arith.constant 0 : i32
    return %c0_i32, %c0_i32_0 : i32, i32
  }
  func.func @transform_4(%arg0: i32) -> (i32, i32, i32) {
    %c0_i32 = arith.constant 0 : i32
    %c0_i32_0 = arith.constant 0 : i32
    %c0_i32_1 = arith.constant 0 : i32
    %c0_i32_2 = arith.constant 0 : i32
    return %c0_i32, %c0_i32_0, %c0_i32_1 : i32, i32, i32
  }
  func.func @transform_5(%arg0: i32) -> (i32, i32) {
    %c0_i32 = arith.constant 0 : i32
    %c0_i32_0 = arith.constant 0 : i32
    %c0_i32_1 = arith.constant 0 : i32
    return %c0_i32, %c0_i32_0 : i32, i32
  }
  func.func @transform_6(%arg0: i32) -> (i32, i32) {
    %c0_i32 = arith.constant 0 : i32
    %c0_i32_0 = arith.constant 0 : i32
    %c0_i32_1 = arith.constant 0 : i32
    return %c0_i32, %c0_i32_0 : i32, i32
  }
  func.func @transform_7(%arg0: i32) -> (i32, i32) {
    %c0_i32 = arith.constant 0 : i32
    %c0_i32_0 = arith.constant 0 : i32
    %c0_i32_1 = arith.constant 0 : i32
    return %c0_i32, %c0_i32_0 : i32, i32
  }
  func.func @transform_8(%arg0: i32) -> (i32, i32) {
    %c0_i32 = arith.constant 0 : i32
    %c0_i32_0 = arith.constant 0 : i32
    %c0_i32_1 = arith.constant 0 : i32
    return %c0_i32, %c0_i32_0 : i32, i32
  }
  func.func @transform_9(%arg0: i32) -> (i32, i32) {
    %c0_i32 = arith.constant 0 : i32
    %c0_i32_0 = arith.constant 0 : i32
    %c0_i32_1 = arith.constant 0 : i32
    return %c0_i32, %c0_i32_0 : i32, i32
  }
  func.func @transform_10(%arg0: i32) -> (i32, i32) {
    %c0_i32 = arith.constant 0 : i32
    %c0_i32_0 = arith.constant 0 : i32
    %c0_i32_1 = arith.constant 0 : i32
    return %c0_i32, %c0_i32_0 : i32, i32
  }
  func.func @transform_11(%arg0: i32) -> (i32, i32) {
    %c0_i32 = arith.constant 0 : i32
    %c0_i32_0 = arith.constant 0 : i32
    %c0_i32_1 = arith.constant 0 : i32
    return %c0_i32, %c0_i32_0 : i32, i32
  }
  func.func @transform_12(%arg0: i32) -> (i32, i32) {
    %c0_i32 = arith.constant 0 : i32
    %c0_i32_0 = arith.constant 0 : i32
    %c0_i32_1 = arith.constant 0 : i32
    return %c0_i32, %c0_i32_0 : i32, i32
  }
  func.func @transform_13(%arg0: i32) -> (i32, i32) {
    %c0_i32 = arith.constant 0 : i32
    %c0_i32_0 = arith.constant 0 : i32
    %c0_i32_1 = arith.constant 0 : i32
    return %c0_i32, %c0_i32_0 : i32, i32
  }
  func.func @transform_14(%arg0: i32) -> (i32, i32) {
    %c0_i32 = arith.constant 0 : i32
    %c0_i32_0 = arith.constant 0 : i32
    %c0_i32_1 = arith.constant 0 : i32
    return %c0_i32, %c0_i32_0 : i32, i32
  }
  func.func @transform_15(%arg0: i32) -> (i32, i32) {
    %c0_i32 = arith.constant 0 : i32
    %c0_i32_0 = arith.constant 0 : i32
    %c0_i32_1 = arith.constant 0 : i32
    return %c0_i32, %c0_i32_0 : i32, i32
  }
  func.func @transform_16(%arg0: i32) -> (i32, i32) {
    %c0_i32 = arith.constant 0 : i32
    %c0_i32_0 = arith.constant 0 : i32
    %c0_i32_1 = arith.constant 0 : i32
    return %c0_i32, %c0_i32_0 : i32, i32
  }
  func.func @transform_17(%arg0: i32) -> (i32, i32) {
    %c0_i32 = arith.constant 0 : i32
    %c0_i32_0 = arith.constant 0 : i32
    %c0_i32_1 = arith.constant 0 : i32
    return %c0_i32, %c0_i32_0 : i32, i32
  }
  func.func @transform_18(%arg0: i32) -> (i32, i32, i32, i32) {
    %c0_i32 = arith.constant 0 : i32
    %c0_i32_0 = arith.constant 0 : i32
    %c0_i32_1 = arith.constant 0 : i32
    %c0_i32_2 = arith.constant 0 : i32
    return %arg0, %c0_i32, %c0_i32_0, %c0_i32_1 : i32, i32, i32, i32
  }
}

</mosaic_0001>

<llo_original>
// kernel: tpu_custom_call.1
$region0: #{tpu_custom_call.1}
  #allocation0 [shape = 'u32[]', space=smem, size = 0x4, offset = 0x4, fixed_abs, tag = 'smem constant byte address 0x4 - core index']
  #allocation1 [shape = 'u32[144,128]{1,0:T(1,128)}', space=vmem, size = 0x12000, scoped, tag = 'internal scratch']
  #allocation2 [shape = 'f32[1,1]{1,0:T(1,128)S(1)}', space=vmem, size = 0x200, scoped, tag = 'scoped memory for tpu_custom_call.1']
  #allocation3 [shape = 'f32[1,1]{1,0:T(1,128)S(1)}', space=vmem, size = 0x200, scoped, tag = 'scoped memory for tpu_custom_call.1']
  %s0 = inlined_call_operand.vmem [shape: f32[2,16,16,4], index: 0, kind: input, shape index: {}]
  %s1 = inlined_call_operand.vmem [shape: f32[9,4,8], index: 1, kind: input, shape index: {}]
  %s2 = inlined_call_operand.vmem [shape: f32[1,8], index: 2, kind: input, shape index: {}]
  %s3 = inlined_call_operand.vmem [shape: f32[1,8], index: 3, kind: input, shape index: {}]
  %s4 = inlined_call_operand.vmem [shape: f32[9,8,8], index: 4, kind: input, shape index: {}]
  %s5 = inlined_call_operand.vmem [shape: f32[1,8], index: 5, kind: input, shape index: {}]
  %s6 = inlined_call_operand.vmem [shape: f32[1,8], index: 6, kind: input, shape index: {}]
  %s7 = inlined_call_operand.vmem [shape: f32[8,1], index: 7, kind: input, shape index: {}]
  %s8 = inlined_call_operand.<no memory space> [shape: f32[1,1], index: 8, kind: input, shape index: {}]
  %s9 = inlined_call_operand.vmem [shape: f32[1,8], index: 9, kind: input, shape index: {}]
  %s10 = inlined_call_operand.vmem [shape: f32[1,8], index: 10, kind: input, shape index: {}]
  %s11 = inlined_call_operand.vmem [shape: f32[8,1], index: 11, kind: input, shape index: {}]
  %s12 = inlined_call_operand.<no memory space> [shape: f32[1,1], index: 12, kind: input, shape index: {}]
  %s13 = inlined_call_operand.vmem [shape: f32[1,8], index: 13, kind: input, shape index: {}]
  %s14 = inlined_call_operand.vmem [shape: f32[1,8], index: 14, kind: input, shape index: {}]
  %s15 = inlined_call_operand.vmem [shape: f32[4,8], index: 15, kind: input, shape index: {}]
  %s16 = inlined_call_operand.vmem [shape: f32[1,8], index: 16, kind: input, shape index: {}]
  %s17 = inlined_call_operand.vmem [shape: f32[1,8], index: 17, kind: input, shape index: {}]
  %s18 = inlined_call_operand.vmem [shape: f32[2,16,16,8], index: 18, kind: output, shape index: {}]
  %s19 = sld [smem:[#allocation0]]
  $region105: #{tpu_custom_call.1} parent=0
    _
  %s21 = ssub.s32 1, %s19
  %s22 = scalar_select 0, %s21, %s19
  %v23 = vstv %s8
  %24 = vst [vmem:[#allocation2] sm:$0x1] %v23
  %v25 = vstv %s12
  %26 = vst [vmem:[#allocation3] sm:$0x1] %v25
  loop: start=0, step=1, limit=4
  $region2: #{tpu_custom_call.1} parent=0 // loop_pre_header
    _
  $region3: #{tpu_custom_call.1} parent=0 // loop_header
    %s28 = sphi 0, %s32
    %p29 = scmp.ge.s32.totalorder %s28, 4
    %s38 = sphi 0, %s40
    %s41 = sphi 0, %s38
    %s42 = sphi 0, %s41
    %s58 = sphi 0, %s42
    %s62 = sphi 0, %s62
    %s64 = sphi 0, %s62
    %s65 = sphi 0, %s64
    %s79 = sphi 0, %s65
    %s83 = sphi 0, %s83
    %s85 = sphi 0, %s83
    %s86 = sphi 0, %s85
    %s100 = sphi 0, %s86
    %s104 = sphi 0, %s104
    %s106 = sphi 0, %s104
    %s107 = sphi 0, %s106
    %s121 = sphi 0, %s107
    %s125 = sphi 0, %s125
    %s127 = sphi 0, %s125
    %s128 = sphi 0, %s127
    %s142 = sphi 0, %s128
    %s146 = sphi 0, %s146
    %s148 = sphi 0, %s146
    %s149 = sphi 0, %s148
    %s163 = sphi 0, %s149
    %s167 = sphi 0, %s167
    %s169 = sphi 0, %s167
    %s170 = sphi 0, %s169
    %s184 = sphi 0, %s170
    %s188 = sphi 0, %s188
    %s190 = sphi 0, %s188
    %s191 = sphi 0, %s190
    %s205 = sphi 0, %s191
    %s209 = sphi 0, %s209
    %s211 = sphi 0, %s209
    %s212 = sphi 0, %s211
    %s226 = sphi 0, %s212
    %s230 = sphi 0, %s230
    %s232 = sphi 0, %s230
    %s233 = sphi 0, %s232
    %s247 = sphi 0, %s233
    %s251 = sphi 0, %s251
    %s253 = sphi 0, %s251
    %s254 = sphi 0, %s253
    %s268 = sphi 0, %s254
    %s272 = sphi 0, %s272
    %s274 = sphi 0, %s272
    %s275 = sphi 0, %s274
    %s289 = sphi 0, %s275
    %s293 = sphi 0, %s293
    %s295 = sphi 0, %s293
    %s296 = sphi 0, %s295
    %s310 = sphi 0, %s296
    %s314 = sphi 0, %s314
    %s316 = sphi 0, %s314
    %s317 = sphi 0, %s316
    %s331 = sphi 0, %s317
    %s335 = sphi 0, %s335
    %s337 = sphi 0, %s335
    %s338 = sphi 0, %s337
    %s352 = sphi 0, %s338
    %s356 = sphi 0, %s356
    %s358 = sphi 0, %s356
    %s359 = sphi 0, %s358
    %s373 = sphi 0, %s359
    %s377 = sphi 0, %s377
    %s379 = sphi 0, %s377
    %s380 = sphi 0, %s379
    %s394 = sphi 0, %s380
    %s398 = sphi 0, %s398
    %s400 = sphi 0, %s398
    %s401 = sphi 0, %s400
    %s415 = sphi 0, %s401
    %s421 = sphi 0, %s423
    %s424 = sphi 0, %s421
    %s425 = sphi 0, %s424
    %s441 = sphi 0, %s425
  $region4: #{tpu_custom_call.1} parent=0 // loop_header_branch
    %31 = sbr.rel (%p29) target = $region8
  $region5: #{tpu_custom_call.1} parent=0 // loop_body
    %s33 = ssub.s32 %s28, 1
    %s34 = ssub.s32 %s28, 2
    %s35 = sadd.s32 %s28, 1
    %s36 = ssub.s32 %s28, %s35
    %p37 = scmp.eq.s32.totalorder %s36, 0
    %s39 = sadd.s32 %s38, 1
    %s40 = scalar_select %p37, %s38, %s39
    %p43 = pneg %p37
    %p44 = scmp.eq.s32.totalorder %s28, 1
    %p45 = por %p43, %p44
    %p46 = scmp.ne.s32.totalorder %s38, %s41
    %p47 = scmp.eq.s32.totalorder %s28, 0
    %p48 = por %p46, %p47
    %p49 = scmp.ne.s32.totalorder %s38, %s41
    %p50 = scmp.eq.s32.totalorder %s33, 1
    %p51 = por %p49, %p50
    %p52 = scmp.ne.s32.totalorder %s41, %s42
    %p53 = scmp.eq.s32.totalorder %s33, 0
    %p54 = por %p52, %p53
    %p55 = scmp.ne.s32.totalorder %s41, %s42
    %p56 = scmp.eq.s32.totalorder %s34, 1
    %p57 = por %p55, %p56
    %p59 = scmp.ne.s32.totalorder %s42, %s58
    %p60 = scmp.eq.s32.totalorder %s34, 0
    %p61 = por %p59, %p60
    %s63 = sadd.s32 %s62, 1
    %p66 = scmp.eq.s32.totalorder %s28, 1
    %p67 = scmp.ne.s32.totalorder %s62, %s64
    %p68 = scmp.eq.s32.totalorder %s28, 0
    %p69 = por %p67, %p68
    %p70 = scmp.ne.s32.totalorder %s62, %s64
    %p71 = scmp.eq.s32.totalorder %s33, 1
    %p72 = por %p70, %p71
    %p73 = scmp.ne.s32.totalorder %s64, %s65
    %p74 = scmp.eq.s32.totalorder %s33, 0
    %p75 = por %p73, %p74
    %p76 = scmp.ne.s32.totalorder %s64, %s65
    %p77 = scmp.eq.s32.totalorder %s34, 1
    %p78 = por %p76, %p77
    %p80 = scmp.ne.s32.totalorder %s65, %s79
    %p81 = scmp.eq.s32.totalorder %s34, 0
    %p82 = por %p80, %p81
    %s84 = sadd.s32 %s83, 1
    %p87 = scmp.eq.s32.totalorder %s28, 1
    %p88 = scmp.ne.s32.totalorder %s83, %s85
    %p89 = scmp.eq.s32.totalorder %s28, 0
    %p90 = por %p88, %p89
    %p91 = scmp.ne.s32.totalorder %s83, %s85
    %p92 = scmp.eq.s32.totalorder %s33, 1
    %p93 = por %p91, %p92
    %p94 = scmp.ne.s32.totalorder %s85, %s86
    %p95 = scmp.eq.s32.totalorder %s33, 0
    %p96 = por %p94, %p95
    %p97 = scmp.ne.s32.totalorder %s85, %s86
    %p98 = scmp.eq.s32.totalorder %s34, 1
    %p99 = por %p97, %p98
    %p101 = scmp.ne.s32.totalorder %s86, %s100
    %p102 = scmp.eq.s32.totalorder %s34, 0
    %p103 = por %p101, %p102
    %s105 = sadd.s32 %s104, 1
    %p108 = scmp.eq.s32.totalorder %s28, 1
    %p109 = scmp.ne.s32.totalorder %s104, %s106
    %p110 = scmp.eq.s32.totalorder %s28, 0
    %p111 = por %p109, %p110
    %p112 = scmp.ne.s32.totalorder %s104, %s106
    %p113 = scmp.eq.s32.totalorder %s33, 1
    %p114 = por %p112, %p113
    %p115 = scmp.ne.s32.totalorder %s106, %s107
    %p116 = scmp.eq.s32.totalorder %s33, 0
    %p117 = por %p115, %p116
    %p118 = scmp.ne.s32.totalorder %s106, %s107
    %p119 = scmp.eq.s32.totalorder %s34, 1
    %p120 = por %p118, %p119
    %p122 = scmp.ne.s32.totalorder %s107, %s121
    %p123 = scmp.eq.s32.totalorder %s34, 0
    %p124 = por %p122, %p123
    %s126 = sadd.s32 %s125, 1
    %p129 = scmp.eq.s32.totalorder %s28, 1
    %p130 = scmp.ne.s32.totalorder %s125, %s127
    %p131 = scmp.eq.s32.totalorder %s28, 0
    %p132 = por %p130, %p131
    %p133 = scmp.ne.s32.totalorder %s125, %s127
    %p134 = scmp.eq.s32.totalorder %s33, 1
    %p135 = por %p133, %p134
    %p136 = scmp.ne.s32.totalorder %s127, %s128
    %p137 = scmp.eq.s32.totalorder %s33, 0
    %p138 = por %p136, %p137
    %p139 = scmp.ne.s32.totalorder %s127, %s128
    %p140 = scmp.eq.s32.totalorder %s34, 1
    %p141 = por %p139, %p140
    %p143 = scmp.ne.s32.totalorder %s128, %s142
    %p144 = scmp.eq.s32.totalorder %s34, 0
    %p145 = por %p143, %p144
    %s147 = sadd.s32 %s146, 1
    %p150 = scmp.eq.s32.totalorder %s28, 1
    %p151 = scmp.ne.s32.totalorder %s146, %s148
    %p152 = scmp.eq.s32.totalorder %s28, 0
    %p153 = por %p151, %p152
    %p154 = scmp.ne.s32.totalorder %s146, %s148
    %p155 = scmp.eq.s32.totalorder %s33, 1
    %p156 = por %p154, %p155
    %p157 = scmp.ne.s32.totalorder %s148, %s149
    %p158 = scmp.eq.s32.totalorder %s33, 0
    %p159 = por %p157, %p158
    %p160 = scmp.ne.s32.totalorder %s148, %s149
    %p161 = scmp.eq.s32.totalorder %s34, 1
    %p162 = por %p160, %p161
    %p164 = scmp.ne.s32.totalorder %s149, %s163
    %p165 = scmp.eq.s32.totalorder %s34, 0
    %p166 = por %p164, %p165
    %s168 = sadd.s32 %s167, 1
    %p171 = scmp.eq.s32.totalorder %s28, 1
    %p172 = scmp.ne.s32.totalorder %s167, %s169
    %p173 = scmp.eq.s32.totalorder %s28, 0
    %p174 = por %p172, %p173
    %p175 = scmp.ne.s32.totalorder %s167, %s169
    %p176 = scmp.eq.s32.totalorder %s33, 1
    %p177 = por %p175, %p176
    %p178 = scmp.ne.s32.totalorder %s169, %s170
    %p179 = scmp.eq.s32.totalorder %s33, 0
    %p180 = por %p178, %p179
    %p181 = scmp.ne.s32.totalorder %s169, %s170
    %p182 = scmp.eq.s32.totalorder %s34, 1
    %p183 = por %p181, %p182
    %p185 = scmp.ne.s32.totalorder %s170, %s184
    %p186 = scmp.eq.s32.totalorder %s34, 0
    %p187 = por %p185, %p186
    %s189 = sadd.s32 %s188, 1
    %p192 = scmp.eq.s32.totalorder %s28, 1
    %p193 = scmp.ne.s32.totalorder %s188, %s190
    %p194 = scmp.eq.s32.totalorder %s28, 0
    %p195 = por %p193, %p194
    %p196 = scmp.ne.s32.totalorder %s188, %s190
    %p197 = scmp.eq.s32.totalorder %s33, 1
    %p198 = por %p196, %p197
    %p199 = scmp.ne.s32.totalorder %s190, %s191
    %p200 = scmp.eq.s32.totalorder %s33, 0
    %p201 = por %p199, %p200
    %p202 = scmp.ne.s32.totalorder %s190, %s191
    %p203 = scmp.eq.s32.totalorder %s34, 1
    %p204 = por %p202, %p203
    %p206 = scmp.ne.s32.totalorder %s191, %s205
    %p207 = scmp.eq.s32.totalorder %s34, 0
    %p208 = por %p206, %p207
    %s210 = sadd.s32 %s209, 1
    %p213 = scmp.eq.s32.totalorder %s28, 1
    %p214 = scmp.ne.s32.totalorder %s209, %s211
    %p215 = scmp.eq.s32.totalorder %s28, 0
    %p216 = por %p214, %p215
    %p217 = scmp.ne.s32.totalorder %s209, %s211
    %p218 = scmp.eq.s32.totalorder %s33, 1
    %p219 = por %p217, %p218
    %p220 = scmp.ne.s32.totalorder %s211, %s212
    %p221 = scmp.eq.s32.totalorder %s33, 0
    %p222 = por %p220, %p221
    %p223 = scmp.ne.s32.totalorder %s211, %s212
    %p224 = scmp.eq.s32.totalorder %s34, 1
    %p225 = por %p223, %p224
    %p227 = scmp.ne.s32.totalorder %s212, %s226
    %p228 = scmp.eq.s32.totalorder %s34, 0
    %p229 = por %p227, %p228
    %s231 = sadd.s32 %s230, 1
    %p234 = scmp.eq.s32.totalorder %s28, 1
    %p235 = scmp.ne.s32.totalorder %s230, %s232
    %p236 = scmp.eq.s32.totalorder %s28, 0
    %p237 = por %p235, %p236
    %p238 = scmp.ne.s32.totalorder %s230, %s232
    %p239 = scmp.eq.s32.totalorder %s33, 1
    %p240 = por %p238, %p239
    %p241 = scmp.ne.s32.totalorder %s232, %s233
    %p242 = scmp.eq.s32.totalorder %s33, 0
    %p243 = por %p241, %p242
    %p244 = scmp.ne.s32.totalorder %s232, %s233
    %p245 = scmp.eq.s32.totalorder %s34, 1
    %p246 = por %p244, %p245
    %p248 = scmp.ne.s32.totalorder %s233, %s247
    %p249 = scmp.eq.s32.totalorder %s34, 0
    %p250 = por %p248, %p249
    %s252 = sadd.s32 %s251, 1
    %p255 = scmp.eq.s32.totalorder %s28, 1
    %p256 = scmp.ne.s32.totalorder %s251, %s253
    %p257 = scmp.eq.s32.totalorder %s28, 0
    %p258 = por %p256, %p257
    %p259 = scmp.ne.s32.totalorder %s251, %s253
    %p260 = scmp.eq.s32.totalorder %s33, 1
    %p261 = por %p259, %p260
    %p262 = scmp.ne.s32.totalorder %s253, %s254
    %p263 = scmp.eq.s32.totalorder %s33, 0
    %p264 = por %p262, %p263
    %p265 = scmp.ne.s32.totalorder %s253, %s254
    %p266 = scmp.eq.s32.totalorder %s34, 1
    %p267 = por %p265, %p266
    %p269 = scmp.ne.s32.totalorder %s254, %s268
    %p270 = scmp.eq.s32.totalorder %s34, 0
    %p271 = por %p269, %p270
    %s273 = sadd.s32 %s272, 1
    %p276 = scmp.eq.s32.totalorder %s28, 1
    %p277 = scmp.ne.s32.totalorder %s272, %s274
    %p278 = scmp.eq.s32.totalorder %s28, 0
    %p279 = por %p277, %p278
    %p280 = scmp.ne.s32.totalorder %s272, %s274
    %p281 = scmp.eq.s32.totalorder %s33, 1
    %p282 = por %p280, %p281
    %p283 = scmp.ne.s32.totalorder %s274, %s275
    %p284 = scmp.eq.s32.totalorder %s33, 0
    %p285 = por %p283, %p284
    %p286 = scmp.ne.s32.totalorder %s274, %s275
    %p287 = scmp.eq.s32.totalorder %s34, 1
    %p288 = por %p286, %p287
    %p290 = scmp.ne.s32.totalorder %s275, %s289
    %p291 = scmp.eq.s32.totalorder %s34, 0
    %p292 = por %p290, %p291
    %s294 = sadd.s32 %s293, 1
    %p297 = scmp.eq.s32.totalorder %s28, 1
    %p298 = scmp.ne.s32.totalorder %s293, %s295
    %p299 = scmp.eq.s32.totalorder %s28, 0
    %p300 = por %p298, %p299
    %p301 = scmp.ne.s32.totalorder %s293, %s295
    %p302 = scmp.eq.s32.totalorder %s33, 1
    %p303 = por %p301, %p302
    %p304 = scmp.ne.s32.totalorder %s295, %s296
    %p305 = scmp.eq.s32.totalorder %s33, 0
    %p306 = por %p304, %p305
    %p307 = scmp.ne.s32.totalorder %s295, %s296
    %p308 = scmp.eq.s32.totalorder %s34, 1
    %p309 = por %p307, %p308
    %p311 = scmp.ne.s32.totalorder %s296, %s310
    %p312 = scmp.eq.s32.totalorder %s34, 0
    %p313 = por %p311, %p312
    %s315 = sadd.s32 %s314, 1
    %p318 = scmp.eq.s32.totalorder %s28, 1
    %p319 = scmp.ne.s32.totalorder %s314, %s316
    %p320 = scmp.eq.s32.totalorder %s28, 0
    %p321 = por %p319, %p320
    %p322 = scmp.ne.s32.totalorder %s314, %s316
    %p323 = scmp.eq.s32.totalorder %s33, 1
    %p324 = por %p322, %p323
    %p325 = scmp.ne.s32.totalorder %s316, %s317
    %p326 = scmp.eq.s32.totalorder %s33, 0
    %p327 = por %p325, %p326
    %p328 = scmp.ne.s32.totalorder %s316, %s317
    %p329 = scmp.eq.s32.totalorder %s34, 1
    %p330 = por %p328, %p329
    %p332 = scmp.ne.s32.totalorder %s317, %s331
    %p333 = scmp.eq.s32.totalorder %s34, 0
    %p334 = por %p332, %p333
    %s336 = sadd.s32 %s335, 1
    %p339 = scmp.eq.s32.totalorder %s28, 1
    %p340 = scmp.ne.s32.totalorder %s335, %s337
    %p341 = scmp.eq.s32.totalorder %s28, 0
    %p342 = por %p340, %p341
    %p343 = scmp.ne.s32.totalorder %s335, %s337
    %p344 = scmp.eq.s32.totalorder %s33, 1
    %p345 = por %p343, %p344
    %p346 = scmp.ne.s32.totalorder %s337, %s338
    %p347 = scmp.eq.s32.totalorder %s33, 0
    %p348 = por %p346, %p347
    %p349 = scmp.ne.s32.totalorder %s337, %s338
    %p350 = scmp.eq.s32.totalorder %s34, 1
    %p351 = por %p349, %p350
    %p353 = scmp.ne.s32.totalorder %s338, %s352
    %p354 = scmp.eq.s32.totalorder %s34, 0
    %p355 = por %p353, %p354
    %s357 = sadd.s32 %s356, 1
    %p360 = scmp.eq.s32.totalorder %s28, 1
    %p361 = scmp.ne.s32.totalorder %s356, %s358
    %p362 = scmp.eq.s32.totalorder %s28, 0
    %p363 = por %p361, %p362
    %p364 = scmp.ne.s32.totalorder %s356, %s358
    %p365 = scmp.eq.s32.totalorder %s33, 1
    %p366 = por %p364, %p365
    %p367 = scmp.ne.s32.totalorder %s358, %s359
    %p368 = scmp.eq.s32.totalorder %s33, 0
    %p369 = por %p367, %p368
    %p370 = scmp.ne.s32.totalorder %s358, %s359
    %p371 = scmp.eq.s32.totalorder %s34, 1
    %p372 = por %p370, %p371
    %p374 = scmp.ne.s32.totalorder %s359, %s373
    %p375 = scmp.eq.s32.totalorder %s34, 0
    %p376 = por %p374, %p375
    %s378 = sadd.s32 %s377, 1
    %p381 = scmp.eq.s32.totalorder %s28, 1
    %p382 = scmp.ne.s32.totalorder %s377, %s379
    %p383 = scmp.eq.s32.totalorder %s28, 0
    %p384 = por %p382, %p383
    %p385 = scmp.ne.s32.totalorder %s377, %s379
    %p386 = scmp.eq.s32.totalorder %s33, 1
    %p387 = por %p385, %p386
    %p388 = scmp.ne.s32.totalorder %s379, %s380
    %p389 = scmp.eq.s32.totalorder %s33, 0
    %p390 = por %p388, %p389
    %p391 = scmp.ne.s32.totalorder %s379, %s380
    %p392 = scmp.eq.s32.totalorder %s34, 1
    %p393 = por %p391, %p392
    %p395 = scmp.ne.s32.totalorder %s380, %s394
    %p396 = scmp.eq.s32.totalorder %s34, 0
    %p397 = por %p395, %p396
    %s399 = sadd.s32 %s398, 1
    %p402 = scmp.eq.s32.totalorder %s28, 1
    %p403 = scmp.ne.s32.totalorder %s398, %s400
    %p404 = scmp.eq.s32.totalorder %s28, 0
    %p405 = por %p403, %p404
    %p406 = scmp.ne.s32.totalorder %s398, %s400
    %p407 = scmp.eq.s32.totalorder %s33, 1
    %p408 = por %p406, %p407
    %p409 = scmp.ne.s32.totalorder %s400, %s401
    %p410 = scmp.eq.s32.totalorder %s33, 0
    %p411 = por %p409, %p410
    %p412 = scmp.ne.s32.totalorder %s400, %s401
    %p413 = scmp.eq.s32.totalorder %s34, 1
    %p414 = por %p412, %p413
    %p416 = scmp.ne.s32.totalorder %s401, %s415
    %p417 = scmp.eq.s32.totalorder %s34, 0
    %p418 = por %p416, %p417
    %s419 = ssub.s32 %s28, %s35
    %p420 = scmp.eq.s32.totalorder %s419, 0
    %s422 = sadd.s32 %s421, 1
    %s423 = scalar_select %p420, %s421, %s422
    %p426 = pneg %p420
    %p427 = scmp.eq.s32.totalorder %s28, 1
    %p428 = por %p426, %p427
    %p429 = scmp.ne.s32.totalorder %s421, %s424
    %p430 = scmp.eq.s32.totalorder %s28, 0
    %p431 = por %p429, %p430
    %p432 = scmp.ne.s32.totalorder %s421, %s424
    %p433 = scmp.eq.s32.totalorder %s33, 1
    %p434 = por %p432, %p433
    %p435 = scmp.ne.s32.totalorder %s424, %s425
    %p436 = scmp.eq.s32.totalorder %s33, 0
    %p437 = por %p435, %p436
    %p438 = scmp.ne.s32.totalorder %s424, %s425
    %p439 = scmp.eq.s32.totalorder %s34, 1
    %p440 = por %p438, %p439
    %p442 = scmp.ne.s32.totalorder %s425, %s441
    %p443 = scmp.eq.s32.totalorder %s34, 0
    %p444 = por %p442, %p443
    %p445 = scmp.le.s32.totalorder 1, %s28
    %p446 = scmp.lt.s32.totalorder %s28, 3
    %p447 = pnand %p445, %p446
    %p448 = pneg %p447
    // Predicated region
    $region9: #{tpu_custom_call.1} parent=5 // pred_check
      _
    $region10: #{tpu_custom_call.1} parent=5 // pred_check_branch
      %450 = sbr.rel (%p447) target = $region12
    $region11: #{tpu_custom_call.1} parent=5 // pred_region
      %s451 = ssub.s32 %s28, 1
      // Predicated region
      $region13: #{tpu_custom_call.1} parent=11 // pred_check
        %p452 = pneg %p75
      $region14: #{tpu_custom_call.1} parent=11 // pred_check_branch
        %454 = sbr.rel (%p452) target = $region16
      $region15: #{tpu_custom_call.1} parent=11 // pred_region
        _
      $region16: #{tpu_custom_call.1} parent=11 // pred_fallthru
        _
      // Predicated region
      $region17: #{tpu_custom_call.1} parent=11 // pred_check
        %p455 = pneg %p96
      $region18: #{tpu_custom_call.1} parent=11 // pred_check_branch
        %457 = sbr.rel (%p455) target = $region20
      $region19: #{tpu_custom_call.1} parent=11 // pred_region
        _
      $region20: #{tpu_custom_call.1} parent=11 // pred_fallthru
        _
      // Predicated region
      $region21: #{tpu_custom_call.1} parent=11 // pred_check
        %p458 = pneg %p117
      $region22: #{tpu_custom_call.1} parent=11 // pred_check_branch
        %460 = sbr.rel (%p458) target = $region24
      $region23: #{tpu_custom_call.1} parent=11 // pred_region
        _
      $region24: #{tpu_custom_call.1} parent=11 // pred_fallthru
        _
      // Predicated region
      $region25: #{tpu_custom_call.1} parent=11 // pred_check
        %p461 = pneg %p138
      $region26: #{tpu_custom_call.1} parent=11 // pred_check_branch
        %463 = sbr.rel (%p461) target = $region28
      $region27: #{tpu_custom_call.1} parent=11 // pred_region
        _
      $region28: #{tpu_custom_call.1} parent=11 // pred_fallthru
        _
      // Predicated region
      $region29: #{tpu_custom_call.1} parent=11 // pred_check
        %p464 = pneg %p159
      $region30: #{tpu_custom_call.1} parent=11 // pred_check_branch
        %466 = sbr.rel (%p464) target = $region32
      $region31: #{tpu_custom_call.1} parent=11 // pred_region
        _
      $region32: #{tpu_custom_call.1} parent=11 // pred_fallthru
        _
      // Predicated region
      $region33: #{tpu_custom_call.1} parent=11 // pred_check
        %p467 = pneg %p180
      $region34: #{tpu_custom_call.1} parent=11 // pred_check_branch
        %469 = sbr.rel (%p467) target = $region36
      $region35: #{tpu_custom_call.1} parent=11 // pred_region
        _
      $region36: #{tpu_custom_call.1} parent=11 // pred_fallthru
        _
      // Predicated region
      $region37: #{tpu_custom_call.1} parent=11 // pred_check
        %p470 = pneg %p201
      $region38: #{tpu_custom_call.1} parent=11 // pred_check_branch
        %472 = sbr.rel (%p470) target = $region40
      $region39: #{tpu_custom_call.1} parent=11 // pred_region
        _
      $region40: #{tpu_custom_call.1} parent=11 // pred_fallthru
        _
      // Predicated region
      $region41: #{tpu_custom_call.1} parent=11 // pred_check
        %p473 = pneg %p222
      $region42: #{tpu_custom_call.1} parent=11 // pred_check_branch
        %475 = sbr.rel (%p473) target = $region44
      $region43: #{tpu_custom_call.1} parent=11 // pred_region
        _
      $region44: #{tpu_custom_call.1} parent=11 // pred_fallthru
        _
      // Predicated region
      $region45: #{tpu_custom_call.1} parent=11 // pred_check
        %p476 = pneg %p243
      $region46: #{tpu_custom_call.1} parent=11 // pred_check_branch
        %478 = sbr.rel (%p476) target = $region48
      $region47: #{tpu_custom_call.1} parent=11 // pred_region
        _
      $region48: #{tpu_custom_call.1} parent=11 // pred_fallthru
        _
      // Predicated region
      $region49: #{tpu_custom_call.1} parent=11 // pred_check
        %p479 = pneg %p264
      $region50: #{tpu_custom_call.1} parent=11 // pred_check_branch
        %481 = sbr.rel (%p479) target = $region52
      $region51: #{tpu_custom_call.1} parent=11 // pred_region
        _
      $region52: #{tpu_custom_call.1} parent=11 // pred_fallthru
        _
      // Predicated region
      $region53: #{tpu_custom_call.1} parent=11 // pred_check
        %p482 = pneg %p285
      $region54: #{tpu_custom_call.1} parent=11 // pred_check_branch
        %484 = sbr.rel (%p482) target = $region56
      $region55: #{tpu_custom_call.1} parent=11 // pred_region
        _
      $region56: #{tpu_custom_call.1} parent=11 // pred_fallthru
        _
      // Predicated region
      $region57: #{tpu_custom_call.1} parent=11 // pred_check
        %p485 = pneg %p306
      $region58: #{tpu_custom_call.1} parent=11 // pred_check_branch
        %487 = sbr.rel (%p485) target = $region60
      $region59: #{tpu_custom_call.1} parent=11 // pred_region
        _
      $region60: #{tpu_custom_call.1} parent=11 // pred_fallthru
        _
      // Predicated region
      $region61: #{tpu_custom_call.1} parent=11 // pred_check
        %p488 = pneg %p327
      $region62: #{tpu_custom_call.1} parent=11 // pred_check_branch
        %490 = sbr.rel (%p488) target = $region64
      $region63: #{tpu_custom_call.1} parent=11 // pred_region
        _
      $region64: #{tpu_custom_call.1} parent=11 // pred_fallthru
        _
      // Predicated region
      $region65: #{tpu_custom_call.1} parent=11 // pred_check
        %p491 = pneg %p348
      $region66: #{tpu_custom_call.1} parent=11 // pred_check_branch
        %493 = sbr.rel (%p491) target = $region68
      $region67: #{tpu_custom_call.1} parent=11 // pred_region
        _
      $region68: #{tpu_custom_call.1} parent=11 // pred_fallthru
        _
      // Predicated region
      $region69: #{tpu_custom_call.1} parent=11 // pred_check
        %p494 = pneg %p369
      $region70: #{tpu_custom_call.1} parent=11 // pred_check_branch
        %496 = sbr.rel (%p494) target = $region72
      $region71: #{tpu_custom_call.1} parent=11 // pred_region
        _
      $region72: #{tpu_custom_call.1} parent=11 // pred_fallthru
        _
      // Predicated region
      $region73: #{tpu_custom_call.1} parent=11 // pred_check
        %p497 = pneg %p390
      $region74: #{tpu_custom_call.1} parent=11 // pred_check_branch
        %499 = sbr.rel (%p497) target = $region76
      $region75: #{tpu_custom_call.1} parent=11 // pred_region
        _
      $region76: #{tpu_custom_call.1} parent=11 // pred_fallthru
        _
      // Predicated region
      $region77: #{tpu_custom_call.1} parent=11 // pred_check
        %p500 = pneg %p411
      $region78: #{tpu_custom_call.1} parent=11 // pred_check_branch
        %502 = sbr.rel (%p500) target = $region80
      $region79: #{tpu_custom_call.1} parent=11 // pred_region
        _
      $region80: #{tpu_custom_call.1} parent=11 // pred_fallthru
        _
    $region12: #{tpu_custom_call.1} parent=5 // pred_fallthru
      _
    %p503 = scmp.lt.s32.totalorder %s28, 2
    // Predicated region
    $region81: #{tpu_custom_call.1} parent=5 // pred_check
      %p504 = pneg %p503
    $region82: #{tpu_custom_call.1} parent=5 // pred_check_branch
      %506 = sbr.rel (%p504) target = $region84
    $region83: #{tpu_custom_call.1} parent=5 // pred_region
      // Predicated region
      $region85: #{tpu_custom_call.1} parent=83 // pred_check
        %p507 = pneg %p48
      $region86: #{tpu_custom_call.1} parent=83 // pred_check_branch
        %509 = sbr.rel (%p507) target = $region88
      $region87: #{tpu_custom_call.1} parent=83 // pred_region
        %p510 = scmp.lt.s32.totalorder %s28, 1
        %s511 = scalar_select %p510, %s28, 1
        %s512 = smul.addr %s511, 32
        %s513 = smul.addr %s512, 8
        %s514 = scalar_lea.vmem %s0, %s513
      $region88: #{tpu_custom_call.1} parent=83 // pred_fallthru
        _
    $region84: #{tpu_custom_call.1} parent=5 // pred_fallthru
      _
    %p515 = scmp.le.s32.totalorder 1, %s28
    %p516 = scmp.lt.s32.totalorder %s28, 3
    %p517 = pnand %p515, %p516
    %p518 = pneg %p517
    // Predicated region
    $region89: #{tpu_custom_call.1} parent=5 // pred_check
      _
    $region90: #{tpu_custom_call.1} parent=5 // pred_check_branch
      %520 = sbr.rel (%p517) target = $region92
    $region91: #{tpu_custom_call.1} parent=5 // pred_region
      %s521 = ssub.s32 %s28, 1
      %p522 = scmp.lt.s32.totalorder %s33, 1
      %s523 = scalar_select %p522, %s33, 1
      %s524 = smul.addr %s523, 32
      %s525 = smul.addr %s524, 8
      %s526 = scalar_lea.vmem %s0, %s525
      %p527 = pneg %p54
      %p528 = pneg %p51
      %p529 = pneg %p75
      %p530 = pneg %p72
      %p531 = pneg %p96
      %p532 = pneg %p93
      %p533 = pneg %p117
      %p534 = pneg %p114
      %p535 = pneg %p138
      %p536 = pneg %p135
      %p537 = pneg %p159
      %p538 = pneg %p156
      %p539 = pneg %p180
      %p540 = pneg %p177
      %p541 = pneg %p201
      %p542 = pneg %p198
      %p543 = pneg %p222
      %p544 = pneg %p219
      %p545 = pneg %p243
      %p546 = pneg %p240
      %p547 = pneg %p264
      %p548 = pneg %p261
      %p549 = pneg %p285
      %p550 = pneg %p282
      %p551 = pneg %p306
      %p552 = pneg %p303
      %p553 = pneg %p327
      %p554 = pneg %p324
      %p555 = pneg %p348
      %p556 = pneg %p345
      %p557 = pneg %p369
      %p558 = pneg %p366
      %p559 = pneg %p390
      %p560 = pneg %p387
      %p561 = pneg %p411
      %p562 = pneg %p408
      %p563 = pneg %p437
      %p564 = pneg %p434
      %p565 = scmp.lt.s32.totalorder %s33, 1
      %s566 = scalar_select %p565, %s33, 1
      %s567 = smul.addr %s566, 32
      %s568 = smul.addr %s567, 8
      %s569 = scalar_lea.vmem %s18, %s568
      %p570 = scmp.lt.s32.totalorder %s33, 1
      %s571 = scalar_select %p570, %s33, 1
      %s572 = smul.addr %s571, 32
      %s573 = smul.addr %s572, 8
      %s574 = scalar_lea.vmem %s0, %s573
      %p575 = scmp.lt.s32.totalorder %s33, 1
      %s576 = scalar_select %p575, %s33, 1
      %s577 = smul.addr %s576, 32
      %s578 = smul.addr %s577, 8
      %s579 = scalar_lea.vmem %s18, %s578
      %v580 = vld [vmem:[%s574] sm:$0xff]
      %v581 = vld [vmem:[%s574 + $0x8] sm:$0xff]
      %v582 = vld [vmem:[%s574 + $0x10] sm:$0xff]
      %v583 = vld [vmem:[%s574 + $0x18] sm:$0xff]
      %v584 = vld [vmem:[%s574 + $0x20] sm:$0xff]
      %v585 = vld [vmem:[%s574 + $0x28] sm:$0xff]
      %v586 = vld [vmem:[%s574 + $0x30] sm:$0xff]
      %v587 = vld [vmem:[%s574 + $0x38] sm:$0xff]
      %v588 = vld [vmem:[%s574 + $0x40] sm:$0xff]
      %v589 = vld [vmem:[%s574 + $0x48] sm:$0xff]
      %v590 = vld [vmem:[%s574 + $0x50] sm:$0xff]
      %v591 = vld [vmem:[%s574 + $0x58] sm:$0xff]
      %v592 = vld [vmem:[%s574 + $0x60] sm:$0xff]
      %v593 = vld [vmem:[%s574 + $0x68] sm:$0xff]
      %v594 = vld [vmem:[%s574 + $0x70] sm:$0xff]
      %v595 = vld [vmem:[%s574 + $0x78] sm:$0xff]
      %v596 = vld [vmem:[%s574 + $0x80] sm:$0xff]
      %v597 = vld [vmem:[%s574 + $0x88] sm:$0xff]
      %v598 = vld [vmem:[%s574 + $0x90] sm:$0xff]
      %v599 = vld [vmem:[%s574 + $0x98] sm:$0xff]
      %v600 = vld [vmem:[%s574 + $0xa0] sm:$0xff]
      %v601 = vld [vmem:[%s574 + $0xa8] sm:$0xff]
      %v602 = vld [vmem:[%s574 + $0xb0] sm:$0xff]
      %v603 = vld [vmem:[%s574 + $0xb8] sm:$0xff]
      %v604 = vld [vmem:[%s574 + $0xc0] sm:$0xff]
      %v605 = vld [vmem:[%s574 + $0xc8] sm:$0xff]
      %v606 = vld [vmem:[%s574 + $0xd0] sm:$0xff]
      %v607 = vld [vmem:[%s574 + $0xd8] sm:$0xff]
      %v608 = vld [vmem:[%s574 + $0xe0] sm:$0xff]
      %v609 = vld [vmem:[%s574 + $0xe8] sm:$0xff]
      %v610 = vld [vmem:[%s574 + $0xf0] sm:$0xff]
      %v611 = vld [vmem:[%s574 + $0xf8] sm:$0xff]
      %v628 = vrot.slane %v583, 7
      %v629 = vrot.slane %v581, 7
      %v630 = vrot.slane %v585, 7
      %v631 = vrot.slane %v587, 7
      %v632 = vrot.slane %v589, 7
      %v633 = vrot.slane %v591, 7
      %v634 = vrot.slane %v593, 7
      %v635 = vrot.slane %v595, 7
      %v636 = vrot.slane %v597, 7
      %v637 = vrot.slane %v599, 7
      %v638 = vrot.slane %v601, 7
      %v639 = vrot.slane %v603, 7
      %v640 = vrot.slane %v605, 7
      %v641 = vrot.slane %v607, 7
      %v642 = vrot.slane %v609, 7
      %v643 = vrot.slane %v611, 7
      %vm676 = vcmask 1040384
      %v677 = vrot.slane %v582, 7
      %v678 = vsel %vm676, %v677, %v628
      %v679 = vrot.slane %v580, 7
      %v680 = vsel %vm676, %v679, %v629
      %v681 = vrot.slane %v584, 7
      %v682 = vsel %vm676, %v681, %v630
      %v683 = vrot.slane %v586, 7
      %v684 = vsel %vm676, %v683, %v631
      %v685 = vrot.slane %v588, 7
      %v686 = vsel %vm676, %v685, %v632
      %v687 = vrot.slane %v590, 7
      %v688 = vsel %vm676, %v687, %v633
      %v689 = vrot.slane %v592, 7
      %v690 = vsel %vm676, %v689, %v634
      %v691 = vrot.slane %v594, 7
      %v692 = vsel %vm676, %v691, %v635
      %v693 = vrot.slane %v596, 7
      %v694 = vsel %vm676, %v693, %v636
      %v695 = vrot.slane %v598, 7
      %v696 = vsel %vm676, %v695, %v637
      %v697 = vrot.slane %v600, 7
      %v698 = vsel %vm676, %v697, %v638
      %v699 = vrot.slane %v602, 7
      %v700 = vsel %vm676, %v699, %v639
      %v701 = vrot.slane %v604, 7
      %v702 = vsel %vm676, %v701, %v640
      %v703 = vrot.slane %v606, 7
      %v704 = vsel %vm676, %v703, %v641
      %v705 = vrot.slane %v608, 7
      %v706 = vsel %vm676, %v705, %v642
      %v707 = vrot.slane %v610, 7
      %v708 = vsel %vm676, %v707, %v643
      %v725 = vsel %vm676, %v628, %v677
      %v726 = vsel %vm676, %v629, %v679
      %v727 = vsel %vm676, %v630, %v681
      %v728 = vsel %vm676, %v631, %v683
      %v729 = vsel %vm676, %v632, %v685
      %v730 = vsel %vm676, %v633, %v687
      %v731 = vsel %vm676, %v634, %v689
      %v732 = vsel %vm676, %v635, %v691
      %v733 = vsel %vm676, %v636, %v693
      %v734 = vsel %vm676, %v637, %v695
      %v735 = vsel %vm676, %v638, %v697
      %v736 = vsel %vm676, %v639, %v699
      %v737 = vsel %vm676, %v640, %v701
      %v738 = vsel %vm676, %v641, %v703
      %v739 = vsel %vm676, %v642, %v705
      %v740 = vsel %vm676, %v643, %v707
      %v741 = vld [vmem:[%s1] sm:$0xf]
      %s742 = scalar_lea.vmem %s1, 12
      %v743 = vld [vmem:[%s742] sm:$0xf]
      %vm744 = vcmask 31744
      %v746 = vsel %vm744, %v726, 0
      %v748 = vsel %vm744, %v680, 0
      %v751 = vsel %vm744, %v725, 0
      %v753 = vsel %vm744, %v678, 0
      %v756 = vsel %vm744, %v727, 0
      %v758 = vsel %vm744, %v682, 0
      %v761 = vsel %vm744, %v728, 0
      %v763 = vsel %vm744, %v684, 0
      %v766 = vsel %vm744, %v729, 0
      %v768 = vsel %vm744, %v686, 0
      %v771 = vsel %vm744, %v730, 0
      %v773 = vsel %vm744, %v688, 0
      %v776 = vsel %vm744, %v731, 0
      %v778 = vsel %vm744, %v690, 0
      %v781 = vsel %vm744, %v732, 0
      %v783 = vsel %vm744, %v692, 0
      %v786 = vsel %vm744, %v733, 0
      %v788 = vsel %vm744, %v694, 0
      %v791 = vsel %vm744, %v734, 0
      %v793 = vsel %vm744, %v696, 0
      %v796 = vsel %vm744, %v735, 0
      %v798 = vsel %vm744, %v698, 0
      %v801 = vsel %vm744, %v736, 0
      %v803 = vsel %vm744, %v700, 0
      %v806 = vsel %vm744, %v737, 0
      %v808 = vsel %vm744, %v702, 0
      %v811 = vsel %vm744, %v738, 0
      %v813 = vsel %vm744, %v704, 0
      %v816 = vsel %vm744, %v739, 0
      %v818 = vsel %vm744, %v706, 0
      %v821 = vsel %vm744, %v740, 0
      %v823 = vsel %vm744, %v708, 0
      %vm825 = vcmask 1043456
      %v827 = vsel %vm825, %v743, 0
      %829 = vmatprep.subr.mxu0 0.0
      %830 = vmatpush1.msra.mxu0 %v827
      %831 = vmatprep.subr.mxu0 0.0
      %832 = vmatpush1.msra.mxu0 0.0
      %833 = vmatprep.subr.mxu0 0.0
      %834 = vmatpush1.msra.mxu0 0.0
      %835 = vmatprep.subr.mxu0 0.0
      %836 = vmatpush1.msra.mxu0 0.0
      %837 = vmatprep.subr.mxu0 0.0
      %838 = vmatpush1.msra.mxu0 0.0
      %839 = vmatprep.subr.mxu0 0.0
      %840 = vmatpush1.msra.mxu0 0.0
      %841 = vmatprep.subr.mxu0 0.0
      %842 = vmatpush1.msra.mxu0 0.0
      %843 = vmatprep.subr.mxu0 0.0
      %844 = vmatpush1.msra.mxu0 0.0
      %845 = vmatprep.subr.mxu0 0.0
      %846 = vmatpush1.msra.mxu0 0.0
      %847 = vmatprep.subr.mxu0 0.0
      %848 = vmatpush1.msra.mxu0 0.0
      %849 = vmatprep.subr.mxu0 0.0
      %850 = vmatpush1.msra.mxu0 0.0
      %851 = vmatprep.subr.mxu0 0.0
      %852 = vmatpush1.msra.mxu0 0.0
      %853 = vmatprep.subr.mxu0 0.0
      %854 = vmatpush1.msra.mxu0 0.0
      %855 = vmatprep.subr.mxu0 0.0
      %856 = vmatpush1.msra.mxu0 0.0
      %857 = vmatprep.subr.mxu0 0.0
      %858 = vmatpush1.msra.mxu0 0.0
      %859 = vmatprep.subr.mxu0 0.0
      %860 = vmatpush1.msra.mxu0 0.0
      %861 = vmatprep.subr.mxu0 0.0
      %862 = vmatpush1.msra.mxu0 0.0
      %863 = vmatprep.subr.mxu0 0.0
      %864 = vmatpush1.msra.mxu0 0.0
      %865 = vmatprep.subr.mxu0 0.0
      %866 = vmatpush1.msra.mxu0 0.0
      %867 = vmatprep.subr.mxu0 0.0
      %868 = vmatpush1.msra.mxu0 0.0
      %869 = vmatprep.subr.mxu0 0.0
      %870 = vmatpush1.msra.mxu0 0.0
      %871 = vmatprep.subr.mxu0 0.0
      %872 = vmatpush1.msra.mxu0 0.0
      %873 = vmatprep.subr.mxu0 0.0
      %874 = vmatpush1.msra.mxu0 0.0
      %875 = vmatprep.subr.mxu0 0.0
      %876 = vmatpush1.msra.mxu0 0.0
      %877 = vmatprep.subr.mxu0 0.0
      %878 = vmatpush1.msra.mxu0 0.0
      %879 = vmatprep.subr.mxu0 0.0
      %880 = vmatpush1.msra.mxu0 0.0
      %881 = vmatprep.subr.mxu0 0.0
      %882 = vmatpush1.msra.mxu0 0.0
      %883 = vmatprep.subr.mxu0 0.0
      %884 = vmatpush1.msra.mxu0 0.0
      %885 = vmatprep.subr.mxu0 0.0
      %886 = vmatpush1.msra.mxu0 0.0
      %887 = vmatprep.subr.mxu0 0.0
      %888 = vmatpush1.msra.mxu0 0.0
      %889 = vmatprep.subr.mxu0 0.0
      %890 = vmatpush1.msra.mxu0 0.0
      %891 = vmatprep.subr.mxu0 0.0
      %892 = vmatpush1.msra.mxu0 0.0
      %893 = vmatprep.mubr.f32.mxu0 0.0
      %894 = vmatmul.mubr.f32.gmra.mrb[0].mxu0 %v746
      %v895 = vpop.f32.mrb[0].mxu0
      %v896 = vadd.f32 0.0, %v895
      %v897 = vpop.f32.mrb[0].mxu0
      %898 = vmatprep.mubr.f32.mxu0 0.0
      %899 = vmatmul.mubr.f32.gmra.mrb[0].mxu0 %v748
      %v900 = vpop.f32.mrb[0].mxu0
      %v901 = vadd.f32 0.0, %v900
      %v902 = vpop.f32.mrb[0].mxu0
      %903 = vmatprep.mubr.f32.mxu0 0.0
      %904 = vmatmul.mubr.f32.gmra.mrb[0].mxu0 %v751
      %v905 = vpop.f32.mrb[0].mxu0
      %v906 = vadd.f32 0.0, %v905
      %v907 = vpop.f32.mrb[0].mxu0
      %908 = vmatprep.mubr.f32.mxu0 0.0
      %909 = vmatmul.mubr.f32.gmra.mrb[0].mxu0 %v753
      %v910 = vpop.f32.mrb[0].mxu0
      %v911 = vadd.f32 0.0, %v910
      %v912 = vpop.f32.mrb[0].mxu0
      %913 = vmatprep.mubr.f32.mxu0 0.0
      %914 = vmatmul.mubr.f32.gmra.mrb[0].mxu0 %v756
      %v915 = vpop.f32.mrb[0].mxu0
      %v916 = vadd.f32 0.0, %v915
      %v917 = vpop.f32.mrb[0].mxu0
      %918 = vmatprep.mubr.f32.mxu0 0.0
      %919 = vmatmul.mubr.f32.gmra.mrb[0].mxu0 %v758
      %v920 = vpop.f32.mrb[0].mxu0
      %v921 = vadd.f32 0.0, %v920
      %v922 = vpop.f32.mrb[0].mxu0
      %923 = vmatprep.mubr.f32.mxu0 0.0
      %924 = vmatmul.mubr.f32.gmra.mrb[0].mxu0 %v761
      %v925 = vpop.f32.mrb[0].mxu0
      %v926 = vadd.f32 0.0, %v925
      %v927 = vpop.f32.mrb[0].mxu0
      %928 = vmatprep.mubr.f32.mxu0 0.0
      %929 = vmatmul.mubr.f32.gmra.mrb[0].mxu0 %v763
      %v930 = vpop.f32.mrb[0].mxu0
      %v931 = vadd.f32 0.0, %v930
      %v932 = vpop.f32.mrb[0].mxu0
      %933 = vmatprep.mubr.f32.mxu0 0.0
      %934 = vmatmul.mubr.f32.gmra.mrb[0].mxu0 %v766
      %v935 = vpop.f32.mrb[0].mxu0
      %v936 = vadd.f32 0.0, %v935
      %v937 = vpop.f32.mrb[0].mxu0
      %938 = vmatprep.mubr.f32.mxu0 0.0
      %939 = vmatmul.mubr.f32.gmra.mrb[0].mxu0 %v768
      %v940 = vpop.f32.mrb[0].mxu0
      %v941 = vadd.f32 0.0, %v940
      %v942 = vpop.f32.mrb[0].mxu0
      %943 = vmatprep.mubr.f32.mxu0 0.0
      %944 = vmatmul.mubr.f32.gmra.mrb[0].mxu0 %v771
      %v945 = vpop.f32.mrb[0].mxu0
      %v946 = vadd.f32 0.0, %v945
      %v947 = vpop.f32.mrb[0].mxu0
      %948 = vmatprep.mubr.f32.mxu0 0.0
      %949 = vmatmul.mubr.f32.gmra.mrb[0].mxu0 %v773
      %v950 = vpop.f32.mrb[0].mxu0
      %v951 = vadd.f32 0.0, %v950
      %v952 = vpop.f32.mrb[0].mxu0
      %953 = vmatprep.mubr.f32.mxu0 0.0
      %954 = vmatmul.mubr.f32.gmra.mrb[0].mxu0 %v776
      %v955 = vpop.f32.mrb[0].mxu0
      %v956 = vadd.f32 0.0, %v955
      %v957 = vpop.f32.mrb[0].mxu0
      %958 = vmatprep.mubr.f32.mxu0 0.0
      %959 = vmatmul.mubr.f32.gmra.mrb[0].mxu0 %v778
      %v960 = vpop.f32.mrb[0].mxu0
      %v961 = vadd.f32 0.0, %v960
      %v962 = vpop.f32.mrb[0].mxu0
      %963 = vmatprep.mubr.f32.mxu0 0.0
      %964 = vmatmul.mubr.f32.gmra.mrb[0].mxu0 %v781
      %v965 = vpop.f32.mrb[0].mxu0
      %v966 = vadd.f32 0.0, %v965
      %v967 = vpop.f32.mrb[0].mxu0
      %968 = vmatprep.mubr.f32.mxu0 0.0
      %969 = vmatmul.mubr.f32.gmra.mrb[0].mxu0 %v783
      %v970 = vpop.f32.mrb[0].mxu0
      %v971 = vadd.f32 0.0, %v970
      %v972 = vpop.f32.mrb[0].mxu0
      %973 = vmatprep.mubr.f32.mxu0 0.0
      %974 = vmatmul.mubr.f32.gmra.mrb[0].mxu0 %v786
      %v975 = vpop.f32.mrb[0].mxu0
      %v976 = vadd.f32 0.0, %v975
      %v977 = vpop.f32.mrb[0].mxu0
      %978 = vmatprep.mubr.f32.mxu0 0.0
      %979 = vmatmul.mubr.f32.gmra.mrb[0].mxu0 %v788
      %v980 = vpop.f32.mrb[0].mxu0
      %v981 = vadd.f32 0.0, %v980
      %v982 = vpop.f32.mrb[0].mxu0
      %983 = vmatprep.mubr.f32.mxu0 0.0
      %984 = vmatmul.mubr.f32.gmra.mrb[0].mxu0 %v791
      %v985 = vpop.f32.mrb[0].mxu0
      %v986 = vadd.f32 0.0, %v985
      %v987 = vpop.f32.mrb[0].mxu0
      %988 = vmatprep.mubr.f32.mxu0 0.0
      %989 = vmatmul.mubr.f32.gmra.mrb[0].mxu0 %v793
      %v990 = vpop.f32.mrb[0].mxu0
      %v991 = vadd.f32 0.0, %v990
      %v992 = vpop.f32.mrb[0].mxu0
      %993 = vmatprep.mubr.f32.mxu0 0.0
      %994 = vmatmul.mubr.f32.gmra.mrb[0].mxu0 %v796
      %v995 = vpop.f32.mrb[0].mxu0
      %v996 = vadd.f32 0.0, %v995
      %v997 = vpop.f32.mrb[0].mxu0
      %998 = vmatprep.mubr.f32.mxu0 0.0
      %999 = vmatmul.mubr.f32.gmra.mrb[0].mxu0 %v798
      %v1000 = vpop.f32.mrb[0].mxu0
      %v1001 = vadd.f32 0.0, %v1000
      %v1002 = vpop.f32.mrb[0].mxu0
      %1003 = vmatprep.mubr.f32.mxu0 0.0
      %1004 = vmatmul.mubr.f32.gmra.mrb[0].mxu0 %v801
      %v1005 = vpop.f32.mrb[0].mxu0
      %v1006 = vadd.f32 0.0, %v1005
      %v1007 = vpop.f32.mrb[0].mxu0
      %1008 = vmatprep.mubr.f32.mxu0 0.0
      %1009 = vmatmul.mubr.f32.gmra.mrb[0].mxu0 %v803
      %v1010 = vpop.f32.mrb[0].mxu0
      %v1011 = vadd.f32 0.0, %v1010
      %v1012 = vpop.f32.mrb[0].mxu0
      %1013 = vmatprep.mubr.f32.mxu0 0.0
      %1014 = vmatmul.mubr.f32.gmra.mrb[0].mxu0 %v806
      %v1015 = vpop.f32.mrb[0].mxu0
      %v1016 = vadd.f32 0.0, %v1015
      %v1017 = vpop.f32.mrb[0].mxu0
      %1018 = vmatprep.mubr.f32.mxu0 0.0
      %1019 = vmatmul.mubr.f32.gmra.mrb[0].mxu0 %v808
      %v1020 = vpop.f32.mrb[0].mxu0
      %v1021 = vadd.f32 0.0, %v1020
      %v1022 = vpop.f32.mrb[0].mxu0
      %1023 = vmatprep.mubr.f32.mxu0 0.0
      %1024 = vmatmul.mubr.f32.gmra.mrb[0].mxu0 %v811
      %v1025 = vpop.f32.mrb[0].mxu0
      %v1026 = vadd.f32 0.0, %v1025
      %v1027 = vpop.f32.mrb[0].mxu0
      %1028 = vmatprep.mubr.f32.mxu0 0.0
      %1029 = vmatmul.mubr.f32.gmra.mrb[0].mxu0 %v813
      %v1030 = vpop.f32.mrb[0].mxu0
      %v1031 = vadd.f32 0.0, %v1030
      %v1032 = vpop.f32.mrb[0].mxu0
      %1033 = vmatprep.mubr.f32.mxu0 0.0
      %1034 = vmatmul.mubr.f32.gmra.mrb[0].mxu0 %v816
      %v1035 = vpop.f32.mrb[0].mxu0
      %v1036 = vadd.f32 0.0, %v1035
      %v1037 = vpop.f32.mrb[0].mxu0
      %1038 = vmatprep.mubr.f32.mxu0 0.0
      %1039 = vmatmul.mubr.f32.gmra.mrb[0].mxu0 %v818
      %v1040 = vpop.f32.mrb[0].mxu0
      %v1041 = vadd.f32 0.0, %v1040
      %v1042 = vpop.f32.mrb[0].mxu0
      %1043 = vmatprep.mubr.f32.mxu0 0.0
      %1044 = vmatmul.mubr.f32.gmra.mrb[0].mxu0 %v821
      %v1045 = vpop.f32.mrb[0].mxu0
      %v1046 = vadd.f32 0.0, %v1045
      %v1047 = vpop.f32.mrb[0].mxu0
      %1048 = vmatprep.mubr.f32.mxu0 0.0
      %1049 = vmatmul.mubr.f32.gmra.mrb[0].mxu0 %v823
      %v1050 = vpop.f32.mrb[0].mxu0
      %v1051 = vadd.f32 0.0, %v1050
      %v1052 = vpop.f32.mrb[0].mxu0
      %1053 = vdwg.mxu0
      %v1055 = vsel %vm825, %v741, 0
      %1057 = vmatprep.subr.mxu0 0.0
      %1058 = vmatpush1.msra.mxu0 %v1055
      %1059 = vmatprep.subr.mxu0 0.0
      %1060 = vmatpush1.msra.mxu0 0.0
      %1061 = vmatprep.subr.mxu0 0.0
      %1062 = vmatpush1.msra.mxu0 0.0
      %1063 = vmatprep.subr.mxu0 0.0
      %1064 = vmatpush1.msra.mxu0 0.0
      %1065 = vmatprep.subr.mxu0 0.0
      %1066 = vmatpush1.msra.mxu0 0.0
      %1067 = vmatprep.subr.mxu0 0.0
      %1068 = vmatpush1.msra.mxu0 0.0
      %1069 = vmatprep.subr.mxu0 0.0
      %1070 = vmatpush1.msra.mxu0 0.0
      %1071 = vmatprep.subr.mxu0 0.0
      %1072 = vmatpush1.msra.mxu0 0.0
      %1073 = vmatprep.subr.mxu0 0.0
      %1074 = vmatpush1.msra.mxu0 0.0
      %1075 = vmatprep.subr.mxu0 0.0
      %1076 = vmatpush1.msra.mxu0 0.0
      %1077 = vmatprep.subr.mxu0 0.0
      %1078 = vmatpush1.msra.mxu0 0.0
      %1079 = vmatprep.subr.mxu0 0.0
      %1080 = vmatpush1.msra.mxu0 0.0
      %1081 = vmatprep.subr.mxu0 0.0
      %1082 = vmatpush1.msra.mxu0 0.0
      %1083 = vmatprep.subr.mxu0 0.0
      %1084 = vmatpush1.msra.mxu0 0.0
      %1085 = vmatprep.subr.mxu0 0.0
      %1086 = vmatpush1.msra.mxu0 0.0
      %1087 = vmatprep.subr.mxu0 0.0
      %1088 = vmatpush1.msra.mxu0 0.0
      %1089 = vmatprep.subr.mxu0 0.0
      %1090 = vmatpush1.msra.mxu0 0.0
      %1091 = vmatprep.subr.mxu0 0.0
      %1092 = vmatpush1.msra.mxu0 0.0
      %1093 = vmatprep.subr.mxu0 0.0
      %1094 = vmatpush1.msra.mxu0 0.0
      %1095 = vmatprep.subr.mxu0 0.0
      %1096 = vmatpush1.msra.mxu0 0.0
      %1097 = vmatprep.subr.mxu0 0.0
      %1098 = vmatpush1.msra.mxu0 0.0
      %1099 = vmatprep.subr.mxu0 0.0
      %1100 = vmatpush1.msra.mxu0 0.0
      %1101 = vmatprep.subr.mxu0 0.0
      %1102 = vmatpush1.msra.mxu0 0.0
      %1103 = vmatprep.subr.mxu0 0.0
      %1104 = vmatpush1.msra.mxu0 0.0
      %1105 = vmatprep.subr.mxu0 0.0
      %1106 = vmatpush1.msra.mxu0 0.0
      %1107 = vmatprep.subr.mxu0 0.0
      %1108 = vmatpush1.msra.mxu0 0.0
      %1109 = vmatprep.subr.mxu0 0.0
      %1110 = vmatpush1.msra.mxu0 0.0
      %1111 = vmatprep.subr.mxu0 0.0
      %1112 = vmatpush1.msra.mxu0 0.0
      %1113 = vmatprep.subr.mxu0 0.0
      %1114 = vmatpush1.msra.mxu0 0.0
      %1115 = vmatprep.subr.mxu0 0.0
      %1116 = vmatpush1.msra.mxu0 0.0
      %1117 = vmatprep.subr.mxu0 0.0
      %1118 = vmatpush1.msra.mxu0 0.0
      %1119 = vmatprep.subr.mxu0 0.0
      %1120 = vmatpush1.msra.mxu0 0.0
      %1121 = vmatprep.mubr.f32.mxu0 0.0
      %1122 = vmatmul.mubr.f32.gmra.mrb[0].mxu0 %v751
      %v1123 = vpop.f32.mrb[0].mxu0
      %v1124 = vadd.f32 %v896, %v1123
      %v1125 = vpop.f32.mrb[0].mxu0
      %1126 = vmatprep.mubr.f32.mxu0 0.0
      %1127 = vmatmul.mubr.f32.gmra.mrb[0].mxu0 %v753
      %v1128 = vpop.f32.mrb[0].mxu0
      %v1129 = vadd.f32 %v901, %v1128
      %v1130 = vpop.f32.mrb[0].mxu0
      %1131 = vmatprep.mubr.f32.mxu0 0.0
      %1132 = vmatmul.mubr.f32.gmra.mrb[0].mxu0 %v746
      %v1133 = vpop.f32.mrb[0].mxu0
      %v1134 = vadd.f32 %v906, %v1133
      %v1135 = vpop.f32.mrb[0].mxu0
      %1136 = vmatprep.mubr.f32.mxu0 0.0
      %1137 = vmatmul.mubr.f32.gmra.mrb[0].mxu0 %v748
      %v1138 = vpop.f32.mrb[0].mxu0
      %v1139 = vadd.f32 %v911, %v1138
      %v1140 = vpop.f32.mrb[0].mxu0
      %1141 = vmatprep.mubr.f32.mxu0 0.0
      %1142 = vmatmul.mubr.f32.gmra.mrb[0].mxu0 %v751
      %v1143 = vpop.f32.mrb[0].mxu0
      %v1144 = vadd.f32 %v916, %v1143
      %v1145 = vpop.f32.mrb[0].mxu0
      %1146 = vmatprep.mubr.f32.mxu0 0.0
      %1147 = vmatmul.mubr.f32.gmra.mrb[0].mxu0 %v753
      %v1148 = vpop.f32.mrb[0].mxu0
      %v1149 = vadd.f32 %v921, %v1148
      %v1150 = vpop.f32.mrb[0].mxu0
      %1151 = vmatprep.mubr.f32.mxu0 0.0
      %1152 = vmatmul.mubr.f32.gmra.mrb[0].mxu0 %v756
      %v1153 = vpop.f32.mrb[0].mxu0
      %v1154 = vadd.f32 %v926, %v1153
      %v1155 = vpop.f32.mrb[0].mxu0
      %1156 = vmatprep.mubr.f32.mxu0 0.0
      %1157 = vmatmul.mubr.f32.gmra.mrb[0].mxu0 %v758
      %v1158 = vpop.f32.mrb[0].mxu0
      %v1159 = vadd.f32 %v931, %v1158
      %v1160 = vpop.f32.mrb[0].mxu0
      %1161 = vmatprep.mubr.f32.mxu0 0.0
      %1162 = vmatmul.mubr.f32.gmra.mrb[0].mxu0 %v761
      %v1163 = vpop.f32.mrb[0].mxu0
      %v1164 = vadd.f32 %v936, %v1163
      %v1165 = vpop.f32.mrb[0].mxu0
      %1166 = vmatprep.mubr.f32.mxu0 0.0
      %1167 = vmatmul.mubr.f32.gmra.mrb[0].mxu0 %v763
      %v1168 = vpop.f32.mrb[0].mxu0
      %v1169 = vadd.f32 %v941, %v1168
      %v1170 = vpop.f32.mrb[0].mxu0
      %1171 = vmatprep.mubr.f32.mxu0 0.0
      %1172 = vmatmul.mubr.f32.gmra.mrb[0].mxu0 %v766
      %v1173 = vpop.f32.mrb[0].mxu0
      %v1174 = vadd.f32 %v946, %v1173
      %v1175 = vpop.f32.mrb[0].mxu0
      %1176 = vmatprep.mubr.f32.mxu0 0.0
      %1177 = vmatmul.mubr.f32.gmra.mrb[0].mxu0 %v768
      %v1178 = vpop.f32.mrb[0].mxu0
      %v1179 = vadd.f32 %v951, %v1178
      %v1180 = vpop.f32.mrb[0].mxu0
      %1181 = vmatprep.mubr.f32.mxu0 0.0
      %1182 = vmatmul.mubr.f32.gmra.mrb[0].mxu0 %v771
      %v1183 = vpop.f32.mrb[0].mxu0
      %v1184 = vadd.f32 %v956, %v1183
      %v1185 = vpop.f32.mrb[0].mxu0
      %1186 = vmatprep.mubr.f32.mxu0 0.0
      %1187 = vmatmul.mubr.f32.gmra.mrb[0].mxu0 %v773
      %v1188 = vpop.f32.mrb[0].mxu0
      %v1189 = vadd.f32 %v961, %v1188
      %v1190 = vpop.f32.mrb[0].mxu0
      %1191 = vmatprep.mubr.f32.mxu0 0.0
      %1192 = vmatmul.mubr.f32.gmra.mrb[0].mxu0 %v776
      %v1193 = vpop.f32.mrb[0].mxu0
      %v1194 = vadd.f32 %v966, %v1193
      %v1195 = vpop.f32.mrb[0].mxu0
      %1196 = vmatprep.mubr.f32.mxu0 0.0
      %1197 = vmatmul.mubr.f32.gmra.mrb[0].mxu0 %v778
      %v1198 = vpop.f32.mrb[0].mxu0
      %v1199 = vadd.f32 %v971, %v1198
      %v1200 = vpop.f32.mrb[0].mxu0
      %1201 = vmatprep.mubr.f32.mxu0 0.0
      %1202 = vmatmul.mubr.f32.gmra.mrb[0].mxu0 %v781
      %v1203 = vpop.f32.mrb[0].mxu0
      %v1204 = vadd.f32 %v976, %v1203
      %v1205 = vpop.f32.mrb[0].mxu0
      %1206 = vmatprep.mubr.f32.mxu0 0.0
      %1207 = vmatmul.mubr.f32.gmra.mrb[0].mxu0 %v783
      %v1208 = vpop.f32.mrb[0].mxu0
      %v1209 = vadd.f32 %v981, %v1208
      %v1210 = vpop.f32.mrb[0].mxu0
      %1211 = vmatprep.mubr.f32.mxu0 0.0
      %1212 = vmatmul.mubr.f32.gmra.mrb[0].mxu0 %v786
      %v1213 = vpop.f32.mrb[0].mxu0
      %v1214 = vadd.f32 %v986, %v1213
      %v1215 = vpop.f32.mrb[0].mxu0
      %1216 = vmatprep.mubr.f32.mxu0 0.0
      %1217 = vmatmul.mubr.f32.gmra.mrb[0].mxu0 %v788
      %v1218 = vpop.f32.mrb[0].mxu0
      %v1219 = vadd.f32 %v991, %v1218
      %v1220 = vpop.f32.mrb[0].mxu0
      %1221 = vmatprep.mubr.f32.mxu0 0.0
      %1222 = vmatmul.mubr.f32.gmra.mrb[0].mxu0 %v791
      %v1223 = vpop.f32.mrb[0].mxu0
      %v1224 = vadd.f32 %v996, %v1223
      %v1225 = vpop.f32.mrb[0].mxu0
      %1226 = vmatprep.mubr.f32.mxu0 0.0
      %1227 = vmatmul.mubr.f32.gmra.mrb[0].mxu0 %v793
      %v1228 = vpop.f32.mrb[0].mxu0
      %v1229 = vadd.f32 %v1001, %v1228
      %v1230 = vpop.f32.mrb[0].mxu0
      %1231 = vmatprep.mubr.f32.mxu0 0.0
      %1232 = vmatmul.mubr.f32.gmra.mrb[0].mxu0 %v796
      %v1233 = vpop.f32.mrb[0].mxu0
      %v1234 = vadd.f32 %v1006, %v1233
      %v1235 = vpop.f32.mrb[0].mxu0
      %1236 = vmatprep.mubr.f32.mxu0 0.0
      %1237 = vmatmul.mubr.f32.gmra.mrb[0].mxu0 %v798
      %v1238 = vpop.f32.mrb[0].mxu0
      %v1239 = vadd.f32 %v1011, %v1238
      %v1240 = vpop.f32.mrb[0].mxu0
      %1241 = vmatprep.mubr.f32.mxu0 0.0
      %1242 = vmatmul.mubr.f32.gmra.mrb[0].mxu0 %v801
      %v1243 = vpop.f32.mrb[0].mxu0
      %v1244 = vadd.f32 %v1016, %v1243
      %v1245 = vpop.f32.mrb[0].mxu0
      %1246 = vmatprep.mubr.f32.mxu0 0.0
      %1247 = vmatmul.mubr.f32.gmra.mrb[0].mxu0 %v803
      %v1248 = vpop.f32.mrb[0].mxu0
      %v1249 = vadd.f32 %v1021, %v1248
      %v1250 = vpop.f32.mrb[0].mxu0
      %1251 = vmatprep.mubr.f32.mxu0 0.0
      %1252 = vmatmul.mubr.f32.gmra.mrb[0].mxu0 %v806
      %v1253 = vpop.f32.mrb[0].mxu0
      %v1254 = vadd.f32 %v1026, %v1253
      %v1255 = vpop.f32.mrb[0].mxu0
      %1256 = vmatprep.mubr.f32.mxu0 0.0
      %1257 = vmatmul.mubr.f32.gmra.mrb[0].mxu0 %v808
      %v1258 = vpop.f32.mrb[0].mxu0
      %v1259 = vadd.f32 %v1031, %v1258
      %v1260 = vpop.f32.mrb[0].mxu0
      %1261 = vmatprep.mubr.f32.mxu0 0.0
      %1262 = vmatmul.mubr.f32.gmra.mrb[0].mxu0 %v811
      %v1263 = vpop.f32.mrb[0].mxu0
      %v1264 = vadd.f32 %v1036, %v1263
      %v1265 = vpop.f32.mrb[0].mxu0
      %1266 = vmatprep.mubr.f32.mxu0 0.0
      %1267 = vmatmul.mubr.f32.gmra.mrb[0].mxu0 %v813
      %v1268 = vpop.f32.mrb[0].mxu0
      %v1269 = vadd.f32 %v1041, %v1268
      %v1270 = vpop.f32.mrb[0].mxu0
      %1271 = vmatprep.mubr.f32.mxu0 0.0
      %1272 = vmatmul.mubr.f32.gmra.mrb[0].mxu0 %v816
      %v1273 = vpop.f32.mrb[0].mxu0
      %v1274 = vadd.f32 %v1046, %v1273
      %v1275 = vpop.f32.mrb[0].mxu0
      %1276 = vmatprep.mubr.f32.mxu0 0.0
      %1277 = vmatmul.mubr.f32.gmra.mrb[0].mxu0 %v818
      %v1278 = vpop.f32.mrb[0].mxu0
      %v1279 = vadd.f32 %v1051, %v1278
      %v1280 = vpop.f32.mrb[0].mxu0
      %1281 = vdwg.mxu0
      %s1282 = scalar_lea.vmem %s1, 24
      %v1283 = vld [vmem:[%s1282] sm:$0xf]
      %v1285 = vsel %vm825, %v1283, 0
      %1287 = vmatprep.subr.mxu0 0.0
      %1288 = vmatpush1.msra.mxu0 %v1285
      %1289 = vmatprep.subr.mxu0 0.0
      %1290 = vmatpush1.msra.mxu0 0.0
      %1291 = vmatprep.subr.mxu0 0.0
      %1292 = vmatpush1.msra.mxu0 0.0
      %1293 = vmatprep.subr.mxu0 0.0
      %1294 = vmatpush1.msra.mxu0 0.0
      %1295 = vmatprep.subr.mxu0 0.0
      %1296 = vmatpush1.msra.mxu0 0.0
      %1297 = vmatprep.subr.mxu0 0.0
      %1298 = vmatpush1.msra.mxu0 0.0
      %1299 = vmatprep.subr.mxu0 0.0
      %1300 = vmatpush1.msra.mxu0 0.0
      %1301 = vmatprep.subr.mxu0 0.0
      %1302 = vmatpush1.msra.mxu0 0.0
      %1303 = vmatprep.subr.mxu0 0.0
      %1304 = vmatpush1.msra.mxu0 0.0
      %1305 = vmatprep.subr.mxu0 0.0
      %1306 = vmatpush1.msra.mxu0 0.0
      %1307 = vmatprep.subr.mxu0 0.0
      %1308 = vmatpush1.msra.mxu0 0.0
      %1309 = vmatprep.subr.mxu0 0.0
      %1310 = vmatpush1.msra.mxu0 0.0
      %1311 = vmatprep.subr.mxu0 0.0
      %1312 = vmatpush1.msra.mxu0 0.0
      %1313 = vmatprep.subr.mxu0 0.0
      %1314 = vmatpush1.msra.mxu0 0.0
      %1315 = vmatprep.subr.mxu0 0.0
      %1316 = vmatpush1.msra.mxu0 0.0
      %1317 = vmatprep.subr.mxu0 0.0
      %1318 = vmatpush1.msra.mxu0 0.0
      %1319 = vmatprep.subr.mxu0 0.0
      %1320 = vmatpush1.msra.mxu0 0.0
      %1321 = vmatprep.subr.mxu0 0.0
      %1322 = vmatpush1.msra.mxu0 0.0
      %1323 = vmatprep.subr.mxu0 0.0
      %1324 = vmatpush1.msra.mxu0 0.0
      %1325 = vmatprep.subr.mxu0 0.0
      %1326 = vmatpush1.msra.mxu0 0.0
      %1327 = vmatprep.subr.mxu0 0.0
      %1328 = vmatpush1.msra.mxu0 0.0
      %1329 = vmatprep.subr.mxu0 0.0
      %1330 = vmatpush1.msra.mxu0 0.0
      %1331 = vmatprep.subr.mxu0 0.0
      %1332 = vmatpush1.msra.mxu0 0.0
      %1333 = vmatprep.subr.mxu0 0.0
      %1334 = vmatpush1.msra.mxu0 0.0
      %1335 = vmatprep.subr.mxu0 0.0
      %1336 = vmatpush1.msra.mxu0 0.0
      %1337 = vmatprep.subr.mxu0 0.0
      %1338 = vmatpush1.msra.mxu0 0.0
      %1339 = vmatprep.subr.mxu0 0.0
      %1340 = vmatpush1.msra.mxu0 0.0
      %1341 = vmatprep.subr.mxu0 0.0
      %1342 = vmatpush1.msra.mxu0 0.0
      %1343 = vmatprep.subr.mxu0 0.0
      %1344 = vmatpush1.msra.mxu0 0.0
      %1345 = vmatprep.subr.mxu0 0.0
      %1346 = vmatpush1.msra.mxu0 0.0
      %1347 = vmatprep.subr.mxu0 0.0
      %1348 = vmatpush1.msra.mxu0 0.0
      %1349 = vmatprep.subr.mxu0 0.0
      %1350 = vmatpush1.msra.mxu0 0.0
      %1351 = vmatprep.mubr.f32.mxu0 0.0
      %1352 = vmatmul.mubr.f32.gmra.mrb[0].mxu0 %v751
      %v1353 = vpop.f32.mrb[0].mxu0
      %v1354 = vadd.f32 0.0, %v1353
      %v1355 = vpop.f32.mrb[0].mxu0
      %1356 = vmatprep.mubr.f32.mxu0 0.0
      %1357 = vmatmul.mubr.f32.gmra.mrb[0].mxu0 %v753
      %v1358 = vpop.f32.mrb[0].mxu0
      %v1359 = vadd.f32 0.0, %v1358
      %v1360 = vpop.f32.mrb[0].mxu0
      %1361 = vmatprep.mubr.f32.mxu0 0.0
      %1362 = vmatmul.mubr.f32.gmra.mrb[0].mxu0 %v756
      %v1363 = vpop.f32.mrb[0].mxu0
      %v1364 = vadd.f32 0.0, %v1363
      %v1365 = vpop.f32.mrb[0].mxu0
      %1366 = vmatprep.mubr.f32.mxu0 0.0
      %1367 = vmatmul.mubr.f32.gmra.mrb[0].mxu0 %v758
      %v1368 = vpop.f32.mrb[0].mxu0
      %v1369 = vadd.f32 0.0, %v1368
      %v1370 = vpop.f32.mrb[0].mxu0
      %1371 = vmatprep.mubr.f32.mxu0 0.0
      %1372 = vmatmul.mubr.f32.gmra.mrb[0].mxu0 %v761
      %v1373 = vpop.f32.mrb[0].mxu0
      %v1374 = vadd.f32 0.0, %v1373
      %v1375 = vpop.f32.mrb[0].mxu0
      %1376 = vmatprep.mubr.f32.mxu0 0.0
      %1377 = vmatmul.mubr.f32.gmra.mrb[0].mxu0 %v763
      %v1378 = vpop.f32.mrb[0].mxu0
      %v1379 = vadd.f32 0.0, %v1378
      %v1380 = vpop.f32.mrb[0].mxu0
      %1381 = vmatprep.mubr.f32.mxu0 0.0
      %1382 = vmatmul.mubr.f32.gmra.mrb[0].mxu0 %v766
      %v1383 = vpop.f32.mrb[0].mxu0
      %v1384 = vadd.f32 0.0, %v1383
      %v1385 = vpop.f32.mrb[0].mxu0
      %1386 = vmatprep.mubr.f32.mxu0 0.0
      %1387 = vmatmul.mubr.f32.gmra.mrb[0].mxu0 %v768
      %v1388 = vpop.f32.mrb[0].mxu0
      %v1389 = vadd.f32 0.0, %v1388
      %v1390 = vpop.f32.mrb[0].mxu0
      %1391 = vmatprep.mubr.f32.mxu0 0.0
      %1392 = vmatmul.mubr.f32.gmra.mrb[0].mxu0 %v771
      %v1393 = vpop.f32.mrb[0].mxu0
      %v1394 = vadd.f32 0.0, %v1393
      %v1395 = vpop.f32.mrb[0].mxu0
      %1396 = vmatprep.mubr.f32.mxu0 0.0
      %1397 = vmatmul.mubr.f32.gmra.mrb[0].mxu0 %v773
      %v1398 = vpop.f32.mrb[0].mxu0
      %v1399 = vadd.f32 0.0, %v1398
      %v1400 = vpop.f32.mrb[0].mxu0
      %1401 = vmatprep.mubr.f32.mxu0 0.0
      %1402 = vmatmul.mubr.f32.gmra.mrb[0].mxu0 %v776
      %v1403 = vpop.f32.mrb[0].mxu0
      %v1404 = vadd.f32 0.0, %v1403
      %v1405 = vpop.f32.mrb[0].mxu0
      %1406 = vmatprep.mubr.f32.mxu0 0.0
      %1407 = vmatmul.mubr.f32.gmra.mrb[0].mxu0 %v778
      %v1408 = vpop.f32.mrb[0].mxu0
      %v1409 = vadd.f32 0.0, %v1408
      %v1410 = vpop.f32.mrb[0].mxu0
      %1411 = vmatprep.mubr.f32.mxu0 0.0
      %1412 = vmatmul.mubr.f32.gmra.mrb[0].mxu0 %v781
      %v1413 = vpop.f32.mrb[0].mxu0
      %v1414 = vadd.f32 0.0, %v1413
      %v1415 = vpop.f32.mrb[0].mxu0
      %1416 = vmatprep.mubr.f32.mxu0 0.0
      %1417 = vmatmul.mubr.f32.gmra.mrb[0].mxu0 %v783
      %v1418 = vpop.f32.mrb[0].mxu0
      %v1419 = vadd.f32 0.0, %v1418
      %v1420 = vpop.f32.mrb[0].mxu0
      %1421 = vmatprep.mubr.f32.mxu0 0.0
      %1422 = vmatmul.mubr.f32.gmra.mrb[0].mxu0 %v786
      %v1423 = vpop.f32.mrb[0].mxu0
      %v1424 = vadd.f32 0.0, %v1423
      %v1425 = vpop.f32.mrb[0].mxu0
      %1426 = vmatprep.mubr.f32.mxu0 0.0
      %1427 = vmatmul.mubr.f32.gmra.mrb[0].mxu0 %v788
      %v1428 = vpop.f32.mrb[0].mxu0
      %v1429 = vadd.f32 0.0, %v1428
      %v1430 = vpop.f32.mrb[0].mxu0
      %1431 = vmatprep.mubr.f32.mxu0 0.0
      %1432 = vmatmul.mubr.f32.gmra.mrb[0].mxu0 %v791
      %v1433 = vpop.f32.mrb[0].mxu0
      %v1434 = vadd.f32 0.0, %v1433
      %v1435 = vpop.f32.mrb[0].mxu0
      %1436 = vmatprep.mubr.f32.mxu0 0.0
      %1437 = vmatmul.mubr.f32.gmra.mrb[0].mxu0 %v793
      %v1438 = vpop.f32.mrb[0].mxu0
      %v1439 = vadd.f32 0.0, %v1438
      %v1440 = vpop.f32.mrb[0].mxu0
      %1441 = vmatprep.mubr.f32.mxu0 0.0
      %1442 = vmatmul.mubr.f32.gmra.mrb[0].mxu0 %v796
      %v1443 = vpop.f32.mrb[0].mxu0
      %v1444 = vadd.f32 0.0, %v1443
      %v1445 = vpop.f32.mrb[0].mxu0
      %1446 = vmatprep.mubr.f32.mxu0 0.0
      %1447 = vmatmul.mubr.f32.gmra.mrb[0].mxu0 %v798
      %v1448 = vpop.f32.mrb[0].mxu0
      %v1449 = vadd.f32 0.0, %v1448
      %v1450 = vpop.f32.mrb[0].mxu0
      %1451 = vmatprep.mubr.f32.mxu0 0.0
      %1452 = vmatmul.mubr.f32.gmra.mrb[0].mxu0 %v801
      %v1453 = vpop.f32.mrb[0].mxu0
      %v1454 = vadd.f32 0.0, %v1453
      %v1455 = vpop.f32.mrb[0].mxu0
      %1456 = vmatprep.mubr.f32.mxu0 0.0
      %1457 = vmatmul.mubr.f32.gmra.mrb[0].mxu0 %v803
      %v1458 = vpop.f32.mrb[0].mxu0
      %v1459 = vadd.f32 0.0, %v1458
      %v1460 = vpop.f32.mrb[0].mxu0
      %1461 = vmatprep.mubr.f32.mxu0 0.0
      %1462 = vmatmul.mubr.f32.gmra.mrb[0].mxu0 %v806
      %v1463 = vpop.f32.mrb[0].mxu0
      %v1464 = vadd.f32 0.0, %v1463
      %v1465 = vpop.f32.mrb[0].mxu0
      %1466 = vmatprep.mubr.f32.mxu0 0.0
      %1467 = vmatmul.mubr.f32.gmra.mrb[0].mxu0 %v808
      %v1468 = vpop.f32.mrb[0].mxu0
      %v1469 = vadd.f32 0.0, %v1468
      %v1470 = vpop.f32.mrb[0].mxu0
      %1471 = vmatprep.mubr.f32.mxu0 0.0
      %1472 = vmatmul.mubr.f32.gmra.mrb[0].mxu0 %v811
      %v1473 = vpop.f32.mrb[0].mxu0
      %v1474 = vadd.f32 0.0, %v1473
      %v1475 = vpop.f32.mrb[0].mxu0
      %1476 = vmatprep.mubr.f32.mxu0 0.0
      %1477 = vmatmul.mubr.f32.gmra.mrb[0].mxu0 %v813
      %v1478 = vpop.f32.mrb[0].mxu0
      %v1479 = vadd.f32 0.0, %v1478
      %v1480 = vpop.f32.mrb[0].mxu0
      %1481 = vmatprep.mubr.f32.mxu0 0.0
      %1482 = vmatmul.mubr.f32.gmra.mrb[0].mxu0 %v816
      %v1483 = vpop.f32.mrb[0].mxu0
      %v1484 = vadd.f32 0.0, %v1483
      %v1485 = vpop.f32.mrb[0].mxu0
      %1486 = vmatprep.mubr.f32.mxu0 0.0
      %1487 = vmatmul.mubr.f32.gmra.mrb[0].mxu0 %v818
      %v1488 = vpop.f32.mrb[0].mxu0
      %v1489 = vadd.f32 0.0, %v1488
      %v1490 = vpop.f32.mrb[0].mxu0
      %1491 = vmatprep.mubr.f32.mxu0 0.0
      %1492 = vmatmul.mubr.f32.gmra.mrb[0].mxu0 %v821
      %v1493 = vpop.f32.mrb[0].mxu0
      %v1494 = vadd.f32 0.0, %v1493
      %v1495 = vpop.f32.mrb[0].mxu0
      %1496 = vmatprep.mubr.f32.mxu0 0.0
      %1497 = vmatmul.mubr.f32.gmra.mrb[0].mxu0 %v823
      %v1498 = vpop.f32.mrb[0].mxu0
      %v1499 = vadd.f32 0.0, %v1498
      %v1500 = vpop.f32.mrb[0].mxu0
      %1501 = vmatprep.mubr.f32.mxu0 0.0
      %1502 = vmatmul.mubr.f32.gmra.mrb[0].mxu0 %v816
      %v1503 = vpop.f32.mrb[0].mxu0
      %v1504 = vadd.f32 0.0, %v1503
      %v1505 = vpop.f32.mrb[0].mxu0
      %1506 = vmatprep.mubr.f32.mxu0 0.0
      %1507 = vmatmul.mubr.f32.gmra.mrb[0].mxu0 %v818
      %v1508 = vpop.f32.mrb[0].mxu0
      %v1509 = vadd.f32 0.0, %v1508
      %v1510 = vpop.f32.mrb[0].mxu0
      %1511 = vdwg.mxu0
      %v1512 = vadd.f32 %v1124, %v1354
      %v1513 = vadd.f32 %v1129, %v1359
      %v1514 = vadd.f32 %v1134, %v1364
      %v1515 = vadd.f32 %v1139, %v1369
      %v1516 = vadd.f32 %v1144, %v1374
      %v1517 = vadd.f32 %v1149, %v1379
      %v1518 = vadd.f32 %v1154, %v1384
      %v1519 = vadd.f32 %v1159, %v1389
      %v1520 = vadd.f32 %v1164, %v1394
      %v1521 = vadd.f32 %v1169, %v1399
      %v1522 = vadd.f32 %v1174, %v1404
      %v1523 = vadd.f32 %v1179, %v1409
      %v1524 = vadd.f32 %v1184, %v1414
      %v1525 = vadd.f32 %v1189, %v1419
      %v1526 = vadd.f32 %v1194, %v1424
      %v1527 = vadd.f32 %v1199, %v1429
      %v1528 = vadd.f32 %v1204, %v1434
      %v1529 = vadd.f32 %v1209, %v1439
      %v1530 = vadd.f32 %v1214, %v1444
      %v1531 = vadd.f32 %v1219, %v1449
      %v1532 = vadd.f32 %v1224, %v1454
      %v1533 = vadd.f32 %v1229, %v1459
      %v1534 = vadd.f32 %v1234, %v1464
      %v1535 = vadd.f32 %v1239, %v1469
      %v1536 = vadd.f32 %v1244, %v1474
      %v1537 = vadd.f32 %v1249, %v1479
      %v1538 = vadd.f32 %v1254, %v1484
      %v1539 = vadd.f32 %v1259, %v1489
      %v1540 = vadd.f32 %v1264, %v1494
      %v1541 = vadd.f32 %v1269, %v1499
      %v1542 = vadd.f32 %v1274, %v1504
      %v1543 = vadd.f32 %v1279, %v1509
      %s1544 = scalar_lea.vmem %s1, 4
      %v1545 = vld [vmem:[%s1544] sm:$0xf]
      %v1546 = vsel %vm744, %v582, 0
      %v1548 = vsel %vm744, %v583, 0
      %v1550 = vsel %vm744, %v580, 0
      %v1552 = vsel %vm744, %v581, 0
      %v1554 = vsel %vm744, %v584, 0
      %v1556 = vsel %vm744, %v585, 0
      %v1558 = vsel %vm744, %v586, 0
      %v1560 = vsel %vm744, %v587, 0
      %v1562 = vsel %vm744, %v588, 0
      %v1564 = vsel %vm744, %v589, 0
      %v1566 = vsel %vm744, %v590, 0
      %v1568 = vsel %vm744, %v591, 0
      %v1570 = vsel %vm744, %v592, 0
      %v1572 = vsel %vm744, %v593, 0
      %v1574 = vsel %vm744, %v594, 0
      %v1576 = vsel %vm744, %v595, 0
      %v1578 = vsel %vm744, %v596, 0
      %v1580 = vsel %vm744, %v597, 0
      %v1582 = vsel %vm744, %v598, 0
      %v1584 = vsel %vm744, %v599, 0
      %v1586 = vsel %vm744, %v600, 0
      %v1588 = vsel %vm744, %v601, 0
      %v1590 = vsel %vm744, %v602, 0
      %v1592 = vsel %vm744, %v603, 0
      %v1594 = vsel %vm744, %v604, 0
      %v1596 = vsel %vm744, %v605, 0
      %v1598 = vsel %vm744, %v606, 0
      %v1600 = vsel %vm744, %v607, 0
      %v1602 = vsel %vm744, %v608, 0
      %v1604 = vsel %vm744, %v609, 0
      %v1607 = vsel %vm825, %v1545, 0
      %1609 = vmatprep.subr.mxu0 0.0
      %1610 = vmatpush1.msra.mxu0 %v1607
      %1611 = vmatprep.subr.mxu0 0.0
      %1612 = vmatpush1.msra.mxu0 0.0
      %1613 = vmatprep.subr.mxu0 0.0
      %1614 = vmatpush1.msra.mxu0 0.0
      %1615 = vmatprep.subr.mxu0 0.0
      %1616 = vmatpush1.msra.mxu0 0.0
      %1617 = vmatprep.subr.mxu0 0.0
      %1618 = vmatpush1.msra.mxu0 0.0
      %1619 = vmatprep.subr.mxu0 0.0
      %1620 = vmatpush1.msra.mxu0 0.0
      %1621 = vmatprep.subr.mxu0 0.0
      %1622 = vmatpush1.msra.mxu0 0.0
      %1623 = vmatprep.subr.mxu0 0.0
      %1624 = vmatpush1.msra.mxu0 0.0
      %1625 = vmatprep.subr.mxu0 0.0
      %1626 = vmatpush1.msra.mxu0 0.0
      %1627 = vmatprep.subr.mxu0 0.0
      %1628 = vmatpush1.msra.mxu0 0.0
      %1629 = vmatprep.subr.mxu0 0.0
      %1630 = vmatpush1.msra.mxu0 0.0
      %1631 = vmatprep.subr.mxu0 0.0
      %1632 = vmatpush1.msra.mxu0 0.0
      %1633 = vmatprep.subr.mxu0 0.0
      %1634 = vmatpush1.msra.mxu0 0.0
      %1635 = vmatprep.subr.mxu0 0.0
      %1636 = vmatpush1.msra.mxu0 0.0
      %1637 = vmatprep.subr.mxu0 0.0
      %1638 = vmatpush1.msra.mxu0 0.0
      %1639 = vmatprep.subr.mxu0 0.0
      %1640 = vmatpush1.msra.mxu0 0.0
      %1641 = vmatprep.subr.mxu0 0.0
      %1642 = vmatpush1.msra.mxu0 0.0
      %1643 = vmatprep.subr.mxu0 0.0
      %1644 = vmatpush1.msra.mxu0 0.0
      %1645 = vmatprep.subr.mxu0 0.0
      %1646 = vmatpush1.msra.mxu0 0.0
      %1647 = vmatprep.subr.mxu0 0.0
      %1648 = vmatpush1.msra.mxu0 0.0
      %1649 = vmatprep.subr.mxu0 0.0
      %1650 = vmatpush1.msra.mxu0 0.0
      %1651 = vmatprep.subr.mxu0 0.0
      %1652 = vmatpush1.msra.mxu0 0.0
      %1653 = vmatprep.subr.mxu0 0.0
      %1654 = vmatpush1.msra.mxu0 0.0
      %1655 = vmatprep.subr.mxu0 0.0
      %1656 = vmatpush1.msra.mxu0 0.0
      %1657 = vmatprep.subr.mxu0 0.0
      %1658 = vmatpush1.msra.mxu0 0.0
      %1659 = vmatprep.subr.mxu0 0.0
      %1660 = vmatpush1.msra.mxu0 0.0
      %1661 = vmatprep.subr.mxu0 0.0
      %1662 = vmatpush1.msra.mxu0 0.0
      %1663 = vmatprep.subr.mxu0 0.0
      %1664 = vmatpush1.msra.mxu0 0.0
      %1665 = vmatprep.subr.mxu0 0.0
      %1666 = vmatpush1.msra.mxu0 0.0
      %1667 = vmatprep.subr.mxu0 0.0
      %1668 = vmatpush1.msra.mxu0 0.0
      %1669 = vmatprep.subr.mxu0 0.0
      %1670 = vmatpush1.msra.mxu0 0.0
      %1671 = vmatprep.subr.mxu0 0.0
      %1672 = vmatpush1.msra.mxu0 0.0
      %1673 = vmatprep.mubr.f32.mxu0 0.0
      %1674 = vmatmul.mubr.f32.gmra.mrb[0].mxu0 %v1546
      %v1675 = vpop.f32.mrb[0].mxu0
      %v1676 = vadd.f32 0.0, %v1675
      %v1677 = vpop.f32.mrb[0].mxu0
      %1678 = vmatprep.mubr.f32.mxu0 0.0
      %1679 = vmatmul.mubr.f32.gmra.mrb[0].mxu0 %v1548
      %v1680 = vpop.f32.mrb[0].mxu0
      %v1681 = vadd.f32 0.0, %v1680
      %v1682 = vpop.f32.mrb[0].mxu0
      %1683 = vmatprep.mubr.f32.mxu0 0.0
      %1684 = vmatmul.mubr.f32.gmra.mrb[0].mxu0 %v1550
      %v1685 = vpop.f32.mrb[0].mxu0
      %v1686 = vadd.f32 0.0, %v1685
      %v1687 = vpop.f32.mrb[0].mxu0
      %1688 = vmatprep.mubr.f32.mxu0 0.0
      %1689 = vmatmul.mubr.f32.gmra.mrb[0].mxu0 %v1552
      %v1690 = vpop.f32.mrb[0].mxu0
      %v1691 = vadd.f32 0.0, %v1690
      %v1692 = vpop.f32.mrb[0].mxu0
      %1693 = vmatprep.mubr.f32.mxu0 0.0
      %1694 = vmatmul.mubr.f32.gmra.mrb[0].mxu0 %v1546
      %v1695 = vpop.f32.mrb[0].mxu0
      %v1696 = vadd.f32 0.0, %v1695
      %v1697 = vpop.f32.mrb[0].mxu0
      %1698 = vmatprep.mubr.f32.mxu0 0.0
      %1699 = vmatmul.mubr.f32.gmra.mrb[0].mxu0 %v1548
      %v1700 = vpop.f32.mrb[0].mxu0
      %v1701 = vadd.f32 0.0, %v1700
      %v1702 = vpop.f32.mrb[0].mxu0
      %1703 = vmatprep.mubr.f32.mxu0 0.0
      %1704 = vmatmul.mubr.f32.gmra.mrb[0].mxu0 %v1554
      %v1705 = vpop.f32.mrb[0].mxu0
      %v1706 = vadd.f32 0.0, %v1705
      %v1707 = vpop.f32.mrb[0].mxu0
      %1708 = vmatprep.mubr.f32.mxu0 0.0
      %1709 = vmatmul.mubr.f32.gmra.mrb[0].mxu0 %v1556
      %v1710 = vpop.f32.mrb[0].mxu0
      %v1711 = vadd.f32 0.0, %v1710
      %v1712 = vpop.f32.mrb[0].mxu0
      %1713 = vmatprep.mubr.f32.mxu0 0.0
      %1714 = vmatmul.mubr.f32.gmra.mrb[0].mxu0 %v1558
      %v1715 = vpop.f32.mrb[0].mxu0
      %v1716 = vadd.f32 0.0, %v1715
      %v1717 = vpop.f32.mrb[0].mxu0
      %1718 = vmatprep.mubr.f32.mxu0 0.0
      %1719 = vmatmul.mubr.f32.gmra.mrb[0].mxu0 %v1560
      %v1720 = vpop.f32.mrb[0].mxu0
      %v1721 = vadd.f32 0.0, %v1720
      %v1722 = vpop.f32.mrb[0].mxu0
      %1723 = vmatprep.mubr.f32.mxu0 0.0
      %1724 = vmatmul.mubr.f32.gmra.mrb[0].mxu0 %v1562
      %v1725 = vpop.f32.mrb[0].mxu0
      %v1726 = vadd.f32 0.0, %v1725
      %v1727 = vpop.f32.mrb[0].mxu0
      %1728 = vmatprep.mubr.f32.mxu0 0.0
      %1729 = vmatmul.mubr.f32.gmra.mrb[0].mxu0 %v1564
      %v1730 = vpop.f32.mrb[0].mxu0
      %v1731 = vadd.f32 0.0, %v1730
      %v1732 = vpop.f32.mrb[0].mxu0
      %1733 = vmatprep.mubr.f32.mxu0 0.0
      %1734 = vmatmul.mubr.f32.gmra.mrb[0].mxu0 %v1566
      %v1735 = vpop.f32.mrb[0].mxu0
      %v1736 = vadd.f32 0.0, %v1735
      %v1737 = vpop.f32.mrb[0].mxu0
      %1738 = vmatprep.mubr.f32.mxu0 0.0
      %1739 = vmatmul.mubr.f32.gmra.mrb[0].mxu0 %v1568
      %v1740 = vpop.f32.mrb[0].mxu0
      %v1741 = vadd.f32 0.0, %v1740
      %v1742 = vpop.f32.mrb[0].mxu0
      %1743 = vmatprep.mubr.f32.mxu0 0.0
      %1744 = vmatmul.mubr.f32.gmra.mrb[0].mxu0 %v1570
      %v1745 = vpop.f32.mrb[0].mxu0
      %v1746 = vadd.f32 0.0, %v1745
      %v1747 = vpop.f32.mrb[0].mxu0
      %1748 = vmatprep.mubr.f32.mxu0 0.0
      %1749 = vmatmul.mubr.f32.gmra.mrb[0].mxu0 %v1572
      %v1750 = vpop.f32.mrb[0].mxu0
      %v1751 = vadd.f32 0.0, %v1750
      %v1752 = vpop.f32.mrb[0].mxu0
      %1753 = vmatprep.mubr.f32.mxu0 0.0
      %1754 = vmatmul.mubr.f32.gmra.mrb[0].mxu0 %v1574
      %v1755 = vpop.f32.mrb[0].mxu0
      %v1756 = vadd.f32 0.0, %v1755
      %v1757 = vpop.f32.mrb[0].mxu0
      %1758 = vmatprep.mubr.f32.mxu0 0.0
      %1759 = vmatmul.mubr.f32.gmra.mrb[0].mxu0 %v1576
      %v1760 = vpop.f32.mrb[0].mxu0
      %v1761 = vadd.f32 0.0, %v1760
      %v1762 = vpop.f32.mrb[0].mxu0
      %1763 = vmatprep.mubr.f32.mxu0 0.0
      %1764 = vmatmul.mubr.f32.gmra.mrb[0].mxu0 %v1578
      %v1765 = vpop.f32.mrb[0].mxu0
      %v1766 = vadd.f32 0.0, %v1765
      %v1767 = vpop.f32.mrb[0].mxu0
      %1768 = vmatprep.mubr.f32.mxu0 0.0
      %1769 = vmatmul.mubr.f32.gmra.mrb[0].mxu0 %v1580
      %v1770 = vpop.f32.mrb[0].mxu0
      %v1771 = vadd.f32 0.0, %v1770
      %v1772 = vpop.f32.mrb[0].mxu0
      %1773 = vmatprep.mubr.f32.mxu0 0.0
      %1774 = vmatmul.mubr.f32.gmra.mrb[0].mxu0 %v1582
      %v1775 = vpop.f32.mrb[0].mxu0
      %v1776 = vadd.f32 0.0, %v1775
      %v1777 = vpop.f32.mrb[0].mxu0
      %1778 = vmatprep.mubr.f32.mxu0 0.0
      %1779 = vmatmul.mubr.f32.gmra.mrb[0].mxu0 %v1584
      %v1780 = vpop.f32.mrb[0].mxu0
      %v1781 = vadd.f32 0.0, %v1780
      %v1782 = vpop.f32.mrb[0].mxu0
      %1783 = vmatprep.mubr.f32.mxu0 0.0
      %1784 = vmatmul.mubr.f32.gmra.mrb[0].mxu0 %v1586
      %v1785 = vpop.f32.mrb[0].mxu0
      %v1786 = vadd.f32 0.0, %v1785
      %v1787 = vpop.f32.mrb[0].mxu0
      %1788 = vmatprep.mubr.f32.mxu0 0.0
      %1789 = vmatmul.mubr.f32.gmra.mrb[0].mxu0 %v1588
      %v1790 = vpop.f32.mrb[0].mxu0
      %v1791 = vadd.f32 0.0, %v1790
      %v1792 = vpop.f32.mrb[0].mxu0
      %1793 = vmatprep.mubr.f32.mxu0 0.0
      %1794 = vmatmul.mubr.f32.gmra.mrb[0].mxu0 %v1590
      %v1795 = vpop.f32.mrb[0].mxu0
      %v1796 = vadd.f32 0.0, %v1795
      %v1797 = vpop.f32.mrb[0].mxu0
      %1798 = vmatprep.mubr.f32.mxu0 0.0
      %1799 = vmatmul.mubr.f32.gmra.mrb[0].mxu0 %v1592
      %v1800 = vpop.f32.mrb[0].mxu0
      %v1801 = vadd.f32 0.0, %v1800
      %v1802 = vpop.f32.mrb[0].mxu0
      %1803 = vmatprep.mubr.f32.mxu0 0.0
      %1804 = vmatmul.mubr.f32.gmra.mrb[0].mxu0 %v1594
      %v1805 = vpop.f32.mrb[0].mxu0
      %v1806 = vadd.f32 0.0, %v1805
      %v1807 = vpop.f32.mrb[0].mxu0
      %1808 = vmatprep.mubr.f32.mxu0 0.0
      %1809 = vmatmul.mubr.f32.gmra.mrb[0].mxu0 %v1596
      %v1810 = vpop.f32.mrb[0].mxu0
      %v1811 = vadd.f32 0.0, %v1810
      %v1812 = vpop.f32.mrb[0].mxu0
      %1813 = vmatprep.mubr.f32.mxu0 0.0
      %1814 = vmatmul.mubr.f32.gmra.mrb[0].mxu0 %v1598
      %v1815 = vpop.f32.mrb[0].mxu0
      %v1816 = vadd.f32 0.0, %v1815
      %v1817 = vpop.f32.mrb[0].mxu0
      %1818 = vmatprep.mubr.f32.mxu0 0.0
      %1819 = vmatmul.mubr.f32.gmra.mrb[0].mxu0 %v1600
      %v1820 = vpop.f32.mrb[0].mxu0
      %v1821 = vadd.f32 0.0, %v1820
      %v1822 = vpop.f32.mrb[0].mxu0
      %1823 = vmatprep.mubr.f32.mxu0 0.0
      %1824 = vmatmul.mubr.f32.gmra.mrb[0].mxu0 %v1602
      %v1825 = vpop.f32.mrb[0].mxu0
      %v1826 = vadd.f32 0.0, %v1825
      %v1827 = vpop.f32.mrb[0].mxu0
      %1828 = vmatprep.mubr.f32.mxu0 0.0
      %1829 = vmatmul.mubr.f32.gmra.mrb[0].mxu0 %v1604
      %v1830 = vpop.f32.mrb[0].mxu0
      %v1831 = vadd.f32 0.0, %v1830
      %v1832 = vpop.f32.mrb[0].mxu0
      %1833 = vdwg.mxu0
      %v1834 = vadd.f32 %v1512, %v1676
      %v1835 = vadd.f32 %v1513, %v1681
      %v1836 = vadd.f32 %v1514, %v1686
      %v1837 = vadd.f32 %v1515, %v1691
      %v1838 = vadd.f32 %v1516, %v1696
      %v1839 = vadd.f32 %v1517, %v1701
      %v1840 = vadd.f32 %v1518, %v1706
      %v1841 = vadd.f32 %v1519, %v1711
      %v1842 = vadd.f32 %v1520, %v1716
      %v1843 = vadd.f32 %v1521, %v1721
      %v1844 = vadd.f32 %v1522, %v1726
      %v1845 = vadd.f32 %v1523, %v1731
      %v1846 = vadd.f32 %v1524, %v1736
      %v1847 = vadd.f32 %v1525, %v1741
      %v1848 = vadd.f32 %v1526, %v1746
      %v1849 = vadd.f32 %v1527, %v1751
      %v1850 = vadd.f32 %v1528, %v1756
      %v1851 = vadd.f32 %v1529, %v1761
      %v1852 = vadd.f32 %v1530, %v1766
      %v1853 = vadd.f32 %v1531, %v1771
      %v1854 = vadd.f32 %v1532, %v1776
      %v1855 = vadd.f32 %v1533, %v1781
      %v1856 = vadd.f32 %v1534, %v1786
      %v1857 = vadd.f32 %v1535, %v1791
      %v1858 = vadd.f32 %v1536, %v1796
      %v1859 = vadd.f32 %v1537, %v1801
      %v1860 = vadd.f32 %v1538, %v1806
      %v1861 = vadd.f32 %v1539, %v1811
      %v1862 = vadd.f32 %v1540, %v1816
      %v1863 = vadd.f32 %v1541, %v1821
      %v1864 = vadd.f32 %v1542, %v1826
      %v1865 = vadd.f32 %v1543, %v1831
      %s1866 = scalar_lea.vmem %s1, 16
      %v1867 = vld [vmem:[%s1866] sm:$0xf]
      %v1868 = vsel %vm744, %v610, 0
      %v1870 = vsel %vm744, %v611, 0
      %v1873 = vsel %vm825, %v1867, 0
      %1875 = vmatprep.subr.mxu0 0.0
      %1876 = vmatpush1.msra.mxu0 %v1873
      %1877 = vmatprep.subr.mxu0 0.0
      %1878 = vmatpush1.msra.mxu0 0.0
      %1879 = vmatprep.subr.mxu0 0.0
      %1880 = vmatpush1.msra.mxu0 0.0
      %1881 = vmatprep.subr.mxu0 0.0
      %1882 = vmatpush1.msra.mxu0 0.0
      %1883 = vmatprep.subr.mxu0 0.0
      %1884 = vmatpush1.msra.mxu0 0.0
      %1885 = vmatprep.subr.mxu0 0.0
      %1886 = vmatpush1.msra.mxu0 0.0
      %1887 = vmatprep.subr.mxu0 0.0
      %1888 = vmatpush1.msra.mxu0 0.0
      %1889 = vmatprep.subr.mxu0 0.0
      %1890 = vmatpush1.msra.mxu0 0.0
      %1891 = vmatprep.subr.mxu0 0.0
      %1892 = vmatpush1.msra.mxu0 0.0
      %1893 = vmatprep.subr.mxu0 0.0
      %1894 = vmatpush1.msra.mxu0 0.0
      %1895 = vmatprep.subr.mxu0 0.0
      %1896 = vmatpush1.msra.mxu0 0.0
      %1897 = vmatprep.subr.mxu0 0.0
      %1898 = vmatpush1.msra.mxu0 0.0
      %1899 = vmatprep.subr.mxu0 0.0
      %1900 = vmatpush1.msra.mxu0 0.0
      %1901 = vmatprep.subr.mxu0 0.0
      %1902 = vmatpush1.msra.mxu0 0.0
      %1903 = vmatprep.subr.mxu0 0.0
      %1904 = vmatpush1.msra.mxu0 0.0
      %1905 = vmatprep.subr.mxu0 0.0
      %1906 = vmatpush1.msra.mxu0 0.0
      %1907 = vmatprep.subr.mxu0 0.0
      %1908 = vmatpush1.msra.mxu0 0.0
      %1909 = vmatprep.subr.mxu0 0.0
      %1910 = vmatpush1.msra.mxu0 0.0
      %1911 = vmatprep.subr.mxu0 0.0
      %1912 = vmatpush1.msra.mxu0 0.0
      %1913 = vmatprep.subr.mxu0 0.0
      %1914 = vmatpush1.msra.mxu0 0.0
      %1915 = vmatprep.subr.mxu0 0.0
      %1916 = vmatpush1.msra.mxu0 0.0
      %1917 = vmatprep.subr.mxu0 0.0
      %1918 = vmatpush1.msra.mxu0 0.0
      %1919 = vmatprep.subr.mxu0 0.0
      %1920 = vmatpush1.msra.mxu0 0.0
      %1921 = vmatprep.subr.mxu0 0.0
      %1922 = vmatpush1.msra.mxu0 0.0
      %1923 = vmatprep.subr.mxu0 0.0
      %1924 = vmatpush1.msra.mxu0 0.0
      %1925 = vmatprep.subr.mxu0 0.0
      %1926 = vmatpush1.msra.mxu0 0.0
      %1927 = vmatprep.subr.mxu0 0.0
      %1928 = vmatpush1.msra.mxu0 0.0
      %1929 = vmatprep.subr.mxu0 0.0
      %1930 = vmatpush1.msra.mxu0 0.0
      %1931 = vmatprep.subr.mxu0 0.0
      %1932 = vmatpush1.msra.mxu0 0.0
      %1933 = vmatprep.subr.mxu0 0.0
      %1934 = vmatpush1.msra.mxu0 0.0
      %1935 = vmatprep.subr.mxu0 0.0
      %1936 = vmatpush1.msra.mxu0 0.0
      %1937 = vmatprep.subr.mxu0 0.0
      %1938 = vmatpush1.msra.mxu0 0.0
      %1939 = vmatprep.mubr.f32.mxu0 0.0
      %1940 = vmatmul.mubr.f32.gmra.mrb[0].mxu0 %v1550
      %v1941 = vpop.f32.mrb[0].mxu0
      %v1942 = vadd.f32 0.0, %v1941
      %v1943 = vpop.f32.mrb[0].mxu0
      %1944 = vmatprep.mubr.f32.mxu0 0.0
      %1945 = vmatmul.mubr.f32.gmra.mrb[0].mxu0 %v1552
      %v1946 = vpop.f32.mrb[0].mxu0
      %v1947 = vadd.f32 0.0, %v1946
      %v1948 = vpop.f32.mrb[0].mxu0
      %1949 = vmatprep.mubr.f32.mxu0 0.0
      %1950 = vmatmul.mubr.f32.gmra.mrb[0].mxu0 %v1546
      %v1951 = vpop.f32.mrb[0].mxu0
      %v1952 = vadd.f32 0.0, %v1951
      %v1953 = vpop.f32.mrb[0].mxu0
      %1954 = vmatprep.mubr.f32.mxu0 0.0
      %1955 = vmatmul.mubr.f32.gmra.mrb[0].mxu0 %v1548
      %v1956 = vpop.f32.mrb[0].mxu0
      %v1957 = vadd.f32 0.0, %v1956
      %v1958 = vpop.f32.mrb[0].mxu0
      %1959 = vmatprep.mubr.f32.mxu0 0.0
      %1960 = vmatmul.mubr.f32.gmra.mrb[0].mxu0 %v1554
      %v1961 = vpop.f32.mrb[0].mxu0
      %v1962 = vadd.f32 0.0, %v1961
      %v1963 = vpop.f32.mrb[0].mxu0
      %1964 = vmatprep.mubr.f32.mxu0 0.0
      %1965 = vmatmul.mubr.f32.gmra.mrb[0].mxu0 %v1556
      %v1966 = vpop.f32.mrb[0].mxu0
      %v1967 = vadd.f32 0.0, %v1966
      %v1968 = vpop.f32.mrb[0].mxu0
      %1969 = vmatprep.mubr.f32.mxu0 0.0
      %1970 = vmatmul.mubr.f32.gmra.mrb[0].mxu0 %v1558
      %v1971 = vpop.f32.mrb[0].mxu0
      %v1972 = vadd.f32 0.0, %v1971
      %v1973 = vpop.f32.mrb[0].mxu0
      %1974 = vmatprep.mubr.f32.mxu0 0.0
      %1975 = vmatmul.mubr.f32.gmra.mrb[0].mxu0 %v1560
      %v1976 = vpop.f32.mrb[0].mxu0
      %v1977 = vadd.f32 0.0, %v1976
      %v1978 = vpop.f32.mrb[0].mxu0
      %1979 = vmatprep.mubr.f32.mxu0 0.0
      %1980 = vmatmul.mubr.f32.gmra.mrb[0].mxu0 %v1562
      %v1981 = vpop.f32.mrb[0].mxu0
      %v1982 = vadd.f32 0.0, %v1981
      %v1983 = vpop.f32.mrb[0].mxu0
      %1984 = vmatprep.mubr.f32.mxu0 0.0
      %1985 = vmatmul.mubr.f32.gmra.mrb[0].mxu0 %v1564
      %v1986 = vpop.f32.mrb[0].mxu0
      %v1987 = vadd.f32 0.0, %v1986
      %v1988 = vpop.f32.mrb[0].mxu0
      %1989 = vmatprep.mubr.f32.mxu0 0.0
      %1990 = vmatmul.mubr.f32.gmra.mrb[0].mxu0 %v1566
      %v1991 = vpop.f32.mrb[0].mxu0
      %v1992 = vadd.f32 0.0, %v1991
      %v1993 = vpop.f32.mrb[0].mxu0
      %1994 = vmatprep.mubr.f32.mxu0 0.0
      %1995 = vmatmul.mubr.f32.gmra.mrb[0].mxu0 %v1568
      %v1996 = vpop.f32.mrb[0].mxu0
      %v1997 = vadd.f32 0.0, %v1996
      %v1998 = vpop.f32.mrb[0].mxu0
      %1999 = vmatprep.mubr.f32.mxu0 0.0
      %2000 = vmatmul.mubr.f32.gmra.mrb[0].mxu0 %v1570
      %v2001 = vpop.f32.mrb[0].mxu0
      %v2002 = vadd.f32 0.0, %v2001
      %v2003 = vpop.f32.mrb[0].mxu0
      %2004 = vmatprep.mubr.f32.mxu0 0.0
      %2005 = vmatmul.mubr.f32.gmra.mrb[0].mxu0 %v1572
      %v2006 = vpop.f32.mrb[0].mxu0
      %v2007 = vadd.f32 0.0, %v2006
      %v2008 = vpop.f32.mrb[0].mxu0
      %2009 = vmatprep.mubr.f32.mxu0 0.0
      %2010 = vmatmul.mubr.f32.gmra.mrb[0].mxu0 %v1574
      %v2011 = vpop.f32.mrb[0].mxu0
      %v2012 = vadd.f32 0.0, %v2011
      %v2013 = vpop.f32.mrb[0].mxu0
      %2014 = vmatprep.mubr.f32.mxu0 0.0
      %2015 = vmatmul.mubr.f32.gmra.mrb[0].mxu0 %v1576
      %v2016 = vpop.f32.mrb[0].mxu0
      %v2017 = vadd.f32 0.0, %v2016
      %v2018 = vpop.f32.mrb[0].mxu0
      %2019 = vmatprep.mubr.f32.mxu0 0.0
      %2020 = vmatmul.mubr.f32.gmra.mrb[0].mxu0 %v1578
      %v2021 = vpop.f32.mrb[0].mxu0
      %v2022 = vadd.f32 0.0, %v2021
      %v2023 = vpop.f32.mrb[0].mxu0
      %2024 = vmatprep.mubr.f32.mxu0 0.0
      %2025 = vmatmul.mubr.f32.gmra.mrb[0].mxu0 %v1580
      %v2026 = vpop.f32.mrb[0].mxu0
      %v2027 = vadd.f32 0.0, %v2026
      %v2028 = vpop.f32.mrb[0].mxu0
      %2029 = vmatprep.mubr.f32.mxu0 0.0
      %2030 = vmatmul.mubr.f32.gmra.mrb[0].mxu0 %v1582
      %v2031 = vpop.f32.mrb[0].mxu0
      %v2032 = vadd.f32 0.0, %v2031
      %v2033 = vpop.f32.mrb[0].mxu0
      %2034 = vmatprep.mubr.f32.mxu0 0.0
      %2035 = vmatmul.mubr.f32.gmra.mrb[0].mxu0 %v1584
      %v2036 = vpop.f32.mrb[0].mxu0
      %v2037 = vadd.f32 0.0, %v2036
      %v2038 = vpop.f32.mrb[0].mxu0
      %2039 = vmatprep.mubr.f32.mxu0 0.0
      %2040 = vmatmul.mubr.f32.gmra.mrb[0].mxu0 %v1586
      %v2041 = vpop.f32.mrb[0].mxu0
      %v2042 = vadd.f32 0.0, %v2041
      %v2043 = vpop.f32.mrb[0].mxu0
      %2044 = vmatprep.mubr.f32.mxu0 0.0
      %2045 = vmatmul.mubr.f32.gmra.mrb[0].mxu0 %v1588
      %v2046 = vpop.f32.mrb[0].mxu0
      %v2047 = vadd.f32 0.0, %v2046
      %v2048 = vpop.f32.mrb[0].mxu0
      %2049 = vmatprep.mubr.f32.mxu0 0.0
      %2050 = vmatmul.mubr.f32.gmra.mrb[0].mxu0 %v1590
      %v2051 = vpop.f32.mrb[0].mxu0
      %v2052 = vadd.f32 0.0, %v2051
      %v2053 = vpop.f32.mrb[0].mxu0
      %2054 = vmatprep.mubr.f32.mxu0 0.0
      %2055 = vmatmul.mubr.f32.gmra.mrb[0].mxu0 %v1592
      %v2056 = vpop.f32.mrb[0].mxu0
      %v2057 = vadd.f32 0.0, %v2056
      %v2058 = vpop.f32.mrb[0].mxu0
      %2059 = vmatprep.mubr.f32.mxu0 0.0
      %2060 = vmatmul.mubr.f32.gmra.mrb[0].mxu0 %v1594
      %v2061 = vpop.f32.mrb[0].mxu0
      %v2062 = vadd.f32 0.0, %v2061
      %v2063 = vpop.f32.mrb[0].mxu0
      %2064 = vmatprep.mubr.f32.mxu0 0.0
      %2065 = vmatmul.mubr.f32.gmra.mrb[0].mxu0 %v1596
      %v2066 = vpop.f32.mrb[0].mxu0
      %v2067 = vadd.f32 0.0, %v2066
      %v2068 = vpop.f32.mrb[0].mxu0
      %2069 = vmatprep.mubr.f32.mxu0 0.0
      %2070 = vmatmul.mubr.f32.gmra.mrb[0].mxu0 %v1598
      %v2071 = vpop.f32.mrb[0].mxu0
      %v2072 = vadd.f32 0.0, %v2071
      %v2073 = vpop.f32.mrb[0].mxu0
      %2074 = vmatprep.mubr.f32.mxu0 0.0
      %2075 = vmatmul.mubr.f32.gmra.mrb[0].mxu0 %v1600
      %v2076 = vpop.f32.mrb[0].mxu0
      %v2077 = vadd.f32 0.0, %v2076
      %v2078 = vpop.f32.mrb[0].mxu0
      %2079 = vmatprep.mubr.f32.mxu0 0.0
      %2080 = vmatmul.mubr.f32.gmra.mrb[0].mxu0 %v1602
      %v2081 = vpop.f32.mrb[0].mxu0
      %v2082 = vadd.f32 0.0, %v2081
      %v2083 = vpop.f32.mrb[0].mxu0
      %2084 = vmatprep.mubr.f32.mxu0 0.0
      %2085 = vmatmul.mubr.f32.gmra.mrb[0].mxu0 %v1604
      %v2086 = vpop.f32.mrb[0].mxu0
      %v2087 = vadd.f32 0.0, %v2086
      %v2088 = vpop.f32.mrb[0].mxu0
      %2089 = vmatprep.mubr.f32.mxu0 0.0
      %2090 = vmatmul.mubr.f32.gmra.mrb[0].mxu0 %v1868
      %v2091 = vpop.f32.mrb[0].mxu0
      %v2092 = vadd.f32 0.0, %v2091
      %v2093 = vpop.f32.mrb[0].mxu0
      %2094 = vmatprep.mubr.f32.mxu0 0.0
      %2095 = vmatmul.mubr.f32.gmra.mrb[0].mxu0 %v1870
      %v2096 = vpop.f32.mrb[0].mxu0
      %v2097 = vadd.f32 0.0, %v2096
      %v2098 = vpop.f32.mrb[0].mxu0
      %2099 = vdwg.mxu0
      %v2100 = vadd.f32 %v1834, %v1942
      %v2101 = vadd.f32 %v1835, %v1947
      %v2102 = vadd.f32 %v1836, %v1952
      %v2103 = vadd.f32 %v1837, %v1957
      %v2104 = vadd.f32 %v1838, %v1962
      %v2105 = vadd.f32 %v1839, %v1967
      %v2106 = vadd.f32 %v1840, %v1972
      %v2107 = vadd.f32 %v1841, %v1977
      %v2108 = vadd.f32 %v1842, %v1982
      %v2109 = vadd.f32 %v1843, %v1987
      %v2110 = vadd.f32 %v1844, %v1992
      %v2111 = vadd.f32 %v1845, %v1997
      %v2112 = vadd.f32 %v1846, %v2002
      %v2113 = vadd.f32 %v1847, %v2007
      %v2114 = vadd.f32 %v1848, %v2012
      %v2115 = vadd.f32 %v1849, %v2017
      %v2116 = vadd.f32 %v1850, %v2022
      %v2117 = vadd.f32 %v1851, %v2027
      %v2118 = vadd.f32 %v1852, %v2032
      %v2119 = vadd.f32 %v1853, %v2037
      %v2120 = vadd.f32 %v1854, %v2042
      %v2121 = vadd.f32 %v1855, %v2047
      %v2122 = vadd.f32 %v1856, %v2052
      %v2123 = vadd.f32 %v1857, %v2057
      %v2124 = vadd.f32 %v1858, %v2062
      %v2125 = vadd.f32 %v1859, %v2067
      %v2126 = vadd.f32 %v1860, %v2072
      %v2127 = vadd.f32 %v1861, %v2077
      %v2128 = vadd.f32 %v1862, %v2082
      %v2129 = vadd.f32 %v1863, %v2087
      %v2130 = vadd.f32 %v1864, %v2092
      %v2131 = vadd.f32 %v1865, %v2097
      %s2132 = scalar_lea.vmem %s1, 28
      %v2133 = vld [vmem:[%s2132] sm:$0xf]
      %v2135 = vsel %vm825, %v2133, 0
      %2137 = vmatprep.subr.mxu0 0.0
      %2138 = vmatpush1.msra.mxu0 %v2135
      %2139 = vmatprep.subr.mxu0 0.0
      %2140 = vmatpush1.msra.mxu0 0.0
      %2141 = vmatprep.subr.mxu0 0.0
      %2142 = vmatpush1.msra.mxu0 0.0
      %2143 = vmatprep.subr.mxu0 0.0
      %2144 = vmatpush1.msra.mxu0 0.0
      %2145 = vmatprep.subr.mxu0 0.0
      %2146 = vmatpush1.msra.mxu0 0.0
      %2147 = vmatprep.subr.mxu0 0.0
      %2148 = vmatpush1.msra.mxu0 0.0
      %2149 = vmatprep.subr.mxu0 0.0
      %2150 = vmatpush1.msra.mxu0 0.0
      %2151 = vmatprep.subr.mxu0 0.0
      %2152 = vmatpush1.msra.mxu0 0.0
      %2153 = vmatprep.subr.mxu0 0.0
      %2154 = vmatpush1.msra.mxu0 0.0
      %2155 = vmatprep.subr.mxu0 0.0
      %2156 = vmatpush1.msra.mxu0 0.0
      %2157 = vmatprep.subr.mxu0 0.0
      %2158 = vmatpush1.msra.mxu0 0.0
      %2159 = vmatprep.subr.mxu0 0.0
      %2160 = vmatpush1.msra.mxu0 0.0
      %2161 = vmatprep.subr.mxu0 0.0
      %2162 = vmatpush1.msra.mxu0 0.0
      %2163 = vmatprep.subr.mxu0 0.0
      %2164 = vmatpush1.msra.mxu0 0.0
      %2165 = vmatprep.subr.mxu0 0.0
      %2166 = vmatpush1.msra.mxu0 0.0
      %2167 = vmatprep.subr.mxu0 0.0
      %2168 = vmatpush1.msra.mxu0 0.0
      %2169 = vmatprep.subr.mxu0 0.0
      %2170 = vmatpush1.msra.mxu0 0.0
      %2171 = vmatprep.subr.mxu0 0.0
      %2172 = vmatpush1.msra.mxu0 0.0
      %2173 = vmatprep.subr.mxu0 0.0
      %2174 = vmatpush1.msra.mxu0 0.0
      %2175 = vmatprep.subr.mxu0 0.0
      %2176 = vmatpush1.msra.mxu0 0.0
      %2177 = vmatprep.subr.mxu0 0.0
      %2178 = vmatpush1.msra.mxu0 0.0
      %2179 = vmatprep.subr.mxu0 0.0
      %2180 = vmatpush1.msra.mxu0 0.0
      %2181 = vmatprep.subr.mxu0 0.0
      %2182 = vmatpush1.msra.mxu0 0.0
      %2183 = vmatprep.subr.mxu0 0.0
      %2184 = vmatpush1.msra.mxu0 0.0
      %2185 = vmatprep.subr.mxu0 0.0
      %2186 = vmatpush1.msra.mxu0 0.0
      %2187 = vmatprep.subr.mxu0 0.0
      %2188 = vmatpush1.msra.mxu0 0.0
      %2189 = vmatprep.subr.mxu0 0.0
      %2190 = vmatpush1.msra.mxu0 0.0
      %2191 = vmatprep.subr.mxu0 0.0
      %2192 = vmatpush1.msra.mxu0 0.0
      %2193 = vmatprep.subr.mxu0 0.0
      %2194 = vmatpush1.msra.mxu0 0.0
      %2195 = vmatprep.subr.mxu0 0.0
      %2196 = vmatpush1.msra.mxu0 0.0
      %2197 = vmatprep.subr.mxu0 0.0
      %2198 = vmatpush1.msra.mxu0 0.0
      %2199 = vmatprep.subr.mxu0 0.0
      %2200 = vmatpush1.msra.mxu0 0.0
      %2201 = vmatprep.mubr.f32.mxu0 0.0
      %2202 = vmatmul.mubr.f32.gmra.mrb[0].mxu0 %v1546
      %v2203 = vpop.f32.mrb[0].mxu0
      %v2204 = vadd.f32 0.0, %v2203
      %v2205 = vpop.f32.mrb[0].mxu0
      %2206 = vmatprep.mubr.f32.mxu0 0.0
      %2207 = vmatmul.mubr.f32.gmra.mrb[0].mxu0 %v1548
      %v2208 = vpop.f32.mrb[0].mxu0
      %v2209 = vadd.f32 0.0, %v2208
      %v2210 = vpop.f32.mrb[0].mxu0
      %2211 = vmatprep.mubr.f32.mxu0 0.0
      %2212 = vmatmul.mubr.f32.gmra.mrb[0].mxu0 %v1554
      %v2213 = vpop.f32.mrb[0].mxu0
      %v2214 = vadd.f32 0.0, %v2213
      %v2215 = vpop.f32.mrb[0].mxu0
      %2216 = vmatprep.mubr.f32.mxu0 0.0
      %2217 = vmatmul.mubr.f32.gmra.mrb[0].mxu0 %v1556
      %v2218 = vpop.f32.mrb[0].mxu0
      %v2219 = vadd.f32 0.0, %v2218
      %v2220 = vpop.f32.mrb[0].mxu0
      %2221 = vmatprep.mubr.f32.mxu0 0.0
      %2222 = vmatmul.mubr.f32.gmra.mrb[0].mxu0 %v1558
      %v2223 = vpop.f32.mrb[0].mxu0
      %v2224 = vadd.f32 0.0, %v2223
      %v2225 = vpop.f32.mrb[0].mxu0
      %2226 = vmatprep.mubr.f32.mxu0 0.0
      %2227 = vmatmul.mubr.f32.gmra.mrb[0].mxu0 %v1560
      %v2228 = vpop.f32.mrb[0].mxu0
      %v2229 = vadd.f32 0.0, %v2228
      %v2230 = vpop.f32.mrb[0].mxu0
      %2231 = vmatprep.mubr.f32.mxu0 0.0
      %2232 = vmatmul.mubr.f32.gmra.mrb[0].mxu0 %v1562
      %v2233 = vpop.f32.mrb[0].mxu0
      %v2234 = vadd.f32 0.0, %v2233
      %v2235 = vpop.f32.mrb[0].mxu0
      %2236 = vmatprep.mubr.f32.mxu0 0.0
      %2237 = vmatmul.mubr.f32.gmra.mrb[0].mxu0 %v1564
      %v2238 = vpop.f32.mrb[0].mxu0
      %v2239 = vadd.f32 0.0, %v2238
      %v2240 = vpop.f32.mrb[0].mxu0
      %2241 = vmatprep.mubr.f32.mxu0 0.0
      %2242 = vmatmul.mubr.f32.gmra.mrb[0].mxu0 %v1566
      %v2243 = vpop.f32.mrb[0].mxu0
      %v2244 = vadd.f32 0.0, %v2243
      %v2245 = vpop.f32.mrb[0].mxu0
      %2246 = vmatprep.mubr.f32.mxu0 0.0
      %2247 = vmatmul.mubr.f32.gmra.mrb[0].mxu0 %v1568
      %v2248 = vpop.f32.mrb[0].mxu0
      %v2249 = vadd.f32 0.0, %v2248
      %v2250 = vpop.f32.mrb[0].mxu0
      %2251 = vmatprep.mubr.f32.mxu0 0.0
      %2252 = vmatmul.mubr.f32.gmra.mrb[0].mxu0 %v1570
      %v2253 = vpop.f32.mrb[0].mxu0
      %v2254 = vadd.f32 0.0, %v2253
      %v2255 = vpop.f32.mrb[0].mxu0
      %2256 = vmatprep.mubr.f32.mxu0 0.0
      %2257 = vmatmul.mubr.f32.gmra.mrb[0].mxu0 %v1572
      %v2258 = vpop.f32.mrb[0].mxu0
      %v2259 = vadd.f32 0.0, %v2258
      %v2260 = vpop.f32.mrb[0].mxu0
      %2261 = vmatprep.mubr.f32.mxu0 0.0
      %2262 = vmatmul.mubr.f32.gmra.mrb[0].mxu0 %v1574
      %v2263 = vpop.f32.mrb[0].mxu0
      %v2264 = vadd.f32 0.0, %v2263
      %v2265 = vpop.f32.mrb[0].mxu0
      %2266 = vmatprep.mubr.f32.mxu0 0.0
      %2267 = vmatmul.mubr.f32.gmra.mrb[0].mxu0 %v1576
      %v2268 = vpop.f32.mrb[0].mxu0
      %v2269 = vadd.f32 0.0, %v2268
      %v2270 = vpop.f32.mrb[0].mxu0
      %2271 = vmatprep.mubr.f32.mxu0 0.0
      %2272 = vmatmul.mubr.f32.gmra.mrb[0].mxu0 %v1578
      %v2273 = vpop.f32.mrb[0].mxu0
      %v2274 = vadd.f32 0.0, %v2273
      %v2275 = vpop.f32.mrb[0].mxu0
      %2276 = vmatprep.mubr.f32.mxu0 0.0
      %2277 = vmatmul.mubr.f32.gmra.mrb[0].mxu0 %v1580
      %v2278 = vpop.f32.mrb[0].mxu0
      %v2279 = vadd.f32 0.0, %v2278
      %v2280 = vpop.f32.mrb[0].mxu0
      %2281 = vmatprep.mubr.f32.mxu0 0.0
      %2282 = vmatmul.mubr.f32.gmra.mrb[0].mxu0 %v1582
      %v2283 = vpop.f32.mrb[0].mxu0
      %v2284 = vadd.f32 0.0, %v2283
      %v2285 = vpop.f32.mrb[0].mxu0
      %2286 = vmatprep.mubr.f32.mxu0 0.0
      %2287 = vmatmul.mubr.f32.gmra.mrb[0].mxu0 %v1584
      %v2288 = vpop.f32.mrb[0].mxu0
      %v2289 = vadd.f32 0.0, %v2288
      %v2290 = vpop.f32.mrb[0].mxu0
      %2291 = vmatprep.mubr.f32.mxu0 0.0
      %2292 = vmatmul.mubr.f32.gmra.mrb[0].mxu0 %v1586
      %v2293 = vpop.f32.mrb[0].mxu0
      %v2294 = vadd.f32 0.0, %v2293
      %v2295 = vpop.f32.mrb[0].mxu0
      %2296 = vmatprep.mubr.f32.mxu0 0.0
      %2297 = vmatmul.mubr.f32.gmra.mrb[0].mxu0 %v1588
      %v2298 = vpop.f32.mrb[0].mxu0
      %v2299 = vadd.f32 0.0, %v2298
      %v2300 = vpop.f32.mrb[0].mxu0
      %2301 = vmatprep.mubr.f32.mxu0 0.0
      %2302 = vmatmul.mubr.f32.gmra.mrb[0].mxu0 %v1590
      %v2303 = vpop.f32.mrb[0].mxu0
      %v2304 = vadd.f32 0.0, %v2303
      %v2305 = vpop.f32.mrb[0].mxu0
      %2306 = vmatprep.mubr.f32.mxu0 0.0
      %2307 = vmatmul.mubr.f32.gmra.mrb[0].mxu0 %v1592
      %v2308 = vpop.f32.mrb[0].mxu0
      %v2309 = vadd.f32 0.0, %v2308
      %v2310 = vpop.f32.mrb[0].mxu0
      %2311 = vmatprep.mubr.f32.mxu0 0.0
      %2312 = vmatmul.mubr.f32.gmra.mrb[0].mxu0 %v1594
      %v2313 = vpop.f32.mrb[0].mxu0
      %v2314 = vadd.f32 0.0, %v2313
      %v2315 = vpop.f32.mrb[0].mxu0
      %2316 = vmatprep.mubr.f32.mxu0 0.0
      %2317 = vmatmul.mubr.f32.gmra.mrb[0].mxu0 %v1596
      %v2318 = vpop.f32.mrb[0].mxu0
      %v2319 = vadd.f32 0.0, %v2318
      %v2320 = vpop.f32.mrb[0].mxu0
      %2321 = vmatprep.mubr.f32.mxu0 0.0
      %2322 = vmatmul.mubr.f32.gmra.mrb[0].mxu0 %v1598
      %v2323 = vpop.f32.mrb[0].mxu0
      %v2324 = vadd.f32 0.0, %v2323
      %v2325 = vpop.f32.mrb[0].mxu0
      %2326 = vmatprep.mubr.f32.mxu0 0.0
      %2327 = vmatmul.mubr.f32.gmra.mrb[0].mxu0 %v1600
      %v2328 = vpop.f32.mrb[0].mxu0
      %v2329 = vadd.f32 0.0, %v2328
      %v2330 = vpop.f32.mrb[0].mxu0
      %2331 = vmatprep.mubr.f32.mxu0 0.0
      %2332 = vmatmul.mubr.f32.gmra.mrb[0].mxu0 %v1602
      %v2333 = vpop.f32.mrb[0].mxu0
      %v2334 = vadd.f32 0.0, %v2333
      %v2335 = vpop.f32.mrb[0].mxu0
      %2336 = vmatprep.mubr.f32.mxu0 0.0
      %2337 = vmatmul.mubr.f32.gmra.mrb[0].mxu0 %v1604
      %v2338 = vpop.f32.mrb[0].mxu0
      %v2339 = vadd.f32 0.0, %v2338
      %v2340 = vpop.f32.mrb[0].mxu0
      %2341 = vmatprep.mubr.f32.mxu0 0.0
      %2342 = vmatmul.mubr.f32.gmra.mrb[0].mxu0 %v1868
      %v2343 = vpop.f32.mrb[0].mxu0
      %v2344 = vadd.f32 0.0, %v2343
      %v2345 = vpop.f32.mrb[0].mxu0
      %2346 = vmatprep.mubr.f32.mxu0 0.0
      %2347 = vmatmul.mubr.f32.gmra.mrb[0].mxu0 %v1870
      %v2348 = vpop.f32.mrb[0].mxu0
      %v2349 = vadd.f32 0.0, %v2348
      %v2350 = vpop.f32.mrb[0].mxu0
      %2351 = vmatprep.mubr.f32.mxu0 0.0
      %2352 = vmatmul.mubr.f32.gmra.mrb[0].mxu0 %v1602
      %v2353 = vpop.f32.mrb[0].mxu0
      %v2354 = vadd.f32 0.0, %v2353
      %v2355 = vpop.f32.mrb[0].mxu0
      %2356 = vmatprep.mubr.f32.mxu0 0.0
      %2357 = vmatmul.mubr.f32.gmra.mrb[0].mxu0 %v1604
      %v2358 = vpop.f32.mrb[0].mxu0
      %v2359 = vadd.f32 0.0, %v2358
      %v2360 = vpop.f32.mrb[0].mxu0
      %2361 = vdwg.mxu0
      %v2362 = vadd.f32 %v2100, %v2204
      %v2363 = vadd.f32 %v2101, %v2209
      %v2364 = vadd.f32 %v2102, %v2214
      %v2365 = vadd.f32 %v2103, %v2219
      %v2366 = vadd.f32 %v2104, %v2224
      %v2367 = vadd.f32 %v2105, %v2229
      %v2368 = vadd.f32 %v2106, %v2234
      %v2369 = vadd.f32 %v2107, %v2239
      %v2370 = vadd.f32 %v2108, %v2244
      %v2371 = vadd.f32 %v2109, %v2249
      %v2372 = vadd.f32 %v2110, %v2254
      %v2373 = vadd.f32 %v2111, %v2259
      %v2374 = vadd.f32 %v2112, %v2264
      %v2375 = vadd.f32 %v2113, %v2269
      %v2376 = vadd.f32 %v2114, %v2274
      %v2377 = vadd.f32 %v2115, %v2279
      %v2378 = vadd.f32 %v2116, %v2284
      %v2379 = vadd.f32 %v2117, %v2289
      %v2380 = vadd.f32 %v2118, %v2294
      %v2381 = vadd.f32 %v2119, %v2299
      %v2382 = vadd.f32 %v2120, %v2304
      %v2383 = vadd.f32 %v2121, %v2309
      %v2384 = vadd.f32 %v2122, %v2314
      %v2385 = vadd.f32 %v2123, %v2319
      %v2386 = vadd.f32 %v2124, %v2324
      %v2387 = vadd.f32 %v2125, %v2329
      %v2388 = vadd.f32 %v2126, %v2334
      %v2389 = vadd.f32 %v2127, %v2339
      %v2390 = vadd.f32 %v2128, %v2344
      %v2391 = vadd.f32 %v2129, %v2349
      %v2392 = vadd.f32 %v2130, %v2354
      %v2393 = vadd.f32 %v2131, %v2359
      %vm2394 = vcmask 1046528
      %v2395 = vrot.slane %v582, 1
      %v2396 = vrot.slane %v583, 1
      %v2397 = vsel %vm2394, %v2395, %v2396
      %v2398 = vrot.slane %v580, 1
      %v2399 = vrot.slane %v581, 1
      %v2400 = vsel %vm2394, %v2398, %v2399
      %v2401 = vrot.slane %v584, 1
      %v2402 = vrot.slane %v585, 1
      %v2403 = vsel %vm2394, %v2401, %v2402
      %v2404 = vrot.slane %v586, 1
      %v2405 = vrot.slane %v587, 1
      %v2406 = vsel %vm2394, %v2404, %v2405
      %v2407 = vrot.slane %v588, 1
      %v2408 = vrot.slane %v589, 1
      %v2409 = vsel %vm2394, %v2407, %v2408
      %v2410 = vrot.slane %v590, 1
      %v2411 = vrot.slane %v591, 1
      %v2412 = vsel %vm2394, %v2410, %v2411
      %v2413 = vrot.slane %v592, 1
      %v2414 = vrot.slane %v593, 1
      %v2415 = vsel %vm2394, %v2413, %v2414
      %v2416 = vrot.slane %v594, 1
      %v2417 = vrot.slane %v595, 1
      %v2418 = vsel %vm2394, %v2416, %v2417
      %v2419 = vrot.slane %v596, 1
      %v2420 = vrot.slane %v597, 1
      %v2421 = vsel %vm2394, %v2419, %v2420
      %v2422 = vrot.slane %v598, 1
      %v2423 = vrot.slane %v599, 1
      %v2424 = vsel %vm2394, %v2422, %v2423
      %v2425 = vrot.slane %v600, 1
      %v2426 = vrot.slane %v601, 1
      %v2427 = vsel %vm2394, %v2425, %v2426
      %v2428 = vrot.slane %v602, 1
      %v2429 = vrot.slane %v603, 1
      %v2430 = vsel %vm2394, %v2428, %v2429
      %v2431 = vrot.slane %v604, 1
      %v2432 = vrot.slane %v605, 1
      %v2433 = vsel %vm2394, %v2431, %v2432
      %v2434 = vrot.slane %v606, 1
      %v2435 = vrot.slane %v607, 1
      %v2436 = vsel %vm2394, %v2434, %v2435
      %v2437 = vrot.slane %v608, 1
      %v2438 = vrot.slane %v609, 1
      %v2439 = vsel %vm2394, %v2437, %v2438
      %v2440 = vrot.slane %v610, 1
      %v2441 = vrot.slane %v611, 1
      %v2442 = vsel %vm2394, %v2440, %v2441
      %v2475 = vsel %vm2394, %v2396, %v2395
      %v2476 = vsel %vm2394, %v2399, %v2398
      %v2477 = vsel %vm2394, %v2402, %v2401
      %v2478 = vsel %vm2394, %v2405, %v2404
      %v2479 = vsel %vm2394, %v2408, %v2407
      %v2480 = vsel %vm2394, %v2411, %v2410
      %v2481 = vsel %vm2394, %v2414, %v2413
      %v2482 = vsel %vm2394, %v2417, %v2416
      %v2483 = vsel %vm2394, %v2420, %v2419
      %v2484 = vsel %vm2394, %v2423, %v2422
      %v2485 = vsel %vm2394, %v2426, %v2425
      %v2486 = vsel %vm2394, %v2429, %v2428
      %v2487 = vsel %vm2394, %v2432, %v2431
      %v2488 = vsel %vm2394, %v2435, %v2434
      %v2489 = vsel %vm2394, %v2438, %v2437
      %v2490 = vsel %vm2394, %v2441, %v2440
      %s2491 = scalar_lea.vmem %s1, 8
      %v2492 = vld [vmem:[%s2491] sm:$0xf]
      %v2493 = vsel %vm744, %v2397, 0
      %v2496 = vsel %vm744, %v2475, 0
      %v2498 = vsel %vm744, %v2400, 0
      %v2501 = vsel %vm744, %v2476, 0
      %v2503 = vsel %vm744, %v2403, 0
      %v2506 = vsel %vm744, %v2477, 0
      %v2508 = vsel %vm744, %v2406, 0
      %v2511 = vsel %vm744, %v2478, 0
      %v2513 = vsel %vm744, %v2409, 0
      %v2516 = vsel %vm744, %v2479, 0
      %v2518 = vsel %vm744, %v2412, 0
      %v2521 = vsel %vm744, %v2480, 0
      %v2523 = vsel %vm744, %v2415, 0
      %v2526 = vsel %vm744, %v2481, 0
      %v2528 = vsel %vm744, %v2418, 0
      %v2531 = vsel %vm744, %v2482, 0
      %v2533 = vsel %vm744, %v2421, 0
      %v2536 = vsel %vm744, %v2483, 0
      %v2538 = vsel %vm744, %v2424, 0
      %v2541 = vsel %vm744, %v2484, 0
      %v2543 = vsel %vm744, %v2427, 0
      %v2546 = vsel %vm744, %v2485, 0
      %v2548 = vsel %vm744, %v2430, 0
      %v2551 = vsel %vm744, %v2486, 0
      %v2553 = vsel %vm744, %v2433, 0
      %v2556 = vsel %vm744, %v2487, 0
      %v2558 = vsel %vm744, %v2436, 0
      %v2561 = vsel %vm744, %v2488, 0
      %v2563 = vsel %vm744, %v2439, 0
      %v2566 = vsel %vm744, %v2489, 0
      %v2569 = vsel %vm825, %v2492, 0
      %2571 = vmatprep.subr.mxu0 0.0
      %2572 = vmatpush1.msra.mxu0 %v2569
      %2573 = vmatprep.subr.mxu0 0.0
      %2574 = vmatpush1.msra.mxu0 0.0
      %2575 = vmatprep.subr.mxu0 0.0
      %2576 = vmatpush1.msra.mxu0 0.0
      %2577 = vmatprep.subr.mxu0 0.0
      %2578 = vmatpush1.msra.mxu0 0.0
      %2579 = vmatprep.subr.mxu0 0.0
      %2580 = vmatpush1.msra.mxu0 0.0
      %2581 = vmatprep.subr.mxu0 0.0
      %2582 = vmatpush1.msra.mxu0 0.0
      %2583 = vmatprep.subr.mxu0 0.0
      %2584 = vmatpush1.msra.mxu0 0.0
      %2585 = vmatprep.subr.mxu0 0.0
      %2586 = vmatpush1.msra.mxu0 0.0
      %2587 = vmatprep.subr.mxu0 0.0
      %2588 = vmatpush1.msra.mxu0 0.0
      %2589 = vmatprep.subr.mxu0 0.0
      %2590 = vmatpush1.msra.mxu0 0.0
      %2591 = vmatprep.subr.mxu0 0.0
      %2592 = vmatpush1.msra.mxu0 0.0
      %2593 = vmatprep.subr.mxu0 0.0
      %2594 = vmatpush1.msra.mxu0 0.0
      %2595 = vmatprep.subr.mxu0 0.0
      %2596 = vmatpush1.msra.mxu0 0.0
      %2597 = vmatprep.subr.mxu0 0.0
      %2598 = vmatpush1.msra.mxu0 0.0
      %2599 = vmatprep.subr.mxu0 0.0
      %2600 = vmatpush1.msra.mxu0 0.0
      %2601 = vmatprep.subr.mxu0 0.0
      %2602 = vmatpush1.msra.mxu0 0.0
      %2603 = vmatprep.subr.mxu0 0.0
      %2604 = vmatpush1.msra.mxu0 0.0
      %2605 = vmatprep.subr.mxu0 0.0
      %2606 = vmatpush1.msra.mxu0 0.0
      %2607 = vmatprep.subr.mxu0 0.0
      %2608 = vmatpush1.msra.mxu0 0.0
      %2609 = vmatprep.subr.mxu0 0.0
      %2610 = vmatpush1.msra.mxu0 0.0
      %2611 = vmatprep.subr.mxu0 0.0
      %2612 = vmatpush1.msra.mxu0 0.0
      %2613 = vmatprep.subr.mxu0 0.0
      %2614 = vmatpush1.msra.mxu0 0.0
      %2615 = vmatprep.subr.mxu0 0.0
      %2616 = vmatpush1.msra.mxu0 0.0
      %2617 = vmatprep.subr.mxu0 0.0
      %2618 = vmatpush1.msra.mxu0 0.0
      %2619 = vmatprep.subr.mxu0 0.0
      %2620 = vmatpush1.msra.mxu0 0.0
      %2621 = vmatprep.subr.mxu0 0.0
      %2622 = vmatpush1.msra.mxu0 0.0
      %2623 = vmatprep.subr.mxu0 0.0
      %2624 = vmatpush1.msra.mxu0 0.0
      %2625 = vmatprep.subr.mxu0 0.0
      %2626 = vmatpush1.msra.mxu0 0.0
      %2627 = vmatprep.subr.mxu0 0.0
      %2628 = vmatpush1.msra.mxu0 0.0
      %2629 = vmatprep.subr.mxu0 0.0
      %2630 = vmatpush1.msra.mxu0 0.0
      %2631 = vmatprep.subr.mxu0 0.0
      %2632 = vmatpush1.msra.mxu0 0.0
      %2633 = vmatprep.subr.mxu0 0.0
      %2634 = vmatpush1.msra.mxu0 0.0
      %2635 = vmatprep.mubr.f32.mxu0 0.0
      %2636 = vmatmul.mubr.f32.gmra.mrb[0].mxu0 %v2493
      %v2637 = vpop.f32.mrb[0].mxu0
      %v2638 = vadd.f32 0.0, %v2637
      %v2639 = vpop.f32.mrb[0].mxu0
      %2640 = vmatprep.mubr.f32.mxu0 0.0
      %2641 = vmatmul.mubr.f32.gmra.mrb[0].mxu0 %v2496
      %v2642 = vpop.f32.mrb[0].mxu0
      %v2643 = vadd.f32 0.0, %v2642
      %v2644 = vpop.f32.mrb[0].mxu0
      %2645 = vmatprep.mubr.f32.mxu0 0.0
      %2646 = vmatmul.mubr.f32.gmra.mrb[0].mxu0 %v2498
      %v2647 = vpop.f32.mrb[0].mxu0
      %v2648 = vadd.f32 0.0, %v2647
      %v2649 = vpop.f32.mrb[0].mxu0
      %2650 = vmatprep.mubr.f32.mxu0 0.0
      %2651 = vmatmul.mubr.f32.gmra.mrb[0].mxu0 %v2501
      %v2652 = vpop.f32.mrb[0].mxu0
      %v2653 = vadd.f32 0.0, %v2652
      %v2654 = vpop.f32.mrb[0].mxu0
      %2655 = vmatprep.mubr.f32.mxu0 0.0
      %2656 = vmatmul.mubr.f32.gmra.mrb[0].mxu0 %v2493
      %v2657 = vpop.f32.mrb[0].mxu0
      %v2658 = vadd.f32 0.0, %v2657
      %v2659 = vpop.f32.mrb[0].mxu0
      %2660 = vmatprep.mubr.f32.mxu0 0.0
      %2661 = vmatmul.mubr.f32.gmra.mrb[0].mxu0 %v2496
      %v2662 = vpop.f32.mrb[0].mxu0
      %v2663 = vadd.f32 0.0, %v2662
      %v2664 = vpop.f32.mrb[0].mxu0
      %2665 = vmatprep.mubr.f32.mxu0 0.0
      %2666 = vmatmul.mubr.f32.gmra.mrb[0].mxu0 %v2503
      %v2667 = vpop.f32.mrb[0].mxu0
      %v2668 = vadd.f32 0.0, %v2667
      %v2669 = vpop.f32.mrb[0].mxu0
      %2670 = vmatprep.mubr.f32.mxu0 0.0
      %2671 = vmatmul.mubr.f32.gmra.mrb[0].mxu0 %v2506
      %v2672 = vpop.f32.mrb[0].mxu0
      %v2673 = vadd.f32 0.0, %v2672
      %v2674 = vpop.f32.mrb[0].mxu0
      %2675 = vmatprep.mubr.f32.mxu0 0.0
      %2676 = vmatmul.mubr.f32.gmra.mrb[0].mxu0 %v2508
      %v2677 = vpop.f32.mrb[0].mxu0
      %v2678 = vadd.f32 0.0, %v2677
      %v2679 = vpop.f32.mrb[0].mxu0
      %2680 = vmatprep.mubr.f32.mxu0 0.0
      %2681 = vmatmul.mubr.f32.gmra.mrb[0].mxu0 %v2511
      %v2682 = vpop.f32.mrb[0].mxu0
      %v2683 = vadd.f32 0.0, %v2682
      %v2684 = vpop.f32.mrb[0].mxu0
      %2685 = vmatprep.mubr.f32.mxu0 0.0
      %2686 = vmatmul.mubr.f32.gmra.mrb[0].mxu0 %v2513
      %v2687 = vpop.f32.mrb[0].mxu0
      %v2688 = vadd.f32 0.0, %v2687
      %v2689 = vpop.f32.mrb[0].mxu0
      %2690 = vmatprep.mubr.f32.mxu0 0.0
      %2691 = vmatmul.mubr.f32.gmra.mrb[0].mxu0 %v2516
      %v2692 = vpop.f32.mrb[0].mxu0
      %v2693 = vadd.f32 0.0, %v2692
      %v2694 = vpop.f32.mrb[0].mxu0
      %2695 = vmatprep.mubr.f32.mxu0 0.0
      %2696 = vmatmul.mubr.f32.gmra.mrb[0].mxu0 %v2518
      %v2697 = vpop.f32.mrb[0].mxu0
      %v2698 = vadd.f32 0.0, %v2697
      %v2699 = vpop.f32.mrb[0].mxu0
      %2700 = vmatprep.mubr.f32.mxu0 0.0
      %2701 = vmatmul.mubr.f32.gmra.mrb[0].mxu0 %v2521
      %v2702 = vpop.f32.mrb[0].mxu0
      %v2703 = vadd.f32 0.0, %v2702
      %v2704 = vpop.f32.mrb[0].mxu0
      %2705 = vmatprep.mubr.f32.mxu0 0.0
      %2706 = vmatmul.mubr.f32.gmra.mrb[0].mxu0 %v2523
      %v2707 = vpop.f32.mrb[0].mxu0
      %v2708 = vadd.f32 0.0, %v2707
      %v2709 = vpop.f32.mrb[0].mxu0
      %2710 = vmatprep.mubr.f32.mxu0 0.0
      %2711 = vmatmul.mubr.f32.gmra.mrb[0].mxu0 %v2526
      %v2712 = vpop.f32.mrb[0].mxu0
      %v2713 = vadd.f32 0.0, %v2712
      %v2714 = vpop.f32.mrb[0].mxu0
      %2715 = vmatprep.mubr.f32.mxu0 0.0
      %2716 = vmatmul.mubr.f32.gmra.mrb[0].mxu0 %v2528
      %v2717 = vpop.f32.mrb[0].mxu0
      %v2718 = vadd.f32 0.0, %v2717
      %v2719 = vpop.f32.mrb[0].mxu0
      %2720 = vmatprep.mubr.f32.mxu0 0.0
      %2721 = vmatmul.mubr.f32.gmra.mrb[0].mxu0 %v2531
      %v2722 = vpop.f32.mrb[0].mxu0
      %v2723 = vadd.f32 0.0, %v2722
      %v2724 = vpop.f32.mrb[0].mxu0
      %2725 = vmatprep.mubr.f32.mxu0 0.0
      %2726 = vmatmul.mubr.f32.gmra.mrb[0].mxu0 %v2533
      %v2727 = vpop.f32.mrb[0].mxu0
      %v2728 = vadd.f32 0.0, %v2727
      %v2729 = vpop.f32.mrb[0].mxu0
      %2730 = vmatprep.mubr.f32.mxu0 0.0
      %2731 = vmatmul.mubr.f32.gmra.mrb[0].mxu0 %v2536
      %v2732 = vpop.f32.mrb[0].mxu0
      %v2733 = vadd.f32 0.0, %v2732
      %v2734 = vpop.f32.mrb[0].mxu0
      %2735 = vmatprep.mubr.f32.mxu0 0.0
      %2736 = vmatmul.mubr.f32.gmra.mrb[0].mxu0 %v2538
      %v2737 = vpop.f32.mrb[0].mxu0
      %v2738 = vadd.f32 0.0, %v2737
      %v2739 = vpop.f32.mrb[0].mxu0
      %2740 = vmatprep.mubr.f32.mxu0 0.0
      %2741 = vmatmul.mubr.f32.gmra.mrb[0].mxu0 %v2541
      %v2742 = vpop.f32.mrb[0].mxu0
      %v2743 = vadd.f32 0.0, %v2742
      %v2744 = vpop.f32.mrb[0].mxu0
      %2745 = vmatprep.mubr.f32.mxu0 0.0
      %2746 = vmatmul.mubr.f32.gmra.mrb[0].mxu0 %v2543
      %v2747 = vpop.f32.mrb[0].mxu0
      %v2748 = vadd.f32 0.0, %v2747
      %v2749 = vpop.f32.mrb[0].mxu0
      %2750 = vmatprep.mubr.f32.mxu0 0.0
      %2751 = vmatmul.mubr.f32.gmra.mrb[0].mxu0 %v2546
      %v2752 = vpop.f32.mrb[0].mxu0
      %v2753 = vadd.f32 0.0, %v2752
      %v2754 = vpop.f32.mrb[0].mxu0
      %2755 = vmatprep.mubr.f32.mxu0 0.0
      %2756 = vmatmul.mubr.f32.gmra.mrb[0].mxu0 %v2548
      %v2757 = vpop.f32.mrb[0].mxu0
      %v2758 = vadd.f32 0.0, %v2757
      %v2759 = vpop.f32.mrb[0].mxu0
      %2760 = vmatprep.mubr.f32.mxu0 0.0
      %2761 = vmatmul.mubr.f32.gmra.mrb[0].mxu0 %v2551
      %v2762 = vpop.f32.mrb[0].mxu0
      %v2763 = vadd.f32 0.0, %v2762
      %v2764 = vpop.f32.mrb[0].mxu0
      %2765 = vmatprep.mubr.f32.mxu0 0.0
      %2766 = vmatmul.mubr.f32.gmra.mrb[0].mxu0 %v2553
      %v2767 = vpop.f32.mrb[0].mxu0
      %v2768 = vadd.f32 0.0, %v2767
      %v2769 = vpop.f32.mrb[0].mxu0
      %2770 = vmatprep.mubr.f32.mxu0 0.0
      %2771 = vmatmul.mubr.f32.gmra.mrb[0].mxu0 %v2556
      %v2772 = vpop.f32.mrb[0].mxu0
      %v2773 = vadd.f32 0.0, %v2772
      %v2774 = vpop.f32.mrb[0].mxu0
      %2775 = vmatprep.mubr.f32.mxu0 0.0
      %2776 = vmatmul.mubr.f32.gmra.mrb[0].mxu0 %v2558
      %v2777 = vpop.f32.mrb[0].mxu0
      %v2778 = vadd.f32 0.0, %v2777
      %v2779 = vpop.f32.mrb[0].mxu0
      %2780 = vmatprep.mubr.f32.mxu0 0.0
      %2781 = vmatmul.mubr.f32.gmra.mrb[0].mxu0 %v2561
      %v2782 = vpop.f32.mrb[0].mxu0
      %v2783 = vadd.f32 0.0, %v2782
      %v2784 = vpop.f32.mrb[0].mxu0
      %2785 = vmatprep.mubr.f32.mxu0 0.0
      %2786 = vmatmul.mubr.f32.gmra.mrb[0].mxu0 %v2563
      %v2787 = vpop.f32.mrb[0].mxu0
      %v2788 = vadd.f32 0.0, %v2787
      %v2789 = vpop.f32.mrb[0].mxu0
      %2790 = vmatprep.mubr.f32.mxu0 0.0
      %2791 = vmatmul.mubr.f32.gmra.mrb[0].mxu0 %v2566
      %v2792 = vpop.f32.mrb[0].mxu0
      %v2793 = vadd.f32 0.0, %v2792
      %v2794 = vpop.f32.mrb[0].mxu0
      %2795 = vdwg.mxu0
      %v2796 = vadd.f32 %v2362, %v2638
      %v2797 = vadd.f32 %v2363, %v2643
      %v2798 = vadd.f32 %v2364, %v2648
      %v2799 = vadd.f32 %v2365, %v2653
      %v2800 = vadd.f32 %v2366, %v2658
      %v2801 = vadd.f32 %v2367, %v2663
      %v2802 = vadd.f32 %v2368, %v2668
      %v2803 = vadd.f32 %v2369, %v2673
      %v2804 = vadd.f32 %v2370, %v2678
      %v2805 = vadd.f32 %v2371, %v2683
      %v2806 = vadd.f32 %v2372, %v2688
      %v2807 = vadd.f32 %v2373, %v2693
      %v2808 = vadd.f32 %v2374, %v2698
      %v2809 = vadd.f32 %v2375, %v2703
      %v2810 = vadd.f32 %v2376, %v2708
      %v2811 = vadd.f32 %v2377, %v2713
      %v2812 = vadd.f32 %v2378, %v2718
      %v2813 = vadd.f32 %v2379, %v2723
      %v2814 = vadd.f32 %v2380, %v2728
      %v2815 = vadd.f32 %v2381, %v2733
      %v2816 = vadd.f32 %v2382, %v2738
      %v2817 = vadd.f32 %v2383, %v2743
      %v2818 = vadd.f32 %v2384, %v2748
      %v2819 = vadd.f32 %v2385, %v2753
      %v2820 = vadd.f32 %v2386, %v2758
      %v2821 = vadd.f32 %v2387, %v2763
      %v2822 = vadd.f32 %v2388, %v2768
      %v2823 = vadd.f32 %v2389, %v2773
      %v2824 = vadd.f32 %v2390, %v2778
      %v2825 = vadd.f32 %v2391, %v2783
      %v2826 = vadd.f32 %v2392, %v2788
      %v2827 = vadd.f32 %v2393, %v2793
      %s2828 = scalar_lea.vmem %s1, 20
      %v2829 = vld [vmem:[%s2828] sm:$0xf]
      %v2830 = vsel %vm744, %v2442, 0
      %v2833 = vsel %vm744, %v2490, 0
      %v2836 = vsel %vm825, %v2829, 0
      %2838 = vmatprep.subr.mxu0 0.0
      %2839 = vmatpush1.msra.mxu0 %v2836
      %2840 = vmatprep.subr.mxu0 0.0
      %2841 = vmatpush1.msra.mxu0 0.0
      %2842 = vmatprep.subr.mxu0 0.0
      %2843 = vmatpush1.msra.mxu0 0.0
      %2844 = vmatprep.subr.mxu0 0.0
      %2845 = vmatpush1.msra.mxu0 0.0
      %2846 = vmatprep.subr.mxu0 0.0
      %2847 = vmatpush1.msra.mxu0 0.0
      %2848 = vmatprep.subr.mxu0 0.0
      %2849 = vmatpush1.msra.mxu0 0.0
      %2850 = vmatprep.subr.mxu0 0.0
      %2851 = vmatpush1.msra.mxu0 0.0
      %2852 = vmatprep.subr.mxu0 0.0
      %2853 = vmatpush1.msra.mxu0 0.0
      %2854 = vmatprep.subr.mxu0 0.0
      %2855 = vmatpush1.msra.mxu0 0.0
      %2856 = vmatprep.subr.mxu0 0.0
      %2857 = vmatpush1.msra.mxu0 0.0
      %2858 = vmatprep.subr.mxu0 0.0
      %2859 = vmatpush1.msra.mxu0 0.0
      %2860 = vmatprep.subr.mxu0 0.0
      %2861 = vmatpush1.msra.mxu0 0.0
      %2862 = vmatprep.subr.mxu0 0.0
      %2863 = vmatpush1.msra.mxu0 0.0
      %2864 = vmatprep.subr.mxu0 0.0
      %2865 = vmatpush1.msra.mxu0 0.0
      %2866 = vmatprep.subr.mxu0 0.0
      %2867 = vmatpush1.msra.mxu0 0.0
      %2868 = vmatprep.subr.mxu0 0.0
      %2869 = vmatpush1.msra.mxu0 0.0
      %2870 = vmatprep.subr.mxu0 0.0
      %2871 = vmatpush1.msra.mxu0 0.0
      %2872 = vmatprep.subr.mxu0 0.0
      %2873 = vmatpush1.msra.mxu0 0.0
      %2874 = vmatprep.subr.mxu0 0.0
      %2875 = vmatpush1.msra.mxu0 0.0
      %2876 = vmatprep.subr.mxu0 0.0
      %2877 = vmatpush1.msra.mxu0 0.0
      %2878 = vmatprep.subr.mxu0 0.0
      %2879 = vmatpush1.msra.mxu0 0.0
      %2880 = vmatprep.subr.mxu0 0.0
      %2881 = vmatpush1.msra.mxu0 0.0
      %2882 = vmatprep.subr.mxu0 0.0
      %2883 = vmatpush1.msra.mxu0 0.0
      %2884 = vmatprep.subr.mxu0 0.0
      %2885 = vmatpush1.msra.mxu0 0.0
      %2886 = vmatprep.subr.mxu0 0.0
      %2887 = vmatpush1.msra.mxu0 0.0
      %2888 = vmatprep.subr.mxu0 0.0
      %2889 = vmatpush1.msra.mxu0 0.0
      %2890 = vmatprep.subr.mxu0 0.0
      %2891 = vmatpush1.msra.mxu0 0.0
      %2892 = vmatprep.subr.mxu0 0.0
      %2893 = vmatpush1.msra.mxu0 0.0
      %2894 = vmatprep.subr.mxu0 0.0
      %2895 = vmatpush1.msra.mxu0 0.0
      %2896 = vmatprep.subr.mxu0 0.0
      %2897 = vmatpush1.msra.mxu0 0.0
      %2898 = vmatprep.subr.mxu0 0.0
      %2899 = vmatpush1.msra.mxu0 0.0
      %2900 = vmatprep.subr.mxu0 0.0
      %2901 = vmatpush1.msra.mxu0 0.0
      %2902 = vmatprep.mubr.f32.mxu0 0.0
      %2903 = vmatmul.mubr.f32.gmra.mrb[0].mxu0 %v2498
      %v2904 = vpop.f32.mrb[0].mxu0
      %v2905 = vadd.f32 0.0, %v2904
      %v2906 = vpop.f32.mrb[0].mxu0
      %2907 = vmatprep.mubr.f32.mxu0 0.0
      %2908 = vmatmul.mubr.f32.gmra.mrb[0].mxu0 %v2501
      %v2909 = vpop.f32.mrb[0].mxu0
      %v2910 = vadd.f32 0.0, %v2909
      %v2911 = vpop.f32.mrb[0].mxu0
      %2912 = vmatprep.mubr.f32.mxu0 0.0
      %2913 = vmatmul.mubr.f32.gmra.mrb[0].mxu0 %v2493
      %v2914 = vpop.f32.mrb[0].mxu0
      %v2915 = vadd.f32 0.0, %v2914
      %v2916 = vpop.f32.mrb[0].mxu0
      %2917 = vmatprep.mubr.f32.mxu0 0.0
      %2918 = vmatmul.mubr.f32.gmra.mrb[0].mxu0 %v2496
      %v2919 = vpop.f32.mrb[0].mxu0
      %v2920 = vadd.f32 0.0, %v2919
      %v2921 = vpop.f32.mrb[0].mxu0
      %2922 = vmatprep.mubr.f32.mxu0 0.0
      %2923 = vmatmul.mubr.f32.gmra.mrb[0].mxu0 %v2503
      %v2924 = vpop.f32.mrb[0].mxu0
      %v2925 = vadd.f32 0.0, %v2924
      %v2926 = vpop.f32.mrb[0].mxu0
      %2927 = vmatprep.mubr.f32.mxu0 0.0
      %2928 = vmatmul.mubr.f32.gmra.mrb[0].mxu0 %v2506
      %v2929 = vpop.f32.mrb[0].mxu0
      %v2930 = vadd.f32 0.0, %v2929
      %v2931 = vpop.f32.mrb[0].mxu0
      %2932 = vmatprep.mubr.f32.mxu0 0.0
      %2933 = vmatmul.mubr.f32.gmra.mrb[0].mxu0 %v2508
      %v2934 = vpop.f32.mrb[0].mxu0
      %v2935 = vadd.f32 0.0, %v2934
      %v2936 = vpop.f32.mrb[0].mxu0
      %2937 = vmatprep.mubr.f32.mxu0 0.0
      %2938 = vmatmul.mubr.f32.gmra.mrb[0].mxu0 %v2511
      %v2939 = vpop.f32.mrb[0].mxu0
      %v2940 = vadd.f32 0.0, %v2939
      %v2941 = vpop.f32.mrb[0].mxu0
      %2942 = vmatprep.mubr.f32.mxu0 0.0
      %2943 = vmatmul.mubr.f32.gmra.mrb[0].mxu0 %v2513
      %v2944 = vpop.f32.mrb[0].mxu0
      %v2945 = vadd.f32 0.0, %v2944
      %v2946 = vpop.f32.mrb[0].mxu0
      %2947 = vmatprep.mubr.f32.mxu0 0.0
      %2948 = vmatmul.mubr.f32.gmra.mrb[0].mxu0 %v2516
      %v2949 = vpop.f32.mrb[0].mxu0
      %v2950 = vadd.f32 0.0, %v2949
      %v2951 = vpop.f32.mrb[0].mxu0
      %2952 = vmatprep.mubr.f32.mxu0 0.0
      %2953 = vmatmul.mubr.f32.gmra.mrb[0].mxu0 %v2518
      %v2954 = vpop.f32.mrb[0].mxu0
      %v2955 = vadd.f32 0.0, %v2954
      %v2956 = vpop.f32.mrb[0].mxu0
      %2957 = vmatprep.mubr.f32.mxu0 0.0
      %2958 = vmatmul.mubr.f32.gmra.mrb[0].mxu0 %v2521
      %v2959 = vpop.f32.mrb[0].mxu0
      %v2960 = vadd.f32 0.0, %v2959
      %v2961 = vpop.f32.mrb[0].mxu0
      %2962 = vmatprep.mubr.f32.mxu0 0.0
      %2963 = vmatmul.mubr.f32.gmra.mrb[0].mxu0 %v2523
      %v2964 = vpop.f32.mrb[0].mxu0
      %v2965 = vadd.f32 0.0, %v2964
      %v2966 = vpop.f32.mrb[0].mxu0
      %2967 = vmatprep.mubr.f32.mxu0 0.0
      %2968 = vmatmul.mubr.f32.gmra.mrb[0].mxu0 %v2526
      %v2969 = vpop.f32.mrb[0].mxu0
      %v2970 = vadd.f32 0.0, %v2969
      %v2971 = vpop.f32.mrb[0].mxu0
      %2972 = vmatprep.mubr.f32.mxu0 0.0
      %2973 = vmatmul.mubr.f32.gmra.mrb[0].mxu0 %v2528
      %v2974 = vpop.f32.mrb[0].mxu0
      %v2975 = vadd.f32 0.0, %v2974
      %v2976 = vpop.f32.mrb[0].mxu0
      %2977 = vmatprep.mubr.f32.mxu0 0.0
      %2978 = vmatmul.mubr.f32.gmra.mrb[0].mxu0 %v2531
      %v2979 = vpop.f32.mrb[0].mxu0
      %v2980 = vadd.f32 0.0, %v2979
      %v2981 = vpop.f32.mrb[0].mxu0
      %2982 = vmatprep.mubr.f32.mxu0 0.0
      %2983 = vmatmul.mubr.f32.gmra.mrb[0].mxu0 %v2533
      %v2984 = vpop.f32.mrb[0].mxu0
      %v2985 = vadd.f32 0.0, %v2984
      %v2986 = vpop.f32.mrb[0].mxu0
      %2987 = vmatprep.mubr.f32.mxu0 0.0
      %2988 = vmatmul.mubr.f32.gmra.mrb[0].mxu0 %v2536
      %v2989 = vpop.f32.mrb[0].mxu0
      %v2990 = vadd.f32 0.0, %v2989
      %v2991 = vpop.f32.mrb[0].mxu0
      %2992 = vmatprep.mubr.f32.mxu0 0.0
      %2993 = vmatmul.mubr.f32.gmra.mrb[0].mxu0 %v2538
      %v2994 = vpop.f32.mrb[0].mxu0
      %v2995 = vadd.f32 0.0, %v2994
      %v2996 = vpop.f32.mrb[0].mxu0
      %2997 = vmatprep.mubr.f32.mxu0 0.0
      %2998 = vmatmul.mubr.f32.gmra.mrb[0].mxu0 %v2541
      %v2999 = vpop.f32.mrb[0].mxu0
      %v3000 = vadd.f32 0.0, %v2999
      %v3001 = vpop.f32.mrb[0].mxu0
      %3002 = vmatprep.mubr.f32.mxu0 0.0
      %3003 = vmatmul.mubr.f32.gmra.mrb[0].mxu0 %v2543
      %v3004 = vpop.f32.mrb[0].mxu0
      %v3005 = vadd.f32 0.0, %v3004
      %v3006 = vpop.f32.mrb[0].mxu0
      %3007 = vmatprep.mubr.f32.mxu0 0.0
      %3008 = vmatmul.mubr.f32.gmra.mrb[0].mxu0 %v2546
      %v3009 = vpop.f32.mrb[0].mxu0
      %v3010 = vadd.f32 0.0, %v3009
      %v3011 = vpop.f32.mrb[0].mxu0
      %3012 = vmatprep.mubr.f32.mxu0 0.0
      %3013 = vmatmul.mubr.f32.gmra.mrb[0].mxu0 %v2548
      %v3014 = vpop.f32.mrb[0].mxu0
      %v3015 = vadd.f32 0.0, %v3014
      %v3016 = vpop.f32.mrb[0].mxu0
      %3017 = vmatprep.mubr.f32.mxu0 0.0
      %3018 = vmatmul.mubr.f32.gmra.mrb[0].mxu0 %v2551
      %v3019 = vpop.f32.mrb[0].mxu0
      %v3020 = vadd.f32 0.0, %v3019
      %v3021 = vpop.f32.mrb[0].mxu0
      %3022 = vmatprep.mubr.f32.mxu0 0.0
      %3023 = vmatmul.mubr.f32.gmra.mrb[0].mxu0 %v2553
      %v3024 = vpop.f32.mrb[0].mxu0
      %v3025 = vadd.f32 0.0, %v3024
      %v3026 = vpop.f32.mrb[0].mxu0
      %3027 = vmatprep.mubr.f32.mxu0 0.0
      %3028 = vmatmul.mubr.f32.gmra.mrb[0].mxu0 %v2556
      %v3029 = vpop.f32.mrb[0].mxu0
      %v3030 = vadd.f32 0.0, %v3029
      %v3031 = vpop.f32.mrb[0].mxu0
      %3032 = vmatprep.mubr.f32.mxu0 0.0
      %3033 = vmatmul.mubr.f32.gmra.mrb[0].mxu0 %v2558
      %v3034 = vpop.f32.mrb[0].mxu0
      %v3035 = vadd.f32 0.0, %v3034
      %v3036 = vpop.f32.mrb[0].mxu0
      %3037 = vmatprep.mubr.f32.mxu0 0.0
      %3038 = vmatmul.mubr.f32.gmra.mrb[0].mxu0 %v2561
      %v3039 = vpop.f32.mrb[0].mxu0
      %v3040 = vadd.f32 0.0, %v3039
      %v3041 = vpop.f32.mrb[0].mxu0
      %3042 = vmatprep.mubr.f32.mxu0 0.0
      %3043 = vmatmul.mubr.f32.gmra.mrb[0].mxu0 %v2563
      %v3044 = vpop.f32.mrb[0].mxu0
      %v3045 = vadd.f32 0.0, %v3044
      %v3046 = vpop.f32.mrb[0].mxu0
      %3047 = vmatprep.mubr.f32.mxu0 0.0
      %3048 = vmatmul.mubr.f32.gmra.mrb[0].mxu0 %v2566
      %v3049 = vpop.f32.mrb[0].mxu0
      %v3050 = vadd.f32 0.0, %v3049
      %v3051 = vpop.f32.mrb[0].mxu0
      %3052 = vmatprep.mubr.f32.mxu0 0.0
      %3053 = vmatmul.mubr.f32.gmra.mrb[0].mxu0 %v2830
      %v3054 = vpop.f32.mrb[0].mxu0
      %v3055 = vadd.f32 0.0, %v3054
      %v3056 = vpop.f32.mrb[0].mxu0
      %3057 = vmatprep.mubr.f32.mxu0 0.0
      %3058 = vmatmul.mubr.f32.gmra.mrb[0].mxu0 %v2833
      %v3059 = vpop.f32.mrb[0].mxu0
      %v3060 = vadd.f32 0.0, %v3059
      %v3061 = vpop.f32.mrb[0].mxu0
      %3062 = vdwg.mxu0
      %v3063 = vadd.f32 %v2796, %v2905
      %v3064 = vadd.f32 %v2797, %v2910
      %v3065 = vadd.f32 %v2798, %v2915
      %v3066 = vadd.f32 %v2799, %v2920
      %v3067 = vadd.f32 %v2800, %v2925
      %v3068 = vadd.f32 %v2801, %v2930
      %v3069 = vadd.f32 %v2802, %v2935
      %v3070 = vadd.f32 %v2803, %v2940
      %v3071 = vadd.f32 %v2804, %v2945
      %v3072 = vadd.f32 %v2805, %v2950
      %v3073 = vadd.f32 %v2806, %v2955
      %v3074 = vadd.f32 %v2807, %v2960
      %v3075 = vadd.f32 %v2808, %v2965
      %v3076 = vadd.f32 %v2809, %v2970
      %v3077 = vadd.f32 %v2810, %v2975
      %v3078 = vadd.f32 %v2811, %v2980
      %v3079 = vadd.f32 %v2812, %v2985
      %v3080 = vadd.f32 %v2813, %v2990
      %v3081 = vadd.f32 %v2814, %v2995
      %v3082 = vadd.f32 %v2815, %v3000
      %v3083 = vadd.f32 %v2816, %v3005
      %v3084 = vadd.f32 %v2817, %v3010
      %v3085 = vadd.f32 %v2818, %v3015
      %v3086 = vadd.f32 %v2819, %v3020
      %v3087 = vadd.f32 %v2820, %v3025
      %v3088 = vadd.f32 %v2821, %v3030
      %v3089 = vadd.f32 %v2822, %v3035
      %v3090 = vadd.f32 %v2823, %v3040
      %v3091 = vadd.f32 %v2824, %v3045
      %v3092 = vadd.f32 %v2825, %v3050
      %v3093 = vadd.f32 %v2826, %v3055
      %v3094 = vadd.f32 %v2827, %v3060
      %s3095 = scalar_lea.vmem %s1, 32
      %v3096 = vld [vmem:[%s3095] sm:$0xf]
      %v3098 = vsel %vm825, %v3096, 0
      %3100 = vmatprep.subr.mxu0 0.0
      %3101 = vmatpush1.msra.mxu0 %v3098
      %3102 = vmatprep.subr.mxu0 0.0
      %3103 = vmatpush1.msra.mxu0 0.0
      %3104 = vmatprep.subr.mxu0 0.0
      %3105 = vmatpush1.msra.mxu0 0.0
      %3106 = vmatprep.subr.mxu0 0.0
      %3107 = vmatpush1.msra.mxu0 0.0
      %3108 = vmatprep.subr.mxu0 0.0
      %3109 = vmatpush1.msra.mxu0 0.0
      %3110 = vmatprep.subr.mxu0 0.0
      %3111 = vmatpush1.msra.mxu0 0.0
      %3112 = vmatprep.subr.mxu0 0.0
      %3113 = vmatpush1.msra.mxu0 0.0
      %3114 = vmatprep.subr.mxu0 0.0
      %3115 = vmatpush1.msra.mxu0 0.0
      %3116 = vmatprep.subr.mxu0 0.0
      %3117 = vmatpush1.msra.mxu0 0.0
      %3118 = vmatprep.subr.mxu0 0.0
      %3119 = vmatpush1.msra.mxu0 0.0
      %3120 = vmatprep.subr.mxu0 0.0
      %3121 = vmatpush1.msra.mxu0 0.0
      %3122 = vmatprep.subr.mxu0 0.0
      %3123 = vmatpush1.msra.mxu0 0.0
      %3124 = vmatprep.subr.mxu0 0.0
      %3125 = vmatpush1.msra.mxu0 0.0
      %3126 = vmatprep.subr.mxu0 0.0
      %3127 = vmatpush1.msra.mxu0 0.0
      %3128 = vmatprep.subr.mxu0 0.0
      %3129 = vmatpush1.msra.mxu0 0.0
      %3130 = vmatprep.subr.mxu0 0.0
      %3131 = vmatpush1.msra.mxu0 0.0
      %3132 = vmatprep.subr.mxu0 0.0
      %3133 = vmatpush1.msra.mxu0 0.0
      %3134 = vmatprep.subr.mxu0 0.0
      %3135 = vmatpush1.msra.mxu0 0.0
      %3136 = vmatprep.subr.mxu0 0.0
      %3137 = vmatpush1.msra.mxu0 0.0
      %3138 = vmatprep.subr.mxu0 0.0
      %3139 = vmatpush1.msra.mxu0 0.0
      %3140 = vmatprep.subr.mxu0 0.0
      %3141 = vmatpush1.msra.mxu0 0.0
      %3142 = vmatprep.subr.mxu0 0.0
      %3143 = vmatpush1.msra.mxu0 0.0
      %3144 = vmatprep.subr.mxu0 0.0
      %3145 = vmatpush1.msra.mxu0 0.0
      %3146 = vmatprep.subr.mxu0 0.0
      %3147 = vmatpush1.msra.mxu0 0.0
      %3148 = vmatprep.subr.mxu0 0.0
      %3149 = vmatpush1.msra.mxu0 0.0
      %3150 = vmatprep.subr.mxu0 0.0
      %3151 = vmatpush1.msra.mxu0 0.0
      %3152 = vmatprep.subr.mxu0 0.0
      %3153 = vmatpush1.msra.mxu0 0.0
      %3154 = vmatprep.subr.mxu0 0.0
      %3155 = vmatpush1.msra.mxu0 0.0
      %3156 = vmatprep.subr.mxu0 0.0
      %3157 = vmatpush1.msra.mxu0 0.0
      %3158 = vmatprep.subr.mxu0 0.0
      %3159 = vmatpush1.msra.mxu0 0.0
      %3160 = vmatprep.subr.mxu0 0.0
      %3161 = vmatpush1.msra.mxu0 0.0
      %3162 = vmatprep.subr.mxu0 0.0
      %3163 = vmatpush1.msra.mxu0 0.0
      %3164 = vmatprep.mubr.f32.mxu0 0.0
      %3165 = vmatmul.mubr.f32.gmra.mrb[0].mxu0 %v2493
      %v3166 = vpop.f32.mrb[0].mxu0
      %v3167 = vadd.f32 0.0, %v3166
      %v3168 = vpop.f32.mrb[0].mxu0
      %3169 = vmatprep.mubr.f32.mxu0 0.0
      %3170 = vmatmul.mubr.f32.gmra.mrb[0].mxu0 %v2496
      %v3171 = vpop.f32.mrb[0].mxu0
      %v3172 = vadd.f32 0.0, %v3171
      %v3173 = vpop.f32.mrb[0].mxu0
      %3174 = vmatprep.mubr.f32.mxu0 0.0
      %3175 = vmatmul.mubr.f32.gmra.mrb[0].mxu0 %v2503
      %v3176 = vpop.f32.mrb[0].mxu0
      %v3177 = vadd.f32 0.0, %v3176
      %v3178 = vpop.f32.mrb[0].mxu0
      %3179 = vmatprep.mubr.f32.mxu0 0.0
      %3180 = vmatmul.mubr.f32.gmra.mrb[0].mxu0 %v2506
      %v3181 = vpop.f32.mrb[0].mxu0
      %v3182 = vadd.f32 0.0, %v3181
      %v3183 = vpop.f32.mrb[0].mxu0
      %3184 = vmatprep.mubr.f32.mxu0 0.0
      %3185 = vmatmul.mubr.f32.gmra.mrb[0].mxu0 %v2508
      %v3186 = vpop.f32.mrb[0].mxu0
      %v3187 = vadd.f32 0.0, %v3186
      %v3188 = vpop.f32.mrb[0].mxu0
      %3189 = vmatprep.mubr.f32.mxu0 0.0
      %3190 = vmatmul.mubr.f32.gmra.mrb[0].mxu0 %v2511
      %v3191 = vpop.f32.mrb[0].mxu0
      %v3192 = vadd.f32 0.0, %v3191
      %v3193 = vpop.f32.mrb[0].mxu0
      %3194 = vmatprep.mubr.f32.mxu0 0.0
      %3195 = vmatmul.mubr.f32.gmra.mrb[0].mxu0 %v2513
      %v3196 = vpop.f32.mrb[0].mxu0
      %v3197 = vadd.f32 0.0, %v3196
      %v3198 = vpop.f32.mrb[0].mxu0
      %3199 = vmatprep.mubr.f32.mxu0 0.0
      %3200 = vmatmul.mubr.f32.gmra.mrb[0].mxu0 %v2516
      %v3201 = vpop.f32.mrb[0].mxu0
      %v3202 = vadd.f32 0.0, %v3201
      %v3203 = vpop.f32.mrb[0].mxu0
      %3204 = vmatprep.mubr.f32.mxu0 0.0
      %3205 = vmatmul.mubr.f32.gmra.mrb[0].mxu0 %v2518
      %v3206 = vpop.f32.mrb[0].mxu0
      %v3207 = vadd.f32 0.0, %v3206
      %v3208 = vpop.f32.mrb[0].mxu0
      %3209 = vmatprep.mubr.f32.mxu0 0.0
      %3210 = vmatmul.mubr.f32.gmra.mrb[0].mxu0 %v2521
      %v3211 = vpop.f32.mrb[0].mxu0
      %v3212 = vadd.f32 0.0, %v3211
      %v3213 = vpop.f32.mrb[0].mxu0
      %3214 = vmatprep.mubr.f32.mxu0 0.0
      %3215 = vmatmul.mubr.f32.gmra.mrb[0].mxu0 %v2523
      %v3216 = vpop.f32.mrb[0].mxu0
      %v3217 = vadd.f32 0.0, %v3216
      %v3218 = vpop.f32.mrb[0].mxu0
      %3219 = vmatprep.mubr.f32.mxu0 0.0
      %3220 = vmatmul.mubr.f32.gmra.mrb[0].mxu0 %v2526
      %v3221 = vpop.f32.mrb[0].mxu0
      %v3222 = vadd.f32 0.0, %v3221
      %v3223 = vpop.f32.mrb[0].mxu0
      %3224 = vmatprep.mubr.f32.mxu0 0.0
      %3225 = vmatmul.mubr.f32.gmra.mrb[0].mxu0 %v2528
      %v3226 = vpop.f32.mrb[0].mxu0
      %v3227 = vadd.f32 0.0, %v3226
      %v3228 = vpop.f32.mrb[0].mxu0
      %3229 = vmatprep.mubr.f32.mxu0 0.0
      %3230 = vmatmul.mubr.f32.gmra.mrb[0].mxu0 %v2531
      %v3231 = vpop.f32.mrb[0].mxu0
      %v3232 = vadd.f32 0.0, %v3231
      %v3233 = vpop.f32.mrb[0].mxu0
      %3234 = vmatprep.mubr.f32.mxu0 0.0
      %3235 = vmatmul.mubr.f32.gmra.mrb[0].mxu0 %v2533
      %v3236 = vpop.f32.mrb[0].mxu0
      %v3237 = vadd.f32 0.0, %v3236
      %v3238 = vpop.f32.mrb[0].mxu0
      %3239 = vmatprep.mubr.f32.mxu0 0.0
      %3240 = vmatmul.mubr.f32.gmra.mrb[0].mxu0 %v2536
      %v3241 = vpop.f32.mrb[0].mxu0
      %v3242 = vadd.f32 0.0, %v3241
      %v3243 = vpop.f32.mrb[0].mxu0
      %3244 = vmatprep.mubr.f32.mxu0 0.0
      %3245 = vmatmul.mubr.f32.gmra.mrb[0].mxu0 %v2538
      %v3246 = vpop.f32.mrb[0].mxu0
      %v3247 = vadd.f32 0.0, %v3246
      %v3248 = vpop.f32.mrb[0].mxu0
      %3249 = vmatprep.mubr.f32.mxu0 0.0
      %3250 = vmatmul.mubr.f32.gmra.mrb[0].mxu0 %v2541
      %v3251 = vpop.f32.mrb[0].mxu0
      %v3252 = vadd.f32 0.0, %v3251
      %v3253 = vpop.f32.mrb[0].mxu0
      %3254 = vmatprep.mubr.f32.mxu0 0.0
      %3255 = vmatmul.mubr.f32.gmra.mrb[0].mxu0 %v2543
      %v3256 = vpop.f32.mrb[0].mxu0
      %v3257 = vadd.f32 0.0, %v3256
      %v3258 = vpop.f32.mrb[0].mxu0
      %3259 = vmatprep.mubr.f32.mxu0 0.0
      %3260 = vmatmul.mubr.f32.gmra.mrb[0].mxu0 %v2546
      %v3261 = vpop.f32.mrb[0].mxu0
      %v3262 = vadd.f32 0.0, %v3261
      %v3263 = vpop.f32.mrb[0].mxu0
      %3264 = vmatprep.mubr.f32.mxu0 0.0
      %3265 = vmatmul.mubr.f32.gmra.mrb[0].mxu0 %v2548
      %v3266 = vpop.f32.mrb[0].mxu0
      %v3267 = vadd.f32 0.0, %v3266
      %v3268 = vpop.f32.mrb[0].mxu0
      %3269 = vmatprep.mubr.f32.mxu0 0.0
      %3270 = vmatmul.mubr.f32.gmra.mrb[0].mxu0 %v2551
      %v3271 = vpop.f32.mrb[0].mxu0
      %v3272 = vadd.f32 0.0, %v3271
      %v3273 = vpop.f32.mrb[0].mxu0
      %3274 = vmatprep.mubr.f32.mxu0 0.0
      %3275 = vmatmul.mubr.f32.gmra.mrb[0].mxu0 %v2553
      %v3276 = vpop.f32.mrb[0].mxu0
      %v3277 = vadd.f32 0.0, %v3276
      %v3278 = vpop.f32.mrb[0].mxu0
      %3279 = vmatprep.mubr.f32.mxu0 0.0
      %3280 = vmatmul.mubr.f32.gmra.mrb[0].mxu0 %v2556
      %v3281 = vpop.f32.mrb[0].mxu0
      %v3282 = vadd.f32 0.0, %v3281
      %v3283 = vpop.f32.mrb[0].mxu0
      %3284 = vmatprep.mubr.f32.mxu0 0.0
      %3285 = vmatmul.mubr.f32.gmra.mrb[0].mxu0 %v2558
      %v3286 = vpop.f32.mrb[0].mxu0
      %v3287 = vadd.f32 0.0, %v3286
      %v3288 = vpop.f32.mrb[0].mxu0
      %3289 = vmatprep.mubr.f32.mxu0 0.0
      %3290 = vmatmul.mubr.f32.gmra.mrb[0].mxu0 %v2561
      %v3291 = vpop.f32.mrb[0].mxu0
      %v3292 = vadd.f32 0.0, %v3291
      %v3293 = vpop.f32.mrb[0].mxu0
      %3294 = vmatprep.mubr.f32.mxu0 0.0
      %3295 = vmatmul.mubr.f32.gmra.mrb[0].mxu0 %v2563
      %v3296 = vpop.f32.mrb[0].mxu0
      %v3297 = vadd.f32 0.0, %v3296
      %v3298 = vpop.f32.mrb[0].mxu0
      %3299 = vmatprep.mubr.f32.mxu0 0.0
      %3300 = vmatmul.mubr.f32.gmra.mrb[0].mxu0 %v2566
      %v3301 = vpop.f32.mrb[0].mxu0
      %v3302 = vadd.f32 0.0, %v3301
      %v3303 = vpop.f32.mrb[0].mxu0
      %3304 = vmatprep.mubr.f32.mxu0 0.0
      %3305 = vmatmul.mubr.f32.gmra.mrb[0].mxu0 %v2830
      %v3306 = vpop.f32.mrb[0].mxu0
      %v3307 = vadd.f32 0.0, %v3306
      %v3308 = vpop.f32.mrb[0].mxu0
      %3309 = vmatprep.mubr.f32.mxu0 0.0
      %3310 = vmatmul.mubr.f32.gmra.mrb[0].mxu0 %v2833
      %v3311 = vpop.f32.mrb[0].mxu0
      %v3312 = vadd.f32 0.0, %v3311
      %v3313 = vpop.f32.mrb[0].mxu0
      %3314 = vmatprep.mubr.f32.mxu0 0.0
      %3315 = vmatmul.mubr.f32.gmra.mrb[0].mxu0 %v2563
      %v3316 = vpop.f32.mrb[0].mxu0
      %v3317 = vadd.f32 0.0, %v3316
      %v3318 = vpop.f32.mrb[0].mxu0
      %3319 = vmatprep.mubr.f32.mxu0 0.0
      %3320 = vmatmul.mubr.f32.gmra.mrb[0].mxu0 %v2566
      %v3321 = vpop.f32.mrb[0].mxu0
      %v3322 = vadd.f32 0.0, %v3321
      %v3323 = vpop.f32.mrb[0].mxu0
      %3324 = vdwg.mxu0
      %v3325 = vadd.f32 %v3063, %v3167
      %v3326 = vadd.f32 %v3064, %v3172
      %v3327 = vadd.f32 %v3065, %v3177
      %v3328 = vadd.f32 %v3066, %v3182
      %v3329 = vadd.f32 %v3067, %v3187
      %v3330 = vadd.f32 %v3068, %v3192
      %v3331 = vadd.f32 %v3069, %v3197
      %v3332 = vadd.f32 %v3070, %v3202
      %v3333 = vadd.f32 %v3071, %v3207
      %v3334 = vadd.f32 %v3072, %v3212
      %v3335 = vadd.f32 %v3073, %v3217
      %v3336 = vadd.f32 %v3074, %v3222
      %v3337 = vadd.f32 %v3075, %v3227
      %v3338 = vadd.f32 %v3076, %v3232
      %v3339 = vadd.f32 %v3077, %v3237
      %v3340 = vadd.f32 %v3078, %v3242
      %v3341 = vadd.f32 %v3079, %v3247
      %v3342 = vadd.f32 %v3080, %v3252
      %v3343 = vadd.f32 %v3081, %v3257
      %v3344 = vadd.f32 %v3082, %v3262
      %v3345 = vadd.f32 %v3083, %v3267
      %v3346 = vadd.f32 %v3084, %v3272
      %v3347 = vadd.f32 %v3085, %v3277
      %v3348 = vadd.f32 %v3086, %v3282
      %v3349 = vadd.f32 %v3087, %v3287
      %v3350 = vadd.f32 %v3088, %v3292
      %v3351 = vadd.f32 %v3089, %v3297
      %v3352 = vadd.f32 %v3090, %v3302
      %v3353 = vadd.f32 %v3091, %v3307
      %v3354 = vadd.f32 %v3092, %v3312
      %v3355 = vadd.f32 %v3093, %v3317
      %v3356 = vadd.f32 %v3094, %v3322
      %v3357 = vld [vmem:[%s2] sm:$0x1]
      %v3359 = vlaneseq
      %v3360 = vshrl.u32 %v3359, 7
      %v3361 = vsub.s32 0, %v3360
      %v3362 = vrot.slane %v3357, %v3361
      %v3364 = vmul.f32 %v3325, %v3362
      %v3365 = vmul.f32 %v3326, %v3362
      %v3366 = vmul.f32 %v3327, %v3362
      %v3367 = vmul.f32 %v3328, %v3362
      %v3368 = vmul.f32 %v3329, %v3362
      %v3369 = vmul.f32 %v3330, %v3362
      %v3370 = vmul.f32 %v3331, %v3362
      %v3371 = vmul.f32 %v3332, %v3362
      %v3372 = vmul.f32 %v3333, %v3362
      %v3373 = vmul.f32 %v3334, %v3362
      %v3374 = vmul.f32 %v3335, %v3362
      %v3375 = vmul.f32 %v3336, %v3362
      %v3376 = vmul.f32 %v3337, %v3362
      %v3377 = vmul.f32 %v3338, %v3362
      %v3378 = vmul.f32 %v3339, %v3362
      %v3379 = vmul.f32 %v3340, %v3362
      %v3380 = vmul.f32 %v3341, %v3362
      %v3381 = vmul.f32 %v3342, %v3362
      %v3382 = vmul.f32 %v3343, %v3362
      %v3383 = vmul.f32 %v3344, %v3362
      %v3384 = vmul.f32 %v3345, %v3362
      %v3385 = vmul.f32 %v3346, %v3362
      %v3386 = vmul.f32 %v3347, %v3362
      %v3387 = vmul.f32 %v3348, %v3362
      %v3388 = vmul.f32 %v3349, %v3362
      %v3389 = vmul.f32 %v3350, %v3362
      %v3390 = vmul.f32 %v3351, %v3362
      %v3391 = vmul.f32 %v3352, %v3362
      %v3392 = vmul.f32 %v3353, %v3362
      %v3393 = vmul.f32 %v3354, %v3362
      %v3394 = vmul.f32 %v3355, %v3362
      %v3395 = vmul.f32 %v3356, %v3362
      %v3396 = vld [vmem:[%s3] sm:$0x1]
      %v3398 = vlaneseq
      %v3399 = vshrl.u32 %v3398, 7
      %v3400 = vsub.s32 0, %v3399
      %v3401 = vrot.slane %v3396, %v3400
      %v3403 = vadd.f32 %v3364, %v3401
      %v3404 = vadd.f32 %v3365, %v3401
      %v3405 = vadd.f32 %v3366, %v3401
      %v3406 = vadd.f32 %v3367, %v3401
      %v3407 = vadd.f32 %v3368, %v3401
      %v3408 = vadd.f32 %v3369, %v3401
      %v3409 = vadd.f32 %v3370, %v3401
      %v3410 = vadd.f32 %v3371, %v3401
      %v3411 = vadd.f32 %v3372, %v3401
      %v3412 = vadd.f32 %v3373, %v3401
      %v3413 = vadd.f32 %v3374, %v3401
      %v3414 = vadd.f32 %v3375, %v3401
      %v3415 = vadd.f32 %v3376, %v3401
      %v3416 = vadd.f32 %v3377, %v3401
      %v3417 = vadd.f32 %v3378, %v3401
      %v3418 = vadd.f32 %v3379, %v3401
      %v3419 = vadd.f32 %v3380, %v3401
      %v3420 = vadd.f32 %v3381, %v3401
      %v3421 = vadd.f32 %v3382, %v3401
      %v3422 = vadd.f32 %v3383, %v3401
      %v3423 = vadd.f32 %v3384, %v3401
      %v3424 = vadd.f32 %v3385, %v3401
      %v3425 = vadd.f32 %v3386, %v3401
      %v3426 = vadd.f32 %v3387, %v3401
      %v3427 = vadd.f32 %v3388, %v3401
      %v3428 = vadd.f32 %v3389, %v3401
      %v3429 = vadd.f32 %v3390, %v3401
      %v3430 = vadd.f32 %v3391, %v3401
      %v3431 = vadd.f32 %v3392, %v3401
      %v3432 = vadd.f32 %v3393, %v3401
      %v3433 = vadd.f32 %v3394, %v3401
      %v3434 = vadd.f32 %v3395, %v3401
      %vm3435 = vcmp.gt.f32.partialorder %v3403, 0.0
      %vm3436 = vcmp.gt.f32.partialorder %v3404, 0.0
      %vm3437 = vcmp.gt.f32.partialorder %v3405, 0.0
      %vm3438 = vcmp.gt.f32.partialorder %v3406, 0.0
      %vm3439 = vcmp.gt.f32.partialorder %v3407, 0.0
      %vm3440 = vcmp.gt.f32.partialorder %v3408, 0.0
      %vm3441 = vcmp.gt.f32.partialorder %v3409, 0.0
      %vm3442 = vcmp.gt.f32.partialorder %v3410, 0.0
      %vm3443 = vcmp.gt.f32.partialorder %v3411, 0.0
      %vm3444 = vcmp.gt.f32.partialorder %v3412, 0.0
      %vm3445 = vcmp.gt.f32.partialorder %v3413, 0.0
      %vm3446 = vcmp.gt.f32.partialorder %v3414, 0.0
      %vm3447 = vcmp.gt.f32.partialorder %v3415, 0.0
      %vm3448 = vcmp.gt.f32.partialorder %v3416, 0.0
      %vm3449 = vcmp.gt.f32.partialorder %v3417, 0.0
      %vm3450 = vcmp.gt.f32.partialorder %v3418, 0.0
      %vm3451 = vcmp.gt.f32.partialorder %v3419, 0.0
      %vm3452 = vcmp.gt.f32.partialorder %v3420, 0.0
      %vm3453 = vcmp.gt.f32.partialorder %v3421, 0.0
      %vm3454 = vcmp.gt.f32.partialorder %v3422, 0.0
      %vm3455 = vcmp.gt.f32.partialorder %v3423, 0.0
      %vm3456 = vcmp.gt.f32.partialorder %v3424, 0.0
      %vm3457 = vcmp.gt.f32.partialorder %v3425, 0.0
      %vm3458 = vcmp.gt.f32.partialorder %v3426, 0.0
      %vm3459 = vcmp.gt.f32.partialorder %v3427, 0.0
      %vm3460 = vcmp.gt.f32.partialorder %v3428, 0.0
      %vm3461 = vcmp.gt.f32.partialorder %v3429, 0.0
      %vm3462 = vcmp.gt.f32.partialorder %v3430, 0.0
      %vm3463 = vcmp.gt.f32.partialorder %v3431, 0.0
      %vm3464 = vcmp.gt.f32.partialorder %v3432, 0.0
      %vm3465 = vcmp.gt.f32.partialorder %v3433, 0.0
      %vm3466 = vcmp.gt.f32.partialorder %v3434, 0.0
      %v3467 = vmul.f32 %v3403, 0.3
      %v3468 = vmul.f32 %v3404, 0.3
      %v3469 = vmul.f32 %v3405, 0.3
      %v3470 = vmul.f32 %v3406, 0.3
      %v3471 = vmul.f32 %v3407, 0.3
      %v3472 = vmul.f32 %v3408, 0.3
      %v3473 = vmul.f32 %v3409, 0.3
      %v3474 = vmul.f32 %v3410, 0.3
      %v3475 = vmul.f32 %v3411, 0.3
      %v3476 = vmul.f32 %v3412, 0.3
      %v3477 = vmul.f32 %v3413, 0.3
      %v3478 = vmul.f32 %v3414, 0.3
      %v3479 = vmul.f32 %v3415, 0.3
      %v3480 = vmul.f32 %v3416, 0.3
      %v3481 = vmul.f32 %v3417, 0.3
      %v3482 = vmul.f32 %v3418, 0.3
      %v3483 = vmul.f32 %v3419, 0.3
      %v3484 = vmul.f32 %v3420, 0.3
      %v3485 = vmul.f32 %v3421, 0.3
      %v3486 = vmul.f32 %v3422, 0.3
      %v3487 = vmul.f32 %v3423, 0.3
      %v3488 = vmul.f32 %v3424, 0.3
      %v3489 = vmul.f32 %v3425, 0.3
      %v3490 = vmul.f32 %v3426, 0.3
      %v3491 = vmul.f32 %v3427, 0.3
      %v3492 = vmul.f32 %v3428, 0.3
      %v3493 = vmul.f32 %v3429, 0.3
      %v3494 = vmul.f32 %v3430, 0.3
      %v3495 = vmul.f32 %v3431, 0.3
      %v3496 = vmul.f32 %v3432, 0.3
      %v3497 = vmul.f32 %v3433, 0.3
      %v3498 = vmul.f32 %v3434, 0.3
      %v3499 = vsel %vm3435, %v3403, %v3467
      %v3500 = vsel %vm3436, %v3404, %v3468
      %v3501 = vsel %vm3437, %v3405, %v3469
      %v3502 = vsel %vm3438, %v3406, %v3470
      %v3503 = vsel %vm3439, %v3407, %v3471
      %v3504 = vsel %vm3440, %v3408, %v3472
      %v3505 = vsel %vm3441, %v3409, %v3473
      %v3506 = vsel %vm3442, %v3410, %v3474
      %v3507 = vsel %vm3443, %v3411, %v3475
      %v3508 = vsel %vm3444, %v3412, %v3476
      %v3509 = vsel %vm3445, %v3413, %v3477
      %v3510 = vsel %vm3446, %v3414, %v3478
      %v3511 = vsel %vm3447, %v3415, %v3479
      %v3512 = vsel %vm3448, %v3416, %v3480
      %v3513 = vsel %vm3449, %v3417, %v3481
      %v3514 = vsel %vm3450, %v3418, %v3482
      %v3515 = vsel %vm3451, %v3419, %v3483
      %v3516 = vsel %vm3452, %v3420, %v3484
      %v3517 = vsel %vm3453, %v3421, %v3485
      %v3518 = vsel %vm3454, %v3422, %v3486
      %v3519 = vsel %vm3455, %v3423, %v3487
      %v3520 = vsel %vm3456, %v3424, %v3488
      %v3521 = vsel %vm3457, %v3425, %v3489
      %v3522 = vsel %vm3458, %v3426, %v3490
      %v3523 = vsel %vm3459, %v3427, %v3491
      %v3524 = vsel %vm3460, %v3428, %v3492
      %v3525 = vsel %vm3461, %v3429, %v3493
      %v3526 = vsel %vm3462, %v3430, %v3494
      %v3527 = vsel %vm3463, %v3431, %v3495
      %v3528 = vsel %vm3464, %v3432, %v3496
      %v3529 = vsel %vm3465, %v3433, %v3497
      %v3530 = vsel %vm3466, %v3434, %v3498
      %v3547 = vrot.slane %v3502, 7
      %v3548 = vrot.slane %v3500, 7
      %v3549 = vrot.slane %v3504, 7
      %v3550 = vrot.slane %v3506, 7
      %v3551 = vrot.slane %v3508, 7
      %v3552 = vrot.slane %v3510, 7
      %v3553 = vrot.slane %v3512, 7
      %v3554 = vrot.slane %v3514, 7
      %v3555 = vrot.slane %v3516, 7
      %v3556 = vrot.slane %v3518, 7
      %v3557 = vrot.slane %v3520, 7
      %v3558 = vrot.slane %v3522, 7
      %v3559 = vrot.slane %v3524, 7
      %v3560 = vrot.slane %v3526, 7
      %v3561 = vrot.slane %v3528, 7
      %v3562 = vrot.slane %v3530, 7
      %v3595 = vrot.slane %v3501, 7
      %v3596 = vsel %vm676, %v3595, %v3547
      %v3597 = vrot.slane %v3499, 7
      %v3598 = vsel %vm676, %v3597, %v3548
      %v3599 = vrot.slane %v3503, 7
      %v3600 = vsel %vm676, %v3599, %v3549
      %v3601 = vrot.slane %v3505, 7
      %v3602 = vsel %vm676, %v3601, %v3550
      %v3603 = vrot.slane %v3507, 7
      %v3604 = vsel %vm676, %v3603, %v3551
      %v3605 = vrot.slane %v3509, 7
      %v3606 = vsel %vm676, %v3605, %v3552
      %v3607 = vrot.slane %v3511, 7
      %v3608 = vsel %vm676, %v3607, %v3553
      %v3609 = vrot.slane %v3513, 7
      %v3610 = vsel %vm676, %v3609, %v3554
      %v3611 = vrot.slane %v3515, 7
      %v3612 = vsel %vm676, %v3611, %v3555
      %v3613 = vrot.slane %v3517, 7
      %v3614 = vsel %vm676, %v3613, %v3556
      %v3615 = vrot.slane %v3519, 7
      %v3616 = vsel %vm676, %v3615, %v3557
      %v3617 = vrot.slane %v3521, 7
      %v3618 = vsel %vm676, %v3617, %v3558
      %v3619 = vrot.slane %v3523, 7
      %v3620 = vsel %vm676, %v3619, %v3559
      %v3621 = vrot.slane %v3525, 7
      %v3622 = vsel %vm676, %v3621, %v3560
      %v3623 = vrot.slane %v3527, 7
      %v3624 = vsel %vm676, %v3623, %v3561
      %v3625 = vrot.slane %v3529, 7
      %v3626 = vsel %vm676, %v3625, %v3562
      %v3643 = vsel %vm676, %v3547, %v3595
      %v3644 = vsel %vm676, %v3548, %v3597
      %v3645 = vsel %vm676, %v3549, %v3599
      %v3646 = vsel %vm676, %v3550, %v3601
      %v3647 = vsel %vm676, %v3551, %v3603
      %v3648 = vsel %vm676, %v3552, %v3605
      %v3649 = vsel %vm676, %v3553, %v3607
      %v3650 = vsel %vm676, %v3554, %v3609
      %v3651 = vsel %vm676, %v3555, %v3611
      %v3652 = vsel %vm676, %v3556, %v3613
      %v3653 = vsel %vm676, %v3557, %v3615
      %v3654 = vsel %vm676, %v3558, %v3617
      %v3655 = vsel %vm676, %v3559, %v3619
      %v3656 = vsel %vm676, %v3560, %v3621
      %v3657 = vsel %vm676, %v3561, %v3623
      %v3658 = vsel %vm676, %v3562, %v3625
      %v3659 = vld [vmem:[%s4] sm:$0xff]
      %s3660 = scalar_lea.vmem %s4, 24
      %v3661 = vld [vmem:[%s3660] sm:$0xff]
      %vm3662 = vcmask 64512
      %v3664 = vsel %vm3662, %v3644, 0
      %v3666 = vsel %vm3662, %v3598, 0
      %v3669 = vsel %vm3662, %v3643, 0
      %v3671 = vsel %vm3662, %v3596, 0
      %v3674 = vsel %vm3662, %v3645, 0
      %v3676 = vsel %vm3662, %v3600, 0
      %v3679 = vsel %vm3662, %v3646, 0
      %v3681 = vsel %vm3662, %v3602, 0
      %v3684 = vsel %vm3662, %v3647, 0
      %v3686 = vsel %vm3662, %v3604, 0
      %v3689 = vsel %vm3662, %v3648, 0
      %v3691 = vsel %vm3662, %v3606, 0
      %v3694 = vsel %vm3662, %v3649, 0
      %v3696 = vsel %vm3662, %v3608, 0
      %v3699 = vsel %vm3662, %v3650, 0
      %v3701 = vsel %vm3662, %v3610, 0
      %v3704 = vsel %vm3662, %v3651, 0
      %v3706 = vsel %vm3662, %v3612, 0
      %v3709 = vsel %vm3662, %v3652, 0
      %v3711 = vsel %vm3662, %v3614, 0
      %v3714 = vsel %vm3662, %v3653, 0
      %v3716 = vsel %vm3662, %v3616, 0
      %v3719 = vsel %vm3662, %v3654, 0
      %v3721 = vsel %vm3662, %v3618, 0
      %v3724 = vsel %vm3662, %v3655, 0
      %v3726 = vsel %vm3662, %v3620, 0
      %v3729 = vsel %vm3662, %v3656, 0
      %v3731 = vsel %vm3662, %v3622, 0
      %v3734 = vsel %vm3662, %v3657, 0
      %v3736 = vsel %vm3662, %v3624, 0
      %v3739 = vsel %vm3662, %v3658, 0
      %v3741 = vsel %vm3662, %v3626, 0
      %3743 = vmatprep.subr.mxu0 0.0
      %3744 = vmatpush1.msra.mxu0 %v3661
      %3745 = vmatprep.subr.mxu0 0.0
      %3746 = vmatpush1.msra.mxu0 0.0
      %3747 = vmatprep.subr.mxu0 0.0
      %3748 = vmatpush1.msra.mxu0 0.0
      %3749 = vmatprep.subr.mxu0 0.0
      %3750 = vmatpush1.msra.mxu0 0.0
      %3751 = vmatprep.subr.mxu0 0.0
      %3752 = vmatpush1.msra.mxu0 0.0
      %3753 = vmatprep.subr.mxu0 0.0
      %3754 = vmatpush1.msra.mxu0 0.0
      %3755 = vmatprep.subr.mxu0 0.0
      %3756 = vmatpush1.msra.mxu0 0.0
      %3757 = vmatprep.subr.mxu0 0.0
      %3758 = vmatpush1.msra.mxu0 0.0
      %3759 = vmatprep.subr.mxu0 0.0
      %3760 = vmatpush1.msra.mxu0 0.0
      %3761 = vmatprep.subr.mxu0 0.0
      %3762 = vmatpush1.msra.mxu0 0.0
      %3763 = vmatprep.subr.mxu0 0.0
      %3764 = vmatpush1.msra.mxu0 0.0
      %3765 = vmatprep.subr.mxu0 0.0
      %3766 = vmatpush1.msra.mxu0 0.0
      %3767 = vmatprep.subr.mxu0 0.0
      %3768 = vmatpush1.msra.mxu0 0.0
      %3769 = vmatprep.subr.mxu0 0.0
      %3770 = vmatpush1.msra.mxu0 0.0
      %3771 = vmatprep.subr.mxu0 0.0
      %3772 = vmatpush1.msra.mxu0 0.0
      %3773 = vmatprep.subr.mxu0 0.0
      %3774 = vmatpush1.msra.mxu0 0.0
      %3775 = vmatprep.subr.mxu0 0.0
      %3776 = vmatpush1.msra.mxu0 0.0
      %3777 = vmatprep.subr.mxu0 0.0
      %3778 = vmatpush1.msra.mxu0 0.0
      %3779 = vmatprep.subr.mxu0 0.0
      %3780 = vmatpush1.msra.mxu0 0.0
      %3781 = vmatprep.subr.mxu0 0.0
      %3782 = vmatpush1.msra.mxu0 0.0
      %3783 = vmatprep.subr.mxu0 0.0
      %3784 = vmatpush1.msra.mxu0 0.0
      %3785 = vmatprep.subr.mxu0 0.0
      %3786 = vmatpush1.msra.mxu0 0.0
      %3787 = vmatprep.subr.mxu0 0.0
      %3788 = vmatpush1.msra.mxu0 0.0
      %3789 = vmatprep.subr.mxu0 0.0
      %3790 = vmatpush1.msra.mxu0 0.0
      %3791 = vmatprep.subr.mxu0 0.0
      %3792 = vmatpush1.msra.mxu0 0.0
      %3793 = vmatprep.subr.mxu0 0.0
      %3794 = vmatpush1.msra.mxu0 0.0
      %3795 = vmatprep.subr.mxu0 0.0
      %3796 = vmatpush1.msra.mxu0 0.0
      %3797 = vmatprep.subr.mxu0 0.0
      %3798 = vmatpush1.msra.mxu0 0.0
      %3799 = vmatprep.subr.mxu0 0.0
      %3800 = vmatpush1.msra.mxu0 0.0
      %3801 = vmatprep.subr.mxu0 0.0
      %3802 = vmatpush1.msra.mxu0 0.0
      %3803 = vmatprep.subr.mxu0 0.0
      %3804 = vmatpush1.msra.mxu0 0.0
      %3805 = vmatprep.subr.mxu0 0.0
      %3806 = vmatpush1.msra.mxu0 0.0
      %3807 = vmatprep.mubr.f32.mxu0 0.0
      %3808 = vmatmul.mubr.f32.gmra.mrb[0].mxu0 %v3664
      %v3809 = vpop.f32.mrb[0].mxu0
      %v3810 = vadd.f32 0.0, %v3809
      %v3811 = vpop.f32.mrb[0].mxu0
      %3812 = vmatprep.mubr.f32.mxu0 0.0
      %3813 = vmatmul.mubr.f32.gmra.mrb[0].mxu0 %v3666
      %v3814 = vpop.f32.mrb[0].mxu0
      %v3815 = vadd.f32 0.0, %v3814
      %v3816 = vpop.f32.mrb[0].mxu0
      %3817 = vmatprep.mubr.f32.mxu0 0.0
      %3818 = vmatmul.mubr.f32.gmra.mrb[0].mxu0 %v3669
      %v3819 = vpop.f32.mrb[0].mxu0
      %v3820 = vadd.f32 0.0, %v3819
      %v3821 = vpop.f32.mrb[0].mxu0
      %3822 = vmatprep.mubr.f32.mxu0 0.0
      %3823 = vmatmul.mubr.f32.gmra.mrb[0].mxu0 %v3671
      %v3824 = vpop.f32.mrb[0].mxu0
      %v3825 = vadd.f32 0.0, %v3824
      %v3826 = vpop.f32.mrb[0].mxu0
      %3827 = vmatprep.mubr.f32.mxu0 0.0
      %3828 = vmatmul.mubr.f32.gmra.mrb[0].mxu0 %v3674
      %v3829 = vpop.f32.mrb[0].mxu0
      %v3830 = vadd.f32 0.0, %v3829
      %v3831 = vpop.f32.mrb[0].mxu0
      %3832 = vmatprep.mubr.f32.mxu0 0.0
      %3833 = vmatmul.mubr.f32.gmra.mrb[0].mxu0 %v3676
      %v3834 = vpop.f32.mrb[0].mxu0
      %v3835 = vadd.f32 0.0, %v3834
      %v3836 = vpop.f32.mrb[0].mxu0
      %3837 = vmatprep.mubr.f32.mxu0 0.0
      %3838 = vmatmul.mubr.f32.gmra.mrb[0].mxu0 %v3679
      %v3839 = vpop.f32.mrb[0].mxu0
      %v3840 = vadd.f32 0.0, %v3839
      %v3841 = vpop.f32.mrb[0].mxu0
      %3842 = vmatprep.mubr.f32.mxu0 0.0
      %3843 = vmatmul.mubr.f32.gmra.mrb[0].mxu0 %v3681
      %v3844 = vpop.f32.mrb[0].mxu0
      %v3845 = vadd.f32 0.0, %v3844
      %v3846 = vpop.f32.mrb[0].mxu0
      %3847 = vmatprep.mubr.f32.mxu0 0.0
      %3848 = vmatmul.mubr.f32.gmra.mrb[0].mxu0 %v3684
      %v3849 = vpop.f32.mrb[0].mxu0
      %v3850 = vadd.f32 0.0, %v3849
      %v3851 = vpop.f32.mrb[0].mxu0
      %3852 = vmatprep.mubr.f32.mxu0 0.0
      %3853 = vmatmul.mubr.f32.gmra.mrb[0].mxu0 %v3686
      %v3854 = vpop.f32.mrb[0].mxu0
      %v3855 = vadd.f32 0.0, %v3854
      %v3856 = vpop.f32.mrb[0].mxu0
      %3857 = vmatprep.mubr.f32.mxu0 0.0
      %3858 = vmatmul.mubr.f32.gmra.mrb[0].mxu0 %v3689
      %v3859 = vpop.f32.mrb[0].mxu0
      %v3860 = vadd.f32 0.0, %v3859
      %v3861 = vpop.f32.mrb[0].mxu0
      %3862 = vmatprep.mubr.f32.mxu0 0.0
      %3863 = vmatmul.mubr.f32.gmra.mrb[0].mxu0 %v3691
      %v3864 = vpop.f32.mrb[0].mxu0
      %v3865 = vadd.f32 0.0, %v3864
      %v3866 = vpop.f32.mrb[0].mxu0
      %3867 = vmatprep.mubr.f32.mxu0 0.0
      %3868 = vmatmul.mubr.f32.gmra.mrb[0].mxu0 %v3694
      %v3869 = vpop.f32.mrb[0].mxu0
      %v3870 = vadd.f32 0.0, %v3869
      %v3871 = vpop.f32.mrb[0].mxu0
      %3872 = vmatprep.mubr.f32.mxu0 0.0
      %3873 = vmatmul.mubr.f32.gmra.mrb[0].mxu0 %v3696
      %v3874 = vpop.f32.mrb[0].mxu0
      %v3875 = vadd.f32 0.0, %v3874
      %v3876 = vpop.f32.mrb[0].mxu0
      %3877 = vmatprep.mubr.f32.mxu0 0.0
      %3878 = vmatmul.mubr.f32.gmra.mrb[0].mxu0 %v3699
      %v3879 = vpop.f32.mrb[0].mxu0
      %v3880 = vadd.f32 0.0, %v3879
      %v3881 = vpop.f32.mrb[0].mxu0
      %3882 = vmatprep.mubr.f32.mxu0 0.0
      %3883 = vmatmul.mubr.f32.gmra.mrb[0].mxu0 %v3701
      %v3884 = vpop.f32.mrb[0].mxu0
      %v3885 = vadd.f32 0.0, %v3884
      %v3886 = vpop.f32.mrb[0].mxu0
      %3887 = vmatprep.mubr.f32.mxu0 0.0
      %3888 = vmatmul.mubr.f32.gmra.mrb[0].mxu0 %v3704
      %v3889 = vpop.f32.mrb[0].mxu0
      %v3890 = vadd.f32 0.0, %v3889
      %v3891 = vpop.f32.mrb[0].mxu0
      %3892 = vmatprep.mubr.f32.mxu0 0.0
      %3893 = vmatmul.mubr.f32.gmra.mrb[0].mxu0 %v3706
      %v3894 = vpop.f32.mrb[0].mxu0
      %v3895 = vadd.f32 0.0, %v3894
      %v3896 = vpop.f32.mrb[0].mxu0
      %3897 = vmatprep.mubr.f32.mxu0 0.0
      %3898 = vmatmul.mubr.f32.gmra.mrb[0].mxu0 %v3709
      %v3899 = vpop.f32.mrb[0].mxu0
      %v3900 = vadd.f32 0.0, %v3899
      %v3901 = vpop.f32.mrb[0].mxu0
      %3902 = vmatprep.mubr.f32.mxu0 0.0
      %3903 = vmatmul.mubr.f32.gmra.mrb[0].mxu0 %v3711
      %v3904 = vpop.f32.mrb[0].mxu0
      %v3905 = vadd.f32 0.0, %v3904
      %v3906 = vpop.f32.mrb[0].mxu0
      %3907 = vmatprep.mubr.f32.mxu0 0.0
      %3908 = vmatmul.mubr.f32.gmra.mrb[0].mxu0 %v3714
      %v3909 = vpop.f32.mrb[0].mxu0
      %v3910 = vadd.f32 0.0, %v3909
      %v3911 = vpop.f32.mrb[0].mxu0
      %3912 = vmatprep.mubr.f32.mxu0 0.0
      %3913 = vmatmul.mubr.f32.gmra.mrb[0].mxu0 %v3716
      %v3914 = vpop.f32.mrb[0].mxu0
      %v3915 = vadd.f32 0.0, %v3914
      %v3916 = vpop.f32.mrb[0].mxu0
      %3917 = vmatprep.mubr.f32.mxu0 0.0
      %3918 = vmatmul.mubr.f32.gmra.mrb[0].mxu0 %v3719
      %v3919 = vpop.f32.mrb[0].mxu0
      %v3920 = vadd.f32 0.0, %v3919
      %v3921 = vpop.f32.mrb[0].mxu0
      %3922 = vmatprep.mubr.f32.mxu0 0.0
      %3923 = vmatmul.mubr.f32.gmra.mrb[0].mxu0 %v3721
      %v3924 = vpop.f32.mrb[0].mxu0
      %v3925 = vadd.f32 0.0, %v3924
      %v3926 = vpop.f32.mrb[0].mxu0
      %3927 = vmatprep.mubr.f32.mxu0 0.0
      %3928 = vmatmul.mubr.f32.gmra.mrb[0].mxu0 %v3724
      %v3929 = vpop.f32.mrb[0].mxu0
      %v3930 = vadd.f32 0.0, %v3929
      %v3931 = vpop.f32.mrb[0].mxu0
      %3932 = vmatprep.mubr.f32.mxu0 0.0
      %3933 = vmatmul.mubr.f32.gmra.mrb[0].mxu0 %v3726
      %v3934 = vpop.f32.mrb[0].mxu0
      %v3935 = vadd.f32 0.0, %v3934
      %v3936 = vpop.f32.mrb[0].mxu0
      %3937 = vmatprep.mubr.f32.mxu0 0.0
      %3938 = vmatmul.mubr.f32.gmra.mrb[0].mxu0 %v3729
      %v3939 = vpop.f32.mrb[0].mxu0
      %v3940 = vadd.f32 0.0, %v3939
      %v3941 = vpop.f32.mrb[0].mxu0
      %3942 = vmatprep.mubr.f32.mxu0 0.0
      %3943 = vmatmul.mubr.f32.gmra.mrb[0].mxu0 %v3731
      %v3944 = vpop.f32.mrb[0].mxu0
      %v3945 = vadd.f32 0.0, %v3944
      %v3946 = vpop.f32.mrb[0].mxu0
      %3947 = vmatprep.mubr.f32.mxu0 0.0
      %3948 = vmatmul.mubr.f32.gmra.mrb[0].mxu0 %v3734
      %v3949 = vpop.f32.mrb[0].mxu0
      %v3950 = vadd.f32 0.0, %v3949
      %v3951 = vpop.f32.mrb[0].mxu0
      %3952 = vmatprep.mubr.f32.mxu0 0.0
      %3953 = vmatmul.mubr.f32.gmra.mrb[0].mxu0 %v3736
      %v3954 = vpop.f32.mrb[0].mxu0
      %v3955 = vadd.f32 0.0, %v3954
      %v3956 = vpop.f32.mrb[0].mxu0
      %3957 = vmatprep.mubr.f32.mxu0 0.0
      %3958 = vmatmul.mubr.f32.gmra.mrb[0].mxu0 %v3739
      %v3959 = vpop.f32.mrb[0].mxu0
      %v3960 = vadd.f32 0.0, %v3959
      %v3961 = vpop.f32.mrb[0].mxu0
      %3962 = vmatprep.mubr.f32.mxu0 0.0
      %3963 = vmatmul.mubr.f32.gmra.mrb[0].mxu0 %v3741
      %v3964 = vpop.f32.mrb[0].mxu0
      %v3965 = vadd.f32 0.0, %v3964
      %v3966 = vpop.f32.mrb[0].mxu0
      %3967 = vdwg.mxu0
      %3968 = vmatprep.subr.mxu0 0.0
      %3969 = vmatpush1.msra.mxu0 %v3659
      %3970 = vmatprep.subr.mxu0 0.0
      %3971 = vmatpush1.msra.mxu0 0.0
      %3972 = vmatprep.subr.mxu0 0.0
      %3973 = vmatpush1.msra.mxu0 0.0
      %3974 = vmatprep.subr.mxu0 0.0
      %3975 = vmatpush1.msra.mxu0 0.0
      %3976 = vmatprep.subr.mxu0 0.0
      %3977 = vmatpush1.msra.mxu0 0.0
      %3978 = vmatprep.subr.mxu0 0.0
      %3979 = vmatpush1.msra.mxu0 0.0
      %3980 = vmatprep.subr.mxu0 0.0
      %3981 = vmatpush1.msra.mxu0 0.0
      %3982 = vmatprep.subr.mxu0 0.0
      %3983 = vmatpush1.msra.mxu0 0.0
      %3984 = vmatprep.subr.mxu0 0.0
      %3985 = vmatpush1.msra.mxu0 0.0
      %3986 = vmatprep.subr.mxu0 0.0
      %3987 = vmatpush1.msra.mxu0 0.0
      %3988 = vmatprep.subr.mxu0 0.0
      %3989 = vmatpush1.msra.mxu0 0.0
      %3990 = vmatprep.subr.mxu0 0.0
      %3991 = vmatpush1.msra.mxu0 0.0
      %3992 = vmatprep.subr.mxu0 0.0
      %3993 = vmatpush1.msra.mxu0 0.0
      %3994 = vmatprep.subr.mxu0 0.0
      %3995 = vmatpush1.msra.mxu0 0.0
      %3996 = vmatprep.subr.mxu0 0.0
      %3997 = vmatpush1.msra.mxu0 0.0
      %3998 = vmatprep.subr.mxu0 0.0
      %3999 = vmatpush1.msra.mxu0 0.0
      %4000 = vmatprep.subr.mxu0 0.0
      %4001 = vmatpush1.msra.mxu0 0.0
      %4002 = vmatprep.subr.mxu0 0.0
      %4003 = vmatpush1.msra.mxu0 0.0
      %4004 = vmatprep.subr.mxu0 0.0
      %4005 = vmatpush1.msra.mxu0 0.0
      %4006 = vmatprep.subr.mxu0 0.0
      %4007 = vmatpush1.msra.mxu0 0.0
      %4008 = vmatprep.subr.mxu0 0.0
      %4009 = vmatpush1.msra.mxu0 0.0
      %4010 = vmatprep.subr.mxu0 0.0
      %4011 = vmatpush1.msra.mxu0 0.0
      %4012 = vmatprep.subr.mxu0 0.0
      %4013 = vmatpush1.msra.mxu0 0.0
      %4014 = vmatprep.subr.mxu0 0.0
      %4015 = vmatpush1.msra.mxu0 0.0
      %4016 = vmatprep.subr.mxu0 0.0
      %4017 = vmatpush1.msra.mxu0 0.0
      %4018 = vmatprep.subr.mxu0 0.0
      %4019 = vmatpush1.msra.mxu0 0.0
      %4020 = vmatprep.subr.mxu0 0.0
      %4021 = vmatpush1.msra.mxu0 0.0
      %4022 = vmatprep.subr.mxu0 0.0
      %4023 = vmatpush1.msra.mxu0 0.0
      %4024 = vmatprep.subr.mxu0 0.0
      %4025 = vmatpush1.msra.mxu0 0.0
      %4026 = vmatprep.subr.mxu0 0.0
      %4027 = vmatpush1.msra.mxu0 0.0
      %4028 = vmatprep.subr.mxu0 0.0
      %4029 = vmatpush1.msra.mxu0 0.0
      %4030 = vmatprep.subr.mxu0 0.0
      %4031 = vmatpush1.msra.mxu0 0.0
      %4032 = vmatprep.mubr.f32.mxu0 0.0
      %4033 = vmatmul.mubr.f32.gmra.mrb[0].mxu0 %v3669
      %v4034 = vpop.f32.mrb[0].mxu0
      %v4035 = vadd.f32 %v3810, %v4034
      %v4036 = vpop.f32.mrb[0].mxu0
      %4037 = vmatprep.mubr.f32.mxu0 0.0
      %4038 = vmatmul.mubr.f32.gmra.mrb[0].mxu0 %v3671
      %v4039 = vpop.f32.mrb[0].mxu0
      %v4040 = vadd.f32 %v3815, %v4039
      %v4041 = vpop.f32.mrb[0].mxu0
      %4042 = vmatprep.mubr.f32.mxu0 0.0
      %4043 = vmatmul.mubr.f32.gmra.mrb[0].mxu0 %v3664
      %v4044 = vpop.f32.mrb[0].mxu0
      %v4045 = vadd.f32 %v3820, %v4044
      %v4046 = vpop.f32.mrb[0].mxu0
      %4047 = vmatprep.mubr.f32.mxu0 0.0
      %4048 = vmatmul.mubr.f32.gmra.mrb[0].mxu0 %v3666
      %v4049 = vpop.f32.mrb[0].mxu0
      %v4050 = vadd.f32 %v3825, %v4049
      %v4051 = vpop.f32.mrb[0].mxu0
      %4052 = vmatprep.mubr.f32.mxu0 0.0
      %4053 = vmatmul.mubr.f32.gmra.mrb[0].mxu0 %v3669
      %v4054 = vpop.f32.mrb[0].mxu0
      %v4055 = vadd.f32 %v3830, %v4054
      %v4056 = vpop.f32.mrb[0].mxu0
      %4057 = vmatprep.mubr.f32.mxu0 0.0
      %4058 = vmatmul.mubr.f32.gmra.mrb[0].mxu0 %v3671
      %v4059 = vpop.f32.mrb[0].mxu0
      %v4060 = vadd.f32 %v3835, %v4059
      %v4061 = vpop.f32.mrb[0].mxu0
      %4062 = vmatprep.mubr.f32.mxu0 0.0
      %4063 = vmatmul.mubr.f32.gmra.mrb[0].mxu0 %v3674
      %v4064 = vpop.f32.mrb[0].mxu0
      %v4065 = vadd.f32 %v3840, %v4064
      %v4066 = vpop.f32.mrb[0].mxu0
      %4067 = vmatprep.mubr.f32.mxu0 0.0
      %4068 = vmatmul.mubr.f32.gmra.mrb[0].mxu0 %v3676
      %v4069 = vpop.f32.mrb[0].mxu0
      %v4070 = vadd.f32 %v3845, %v4069
      %v4071 = vpop.f32.mrb[0].mxu0
      %4072 = vmatprep.mubr.f32.mxu0 0.0
      %4073 = vmatmul.mubr.f32.gmra.mrb[0].mxu0 %v3679
      %v4074 = vpop.f32.mrb[0].mxu0
      %v4075 = vadd.f32 %v3850, %v4074
      %v4076 = vpop.f32.mrb[0].mxu0
      %4077 = vmatprep.mubr.f32.mxu0 0.0
      %4078 = vmatmul.mubr.f32.gmra.mrb[0].mxu0 %v3681
      %v4079 = vpop.f32.mrb[0].mxu0
      %v4080 = vadd.f32 %v3855, %v4079
      %v4081 = vpop.f32.mrb[0].mxu0
      %4082 = vmatprep.mubr.f32.mxu0 0.0
      %4083 = vmatmul.mubr.f32.gmra.mrb[0].mxu0 %v3684
      %v4084 = vpop.f32.mrb[0].mxu0
      %v4085 = vadd.f32 %v3860, %v4084
      %v4086 = vpop.f32.mrb[0].mxu0
      %4087 = vmatprep.mubr.f32.mxu0 0.0
      %4088 = vmatmul.mubr.f32.gmra.mrb[0].mxu0 %v3686
      %v4089 = vpop.f32.mrb[0].mxu0
      %v4090 = vadd.f32 %v3865, %v4089
      %v4091 = vpop.f32.mrb[0].mxu0
      %4092 = vmatprep.mubr.f32.mxu0 0.0
      %4093 = vmatmul.mubr.f32.gmra.mrb[0].mxu0 %v3689
      %v4094 = vpop.f32.mrb[0].mxu0
      %v4095 = vadd.f32 %v3870, %v4094
      %v4096 = vpop.f32.mrb[0].mxu0
      %4097 = vmatprep.mubr.f32.mxu0 0.0
      %4098 = vmatmul.mubr.f32.gmra.mrb[0].mxu0 %v3691
      %v4099 = vpop.f32.mrb[0].mxu0
      %v4100 = vadd.f32 %v3875, %v4099
      %v4101 = vpop.f32.mrb[0].mxu0
      %4102 = vmatprep.mubr.f32.mxu0 0.0
      %4103 = vmatmul.mubr.f32.gmra.mrb[0].mxu0 %v3694
      %v4104 = vpop.f32.mrb[0].mxu0
      %v4105 = vadd.f32 %v3880, %v4104
      %v4106 = vpop.f32.mrb[0].mxu0
      %4107 = vmatprep.mubr.f32.mxu0 0.0
      %4108 = vmatmul.mubr.f32.gmra.mrb[0].mxu0 %v3696
      %v4109 = vpop.f32.mrb[0].mxu0
      %v4110 = vadd.f32 %v3885, %v4109
      %v4111 = vpop.f32.mrb[0].mxu0
      %4112 = vmatprep.mubr.f32.mxu0 0.0
      %4113 = vmatmul.mubr.f32.gmra.mrb[0].mxu0 %v3699
      %v4114 = vpop.f32.mrb[0].mxu0
      %v4115 = vadd.f32 %v3890, %v4114
      %v4116 = vpop.f32.mrb[0].mxu0
      %4117 = vmatprep.mubr.f32.mxu0 0.0
      %4118 = vmatmul.mubr.f32.gmra.mrb[0].mxu0 %v3701
      %v4119 = vpop.f32.mrb[0].mxu0
      %v4120 = vadd.f32 %v3895, %v4119
      %v4121 = vpop.f32.mrb[0].mxu0
      %4122 = vmatprep.mubr.f32.mxu0 0.0
      %4123 = vmatmul.mubr.f32.gmra.mrb[0].mxu0 %v3704
      %v4124 = vpop.f32.mrb[0].mxu0
      %v4125 = vadd.f32 %v3900, %v4124
      %v4126 = vpop.f32.mrb[0].mxu0
      %4127 = vmatprep.mubr.f32.mxu0 0.0
      %4128 = vmatmul.mubr.f32.gmra.mrb[0].mxu0 %v3706
      %v4129 = vpop.f32.mrb[0].mxu0
      %v4130 = vadd.f32 %v3905, %v4129
      %v4131 = vpop.f32.mrb[0].mxu0
      %4132 = vmatprep.mubr.f32.mxu0 0.0
      %4133 = vmatmul.mubr.f32.gmra.mrb[0].mxu0 %v3709
      %v4134 = vpop.f32.mrb[0].mxu0
      %v4135 = vadd.f32 %v3910, %v4134
      %v4136 = vpop.f32.mrb[0].mxu0
      %4137 = vmatprep.mubr.f32.mxu0 0.0
      %4138 = vmatmul.mubr.f32.gmra.mrb[0].mxu0 %v3711
      %v4139 = vpop.f32.mrb[0].mxu0
      %v4140 = vadd.f32 %v3915, %v4139
      %v4141 = vpop.f32.mrb[0].mxu0
      %4142 = vmatprep.mubr.f32.mxu0 0.0
      %4143 = vmatmul.mubr.f32.gmra.mrb[0].mxu0 %v3714
      %v4144 = vpop.f32.mrb[0].mxu0
      %v4145 = vadd.f32 %v3920, %v4144
      %v4146 = vpop.f32.mrb[0].mxu0
      %4147 = vmatprep.mubr.f32.mxu0 0.0
      %4148 = vmatmul.mubr.f32.gmra.mrb[0].mxu0 %v3716
      %v4149 = vpop.f32.mrb[0].mxu0
      %v4150 = vadd.f32 %v3925, %v4149
      %v4151 = vpop.f32.mrb[0].mxu0
      %4152 = vmatprep.mubr.f32.mxu0 0.0
      %4153 = vmatmul.mubr.f32.gmra.mrb[0].mxu0 %v3719
      %v4154 = vpop.f32.mrb[0].mxu0
      %v4155 = vadd.f32 %v3930, %v4154
      %v4156 = vpop.f32.mrb[0].mxu0
      %4157 = vmatprep.mubr.f32.mxu0 0.0
      %4158 = vmatmul.mubr.f32.gmra.mrb[0].mxu0 %v3721
      %v4159 = vpop.f32.mrb[0].mxu0
      %v4160 = vadd.f32 %v3935, %v4159
      %v4161 = vpop.f32.mrb[0].mxu0
      %4162 = vmatprep.mubr.f32.mxu0 0.0
      %4163 = vmatmul.mubr.f32.gmra.mrb[0].mxu0 %v3724
      %v4164 = vpop.f32.mrb[0].mxu0
      %v4165 = vadd.f32 %v3940, %v4164
      %v4166 = vpop.f32.mrb[0].mxu0
      %4167 = vmatprep.mubr.f32.mxu0 0.0
      %4168 = vmatmul.mubr.f32.gmra.mrb[0].mxu0 %v3726
      %v4169 = vpop.f32.mrb[0].mxu0
      %v4170 = vadd.f32 %v3945, %v4169
      %v4171 = vpop.f32.mrb[0].mxu0
      %4172 = vmatprep.mubr.f32.mxu0 0.0
      %4173 = vmatmul.mubr.f32.gmra.mrb[0].mxu0 %v3729
      %v4174 = vpop.f32.mrb[0].mxu0
      %v4175 = vadd.f32 %v3950, %v4174
      %v4176 = vpop.f32.mrb[0].mxu0
      %4177 = vmatprep.mubr.f32.mxu0 0.0
      %4178 = vmatmul.mubr.f32.gmra.mrb[0].mxu0 %v3731
      %v4179 = vpop.f32.mrb[0].mxu0
      %v4180 = vadd.f32 %v3955, %v4179
      %v4181 = vpop.f32.mrb[0].mxu0
      %4182 = vmatprep.mubr.f32.mxu0 0.0
      %4183 = vmatmul.mubr.f32.gmra.mrb[0].mxu0 %v3734
      %v4184 = vpop.f32.mrb[0].mxu0
      %v4185 = vadd.f32 %v3960, %v4184
      %v4186 = vpop.f32.mrb[0].mxu0
      %4187 = vmatprep.mubr.f32.mxu0 0.0
      %4188 = vmatmul.mubr.f32.gmra.mrb[0].mxu0 %v3736
      %v4189 = vpop.f32.mrb[0].mxu0
      %v4190 = vadd.f32 %v3965, %v4189
      %v4191 = vpop.f32.mrb[0].mxu0
      %4192 = vdwg.mxu0
      %s4193 = scalar_lea.vmem %s4, 48
      %v4194 = vld [vmem:[%s4193] sm:$0xff]
      %4195 = vmatprep.subr.mxu0 0.0
      %4196 = vmatpush1.msra.mxu0 %v4194
      %4197 = vmatprep.subr.mxu0 0.0
      %4198 = vmatpush1.msra.mxu0 0.0
      %4199 = vmatprep.subr.mxu0 0.0
      %4200 = vmatpush1.msra.mxu0 0.0
      %4201 = vmatprep.subr.mxu0 0.0
      %4202 = vmatpush1.msra.mxu0 0.0
      %4203 = vmatprep.subr.mxu0 0.0
      %4204 = vmatpush1.msra.mxu0 0.0
      %4205 = vmatprep.subr.mxu0 0.0
      %4206 = vmatpush1.msra.mxu0 0.0
      %4207 = vmatprep.subr.mxu0 0.0
      %4208 = vmatpush1.msra.mxu0 0.0
      %4209 = vmatprep.subr.mxu0 0.0
      %4210 = vmatpush1.msra.mxu0 0.0
      %4211 = vmatprep.subr.mxu0 0.0
      %4212 = vmatpush1.msra.mxu0 0.0
      %4213 = vmatprep.subr.mxu0 0.0
      %4214 = vmatpush1.msra.mxu0 0.0
      %4215 = vmatprep.subr.mxu0 0.0
      %4216 = vmatpush1.msra.mxu0 0.0
      %4217 = vmatprep.subr.mxu0 0.0
      %4218 = vmatpush1.msra.mxu0 0.0
      %4219 = vmatprep.subr.mxu0 0.0
      %4220 = vmatpush1.msra.mxu0 0.0
      %4221 = vmatprep.subr.mxu0 0.0
      %4222 = vmatpush1.msra.mxu0 0.0
      %4223 = vmatprep.subr.mxu0 0.0
      %4224 = vmatpush1.msra.mxu0 0.0
      %4225 = vmatprep.subr.mxu0 0.0
      %4226 = vmatpush1.msra.mxu0 0.0
      %4227 = vmatprep.subr.mxu0 0.0
      %4228 = vmatpush1.msra.mxu0 0.0
      %4229 = vmatprep.subr.mxu0 0.0
      %4230 = vmatpush1.msra.mxu0 0.0
      %4231 = vmatprep.subr.mxu0 0.0
      %4232 = vmatpush1.msra.mxu0 0.0
      %4233 = vmatprep.subr.mxu0 0.0
      %4234 = vmatpush1.msra.mxu0 0.0
      %4235 = vmatprep.subr.mxu0 0.0
      %4236 = vmatpush1.msra.mxu0 0.0
      %4237 = vmatprep.subr.mxu0 0.0
      %4238 = vmatpush1.msra.mxu0 0.0
      %4239 = vmatprep.subr.mxu0 0.0
      %4240 = vmatpush1.msra.mxu0 0.0
      %4241 = vmatprep.subr.mxu0 0.0
      %4242 = vmatpush1.msra.mxu0 0.0
      %4243 = vmatprep.subr.mxu0 0.0
      %4244 = vmatpush1.msra.mxu0 0.0
      %4245 = vmatprep.subr.mxu0 0.0
      %4246 = vmatpush1.msra.mxu0 0.0
      %4247 = vmatprep.subr.mxu0 0.0
      %4248 = vmatpush1.msra.mxu0 0.0
      %4249 = vmatprep.subr.mxu0 0.0
      %4250 = vmatpush1.msra.mxu0 0.0
      %4251 = vmatprep.subr.mxu0 0.0
      %4252 = vmatpush1.msra.mxu0 0.0
      %4253 = vmatprep.subr.mxu0 0.0
      %4254 = vmatpush1.msra.mxu0 0.0
      %4255 = vmatprep.subr.mxu0 0.0
      %4256 = vmatpush1.msra.mxu0 0.0
      %4257 = vmatprep.subr.mxu0 0.0
      %4258 = vmatpush1.msra.mxu0 0.0
      %4259 = vmatprep.mubr.f32.mxu0 0.0
      %4260 = vmatmul.mubr.f32.gmra.mrb[0].mxu0 %v3669
      %v4261 = vpop.f32.mrb[0].mxu0
      %v4262 = vadd.f32 0.0, %v4261
      %v4263 = vpop.f32.mrb[0].mxu0
      %4264 = vmatprep.mubr.f32.mxu0 0.0
      %4265 = vmatmul.mubr.f32.gmra.mrb[0].mxu0 %v3671
      %v4266 = vpop.f32.mrb[0].mxu0
      %v4267 = vadd.f32 0.0, %v4266
      %v4268 = vpop.f32.mrb[0].mxu0
      %4269 = vmatprep.mubr.f32.mxu0 0.0
      %4270 = vmatmul.mubr.f32.gmra.mrb[0].mxu0 %v3674
      %v4271 = vpop.f32.mrb[0].mxu0
      %v4272 = vadd.f32 0.0, %v4271
      %v4273 = vpop.f32.mrb[0].mxu0
      %4274 = vmatprep.mubr.f32.mxu0 0.0
      %4275 = vmatmul.mubr.f32.gmra.mrb[0].mxu0 %v3676
      %v4276 = vpop.f32.mrb[0].mxu0
      %v4277 = vadd.f32 0.0, %v4276
      %v4278 = vpop.f32.mrb[0].mxu0
      %4279 = vmatprep.mubr.f32.mxu0 0.0
      %4280 = vmatmul.mubr.f32.gmra.mrb[0].mxu0 %v3679
      %v4281 = vpop.f32.mrb[0].mxu0
      %v4282 = vadd.f32 0.0, %v4281
      %v4283 = vpop.f32.mrb[0].mxu0
      %4284 = vmatprep.mubr.f32.mxu0 0.0
      %4285 = vmatmul.mubr.f32.gmra.mrb[0].mxu0 %v3681
      %v4286 = vpop.f32.mrb[0].mxu0
      %v4287 = vadd.f32 0.0, %v4286
      %v4288 = vpop.f32.mrb[0].mxu0
      %4289 = vmatprep.mubr.f32.mxu0 0.0
      %4290 = vmatmul.mubr.f32.gmra.mrb[0].mxu0 %v3684
      %v4291 = vpop.f32.mrb[0].mxu0
      %v4292 = vadd.f32 0.0, %v4291
      %v4293 = vpop.f32.mrb[0].mxu0
      %4294 = vmatprep.mubr.f32.mxu0 0.0
      %4295 = vmatmul.mubr.f32.gmra.mrb[0].mxu0 %v3686
      %v4296 = vpop.f32.mrb[0].mxu0
      %v4297 = vadd.f32 0.0, %v4296
      %v4298 = vpop.f32.mrb[0].mxu0
      %4299 = vmatprep.mubr.f32.mxu0 0.0
      %4300 = vmatmul.mubr.f32.gmra.mrb[0].mxu0 %v3689
      %v4301 = vpop.f32.mrb[0].mxu0
      %v4302 = vadd.f32 0.0, %v4301
      %v4303 = vpop.f32.mrb[0].mxu0
      %4304 = vmatprep.mubr.f32.mxu0 0.0
      %4305 = vmatmul.mubr.f32.gmra.mrb[0].mxu0 %v3691
      %v4306 = vpop.f32.mrb[0].mxu0
      %v4307 = vadd.f32 0.0, %v4306
      %v4308 = vpop.f32.mrb[0].mxu0
      %4309 = vmatprep.mubr.f32.mxu0 0.0
      %4310 = vmatmul.mubr.f32.gmra.mrb[0].mxu0 %v3694
      %v4311 = vpop.f32.mrb[0].mxu0
      %v4312 = vadd.f32 0.0, %v4311
      %v4313 = vpop.f32.mrb[0].mxu0
      %4314 = vmatprep.mubr.f32.mxu0 0.0
      %4315 = vmatmul.mubr.f32.gmra.mrb[0].mxu0 %v3696
      %v4316 = vpop.f32.mrb[0].mxu0
      %v4317 = vadd.f32 0.0, %v4316
      %v4318 = vpop.f32.mrb[0].mxu0
      %4319 = vmatprep.mubr.f32.mxu0 0.0
      %4320 = vmatmul.mubr.f32.gmra.mrb[0].mxu0 %v3699
      %v4321 = vpop.f32.mrb[0].mxu0
      %v4322 = vadd.f32 0.0, %v4321
      %v4323 = vpop.f32.mrb[0].mxu0
      %4324 = vmatprep.mubr.f32.mxu0 0.0
      %4325 = vmatmul.mubr.f32.gmra.mrb[0].mxu0 %v3701
      %v4326 = vpop.f32.mrb[0].mxu0
      %v4327 = vadd.f32 0.0, %v4326
      %v4328 = vpop.f32.mrb[0].mxu0
      %4329 = vmatprep.mubr.f32.mxu0 0.0
      %4330 = vmatmul.mubr.f32.gmra.mrb[0].mxu0 %v3704
      %v4331 = vpop.f32.mrb[0].mxu0
      %v4332 = vadd.f32 0.0, %v4331
      %v4333 = vpop.f32.mrb[0].mxu0
      %4334 = vmatprep.mubr.f32.mxu0 0.0
      %4335 = vmatmul.mubr.f32.gmra.mrb[0].mxu0 %v3706
      %v4336 = vpop.f32.mrb[0].mxu0
      %v4337 = vadd.f32 0.0, %v4336
      %v4338 = vpop.f32.mrb[0].mxu0
      %4339 = vmatprep.mubr.f32.mxu0 0.0
      %4340 = vmatmul.mubr.f32.gmra.mrb[0].mxu0 %v3709
      %v4341 = vpop.f32.mrb[0].mxu0
      %v4342 = vadd.f32 0.0, %v4341
      %v4343 = vpop.f32.mrb[0].mxu0
      %4344 = vmatprep.mubr.f32.mxu0 0.0
      %4345 = vmatmul.mubr.f32.gmra.mrb[0].mxu0 %v3711
      %v4346 = vpop.f32.mrb[0].mxu0
      %v4347 = vadd.f32 0.0, %v4346
      %v4348 = vpop.f32.mrb[0].mxu0
      %4349 = vmatprep.mubr.f32.mxu0 0.0
      %4350 = vmatmul.mubr.f32.gmra.mrb[0].mxu0 %v3714
      %v4351 = vpop.f32.mrb[0].mxu0
      %v4352 = vadd.f32 0.0, %v4351
      %v4353 = vpop.f32.mrb[0].mxu0
      %4354 = vmatprep.mubr.f32.mxu0 0.0
      %4355 = vmatmul.mubr.f32.gmra.mrb[0].mxu0 %v3716
      %v4356 = vpop.f32.mrb[0].mxu0
      %v4357 = vadd.f32 0.0, %v4356
      %v4358 = vpop.f32.mrb[0].mxu0
      %4359 = vmatprep.mubr.f32.mxu0 0.0
      %4360 = vmatmul.mubr.f32.gmra.mrb[0].mxu0 %v3719
      %v4361 = vpop.f32.mrb[0].mxu0
      %v4362 = vadd.f32 0.0, %v4361
      %v4363 = vpop.f32.mrb[0].mxu0
      %4364 = vmatprep.mubr.f32.mxu0 0.0
      %4365 = vmatmul.mubr.f32.gmra.mrb[0].mxu0 %v3721
      %v4366 = vpop.f32.mrb[0].mxu0
      %v4367 = vadd.f32 0.0, %v4366
      %v4368 = vpop.f32.mrb[0].mxu0
      %4369 = vmatprep.mubr.f32.mxu0 0.0
      %4370 = vmatmul.mubr.f32.gmra.mrb[0].mxu0 %v3724
      %v4371 = vpop.f32.mrb[0].mxu0
      %v4372 = vadd.f32 0.0, %v4371
      %v4373 = vpop.f32.mrb[0].mxu0
      %4374 = vmatprep.mubr.f32.mxu0 0.0
      %4375 = vmatmul.mubr.f32.gmra.mrb[0].mxu0 %v3726
      %v4376 = vpop.f32.mrb[0].mxu0
      %v4377 = vadd.f32 0.0, %v4376
      %v4378 = vpop.f32.mrb[0].mxu0
      %4379 = vmatprep.mubr.f32.mxu0 0.0
      %4380 = vmatmul.mubr.f32.gmra.mrb[0].mxu0 %v3729
      %v4381 = vpop.f32.mrb[0].mxu0
      %v4382 = vadd.f32 0.0, %v4381
      %v4383 = vpop.f32.mrb[0].mxu0
      %4384 = vmatprep.mubr.f32.mxu0 0.0
      %4385 = vmatmul.mubr.f32.gmra.mrb[0].mxu0 %v3731
      %v4386 = vpop.f32.mrb[0].mxu0
      %v4387 = vadd.f32 0.0, %v4386
      %v4388 = vpop.f32.mrb[0].mxu0
      %4389 = vmatprep.mubr.f32.mxu0 0.0
      %4390 = vmatmul.mubr.f32.gmra.mrb[0].mxu0 %v3734
      %v4391 = vpop.f32.mrb[0].mxu0
      %v4392 = vadd.f32 0.0, %v4391
      %v4393 = vpop.f32.mrb[0].mxu0
      %4394 = vmatprep.mubr.f32.mxu0 0.0
      %4395 = vmatmul.mubr.f32.gmra.mrb[0].mxu0 %v3736
      %v4396 = vpop.f32.mrb[0].mxu0
      %v4397 = vadd.f32 0.0, %v4396
      %v4398 = vpop.f32.mrb[0].mxu0
      %4399 = vmatprep.mubr.f32.mxu0 0.0
      %4400 = vmatmul.mubr.f32.gmra.mrb[0].mxu0 %v3739
      %v4401 = vpop.f32.mrb[0].mxu0
      %v4402 = vadd.f32 0.0, %v4401
      %v4403 = vpop.f32.mrb[0].mxu0
      %4404 = vmatprep.mubr.f32.mxu0 0.0
      %4405 = vmatmul.mubr.f32.gmra.mrb[0].mxu0 %v3741
      %v4406 = vpop.f32.mrb[0].mxu0
      %v4407 = vadd.f32 0.0, %v4406
      %v4408 = vpop.f32.mrb[0].mxu0
      %4409 = vmatprep.mubr.f32.mxu0 0.0
      %4410 = vmatmul.mubr.f32.gmra.mrb[0].mxu0 %v3734
      %v4411 = vpop.f32.mrb[0].mxu0
      %v4412 = vadd.f32 0.0, %v4411
      %v4413 = vpop.f32.mrb[0].mxu0
      %4414 = vmatprep.mubr.f32.mxu0 0.0
      %4415 = vmatmul.mubr.f32.gmra.mrb[0].mxu0 %v3736
      %v4416 = vpop.f32.mrb[0].mxu0
      %v4417 = vadd.f32 0.0, %v4416
      %v4418 = vpop.f32.mrb[0].mxu0
      %4419 = vdwg.mxu0
      %v4420 = vadd.f32 %v4035, %v4262
      %v4421 = vadd.f32 %v4040, %v4267
      %v4422 = vadd.f32 %v4045, %v4272
      %v4423 = vadd.f32 %v4050, %v4277
      %v4424 = vadd.f32 %v4055, %v4282
      %v4425 = vadd.f32 %v4060, %v4287
      %v4426 = vadd.f32 %v4065, %v4292
      %v4427 = vadd.f32 %v4070, %v4297
      %v4428 = vadd.f32 %v4075, %v4302
      %v4429 = vadd.f32 %v4080, %v4307
      %v4430 = vadd.f32 %v4085, %v4312
      %v4431 = vadd.f32 %v4090, %v4317
      %v4432 = vadd.f32 %v4095, %v4322
      %v4433 = vadd.f32 %v4100, %v4327
      %v4434 = vadd.f32 %v4105, %v4332
      %v4435 = vadd.f32 %v4110, %v4337
      %v4436 = vadd.f32 %v4115, %v4342
      %v4437 = vadd.f32 %v4120, %v4347
      %v4438 = vadd.f32 %v4125, %v4352
      %v4439 = vadd.f32 %v4130, %v4357
      %v4440 = vadd.f32 %v4135, %v4362
      %v4441 = vadd.f32 %v4140, %v4367
      %v4442 = vadd.f32 %v4145, %v4372
      %v4443 = vadd.f32 %v4150, %v4377
      %v4444 = vadd.f32 %v4155, %v4382
      %v4445 = vadd.f32 %v4160, %v4387
      %v4446 = vadd.f32 %v4165, %v4392
      %v4447 = vadd.f32 %v4170, %v4397
      %v4448 = vadd.f32 %v4175, %v4402
      %v4449 = vadd.f32 %v4180, %v4407
      %v4450 = vadd.f32 %v4185, %v4412
      %v4451 = vadd.f32 %v4190, %v4417
      %s4452 = scalar_lea.vmem %s4, 8
      %v4453 = vld [vmem:[%s4452] sm:$0xff]
      %v4454 = vsel %vm3662, %v3501, 0
      %v4456 = vsel %vm3662, %v3502, 0
      %v4458 = vsel %vm3662, %v3499, 0
      %v4460 = vsel %vm3662, %v3500, 0
      %v4462 = vsel %vm3662, %v3503, 0
      %v4464 = vsel %vm3662, %v3504, 0
      %v4466 = vsel %vm3662, %v3505, 0
      %v4468 = vsel %vm3662, %v3506, 0
      %v4470 = vsel %vm3662, %v3507, 0
      %v4472 = vsel %vm3662, %v3508, 0
      %v4474 = vsel %vm3662, %v3509, 0
      %v4476 = vsel %vm3662, %v3510, 0
      %v4478 = vsel %vm3662, %v3511, 0
      %v4480 = vsel %vm3662, %v3512, 0
      %v4482 = vsel %vm3662, %v3513, 0
      %v4484 = vsel %vm3662, %v3514, 0
      %v4486 = vsel %vm3662, %v3515, 0
      %v4488 = vsel %vm3662, %v3516, 0
      %v4490 = vsel %vm3662, %v3517, 0
      %v4492 = vsel %vm3662, %v3518, 0
      %v4494 = vsel %vm3662, %v3519, 0
      %v4496 = vsel %vm3662, %v3520, 0
      %v4498 = vsel %vm3662, %v3521, 0
      %v4500 = vsel %vm3662, %v3522, 0
      %v4502 = vsel %vm3662, %v3523, 0
      %v4504 = vsel %vm3662, %v3524, 0
      %v4506 = vsel %vm3662, %v3525, 0
      %v4508 = vsel %vm3662, %v3526, 0
      %v4510 = vsel %vm3662, %v3527, 0
      %v4512 = vsel %vm3662, %v3528, 0
      %4514 = vmatprep.subr.mxu0 0.0
      %4515 = vmatpush1.msra.mxu0 %v4453
      %4516 = vmatprep.subr.mxu0 0.0
      %4517 = vmatpush1.msra.mxu0 0.0
      %4518 = vmatprep.subr.mxu0 0.0
      %4519 = vmatpush1.msra.mxu0 0.0
      %4520 = vmatprep.subr.mxu0 0.0
      %4521 = vmatpush1.msra.mxu0 0.0
      %4522 = vmatprep.subr.mxu0 0.0
      %4523 = vmatpush1.msra.mxu0 0.0
      %4524 = vmatprep.subr.mxu0 0.0
      %4525 = vmatpush1.msra.mxu0 0.0
      %4526 = vmatprep.subr.mxu0 0.0
      %4527 = vmatpush1.msra.mxu0 0.0
      %4528 = vmatprep.subr.mxu0 0.0
      %4529 = vmatpush1.msra.mxu0 0.0
      %4530 = vmatprep.subr.mxu0 0.0
      %4531 = vmatpush1.msra.mxu0 0.0
      %4532 = vmatprep.subr.mxu0 0.0
      %4533 = vmatpush1.msra.mxu0 0.0
      %4534 = vmatprep.subr.mxu0 0.0
      %4535 = vmatpush1.msra.mxu0 0.0
      %4536 = vmatprep.subr.mxu0 0.0
      %4537 = vmatpush1.msra.mxu0 0.0
      %4538 = vmatprep.subr.mxu0 0.0
      %4539 = vmatpush1.msra.mxu0 0.0
      %4540 = vmatprep.subr.mxu0 0.0
      %4541 = vmatpush1.msra.mxu0 0.0
      %4542 = vmatprep.subr.mxu0 0.0
      %4543 = vmatpush1.msra.mxu0 0.0
      %4544 = vmatprep.subr.mxu0 0.0
      %4545 = vmatpush1.msra.mxu0 0.0
      %4546 = vmatprep.subr.mxu0 0.0
      %4547 = vmatpush1.msra.mxu0 0.0
      %4548 = vmatprep.subr.mxu0 0.0
      %4549 = vmatpush1.msra.mxu0 0.0
      %4550 = vmatprep.subr.mxu0 0.0
      %4551 = vmatpush1.msra.mxu0 0.0
      %4552 = vmatprep.subr.mxu0 0.0
      %4553 = vmatpush1.msra.mxu0 0.0
      %4554 = vmatprep.subr.mxu0 0.0
      %4555 = vmatpush1.msra.mxu0 0.0
      %4556 = vmatprep.subr.mxu0 0.0
      %4557 = vmatpush1.msra.mxu0 0.0
      %4558 = vmatprep.subr.mxu0 0.0
      %4559 = vmatpush1.msra.mxu0 0.0
      %4560 = vmatprep.subr.mxu0 0.0
      %4561 = vmatpush1.msra.mxu0 0.0
      %4562 = vmatprep.subr.mxu0 0.0
      %4563 = vmatpush1.msra.mxu0 0.0
      %4564 = vmatprep.subr.mxu0 0.0
      %4565 = vmatpush1.msra.mxu0 0.0
      %4566 = vmatprep.subr.mxu0 0.0
      %4567 = vmatpush1.msra.mxu0 0.0
      %4568 = vmatprep.subr.mxu0 0.0
      %4569 = vmatpush1.msra.mxu0 0.0
      %4570 = vmatprep.subr.mxu0 0.0
      %4571 = vmatpush1.msra.mxu0 0.0
      %4572 = vmatprep.subr.mxu0 0.0
      %4573 = vmatpush1.msra.mxu0 0.0
      %4574 = vmatprep.subr.mxu0 0.0
      %4575 = vmatpush1.msra.mxu0 0.0
      %4576 = vmatprep.subr.mxu0 0.0
      %4577 = vmatpush1.msra.mxu0 0.0
      %4578 = vmatprep.mubr.f32.mxu0 0.0
      %4579 = vmatmul.mubr.f32.gmra.mrb[0].mxu0 %v4454
      %v4580 = vpop.f32.mrb[0].mxu0
      %v4581 = vadd.f32 0.0, %v4580
      %v4582 = vpop.f32.mrb[0].mxu0
      %4583 = vmatprep.mubr.f32.mxu0 0.0
      %4584 = vmatmul.mubr.f32.gmra.mrb[0].mxu0 %v4456
      %v4585 = vpop.f32.mrb[0].mxu0
      %v4586 = vadd.f32 0.0, %v4585
      %v4587 = vpop.f32.mrb[0].mxu0
      %4588 = vmatprep.mubr.f32.mxu0 0.0
      %4589 = vmatmul.mubr.f32.gmra.mrb[0].mxu0 %v4458
      %v4590 = vpop.f32.mrb[0].mxu0
      %v4591 = vadd.f32 0.0, %v4590
      %v4592 = vpop.f32.mrb[0].mxu0
      %4593 = vmatprep.mubr.f32.mxu0 0.0
      %4594 = vmatmul.mubr.f32.gmra.mrb[0].mxu0 %v4460
      %v4595 = vpop.f32.mrb[0].mxu0
      %v4596 = vadd.f32 0.0, %v4595
      %v4597 = vpop.f32.mrb[0].mxu0
      %4598 = vmatprep.mubr.f32.mxu0 0.0
      %4599 = vmatmul.mubr.f32.gmra.mrb[0].mxu0 %v4454
      %v4600 = vpop.f32.mrb[0].mxu0
      %v4601 = vadd.f32 0.0, %v4600
      %v4602 = vpop.f32.mrb[0].mxu0
      %4603 = vmatprep.mubr.f32.mxu0 0.0
      %4604 = vmatmul.mubr.f32.gmra.mrb[0].mxu0 %v4456
      %v4605 = vpop.f32.mrb[0].mxu0
      %v4606 = vadd.f32 0.0, %v4605
      %v4607 = vpop.f32.mrb[0].mxu0
      %4608 = vmatprep.mubr.f32.mxu0 0.0
      %4609 = vmatmul.mubr.f32.gmra.mrb[0].mxu0 %v4462
      %v4610 = vpop.f32.mrb[0].mxu0
      %v4611 = vadd.f32 0.0, %v4610
      %v4612 = vpop.f32.mrb[0].mxu0
      %4613 = vmatprep.mubr.f32.mxu0 0.0
      %4614 = vmatmul.mubr.f32.gmra.mrb[0].mxu0 %v4464
      %v4615 = vpop.f32.mrb[0].mxu0
      %v4616 = vadd.f32 0.0, %v4615
      %v4617 = vpop.f32.mrb[0].mxu0
      %4618 = vmatprep.mubr.f32.mxu0 0.0
      %4619 = vmatmul.mubr.f32.gmra.mrb[0].mxu0 %v4466
      %v4620 = vpop.f32.mrb[0].mxu0
      %v4621 = vadd.f32 0.0, %v4620
      %v4622 = vpop.f32.mrb[0].mxu0
      %4623 = vmatprep.mubr.f32.mxu0 0.0
      %4624 = vmatmul.mubr.f32.gmra.mrb[0].mxu0 %v4468
      %v4625 = vpop.f32.mrb[0].mxu0
      %v4626 = vadd.f32 0.0, %v4625
      %v4627 = vpop.f32.mrb[0].mxu0
      %4628 = vmatprep.mubr.f32.mxu0 0.0
      %4629 = vmatmul.mubr.f32.gmra.mrb[0].mxu0 %v4470
      %v4630 = vpop.f32.mrb[0].mxu0
      %v4631 = vadd.f32 0.0, %v4630
      %v4632 = vpop.f32.mrb[0].mxu0
      %4633 = vmatprep.mubr.f32.mxu0 0.0
      %4634 = vmatmul.mubr.f32.gmra.mrb[0].mxu0 %v4472
      %v4635 = vpop.f32.mrb[0].mxu0
      %v4636 = vadd.f32 0.0, %v4635
      %v4637 = vpop.f32.mrb[0].mxu0
      %4638 = vmatprep.mubr.f32.mxu0 0.0
      %4639 = vmatmul.mubr.f32.gmra.mrb[0].mxu0 %v4474
      %v4640 = vpop.f32.mrb[0].mxu0
      %v4641 = vadd.f32 0.0, %v4640
      %v4642 = vpop.f32.mrb[0].mxu0
      %4643 = vmatprep.mubr.f32.mxu0 0.0
      %4644 = vmatmul.mubr.f32.gmra.mrb[0].mxu0 %v4476
      %v4645 = vpop.f32.mrb[0].mxu0
      %v4646 = vadd.f32 0.0, %v4645
      %v4647 = vpop.f32.mrb[0].mxu0
      %4648 = vmatprep.mubr.f32.mxu0 0.0
      %4649 = vmatmul.mubr.f32.gmra.mrb[0].mxu0 %v4478
      %v4650 = vpop.f32.mrb[0].mxu0
      %v4651 = vadd.f32 0.0, %v4650
      %v4652 = vpop.f32.mrb[0].mxu0
      %4653 = vmatprep.mubr.f32.mxu0 0.0
      %4654 = vmatmul.mubr.f32.gmra.mrb[0].mxu0 %v4480
      %v4655 = vpop.f32.mrb[0].mxu0
      %v4656 = vadd.f32 0.0, %v4655
      %v4657 = vpop.f32.mrb[0].mxu0
      %4658 = vmatprep.mubr.f32.mxu0 0.0
      %4659 = vmatmul.mubr.f32.gmra.mrb[0].mxu0 %v4482
      %v4660 = vpop.f32.mrb[0].mxu0
      %v4661 = vadd.f32 0.0, %v4660
      %v4662 = vpop.f32.mrb[0].mxu0
      %4663 = vmatprep.mubr.f32.mxu0 0.0
      %4664 = vmatmul.mubr.f32.gmra.mrb[0].mxu0 %v4484
      %v4665 = vpop.f32.mrb[0].mxu0
      %v4666 = vadd.f32 0.0, %v4665
      %v4667 = vpop.f32.mrb[0].mxu0
      %4668 = vmatprep.mubr.f32.mxu0 0.0
      %4669 = vmatmul.mubr.f32.gmra.mrb[0].mxu0 %v4486
      %v4670 = vpop.f32.mrb[0].mxu0
      %v4671 = vadd.f32 0.0, %v4670
      %v4672 = vpop.f32.mrb[0].mxu0
      %4673 = vmatprep.mubr.f32.mxu0 0.0
      %4674 = vmatmul.mubr.f32.gmra.mrb[0].mxu0 %v4488
      %v4675 = vpop.f32.mrb[0].mxu0
      %v4676 = vadd.f32 0.0, %v4675
      %v4677 = vpop.f32.mrb[0].mxu0
      %4678 = vmatprep.mubr.f32.mxu0 0.0
      %4679 = vmatmul.mubr.f32.gmra.mrb[0].mxu0 %v4490
      %v4680 = vpop.f32.mrb[0].mxu0
      %v4681 = vadd.f32 0.0, %v4680
      %v4682 = vpop.f32.mrb[0].mxu0
      %4683 = vmatprep.mubr.f32.mxu0 0.0
      %4684 = vmatmul.mubr.f32.gmra.mrb[0].mxu0 %v4492
      %v4685 = vpop.f32.mrb[0].mxu0
      %v4686 = vadd.f32 0.0, %v4685
      %v4687 = vpop.f32.mrb[0].mxu0
      %4688 = vmatprep.mubr.f32.mxu0 0.0
      %4689 = vmatmul.mubr.f32.gmra.mrb[0].mxu0 %v4494
      %v4690 = vpop.f32.mrb[0].mxu0
      %v4691 = vadd.f32 0.0, %v4690
      %v4692 = vpop.f32.mrb[0].mxu0
      %4693 = vmatprep.mubr.f32.mxu0 0.0
      %4694 = vmatmul.mubr.f32.gmra.mrb[0].mxu0 %v4496
      %v4695 = vpop.f32.mrb[0].mxu0
      %v4696 = vadd.f32 0.0, %v4695
      %v4697 = vpop.f32.mrb[0].mxu0
      %4698 = vmatprep.mubr.f32.mxu0 0.0
      %4699 = vmatmul.mubr.f32.gmra.mrb[0].mxu0 %v4498
      %v4700 = vpop.f32.mrb[0].mxu0
      %v4701 = vadd.f32 0.0, %v4700
      %v4702 = vpop.f32.mrb[0].mxu0
      %4703 = vmatprep.mubr.f32.mxu0 0.0
      %4704 = vmatmul.mubr.f32.gmra.mrb[0].mxu0 %v4500
      %v4705 = vpop.f32.mrb[0].mxu0
      %v4706 = vadd.f32 0.0, %v4705
      %v4707 = vpop.f32.mrb[0].mxu0
      %4708 = vmatprep.mubr.f32.mxu0 0.0
      %4709 = vmatmul.mubr.f32.gmra.mrb[0].mxu0 %v4502
      %v4710 = vpop.f32.mrb[0].mxu0
      %v4711 = vadd.f32 0.0, %v4710
      %v4712 = vpop.f32.mrb[0].mxu0
      %4713 = vmatprep.mubr.f32.mxu0 0.0
      %4714 = vmatmul.mubr.f32.gmra.mrb[0].mxu0 %v4504
      %v4715 = vpop.f32.mrb[0].mxu0
      %v4716 = vadd.f32 0.0, %v4715
      %v4717 = vpop.f32.mrb[0].mxu0
      %4718 = vmatprep.mubr.f32.mxu0 0.0
      %4719 = vmatmul.mubr.f32.gmra.mrb[0].mxu0 %v4506
      %v4720 = vpop.f32.mrb[0].mxu0
      %v4721 = vadd.f32 0.0, %v4720
      %v4722 = vpop.f32.mrb[0].mxu0
      %4723 = vmatprep.mubr.f32.mxu0 0.0
      %4724 = vmatmul.mubr.f32.gmra.mrb[0].mxu0 %v4508
      %v4725 = vpop.f32.mrb[0].mxu0
      %v4726 = vadd.f32 0.0, %v4725
      %v4727 = vpop.f32.mrb[0].mxu0
      %4728 = vmatprep.mubr.f32.mxu0 0.0
      %4729 = vmatmul.mubr.f32.gmra.mrb[0].mxu0 %v4510
      %v4730 = vpop.f32.mrb[0].mxu0
      %v4731 = vadd.f32 0.0, %v4730
      %v4732 = vpop.f32.mrb[0].mxu0
      %4733 = vmatprep.mubr.f32.mxu0 0.0
      %4734 = vmatmul.mubr.f32.gmra.mrb[0].mxu0 %v4512
      %v4735 = vpop.f32.mrb[0].mxu0
      %v4736 = vadd.f32 0.0, %v4735
      %v4737 = vpop.f32.mrb[0].mxu0
      %4738 = vdwg.mxu0
      %v4739 = vadd.f32 %v4420, %v4581
      %v4740 = vadd.f32 %v4421, %v4586
      %v4741 = vadd.f32 %v4422, %v4591
      %v4742 = vadd.f32 %v4423, %v4596
      %v4743 = vadd.f32 %v4424, %v4601
      %v4744 = vadd.f32 %v4425, %v4606
      %v4745 = vadd.f32 %v4426, %v4611
      %v4746 = vadd.f32 %v4427, %v4616
      %v4747 = vadd.f32 %v4428, %v4621
      %v4748 = vadd.f32 %v4429, %v4626
      %v4749 = vadd.f32 %v4430, %v4631
      %v4750 = vadd.f32 %v4431, %v4636
      %v4751 = vadd.f32 %v4432, %v4641
      %v4752 = vadd.f32 %v4433, %v4646
      %v4753 = vadd.f32 %v4434, %v4651
      %v4754 = vadd.f32 %v4435, %v4656
      %v4755 = vadd.f32 %v4436, %v4661
      %v4756 = vadd.f32 %v4437, %v4666
      %v4757 = vadd.f32 %v4438, %v4671
      %v4758 = vadd.f32 %v4439, %v4676
      %v4759 = vadd.f32 %v4440, %v4681
      %v4760 = vadd.f32 %v4441, %v4686
      %v4761 = vadd.f32 %v4442, %v4691
      %v4762 = vadd.f32 %v4443, %v4696
      %v4763 = vadd.f32 %v4444, %v4701
      %v4764 = vadd.f32 %v4445, %v4706
      %v4765 = vadd.f32 %v4446, %v4711
      %v4766 = vadd.f32 %v4447, %v4716
      %v4767 = vadd.f32 %v4448, %v4721
      %v4768 = vadd.f32 %v4449, %v4726
      %v4769 = vadd.f32 %v4450, %v4731
      %v4770 = vadd.f32 %v4451, %v4736
      %s4771 = scalar_lea.vmem %s4, 32
      %v4772 = vld [vmem:[%s4771] sm:$0xff]
      %v4773 = vsel %vm3662, %v3529, 0
      %v4775 = vsel %vm3662, %v3530, 0
      %4777 = vmatprep.subr.mxu0 0.0
      %4778 = vmatpush1.msra.mxu0 %v4772
      %4779 = vmatprep.subr.mxu0 0.0
      %4780 = vmatpush1.msra.mxu0 0.0
      %4781 = vmatprep.subr.mxu0 0.0
      %4782 = vmatpush1.msra.mxu0 0.0
      %4783 = vmatprep.subr.mxu0 0.0
      %4784 = vmatpush1.msra.mxu0 0.0
      %4785 = vmatprep.subr.mxu0 0.0
      %4786 = vmatpush1.msra.mxu0 0.0
      %4787 = vmatprep.subr.mxu0 0.0
      %4788 = vmatpush1.msra.mxu0 0.0
      %4789 = vmatprep.subr.mxu0 0.0
      %4790 = vmatpush1.msra.mxu0 0.0
      %4791 = vmatprep.subr.mxu0 0.0
      %4792 = vmatpush1.msra.mxu0 0.0
      %4793 = vmatprep.subr.mxu0 0.0
      %4794 = vmatpush1.msra.mxu0 0.0
      %4795 = vmatprep.subr.mxu0 0.0
      %4796 = vmatpush1.msra.mxu0 0.0
      %4797 = vmatprep.subr.mxu0 0.0
      %4798 = vmatpush1.msra.mxu0 0.0
      %4799 = vmatprep.subr.mxu0 0.0
      %4800 = vmatpush1.msra.mxu0 0.0
      %4801 = vmatprep.subr.mxu0 0.0
      %4802 = vmatpush1.msra.mxu0 0.0
      %4803 = vmatprep.subr.mxu0 0.0
      %4804 = vmatpush1.msra.mxu0 0.0
      %4805 = vmatprep.subr.mxu0 0.0
      %4806 = vmatpush1.msra.mxu0 0.0
      %4807 = vmatprep.subr.mxu0 0.0
      %4808 = vmatpush1.msra.mxu0 0.0
      %4809 = vmatprep.subr.mxu0 0.0
      %4810 = vmatpush1.msra.mxu0 0.0
      %4811 = vmatprep.subr.mxu0 0.0
      %4812 = vmatpush1.msra.mxu0 0.0
      %4813 = vmatprep.subr.mxu0 0.0
      %4814 = vmatpush1.msra.mxu0 0.0
      %4815 = vmatprep.subr.mxu0 0.0
      %4816 = vmatpush1.msra.mxu0 0.0
      %4817 = vmatprep.subr.mxu0 0.0
      %4818 = vmatpush1.msra.mxu0 0.0
      %4819 = vmatprep.subr.mxu0 0.0
      %4820 = vmatpush1.msra.mxu0 0.0
      %4821 = vmatprep.subr.mxu0 0.0
      %4822 = vmatpush1.msra.mxu0 0.0
      %4823 = vmatprep.subr.mxu0 0.0
      %4824 = vmatpush1.msra.mxu0 0.0
      %4825 = vmatprep.subr.mxu0 0.0
      %4826 = vmatpush1.msra.mxu0 0.0
      %4827 = vmatprep.subr.mxu0 0.0
      %4828 = vmatpush1.msra.mxu0 0.0
      %4829 = vmatprep.subr.mxu0 0.0
      %4830 = vmatpush1.msra.mxu0 0.0
      %4831 = vmatprep.subr.mxu0 0.0
      %4832 = vmatpush1.msra.mxu0 0.0
      %4833 = vmatprep.subr.mxu0 0.0
      %4834 = vmatpush1.msra.mxu0 0.0
      %4835 = vmatprep.subr.mxu0 0.0
      %4836 = vmatpush1.msra.mxu0 0.0
      %4837 = vmatprep.subr.mxu0 0.0
      %4838 = vmatpush1.msra.mxu0 0.0
      %4839 = vmatprep.subr.mxu0 0.0
      %4840 = vmatpush1.msra.mxu0 0.0
      %4841 = vmatprep.mubr.f32.mxu0 0.0
      %4842 = vmatmul.mubr.f32.gmra.mrb[0].mxu0 %v4458
      %v4843 = vpop.f32.mrb[0].mxu0
      %v4844 = vadd.f32 0.0, %v4843
      %v4845 = vpop.f32.mrb[0].mxu0
      %4846 = vmatprep.mubr.f32.mxu0 0.0
      %4847 = vmatmul.mubr.f32.gmra.mrb[0].mxu0 %v4460
      %v4848 = vpop.f32.mrb[0].mxu0
      %v4849 = vadd.f32 0.0, %v4848
      %v4850 = vpop.f32.mrb[0].mxu0
      %4851 = vmatprep.mubr.f32.mxu0 0.0
      %4852 = vmatmul.mubr.f32.gmra.mrb[0].mxu0 %v4454
      %v4853 = vpop.f32.mrb[0].mxu0
      %v4854 = vadd.f32 0.0, %v4853
      %v4855 = vpop.f32.mrb[0].mxu0
      %4856 = vmatprep.mubr.f32.mxu0 0.0
      %4857 = vmatmul.mubr.f32.gmra.mrb[0].mxu0 %v4456
      %v4858 = vpop.f32.mrb[0].mxu0
      %v4859 = vadd.f32 0.0, %v4858
      %v4860 = vpop.f32.mrb[0].mxu0
      %4861 = vmatprep.mubr.f32.mxu0 0.0
      %4862 = vmatmul.mubr.f32.gmra.mrb[0].mxu0 %v4462
      %v4863 = vpop.f32.mrb[0].mxu0
      %v4864 = vadd.f32 0.0, %v4863
      %v4865 = vpop.f32.mrb[0].mxu0
      %4866 = vmatprep.mubr.f32.mxu0 0.0
      %4867 = vmatmul.mubr.f32.gmra.mrb[0].mxu0 %v4464
      %v4868 = vpop.f32.mrb[0].mxu0
      %v4869 = vadd.f32 0.0, %v4868
      %v4870 = vpop.f32.mrb[0].mxu0
      %4871 = vmatprep.mubr.f32.mxu0 0.0
      %4872 = vmatmul.mubr.f32.gmra.mrb[0].mxu0 %v4466
      %v4873 = vpop.f32.mrb[0].mxu0
      %v4874 = vadd.f32 0.0, %v4873
      %v4875 = vpop.f32.mrb[0].mxu0
      %4876 = vmatprep.mubr.f32.mxu0 0.0
      %4877 = vmatmul.mubr.f32.gmra.mrb[0].mxu0 %v4468
      %v4878 = vpop.f32.mrb[0].mxu0
      %v4879 = vadd.f32 0.0, %v4878
      %v4880 = vpop.f32.mrb[0].mxu0
      %4881 = vmatprep.mubr.f32.mxu0 0.0
      %4882 = vmatmul.mubr.f32.gmra.mrb[0].mxu0 %v4470
      %v4883 = vpop.f32.mrb[0].mxu0
      %v4884 = vadd.f32 0.0, %v4883
      %v4885 = vpop.f32.mrb[0].mxu0
      %4886 = vmatprep.mubr.f32.mxu0 0.0
      %4887 = vmatmul.mubr.f32.gmra.mrb[0].mxu0 %v4472
      %v4888 = vpop.f32.mrb[0].mxu0
      %v4889 = vadd.f32 0.0, %v4888
      %v4890 = vpop.f32.mrb[0].mxu0
      %4891 = vmatprep.mubr.f32.mxu0 0.0
      %4892 = vmatmul.mubr.f32.gmra.mrb[0].mxu0 %v4474
      %v4893 = vpop.f32.mrb[0].mxu0
      %v4894 = vadd.f32 0.0, %v4893
      %v4895 = vpop.f32.mrb[0].mxu0
      %4896 = vmatprep.mubr.f32.mxu0 0.0
      %4897 = vmatmul.mubr.f32.gmra.mrb[0].mxu0 %v4476
      %v4898 = vpop.f32.mrb[0].mxu0
      %v4899 = vadd.f32 0.0, %v4898
      %v4900 = vpop.f32.mrb[0].mxu0
      %4901 = vmatprep.mubr.f32.mxu0 0.0
      %4902 = vmatmul.mubr.f32.gmra.mrb[0].mxu0 %v4478
      %v4903 = vpop.f32.mrb[0].mxu0
      %v4904 = vadd.f32 0.0, %v4903
      %v4905 = vpop.f32.mrb[0].mxu0
      %4906 = vmatprep.mubr.f32.mxu0 0.0
      %4907 = vmatmul.mubr.f32.gmra.mrb[0].mxu0 %v4480
      %v4908 = vpop.f32.mrb[0].mxu0
      %v4909 = vadd.f32 0.0, %v4908
      %v4910 = vpop.f32.mrb[0].mxu0
      %4911 = vmatprep.mubr.f32.mxu0 0.0
      %4912 = vmatmul.mubr.f32.gmra.mrb[0].mxu0 %v4482
      %v4913 = vpop.f32.mrb[0].mxu0
      %v4914 = vadd.f32 0.0, %v4913
      %v4915 = vpop.f32.mrb[0].mxu0
      %4916 = vmatprep.mubr.f32.mxu0 0.0
      %4917 = vmatmul.mubr.f32.gmra.mrb[0].mxu0 %v4484
      %v4918 = vpop.f32.mrb[0].mxu0
      %v4919 = vadd.f32 0.0, %v4918
      %v4920 = vpop.f32.mrb[0].mxu0
      %4921 = vmatprep.mubr.f32.mxu0 0.0
      %4922 = vmatmul.mubr.f32.gmra.mrb[0].mxu0 %v4486
      %v4923 = vpop.f32.mrb[0].mxu0
      %v4924 = vadd.f32 0.0, %v4923
      %v4925 = vpop.f32.mrb[0].mxu0
      %4926 = vmatprep.mubr.f32.mxu0 0.0
      %4927 = vmatmul.mubr.f32.gmra.mrb[0].mxu0 %v4488
      %v4928 = vpop.f32.mrb[0].mxu0
      %v4929 = vadd.f32 0.0, %v4928
      %v4930 = vpop.f32.mrb[0].mxu0
      %4931 = vmatprep.mubr.f32.mxu0 0.0
      %4932 = vmatmul.mubr.f32.gmra.mrb[0].mxu0 %v4490
      %v4933 = vpop.f32.mrb[0].mxu0
      %v4934 = vadd.f32 0.0, %v4933
      %v4935 = vpop.f32.mrb[0].mxu0
      %4936 = vmatprep.mubr.f32.mxu0 0.0
      %4937 = vmatmul.mubr.f32.gmra.mrb[0].mxu0 %v4492
      %v4938 = vpop.f32.mrb[0].mxu0
      %v4939 = vadd.f32 0.0, %v4938
      %v4940 = vpop.f32.mrb[0].mxu0
      %4941 = vmatprep.mubr.f32.mxu0 0.0
      %4942 = vmatmul.mubr.f32.gmra.mrb[0].mxu0 %v4494
      %v4943 = vpop.f32.mrb[0].mxu0
      %v4944 = vadd.f32 0.0, %v4943
      %v4945 = vpop.f32.mrb[0].mxu0
      %4946 = vmatprep.mubr.f32.mxu0 0.0
      %4947 = vmatmul.mubr.f32.gmra.mrb[0].mxu0 %v4496
      %v4948 = vpop.f32.mrb[0].mxu0
      %v4949 = vadd.f32 0.0, %v4948
      %v4950 = vpop.f32.mrb[0].mxu0
      %4951 = vmatprep.mubr.f32.mxu0 0.0
      %4952 = vmatmul.mubr.f32.gmra.mrb[0].mxu0 %v4498
      %v4953 = vpop.f32.mrb[0].mxu0
      %v4954 = vadd.f32 0.0, %v4953
      %v4955 = vpop.f32.mrb[0].mxu0
      %4956 = vmatprep.mubr.f32.mxu0 0.0
      %4957 = vmatmul.mubr.f32.gmra.mrb[0].mxu0 %v4500
      %v4958 = vpop.f32.mrb[0].mxu0
      %v4959 = vadd.f32 0.0, %v4958
      %v4960 = vpop.f32.mrb[0].mxu0
      %4961 = vmatprep.mubr.f32.mxu0 0.0
      %4962 = vmatmul.mubr.f32.gmra.mrb[0].mxu0 %v4502
      %v4963 = vpop.f32.mrb[0].mxu0
      %v4964 = vadd.f32 0.0, %v4963
      %v4965 = vpop.f32.mrb[0].mxu0
      %4966 = vmatprep.mubr.f32.mxu0 0.0
      %4967 = vmatmul.mubr.f32.gmra.mrb[0].mxu0 %v4504
      %v4968 = vpop.f32.mrb[0].mxu0
      %v4969 = vadd.f32 0.0, %v4968
      %v4970 = vpop.f32.mrb[0].mxu0
      %4971 = vmatprep.mubr.f32.mxu0 0.0
      %4972 = vmatmul.mubr.f32.gmra.mrb[0].mxu0 %v4506
      %v4973 = vpop.f32.mrb[0].mxu0
      %v4974 = vadd.f32 0.0, %v4973
      %v4975 = vpop.f32.mrb[0].mxu0
      %4976 = vmatprep.mubr.f32.mxu0 0.0
      %4977 = vmatmul.mubr.f32.gmra.mrb[0].mxu0 %v4508
      %v4978 = vpop.f32.mrb[0].mxu0
      %v4979 = vadd.f32 0.0, %v4978
      %v4980 = vpop.f32.mrb[0].mxu0
      %4981 = vmatprep.mubr.f32.mxu0 0.0
      %4982 = vmatmul.mubr.f32.gmra.mrb[0].mxu0 %v4510
      %v4983 = vpop.f32.mrb[0].mxu0
      %v4984 = vadd.f32 0.0, %v4983
      %v4985 = vpop.f32.mrb[0].mxu0
      %4986 = vmatprep.mubr.f32.mxu0 0.0
      %4987 = vmatmul.mubr.f32.gmra.mrb[0].mxu0 %v4512
      %v4988 = vpop.f32.mrb[0].mxu0
      %v4989 = vadd.f32 0.0, %v4988
      %v4990 = vpop.f32.mrb[0].mxu0
      %4991 = vmatprep.mubr.f32.mxu0 0.0
      %4992 = vmatmul.mubr.f32.gmra.mrb[0].mxu0 %v4773
      %v4993 = vpop.f32.mrb[0].mxu0
      %v4994 = vadd.f32 0.0, %v4993
      %v4995 = vpop.f32.mrb[0].mxu0
      %4996 = vmatprep.mubr.f32.mxu0 0.0
      %4997 = vmatmul.mubr.f32.gmra.mrb[0].mxu0 %v4775
      %v4998 = vpop.f32.mrb[0].mxu0
      %v4999 = vadd.f32 0.0, %v4998
      %v5000 = vpop.f32.mrb[0].mxu0
      %5001 = vdwg.mxu0
      %v5002 = vadd.f32 %v4739, %v4844
      %v5003 = vadd.f32 %v4740, %v4849
      %v5004 = vadd.f32 %v4741, %v4854
      %v5005 = vadd.f32 %v4742, %v4859
      %v5006 = vadd.f32 %v4743, %v4864
      %v5007 = vadd.f32 %v4744, %v4869
      %v5008 = vadd.f32 %v4745, %v4874
      %v5009 = vadd.f32 %v4746, %v4879
      %v5010 = vadd.f32 %v4747, %v4884
      %v5011 = vadd.f32 %v4748, %v4889
      %v5012 = vadd.f32 %v4749, %v4894
      %v5013 = vadd.f32 %v4750, %v4899
      %v5014 = vadd.f32 %v4751, %v4904
      %v5015 = vadd.f32 %v4752, %v4909
      %v5016 = vadd.f32 %v4753, %v4914
      %v5017 = vadd.f32 %v4754, %v4919
      %v5018 = vadd.f32 %v4755, %v4924
      %v5019 = vadd.f32 %v4756, %v4929
      %v5020 = vadd.f32 %v4757, %v4934
      %v5021 = vadd.f32 %v4758, %v4939
      %v5022 = vadd.f32 %v4759, %v4944
      %v5023 = vadd.f32 %v4760, %v4949
      %v5024 = vadd.f32 %v4761, %v4954
      %v5025 = vadd.f32 %v4762, %v4959
      %v5026 = vadd.f32 %v4763, %v4964
      %v5027 = vadd.f32 %v4764, %v4969
      %v5028 = vadd.f32 %v4765, %v4974
      %v5029 = vadd.f32 %v4766, %v4979
      %v5030 = vadd.f32 %v4767, %v4984
      %v5031 = vadd.f32 %v4768, %v4989
      %v5032 = vadd.f32 %v4769, %v4994
      %v5033 = vadd.f32 %v4770, %v4999
      %s5034 = scalar_lea.vmem %s4, 56
      %v5035 = vld [vmem:[%s5034] sm:$0xff]
      %5036 = vmatprep.subr.mxu0 0.0
      %5037 = vmatpush1.msra.mxu0 %v5035
      %5038 = vmatprep.subr.mxu0 0.0
      %5039 = vmatpush1.msra.mxu0 0.0
      %5040 = vmatprep.subr.mxu0 0.0
      %5041 = vmatpush1.msra.mxu0 0.0
      %5042 = vmatprep.subr.mxu0 0.0
      %5043 = vmatpush1.msra.mxu0 0.0
      %5044 = vmatprep.subr.mxu0 0.0
      %5045 = vmatpush1.msra.mxu0 0.0
      %5046 = vmatprep.subr.mxu0 0.0
      %5047 = vmatpush1.msra.mxu0 0.0
      %5048 = vmatprep.subr.mxu0 0.0
      %5049 = vmatpush1.msra.mxu0 0.0
      %5050 = vmatprep.subr.mxu0 0.0
      %5051 = vmatpush1.msra.mxu0 0.0
      %5052 = vmatprep.subr.mxu0 0.0
      %5053 = vmatpush1.msra.mxu0 0.0
      %5054 = vmatprep.subr.mxu0 0.0
      %5055 = vmatpush1.msra.mxu0 0.0
      %5056 = vmatprep.subr.mxu0 0.0
      %5057 = vmatpush1.msra.mxu0 0.0
      %5058 = vmatprep.subr.mxu0 0.0
      %5059 = vmatpush1.msra.mxu0 0.0
      %5060 = vmatprep.subr.mxu0 0.0
      %5061 = vmatpush1.msra.mxu0 0.0
      %5062 = vmatprep.subr.mxu0 0.0
      %5063 = vmatpush1.msra.mxu0 0.0
      %5064 = vmatprep.subr.mxu0 0.0
      %5065 = vmatpush1.msra.mxu0 0.0
      %5066 = vmatprep.subr.mxu0 0.0
      %5067 = vmatpush1.msra.mxu0 0.0
      %5068 = vmatprep.subr.mxu0 0.0
      %5069 = vmatpush1.msra.mxu0 0.0
      %5070 = vmatprep.subr.mxu0 0.0
      %5071 = vmatpush1.msra.mxu0 0.0
      %5072 = vmatprep.subr.mxu0 0.0
      %5073 = vmatpush1.msra.mxu0 0.0
      %5074 = vmatprep.subr.mxu0 0.0
      %5075 = vmatpush1.msra.mxu0 0.0
      %5076 = vmatprep.subr.mxu0 0.0
      %5077 = vmatpush1.msra.mxu0 0.0
      %5078 = vmatprep.subr.mxu0 0.0
      %5079 = vmatpush1.msra.mxu0 0.0
      %5080 = vmatprep.subr.mxu0 0.0
      %5081 = vmatpush1.msra.mxu0 0.0
      %5082 = vmatprep.subr.mxu0 0.0
      %5083 = vmatpush1.msra.mxu0 0.0
      %5084 = vmatprep.subr.mxu0 0.0
      %5085 = vmatpush1.msra.mxu0 0.0
      %5086 = vmatprep.subr.mxu0 0.0
      %5087 = vmatpush1.msra.mxu0 0.0
      %5088 = vmatprep.subr.mxu0 0.0
      %5089 = vmatpush1.msra.mxu0 0.0
      %5090 = vmatprep.subr.mxu0 0.0
      %5091 = vmatpush1.msra.mxu0 0.0
      %5092 = vmatprep.subr.mxu0 0.0
      %5093 = vmatpush1.msra.mxu0 0.0
      %5094 = vmatprep.subr.mxu0 0.0
      %5095 = vmatpush1.msra.mxu0 0.0
      %5096 = vmatprep.subr.mxu0 0.0
      %5097 = vmatpush1.msra.mxu0 0.0
      %5098 = vmatprep.subr.mxu0 0.0
      %5099 = vmatpush1.msra.mxu0 0.0
      %5100 = vmatprep.mubr.f32.mxu0 0.0
      %5101 = vmatmul.mubr.f32.gmra.mrb[0].mxu0 %v4454
      %v5102 = vpop.f32.mrb[0].mxu0
      %v5103 = vadd.f32 0.0, %v5102
      %v5104 = vpop.f32.mrb[0].mxu0
      %5105 = vmatprep.mubr.f32.mxu0 0.0
      %5106 = vmatmul.mubr.f32.gmra.mrb[0].mxu0 %v4456
      %v5107 = vpop.f32.mrb[0].mxu0
      %v5108 = vadd.f32 0.0, %v5107
      %v5109 = vpop.f32.mrb[0].mxu0
      %5110 = vmatprep.mubr.f32.mxu0 0.0
      %5111 = vmatmul.mubr.f32.gmra.mrb[0].mxu0 %v4462
      %v5112 = vpop.f32.mrb[0].mxu0
      %v5113 = vadd.f32 0.0, %v5112
      %v5114 = vpop.f32.mrb[0].mxu0
      %5115 = vmatprep.mubr.f32.mxu0 0.0
      %5116 = vmatmul.mubr.f32.gmra.mrb[0].mxu0 %v4464
      %v5117 = vpop.f32.mrb[0].mxu0
      %v5118 = vadd.f32 0.0, %v5117
      %v5119 = vpop.f32.mrb[0].mxu0
      %5120 = vmatprep.mubr.f32.mxu0 0.0
      %5121 = vmatmul.mubr.f32.gmra.mrb[0].mxu0 %v4466
      %v5122 = vpop.f32.mrb[0].mxu0
      %v5123 = vadd.f32 0.0, %v5122
      %v5124 = vpop.f32.mrb[0].mxu0
      %5125 = vmatprep.mubr.f32.mxu0 0.0
      %5126 = vmatmul.mubr.f32.gmra.mrb[0].mxu0 %v4468
      %v5127 = vpop.f32.mrb[0].mxu0
      %v5128 = vadd.f32 0.0, %v5127
      %v5129 = vpop.f32.mrb[0].mxu0
      %5130 = vmatprep.mubr.f32.mxu0 0.0
      %5131 = vmatmul.mubr.f32.gmra.mrb[0].mxu0 %v4470
      %v5132 = vpop.f32.mrb[0].mxu0
      %v5133 = vadd.f32 0.0, %v5132
      %v5134 = vpop.f32.mrb[0].mxu0
      %5135 = vmatprep.mubr.f32.mxu0 0.0
      %5136 = vmatmul.mubr.f32.gmra.mrb[0].mxu0 %v4472
      %v5137 = vpop.f32.mrb[0].mxu0
      %v5138 = vadd.f32 0.0, %v5137
      %v5139 = vpop.f32.mrb[0].mxu0
      %5140 = vmatprep.mubr.f32.mxu0 0.0
      %5141 = vmatmul.mubr.f32.gmra.mrb[0].mxu0 %v4474
      %v5142 = vpop.f32.mrb[0].mxu0
      %v5143 = vadd.f32 0.0, %v5142
      %v5144 = vpop.f32.mrb[0].mxu0
      %5145 = vmatprep.mubr.f32.mxu0 0.0
      %5146 = vmatmul.mubr.f32.gmra.mrb[0].mxu0 %v4476
      %v5147 = vpop.f32.mrb[0].mxu0
      %v5148 = vadd.f32 0.0, %v5147
      %v5149 = vpop.f32.mrb[0].mxu0
      %5150 = vmatprep.mubr.f32.mxu0 0.0
      %5151 = vmatmul.mubr.f32.gmra.mrb[0].mxu0 %v4478
      %v5152 = vpop.f32.mrb[0].mxu0
      %v5153 = vadd.f32 0.0, %v5152
      %v5154 = vpop.f32.mrb[0].mxu0
      %5155 = vmatprep.mubr.f32.mxu0 0.0
      %5156 = vmatmul.mubr.f32.gmra.mrb[0].mxu0 %v4480
      %v5157 = vpop.f32.mrb[0].mxu0
      %v5158 = vadd.f32 0.0, %v5157
      %v5159 = vpop.f32.mrb[0].mxu0
      %5160 = vmatprep.mubr.f32.mxu0 0.0
      %5161 = vmatmul.mubr.f32.gmra.mrb[0].mxu0 %v4482
      %v5162 = vpop.f32.mrb[0].mxu0
      %v5163 = vadd.f32 0.0, %v5162
      %v5164 = vpop.f32.mrb[0].mxu0
      %5165 = vmatprep.mubr.f32.mxu0 0.0
      %5166 = vmatmul.mubr.f32.gmra.mrb[0].mxu0 %v4484
      %v5167 = vpop.f32.mrb[0].mxu0
      %v5168 = vadd.f32 0.0, %v5167
      %v5169 = vpop.f32.mrb[0].mxu0
      %5170 = vmatprep.mubr.f32.mxu0 0.0
      %5171 = vmatmul.mubr.f32.gmra.mrb[0].mxu0 %v4486
      %v5172 = vpop.f32.mrb[0].mxu0
      %v5173 = vadd.f32 0.0, %v5172
      %v5174 = vpop.f32.mrb[0].mxu0
      %5175 = vmatprep.mubr.f32.mxu0 0.0
      %5176 = vmatmul.mubr.f32.gmra.mrb[0].mxu0 %v4488
      %v5177 = vpop.f32.mrb[0].mxu0
      %v5178 = vadd.f32 0.0, %v5177
      %v5179 = vpop.f32.mrb[0].mxu0
      %5180 = vmatprep.mubr.f32.mxu0 0.0
      %5181 = vmatmul.mubr.f32.gmra.mrb[0].mxu0 %v4490
      %v5182 = vpop.f32.mrb[0].mxu0
      %v5183 = vadd.f32 0.0, %v5182
      %v5184 = vpop.f32.mrb[0].mxu0
      %5185 = vmatprep.mubr.f32.mxu0 0.0
      %5186 = vmatmul.mubr.f32.gmra.mrb[0].mxu0 %v4492
      %v5187 = vpop.f32.mrb[0].mxu0
      %v5188 = vadd.f32 0.0, %v5187
      %v5189 = vpop.f32.mrb[0].mxu0
      %5190 = vmatprep.mubr.f32.mxu0 0.0
      %5191 = vmatmul.mubr.f32.gmra.mrb[0].mxu0 %v4494
      %v5192 = vpop.f32.mrb[0].mxu0
      %v5193 = vadd.f32 0.0, %v5192
      %v5194 = vpop.f32.mrb[0].mxu0
      %5195 = vmatprep.mubr.f32.mxu0 0.0
      %5196 = vmatmul.mubr.f32.gmra.mrb[0].mxu0 %v4496
      %v5197 = vpop.f32.mrb[0].mxu0
      %v5198 = vadd.f32 0.0, %v5197
      %v5199 = vpop.f32.mrb[0].mxu0
      %5200 = vmatprep.mubr.f32.mxu0 0.0
      %5201 = vmatmul.mubr.f32.gmra.mrb[0].mxu0 %v4498
      %v5202 = vpop.f32.mrb[0].mxu0
      %v5203 = vadd.f32 0.0, %v5202
      %v5204 = vpop.f32.mrb[0].mxu0
      %5205 = vmatprep.mubr.f32.mxu0 0.0
      %5206 = vmatmul.mubr.f32.gmra.mrb[0].mxu0 %v4500
      %v5207 = vpop.f32.mrb[0].mxu0
      %v5208 = vadd.f32 0.0, %v5207
      %v5209 = vpop.f32.mrb[0].mxu0
      %5210 = vmatprep.mubr.f32.mxu0 0.0
      %5211 = vmatmul.mubr.f32.gmra.mrb[0].mxu0 %v4502
      %v5212 = vpop.f32.mrb[0].mxu0
      %v5213 = vadd.f32 0.0, %v5212
      %v5214 = vpop.f32.mrb[0].mxu0
      %5215 = vmatprep.mubr.f32.mxu0 0.0
      %5216 = vmatmul.mubr.f32.gmra.mrb[0].mxu0 %v4504
      %v5217 = vpop.f32.mrb[0].mxu0
      %v5218 = vadd.f32 0.0, %v5217
      %v5219 = vpop.f32.mrb[0].mxu0
      %5220 = vmatprep.mubr.f32.mxu0 0.0
      %5221 = vmatmul.mubr.f32.gmra.mrb[0].mxu0 %v4506
      %v5222 = vpop.f32.mrb[0].mxu0
      %v5223 = vadd.f32 0.0, %v5222
      %v5224 = vpop.f32.mrb[0].mxu0
      %5225 = vmatprep.mubr.f32.mxu0 0.0
      %5226 = vmatmul.mubr.f32.gmra.mrb[0].mxu0 %v4508
      %v5227 = vpop.f32.mrb[0].mxu0
      %v5228 = vadd.f32 0.0, %v5227
      %v5229 = vpop.f32.mrb[0].mxu0
      %5230 = vmatprep.mubr.f32.mxu0 0.0
      %5231 = vmatmul.mubr.f32.gmra.mrb[0].mxu0 %v4510
      %v5232 = vpop.f32.mrb[0].mxu0
      %v5233 = vadd.f32 0.0, %v5232
      %v5234 = vpop.f32.mrb[0].mxu0
      %5235 = vmatprep.mubr.f32.mxu0 0.0
      %5236 = vmatmul.mubr.f32.gmra.mrb[0].mxu0 %v4512
      %v5237 = vpop.f32.mrb[0].mxu0
      %v5238 = vadd.f32 0.0, %v5237
      %v5239 = vpop.f32.mrb[0].mxu0
      %5240 = vmatprep.mubr.f32.mxu0 0.0
      %5241 = vmatmul.mubr.f32.gmra.mrb[0].mxu0 %v4773
      %v5242 = vpop.f32.mrb[0].mxu0
      %v5243 = vadd.f32 0.0, %v5242
      %v5244 = vpop.f32.mrb[0].mxu0
      %5245 = vmatprep.mubr.f32.mxu0 0.0
      %5246 = vmatmul.mubr.f32.gmra.mrb[0].mxu0 %v4775
      %v5247 = vpop.f32.mrb[0].mxu0
      %v5248 = vadd.f32 0.0, %v5247
      %v5249 = vpop.f32.mrb[0].mxu0
      %5250 = vmatprep.mubr.f32.mxu0 0.0
      %5251 = vmatmul.mubr.f32.gmra.mrb[0].mxu0 %v4510
      %v5252 = vpop.f32.mrb[0].mxu0
      %v5253 = vadd.f32 0.0, %v5252
      %v5254 = vpop.f32.mrb[0].mxu0
      %5255 = vmatprep.mubr.f32.mxu0 0.0
      %5256 = vmatmul.mubr.f32.gmra.mrb[0].mxu0 %v4512
      %v5257 = vpop.f32.mrb[0].mxu0
      %v5258 = vadd.f32 0.0, %v5257
      %v5259 = vpop.f32.mrb[0].mxu0
      %5260 = vdwg.mxu0
      %v5261 = vadd.f32 %v5002, %v5103
      %v5262 = vadd.f32 %v5003, %v5108
      %v5263 = vadd.f32 %v5004, %v5113
      %v5264 = vadd.f32 %v5005, %v5118
      %v5265 = vadd.f32 %v5006, %v5123
      %v5266 = vadd.f32 %v5007, %v5128
      %v5267 = vadd.f32 %v5008, %v5133
      %v5268 = vadd.f32 %v5009, %v5138
      %v5269 = vadd.f32 %v5010, %v5143
      %v5270 = vadd.f32 %v5011, %v5148
      %v5271 = vadd.f32 %v5012, %v5153
      %v5272 = vadd.f32 %v5013, %v5158
      %v5273 = vadd.f32 %v5014, %v5163
      %v5274 = vadd.f32 %v5015, %v5168
      %v5275 = vadd.f32 %v5016, %v5173
      %v5276 = vadd.f32 %v5017, %v5178
      %v5277 = vadd.f32 %v5018, %v5183
      %v5278 = vadd.f32 %v5019, %v5188
      %v5279 = vadd.f32 %v5020, %v5193
      %v5280 = vadd.f32 %v5021, %v5198
      %v5281 = vadd.f32 %v5022, %v5203
      %v5282 = vadd.f32 %v5023, %v5208
      %v5283 = vadd.f32 %v5024, %v5213
      %v5284 = vadd.f32 %v5025, %v5218
      %v5285 = vadd.f32 %v5026, %v5223
      %v5286 = vadd.f32 %v5027, %v5228
      %v5287 = vadd.f32 %v5028, %v5233
      %v5288 = vadd.f32 %v5029, %v5238
      %v5289 = vadd.f32 %v5030, %v5243
      %v5290 = vadd.f32 %v5031, %v5248
      %v5291 = vadd.f32 %v5032, %v5253
      %v5292 = vadd.f32 %v5033, %v5258
      %v5293 = vrot.slane %v3501, 1
      %v5294 = vrot.slane %v3502, 1
      %v5295 = vsel %vm2394, %v5293, %v5294
      %v5296 = vrot.slane %v3499, 1
      %v5297 = vrot.slane %v3500, 1
      %v5298 = vsel %vm2394, %v5296, %v5297
      %v5299 = vrot.slane %v3503, 1
      %v5300 = vrot.slane %v3504, 1
      %v5301 = vsel %vm2394, %v5299, %v5300
      %v5302 = vrot.slane %v3505, 1
      %v5303 = vrot.slane %v3506, 1
      %v5304 = vsel %vm2394, %v5302, %v5303
      %v5305 = vrot.slane %v3507, 1
      %v5306 = vrot.slane %v3508, 1
      %v5307 = vsel %vm2394, %v5305, %v5306
      %v5308 = vrot.slane %v3509, 1
      %v5309 = vrot.slane %v3510, 1
      %v5310 = vsel %vm2394, %v5308, %v5309
      %v5311 = vrot.slane %v3511, 1
      %v5312 = vrot.slane %v3512, 1
      %v5313 = vsel %vm2394, %v5311, %v5312
      %v5314 = vrot.slane %v3513, 1
      %v5315 = vrot.slane %v3514, 1
      %v5316 = vsel %vm2394, %v5314, %v5315
      %v5317 = vrot.slane %v3515, 1
      %v5318 = vrot.slane %v3516, 1
      %v5319 = vsel %vm2394, %v5317, %v5318
      %v5320 = vrot.slane %v3517, 1
      %v5321 = vrot.slane %v3518, 1
      %v5322 = vsel %vm2394, %v5320, %v5321
      %v5323 = vrot.slane %v3519, 1
      %v5324 = vrot.slane %v3520, 1
      %v5325 = vsel %vm2394, %v5323, %v5324
      %v5326 = vrot.slane %v3521, 1
      %v5327 = vrot.slane %v3522, 1
      %v5328 = vsel %vm2394, %v5326, %v5327
      %v5329 = vrot.slane %v3523, 1
      %v5330 = vrot.slane %v3524, 1
      %v5331 = vsel %vm2394, %v5329, %v5330
      %v5332 = vrot.slane %v3525, 1
      %v5333 = vrot.slane %v3526, 1
      %v5334 = vsel %vm2394, %v5332, %v5333
      %v5335 = vrot.slane %v3527, 1
      %v5336 = vrot.slane %v3528, 1
      %v5337 = vsel %vm2394, %v5335, %v5336
      %v5338 = vrot.slane %v3529, 1
      %v5339 = vrot.slane %v3530, 1
      %v5340 = vsel %vm2394, %v5338, %v5339
      %v5373 = vsel %vm2394, %v5294, %v5293
      %v5374 = vsel %vm2394, %v5297, %v5296
      %v5375 = vsel %vm2394, %v5300, %v5299
      %v5376 = vsel %vm2394, %v5303, %v5302
      %v5377 = vsel %vm2394, %v5306, %v5305
      %v5378 = vsel %vm2394, %v5309, %v5308
      %v5379 = vsel %vm2394, %v5312, %v5311
      %v5380 = vsel %vm2394, %v5315, %v5314
      %v5381 = vsel %vm2394, %v5318, %v5317
      %v5382 = vsel %vm2394, %v5321, %v5320
      %v5383 = vsel %vm2394, %v5324, %v5323
      %v5384 = vsel %vm2394, %v5327, %v5326
      %v5385 = vsel %vm2394, %v5330, %v5329
      %v5386 = vsel %vm2394, %v5333, %v5332
      %v5387 = vsel %vm2394, %v5336, %v5335
      %v5388 = vsel %vm2394, %v5339, %v5338
      %s5389 = scalar_lea.vmem %s4, 16
      %v5390 = vld [vmem:[%s5389] sm:$0xff]
      %v5391 = vsel %vm3662, %v5295, 0
      %v5394 = vsel %vm3662, %v5373, 0
      %v5396 = vsel %vm3662, %v5298, 0
      %v5399 = vsel %vm3662, %v5374, 0
      %v5401 = vsel %vm3662, %v5301, 0
      %v5404 = vsel %vm3662, %v5375, 0
      %v5406 = vsel %vm3662, %v5304, 0
      %v5409 = vsel %vm3662, %v5376, 0
      %v5411 = vsel %vm3662, %v5307, 0
      %v5414 = vsel %vm3662, %v5377, 0
      %v5416 = vsel %vm3662, %v5310, 0
      %v5419 = vsel %vm3662, %v5378, 0
      %v5421 = vsel %vm3662, %v5313, 0
      %v5424 = vsel %vm3662, %v5379, 0
      %v5426 = vsel %vm3662, %v5316, 0
      %v5429 = vsel %vm3662, %v5380, 0
      %v5431 = vsel %vm3662, %v5319, 0
      %v5434 = vsel %vm3662, %v5381, 0
      %v5436 = vsel %vm3662, %v5322, 0
      %v5439 = vsel %vm3662, %v5382, 0
      %v5441 = vsel %vm3662, %v5325, 0
      %v5444 = vsel %vm3662, %v5383, 0
      %v5446 = vsel %vm3662, %v5328, 0
      %v5449 = vsel %vm3662, %v5384, 0
      %v5451 = vsel %vm3662, %v5331, 0
      %v5454 = vsel %vm3662, %v5385, 0
      %v5456 = vsel %vm3662, %v5334, 0
      %v5459 = vsel %vm3662, %v5386, 0
      %v5461 = vsel %vm3662, %v5337, 0
      %v5464 = vsel %vm3662, %v5387, 0
      %5466 = vmatprep.subr.mxu0 0.0
      %5467 = vmatpush1.msra.mxu0 %v5390
      %5468 = vmatprep.subr.mxu0 0.0
      %5469 = vmatpush1.msra.mxu0 0.0
      %5470 = vmatprep.subr.mxu0 0.0
      %5471 = vmatpush1.msra.mxu0 0.0
      %5472 = vmatprep.subr.mxu0 0.0
      %5473 = vmatpush1.msra.mxu0 0.0
      %5474 = vmatprep.subr.mxu0 0.0
      %5475 = vmatpush1.msra.mxu0 0.0
      %5476 = vmatprep.subr.mxu0 0.0
      %5477 = vmatpush1.msra.mxu0 0.0
      %5478 = vmatprep.subr.mxu0 0.0
      %5479 = vmatpush1.msra.mxu0 0.0
      %5480 = vmatprep.subr.mxu0 0.0
      %5481 = vmatpush1.msra.mxu0 0.0
      %5482 = vmatprep.subr.mxu0 0.0
      %5483 = vmatpush1.msra.mxu0 0.0
      %5484 = vmatprep.subr.mxu0 0.0
      %5485 = vmatpush1.msra.mxu0 0.0
      %5486 = vmatprep.subr.mxu0 0.0
      %5487 = vmatpush1.msra.mxu0 0.0
      %5488 = vmatprep.subr.mxu0 0.0
      %5489 = vmatpush1.msra.mxu0 0.0
      %5490 = vmatprep.subr.mxu0 0.0
      %5491 = vmatpush1.msra.mxu0 0.0
      %5492 = vmatprep.subr.mxu0 0.0
      %5493 = vmatpush1.msra.mxu0 0.0
      %5494 = vmatprep.subr.mxu0 0.0
      %5495 = vmatpush1.msra.mxu0 0.0
      %5496 = vmatprep.subr.mxu0 0.0
      %5497 = vmatpush1.msra.mxu0 0.0
      %5498 = vmatprep.subr.mxu0 0.0
      %5499 = vmatpush1.msra.mxu0 0.0
      %5500 = vmatprep.subr.mxu0 0.0
      %5501 = vmatpush1.msra.mxu0 0.0
      %5502 = vmatprep.subr.mxu0 0.0
      %5503 = vmatpush1.msra.mxu0 0.0
      %5504 = vmatprep.subr.mxu0 0.0
      %5505 = vmatpush1.msra.mxu0 0.0
      %5506 = vmatprep.subr.mxu0 0.0
      %5507 = vmatpush1.msra.mxu0 0.0
      %5508 = vmatprep.subr.mxu0 0.0
      %5509 = vmatpush1.msra.mxu0 0.0
      %5510 = vmatprep.subr.mxu0 0.0
      %5511 = vmatpush1.msra.mxu0 0.0
      %5512 = vmatprep.subr.mxu0 0.0
      %5513 = vmatpush1.msra.mxu0 0.0
      %5514 = vmatprep.subr.mxu0 0.0
      %5515 = vmatpush1.msra.mxu0 0.0
      %5516 = vmatprep.subr.mxu0 0.0
      %5517 = vmatpush1.msra.mxu0 0.0
      %5518 = vmatprep.subr.mxu0 0.0
      %5519 = vmatpush1.msra.mxu0 0.0
      %5520 = vmatprep.subr.mxu0 0.0
      %5521 = vmatpush1.msra.mxu0 0.0
      %5522 = vmatprep.subr.mxu0 0.0
      %5523 = vmatpush1.msra.mxu0 0.0
      %5524 = vmatprep.subr.mxu0 0.0
      %5525 = vmatpush1.msra.mxu0 0.0
      %5526 = vmatprep.subr.mxu0 0.0
      %5527 = vmatpush1.msra.mxu0 0.0
      %5528 = vmatprep.subr.mxu0 0.0
      %5529 = vmatpush1.msra.mxu0 0.0
      %5530 = vmatprep.mubr.f32.mxu0 0.0
      %5531 = vmatmul.mubr.f32.gmra.mrb[0].mxu0 %v5391
      %v5532 = vpop.f32.mrb[0].mxu0
      %v5533 = vadd.f32 0.0, %v5532
      %v5534 = vpop.f32.mrb[0].mxu0
      %5535 = vmatprep.mubr.f32.mxu0 0.0
      %5536 = vmatmul.mubr.f32.gmra.mrb[0].mxu0 %v5394
      %v5537 = vpop.f32.mrb[0].mxu0
      %v5538 = vadd.f32 0.0, %v5537
      %v5539 = vpop.f32.mrb[0].mxu0
      %5540 = vmatprep.mubr.f32.mxu0 0.0
      %5541 = vmatmul.mubr.f32.gmra.mrb[0].mxu0 %v5396
      %v5542 = vpop.f32.mrb[0].mxu0
      %v5543 = vadd.f32 0.0, %v5542
      %v5544 = vpop.f32.mrb[0].mxu0
      %5545 = vmatprep.mubr.f32.mxu0 0.0
      %5546 = vmatmul.mubr.f32.gmra.mrb[0].mxu0 %v5399
      %v5547 = vpop.f32.mrb[0].mxu0
      %v5548 = vadd.f32 0.0, %v5547
      %v5549 = vpop.f32.mrb[0].mxu0
      %5550 = vmatprep.mubr.f32.mxu0 0.0
      %5551 = vmatmul.mubr.f32.gmra.mrb[0].mxu0 %v5391
      %v5552 = vpop.f32.mrb[0].mxu0
      %v5553 = vadd.f32 0.0, %v5552
      %v5554 = vpop.f32.mrb[0].mxu0
      %5555 = vmatprep.mubr.f32.mxu0 0.0
      %5556 = vmatmul.mubr.f32.gmra.mrb[0].mxu0 %v5394
      %v5557 = vpop.f32.mrb[0].mxu0
      %v5558 = vadd.f32 0.0, %v5557
      %v5559 = vpop.f32.mrb[0].mxu0
      %5560 = vmatprep.mubr.f32.mxu0 0.0
      %5561 = vmatmul.mubr.f32.gmra.mrb[0].mxu0 %v5401
      %v5562 = vpop.f32.mrb[0].mxu0
      %v5563 = vadd.f32 0.0, %v5562
      %v5564 = vpop.f32.mrb[0].mxu0
      %5565 = vmatprep.mubr.f32.mxu0 0.0
      %5566 = vmatmul.mubr.f32.gmra.mrb[0].mxu0 %v5404
      %v5567 = vpop.f32.mrb[0].mxu0
      %v5568 = vadd.f32 0.0, %v5567
      %v5569 = vpop.f32.mrb[0].mxu0
      %5570 = vmatprep.mubr.f32.mxu0 0.0
      %5571 = vmatmul.mubr.f32.gmra.mrb[0].mxu0 %v5406
      %v5572 = vpop.f32.mrb[0].mxu0
      %v5573 = vadd.f32 0.0, %v5572
      %v5574 = vpop.f32.mrb[0].mxu0
      %5575 = vmatprep.mubr.f32.mxu0 0.0
      %5576 = vmatmul.mubr.f32.gmra.mrb[0].mxu0 %v5409
      %v5577 = vpop.f32.mrb[0].mxu0
      %v5578 = vadd.f32 0.0, %v5577
      %v5579 = vpop.f32.mrb[0].mxu0
      %5580 = vmatprep.mubr.f32.mxu0 0.0
      %5581 = vmatmul.mubr.f32.gmra.mrb[0].mxu0 %v5411
      %v5582 = vpop.f32.mrb[0].mxu0
      %v5583 = vadd.f32 0.0, %v5582
      %v5584 = vpop.f32.mrb[0].mxu0
      %5585 = vmatprep.mubr.f32.mxu0 0.0
      %5586 = vmatmul.mubr.f32.gmra.mrb[0].mxu0 %v5414
      %v5587 = vpop.f32.mrb[0].mxu0
      %v5588 = vadd.f32 0.0, %v5587
      %v5589 = vpop.f32.mrb[0].mxu0
      %5590 = vmatprep.mubr.f32.mxu0 0.0
      %5591 = vmatmul.mubr.f32.gmra.mrb[0].mxu0 %v5416
      %v5592 = vpop.f32.mrb[0].mxu0
      %v5593 = vadd.f32 0.0, %v5592
      %v5594 = vpop.f32.mrb[0].mxu0
      %5595 = vmatprep.mubr.f32.mxu0 0.0
      %5596 = vmatmul.mubr.f32.gmra.mrb[0].mxu0 %v5419
      %v5597 = vpop.f32.mrb[0].mxu0
      %v5598 = vadd.f32 0.0, %v5597
      %v5599 = vpop.f32.mrb[0].mxu0
      %5600 = vmatprep.mubr.f32.mxu0 0.0
      %5601 = vmatmul.mubr.f32.gmra.mrb[0].mxu0 %v5421
      %v5602 = vpop.f32.mrb[0].mxu0
      %v5603 = vadd.f32 0.0, %v5602
      %v5604 = vpop.f32.mrb[0].mxu0
      %5605 = vmatprep.mubr.f32.mxu0 0.0
      %5606 = vmatmul.mubr.f32.gmra.mrb[0].mxu0 %v5424
      %v5607 = vpop.f32.mrb[0].mxu0
      %v5608 = vadd.f32 0.0, %v5607
      %v5609 = vpop.f32.mrb[0].mxu0
      %5610 = vmatprep.mubr.f32.mxu0 0.0
      %5611 = vmatmul.mubr.f32.gmra.mrb[0].mxu0 %v5426
      %v5612 = vpop.f32.mrb[0].mxu0
      %v5613 = vadd.f32 0.0, %v5612
      %v5614 = vpop.f32.mrb[0].mxu0
      %5615 = vmatprep.mubr.f32.mxu0 0.0
      %5616 = vmatmul.mubr.f32.gmra.mrb[0].mxu0 %v5429
      %v5617 = vpop.f32.mrb[0].mxu0
      %v5618 = vadd.f32 0.0, %v5617
      %v5619 = vpop.f32.mrb[0].mxu0
      %5620 = vmatprep.mubr.f32.mxu0 0.0
      %5621 = vmatmul.mubr.f32.gmra.mrb[0].mxu0 %v5431
      %v5622 = vpop.f32.mrb[0].mxu0
      %v5623 = vadd.f32 0.0, %v5622
      %v5624 = vpop.f32.mrb[0].mxu0
      %5625 = vmatprep.mubr.f32.mxu0 0.0
      %5626 = vmatmul.mubr.f32.gmra.mrb[0].mxu0 %v5434
      %v5627 = vpop.f32.mrb[0].mxu0
      %v5628 = vadd.f32 0.0, %v5627
      %v5629 = vpop.f32.mrb[0].mxu0
      %5630 = vmatprep.mubr.f32.mxu0 0.0
      %5631 = vmatmul.mubr.f32.gmra.mrb[0].mxu0 %v5436
      %v5632 = vpop.f32.mrb[0].mxu0
      %v5633 = vadd.f32 0.0, %v5632
      %v5634 = vpop.f32.mrb[0].mxu0
      %5635 = vmatprep.mubr.f32.mxu0 0.0
      %5636 = vmatmul.mubr.f32.gmra.mrb[0].mxu0 %v5439
      %v5637 = vpop.f32.mrb[0].mxu0
      %v5638 = vadd.f32 0.0, %v5637
      %v5639 = vpop.f32.mrb[0].mxu0
      %5640 = vmatprep.mubr.f32.mxu0 0.0
      %5641 = vmatmul.mubr.f32.gmra.mrb[0].mxu0 %v5441
      %v5642 = vpop.f32.mrb[0].mxu0
      %v5643 = vadd.f32 0.0, %v5642
      %v5644 = vpop.f32.mrb[0].mxu0
      %5645 = vmatprep.mubr.f32.mxu0 0.0
      %5646 = vmatmul.mubr.f32.gmra.mrb[0].mxu0 %v5444
      %v5647 = vpop.f32.mrb[0].mxu0
      %v5648 = vadd.f32 0.0, %v5647
      %v5649 = vpop.f32.mrb[0].mxu0
      %5650 = vmatprep.mubr.f32.mxu0 0.0
      %5651 = vmatmul.mubr.f32.gmra.mrb[0].mxu0 %v5446
      %v5652 = vpop.f32.mrb[0].mxu0
      %v5653 = vadd.f32 0.0, %v5652
      %v5654 = vpop.f32.mrb[0].mxu0
      %5655 = vmatprep.mubr.f32.mxu0 0.0
      %5656 = vmatmul.mubr.f32.gmra.mrb[0].mxu0 %v5449
      %v5657 = vpop.f32.mrb[0].mxu0
      %v5658 = vadd.f32 0.0, %v5657
      %v5659 = vpop.f32.mrb[0].mxu0
      %5660 = vmatprep.mubr.f32.mxu0 0.0
      %5661 = vmatmul.mubr.f32.gmra.mrb[0].mxu0 %v5451
      %v5662 = vpop.f32.mrb[0].mxu0
      %v5663 = vadd.f32 0.0, %v5662
      %v5664 = vpop.f32.mrb[0].mxu0
      %5665 = vmatprep.mubr.f32.mxu0 0.0
      %5666 = vmatmul.mubr.f32.gmra.mrb[0].mxu0 %v5454
      %v5667 = vpop.f32.mrb[0].mxu0
      %v5668 = vadd.f32 0.0, %v5667
      %v5669 = vpop.f32.mrb[0].mxu0
      %5670 = vmatprep.mubr.f32.mxu0 0.0
      %5671 = vmatmul.mubr.f32.gmra.mrb[0].mxu0 %v5456
      %v5672 = vpop.f32.mrb[0].mxu0
      %v5673 = vadd.f32 0.0, %v5672
      %v5674 = vpop.f32.mrb[0].mxu0
      %5675 = vmatprep.mubr.f32.mxu0 0.0
      %5676 = vmatmul.mubr.f32.gmra.mrb[0].mxu0 %v5459
      %v5677 = vpop.f32.mrb[0].mxu0
      %v5678 = vadd.f32 0.0, %v5677
      %v5679 = vpop.f32.mrb[0].mxu0
      %5680 = vmatprep.mubr.f32.mxu0 0.0
      %5681 = vmatmul.mubr.f32.gmra.mrb[0].mxu0 %v5461
      %v5682 = vpop.f32.mrb[0].mxu0
      %v5683 = vadd.f32 0.0, %v5682
      %v5684 = vpop.f32.mrb[0].mxu0
      %5685 = vmatprep.mubr.f32.mxu0 0.0
      %5686 = vmatmul.mubr.f32.gmra.mrb[0].mxu0 %v5464
      %v5687 = vpop.f32.mrb[0].mxu0
      %v5688 = vadd.f32 0.0, %v5687
      %v5689 = vpop.f32.mrb[0].mxu0
      %5690 = vdwg.mxu0
      %v5691 = vadd.f32 %v5261, %v5533
      %v5692 = vadd.f32 %v5262, %v5538
      %v5693 = vadd.f32 %v5263, %v5543
      %v5694 = vadd.f32 %v5264, %v5548
      %v5695 = vadd.f32 %v5265, %v5553
      %v5696 = vadd.f32 %v5266, %v5558
      %v5697 = vadd.f32 %v5267, %v5563
      %v5698 = vadd.f32 %v5268, %v5568
      %v5699 = vadd.f32 %v5269, %v5573
      %v5700 = vadd.f32 %v5270, %v5578
      %v5701 = vadd.f32 %v5271, %v5583
      %v5702 = vadd.f32 %v5272, %v5588
      %v5703 = vadd.f32 %v5273, %v5593
      %v5704 = vadd.f32 %v5274, %v5598
      %v5705 = vadd.f32 %v5275, %v5603
      %v5706 = vadd.f32 %v5276, %v5608
      %v5707 = vadd.f32 %v5277, %v5613
      %v5708 = vadd.f32 %v5278, %v5618
      %v5709 = vadd.f32 %v5279, %v5623
      %v5710 = vadd.f32 %v5280, %v5628
      %v5711 = vadd.f32 %v5281, %v5633
      %v5712 = vadd.f32 %v5282, %v5638
      %v5713 = vadd.f32 %v5283, %v5643
      %v5714 = vadd.f32 %v5284, %v5648
      %v5715 = vadd.f32 %v5285, %v5653
      %v5716 = vadd.f32 %v5286, %v5658
      %v5717 = vadd.f32 %v5287, %v5663
      %v5718 = vadd.f32 %v5288, %v5668
      %v5719 = vadd.f32 %v5289, %v5673
      %v5720 = vadd.f32 %v5290, %v5678
      %v5721 = vadd.f32 %v5291, %v5683
      %v5722 = vadd.f32 %v5292, %v5688
      %s5723 = scalar_lea.vmem %s4, 40
      %v5724 = vld [vmem:[%s5723] sm:$0xff]
      %v5725 = vsel %vm3662, %v5340, 0
      %v5728 = vsel %vm3662, %v5388, 0
      %5730 = vmatprep.subr.mxu0 0.0
      %5731 = vmatpush1.msra.mxu0 %v5724
      %5732 = vmatprep.subr.mxu0 0.0
      %5733 = vmatpush1.msra.mxu0 0.0
      %5734 = vmatprep.subr.mxu0 0.0
      %5735 = vmatpush1.msra.mxu0 0.0
      %5736 = vmatprep.subr.mxu0 0.0
      %5737 = vmatpush1.msra.mxu0 0.0
      %5738 = vmatprep.subr.mxu0 0.0
      %5739 = vmatpush1.msra.mxu0 0.0
      %5740 = vmatprep.subr.mxu0 0.0
      %5741 = vmatpush1.msra.mxu0 0.0
      %5742 = vmatprep.subr.mxu0 0.0
      %5743 = vmatpush1.msra.mxu0 0.0
      %5744 = vmatprep.subr.mxu0 0.0
      %5745 = vmatpush1.msra.mxu0 0.0
      %5746 = vmatprep.subr.mxu0 0.0
      %5747 = vmatpush1.msra.mxu0 0.0
      %5748 = vmatprep.subr.mxu0 0.0
      %5749 = vmatpush1.msra.mxu0 0.0
      %5750 = vmatprep.subr.mxu0 0.0
      %5751 = vmatpush1.msra.mxu0 0.0
      %5752 = vmatprep.subr.mxu0 0.0
      %5753 = vmatpush1.msra.mxu0 0.0
      %5754 = vmatprep.subr.mxu0 0.0
      %5755 = vmatpush1.msra.mxu0 0.0
      %5756 = vmatprep.subr.mxu0 0.0
      %5757 = vmatpush1.msra.mxu0 0.0
      %5758 = vmatprep.subr.mxu0 0.0
      %5759 = vmatpush1.msra.mxu0 0.0
      %5760 = vmatprep.subr.mxu0 0.0
      %5761 = vmatpush1.msra.mxu0 0.0
      %5762 = vmatprep.subr.mxu0 0.0
      %5763 = vmatpush1.msra.mxu0 0.0
      %5764 = vmatprep.subr.mxu0 0.0
      %5765 = vmatpush1.msra.mxu0 0.0
      %5766 = vmatprep.subr.mxu0 0.0
      %5767 = vmatpush1.msra.mxu0 0.0
      %5768 = vmatprep.subr.mxu0 0.0
      %5769 = vmatpush1.msra.mxu0 0.0
      %5770 = vmatprep.subr.mxu0 0.0
      %5771 = vmatpush1.msra.mxu0 0.0
      %5772 = vmatprep.subr.mxu0 0.0
      %5773 = vmatpush1.msra.mxu0 0.0
      %5774 = vmatprep.subr.mxu0 0.0
      %5775 = vmatpush1.msra.mxu0 0.0
      %5776 = vmatprep.subr.mxu0 0.0
      %5777 = vmatpush1.msra.mxu0 0.0
      %5778 = vmatprep.subr.mxu0 0.0
      %5779 = vmatpush1.msra.mxu0 0.0
      %5780 = vmatprep.subr.mxu0 0.0
      %5781 = vmatpush1.msra.mxu0 0.0
      %5782 = vmatprep.subr.mxu0 0.0
      %5783 = vmatpush1.msra.mxu0 0.0
      %5784 = vmatprep.subr.mxu0 0.0
      %5785 = vmatpush1.msra.mxu0 0.0
      %5786 = vmatprep.subr.mxu0 0.0
      %5787 = vmatpush1.msra.mxu0 0.0
      %5788 = vmatprep.subr.mxu0 0.0
      %5789 = vmatpush1.msra.mxu0 0.0
      %5790 = vmatprep.subr.mxu0 0.0
      %5791 = vmatpush1.msra.mxu0 0.0
      %5792 = vmatprep.subr.mxu0 0.0
      %5793 = vmatpush1.msra.mxu0 0.0
      %5794 = vmatprep.mubr.f32.mxu0 0.0
      %5795 = vmatmul.mubr.f32.gmra.mrb[0].mxu0 %v5396
      %v5796 = vpop.f32.mrb[0].mxu0
      %v5797 = vadd.f32 0.0, %v5796
      %v5798 = vpop.f32.mrb[0].mxu0
      %5799 = vmatprep.mubr.f32.mxu0 0.0
      %5800 = vmatmul.mubr.f32.gmra.mrb[0].mxu0 %v5399
      %v5801 = vpop.f32.mrb[0].mxu0
      %v5802 = vadd.f32 0.0, %v5801
      %v5803 = vpop.f32.mrb[0].mxu0
      %5804 = vmatprep.mubr.f32.mxu0 0.0
      %5805 = vmatmul.mubr.f32.gmra.mrb[0].mxu0 %v5391
      %v5806 = vpop.f32.mrb[0].mxu0
      %v5807 = vadd.f32 0.0, %v5806
      %v5808 = vpop.f32.mrb[0].mxu0
      %5809 = vmatprep.mubr.f32.mxu0 0.0
      %5810 = vmatmul.mubr.f32.gmra.mrb[0].mxu0 %v5394
      %v5811 = vpop.f32.mrb[0].mxu0
      %v5812 = vadd.f32 0.0, %v5811
      %v5813 = vpop.f32.mrb[0].mxu0
      %5814 = vmatprep.mubr.f32.mxu0 0.0
      %5815 = vmatmul.mubr.f32.gmra.mrb[0].mxu0 %v5401
      %v5816 = vpop.f32.mrb[0].mxu0
      %v5817 = vadd.f32 0.0, %v5816
      %v5818 = vpop.f32.mrb[0].mxu0
      %5819 = vmatprep.mubr.f32.mxu0 0.0
      %5820 = vmatmul.mubr.f32.gmra.mrb[0].mxu0 %v5404
      %v5821 = vpop.f32.mrb[0].mxu0
      %v5822 = vadd.f32 0.0, %v5821
      %v5823 = vpop.f32.mrb[0].mxu0
      %5824 = vmatprep.mubr.f32.mxu0 0.0
      %5825 = vmatmul.mubr.f32.gmra.mrb[0].mxu0 %v5406
      %v5826 = vpop.f32.mrb[0].mxu0
      %v5827 = vadd.f32 0.0, %v5826
      %v5828 = vpop.f32.mrb[0].mxu0
      %5829 = vmatprep.mubr.f32.mxu0 0.0
      %5830 = vmatmul.mubr.f32.gmra.mrb[0].mxu0 %v5409
      %v5831 = vpop.f32.mrb[0].mxu0
      %v5832 = vadd.f32 0.0, %v5831
      %v5833 = vpop.f32.mrb[0].mxu0
      %5834 = vmatprep.mubr.f32.mxu0 0.0
      %5835 = vmatmul.mubr.f32.gmra.mrb[0].mxu0 %v5411
      %v5836 = vpop.f32.mrb[0].mxu0
      %v5837 = vadd.f32 0.0, %v5836
      %v5838 = vpop.f32.mrb[0].mxu0
      %5839 = vmatprep.mubr.f32.mxu0 0.0
      %5840 = vmatmul.mubr.f32.gmra.mrb[0].mxu0 %v5414
      %v5841 = vpop.f32.mrb[0].mxu0
      %v5842 = vadd.f32 0.0, %v5841
      %v5843 = vpop.f32.mrb[0].mxu0
      %5844 = vmatprep.mubr.f32.mxu0 0.0
      %5845 = vmatmul.mubr.f32.gmra.mrb[0].mxu0 %v5416
      %v5846 = vpop.f32.mrb[0].mxu0
      %v5847 = vadd.f32 0.0, %v5846
      %v5848 = vpop.f32.mrb[0].mxu0
      %5849 = vmatprep.mubr.f32.mxu0 0.0
      %5850 = vmatmul.mubr.f32.gmra.mrb[0].mxu0 %v5419
      %v5851 = vpop.f32.mrb[0].mxu0
      %v5852 = vadd.f32 0.0, %v5851
      %v5853 = vpop.f32.mrb[0].mxu0
      %5854 = vmatprep.mubr.f32.mxu0 0.0
      %5855 = vmatmul.mubr.f32.gmra.mrb[0].mxu0 %v5421
      %v5856 = vpop.f32.mrb[0].mxu0
      %v5857 = vadd.f32 0.0, %v5856
      %v5858 = vpop.f32.mrb[0].mxu0
      %5859 = vmatprep.mubr.f32.mxu0 0.0
      %5860 = vmatmul.mubr.f32.gmra.mrb[0].mxu0 %v5424
      %v5861 = vpop.f32.mrb[0].mxu0
      %v5862 = vadd.f32 0.0, %v5861
      %v5863 = vpop.f32.mrb[0].mxu0
      %5864 = vmatprep.mubr.f32.mxu0 0.0
      %5865 = vmatmul.mubr.f32.gmra.mrb[0].mxu0 %v5426
      %v5866 = vpop.f32.mrb[0].mxu0
      %v5867 = vadd.f32 0.0, %v5866
      %v5868 = vpop.f32.mrb[0].mxu0
      %5869 = vmatprep.mubr.f32.mxu0 0.0
      %5870 = vmatmul.mubr.f32.gmra.mrb[0].mxu0 %v5429
      %v5871 = vpop.f32.mrb[0].mxu0
      %v5872 = vadd.f32 0.0, %v5871
      %v5873 = vpop.f32.mrb[0].mxu0
      %5874 = vmatprep.mubr.f32.mxu0 0.0
      %5875 = vmatmul.mubr.f32.gmra.mrb[0].mxu0 %v5431
      %v5876 = vpop.f32.mrb[0].mxu0
      %v5877 = vadd.f32 0.0, %v5876
      %v5878 = vpop.f32.mrb[0].mxu0
      %5879 = vmatprep.mubr.f32.mxu0 0.0
      %5880 = vmatmul.mubr.f32.gmra.mrb[0].mxu0 %v5434
      %v5881 = vpop.f32.mrb[0].mxu0
      %v5882 = vadd.f32 0.0, %v5881
      %v5883 = vpop.f32.mrb[0].mxu0
      %5884 = vmatprep.mubr.f32.mxu0 0.0
      %5885 = vmatmul.mubr.f32.gmra.mrb[0].mxu0 %v5436
      %v5886 = vpop.f32.mrb[0].mxu0
      %v5887 = vadd.f32 0.0, %v5886
      %v5888 = vpop.f32.mrb[0].mxu0
      %5889 = vmatprep.mubr.f32.mxu0 0.0
      %5890 = vmatmul.mubr.f32.gmra.mrb[0].mxu0 %v5439
      %v5891 = vpop.f32.mrb[0].mxu0
      %v5892 = vadd.f32 0.0, %v5891
      %v5893 = vpop.f32.mrb[0].mxu0
      %5894 = vmatprep.mubr.f32.mxu0 0.0
      %5895 = vmatmul.mubr.f32.gmra.mrb[0].mxu0 %v5441
      %v5896 = vpop.f32.mrb[0].mxu0
      %v5897 = vadd.f32 0.0, %v5896
      %v5898 = vpop.f32.mrb[0].mxu0
      %5899 = vmatprep.mubr.f32.mxu0 0.0
      %5900 = vmatmul.mubr.f32.gmra.mrb[0].mxu0 %v5444
      %v5901 = vpop.f32.mrb[0].mxu0
      %v5902 = vadd.f32 0.0, %v5901
      %v5903 = vpop.f32.mrb[0].mxu0
      %5904 = vmatprep.mubr.f32.mxu0 0.0
      %5905 = vmatmul.mubr.f32.gmra.mrb[0].mxu0 %v5446
      %v5906 = vpop.f32.mrb[0].mxu0
      %v5907 = vadd.f32 0.0, %v5906
      %v5908 = vpop.f32.mrb[0].mxu0
      %5909 = vmatprep.mubr.f32.mxu0 0.0
      %5910 = vmatmul.mubr.f32.gmra.mrb[0].mxu0 %v5449
      %v5911 = vpop.f32.mrb[0].mxu0
      %v5912 = vadd.f32 0.0, %v5911
      %v5913 = vpop.f32.mrb[0].mxu0
      %5914 = vmatprep.mubr.f32.mxu0 0.0
      %5915 = vmatmul.mubr.f32.gmra.mrb[0].mxu0 %v5451
      %v5916 = vpop.f32.mrb[0].mxu0
      %v5917 = vadd.f32 0.0, %v5916
      %v5918 = vpop.f32.mrb[0].mxu0
      %5919 = vmatprep.mubr.f32.mxu0 0.0
      %5920 = vmatmul.mubr.f32.gmra.mrb[0].mxu0 %v5454
      %v5921 = vpop.f32.mrb[0].mxu0
      %v5922 = vadd.f32 0.0, %v5921
      %v5923 = vpop.f32.mrb[0].mxu0
      %5924 = vmatprep.mubr.f32.mxu0 0.0
      %5925 = vmatmul.mubr.f32.gmra.mrb[0].mxu0 %v5456
      %v5926 = vpop.f32.mrb[0].mxu0
      %v5927 = vadd.f32 0.0, %v5926
      %v5928 = vpop.f32.mrb[0].mxu0
      %5929 = vmatprep.mubr.f32.mxu0 0.0
      %5930 = vmatmul.mubr.f32.gmra.mrb[0].mxu0 %v5459
      %v5931 = vpop.f32.mrb[0].mxu0
      %v5932 = vadd.f32 0.0, %v5931
      %v5933 = vpop.f32.mrb[0].mxu0
      %5934 = vmatprep.mubr.f32.mxu0 0.0
      %5935 = vmatmul.mubr.f32.gmra.mrb[0].mxu0 %v5461
      %v5936 = vpop.f32.mrb[0].mxu0
      %v5937 = vadd.f32 0.0, %v5936
      %v5938 = vpop.f32.mrb[0].mxu0
      %5939 = vmatprep.mubr.f32.mxu0 0.0
      %5940 = vmatmul.mubr.f32.gmra.mrb[0].mxu0 %v5464
      %v5941 = vpop.f32.mrb[0].mxu0
      %v5942 = vadd.f32 0.0, %v5941
      %v5943 = vpop.f32.mrb[0].mxu0
      %5944 = vmatprep.mubr.f32.mxu0 0.0
      %5945 = vmatmul.mubr.f32.gmra.mrb[0].mxu0 %v5725
      %v5946 = vpop.f32.mrb[0].mxu0
      %v5947 = vadd.f32 0.0, %v5946
      %v5948 = vpop.f32.mrb[0].mxu0
      %5949 = vmatprep.mubr.f32.mxu0 0.0
      %5950 = vmatmul.mubr.f32.gmra.mrb[0].mxu0 %v5728
      %v5951 = vpop.f32.mrb[0].mxu0
      %v5952 = vadd.f32 0.0, %v5951
      %v5953 = vpop.f32.mrb[0].mxu0
      %5954 = vdwg.mxu0
      %v5955 = vadd.f32 %v5691, %v5797
      %v5956 = vadd.f32 %v5692, %v5802
      %v5957 = vadd.f32 %v5693, %v5807
      %v5958 = vadd.f32 %v5694, %v5812
      %v5959 = vadd.f32 %v5695, %v5817
      %v5960 = vadd.f32 %v5696, %v5822
      %v5961 = vadd.f32 %v5697, %v5827
      %v5962 = vadd.f32 %v5698, %v5832
      %v5963 = vadd.f32 %v5699, %v5837
      %v5964 = vadd.f32 %v5700, %v5842
      %v5965 = vadd.f32 %v5701, %v5847
      %v5966 = vadd.f32 %v5702, %v5852
      %v5967 = vadd.f32 %v5703, %v5857
      %v5968 = vadd.f32 %v5704, %v5862
      %v5969 = vadd.f32 %v5705, %v5867
      %v5970 = vadd.f32 %v5706, %v5872
      %v5971 = vadd.f32 %v5707, %v5877
      %v5972 = vadd.f32 %v5708, %v5882
      %v5973 = vadd.f32 %v5709, %v5887
      %v5974 = vadd.f32 %v5710, %v5892
      %v5975 = vadd.f32 %v5711, %v5897
      %v5976 = vadd.f32 %v5712, %v5902
      %v5977 = vadd.f32 %v5713, %v5907
      %v5978 = vadd.f32 %v5714, %v5912
      %v5979 = vadd.f32 %v5715, %v5917
      %v5980 = vadd.f32 %v5716, %v5922
      %v5981 = vadd.f32 %v5717, %v5927
      %v5982 = vadd.f32 %v5718, %v5932
      %v5983 = vadd.f32 %v5719, %v5937
      %v5984 = vadd.f32 %v5720, %v5942
      %v5985 = vadd.f32 %v5721, %v5947
      %v5986 = vadd.f32 %v5722, %v5952
      %s5987 = scalar_lea.vmem %s4, 64
      %v5988 = vld [vmem:[%s5987] sm:$0xff]
      %5989 = vmatprep.subr.mxu0 0.0
      %5990 = vmatpush1.msra.mxu0 %v5988
      %5991 = vmatprep.subr.mxu0 0.0
      %5992 = vmatpush1.msra.mxu0 0.0
      %5993 = vmatprep.subr.mxu0 0.0
      %5994 = vmatpush1.msra.mxu0 0.0
      %5995 = vmatprep.subr.mxu0 0.0
      %5996 = vmatpush1.msra.mxu0 0.0
      %5997 = vmatprep.subr.mxu0 0.0
      %5998 = vmatpush1.msra.mxu0 0.0
      %5999 = vmatprep.subr.mxu0 0.0
      %6000 = vmatpush1.msra.mxu0 0.0
      %6001 = vmatprep.subr.mxu0 0.0
      %6002 = vmatpush1.msra.mxu0 0.0
      %6003 = vmatprep.subr.mxu0 0.0
      %6004 = vmatpush1.msra.mxu0 0.0
      %6005 = vmatprep.subr.mxu0 0.0
      %6006 = vmatpush1.msra.mxu0 0.0
      %6007 = vmatprep.subr.mxu0 0.0
      %6008 = vmatpush1.msra.mxu0 0.0
      %6009 = vmatprep.subr.mxu0 0.0
      %6010 = vmatpush1.msra.mxu0 0.0
      %6011 = vmatprep.subr.mxu0 0.0
      %6012 = vmatpush1.msra.mxu0 0.0
      %6013 = vmatprep.subr.mxu0 0.0
      %6014 = vmatpush1.msra.mxu0 0.0
      %6015 = vmatprep.subr.mxu0 0.0
      %6016 = vmatpush1.msra.mxu0 0.0
      %6017 = vmatprep.subr.mxu0 0.0
      %6018 = vmatpush1.msra.mxu0 0.0
      %6019 = vmatprep.subr.mxu0 0.0
      %6020 = vmatpush1.msra.mxu0 0.0
      %6021 = vmatprep.subr.mxu0 0.0
      %6022 = vmatpush1.msra.mxu0 0.0
      %6023 = vmatprep.subr.mxu0 0.0
      %6024 = vmatpush1.msra.mxu0 0.0
      %6025 = vmatprep.subr.mxu0 0.0
      %6026 = vmatpush1.msra.mxu0 0.0
      %6027 = vmatprep.subr.mxu0 0.0
      %6028 = vmatpush1.msra.mxu0 0.0
      %6029 = vmatprep.subr.mxu0 0.0
      %6030 = vmatpush1.msra.mxu0 0.0
      %6031 = vmatprep.subr.mxu0 0.0
      %6032 = vmatpush1.msra.mxu0 0.0
      %6033 = vmatprep.subr.mxu0 0.0
      %6034 = vmatpush1.msra.mxu0 0.0
      %6035 = vmatprep.subr.mxu0 0.0
      %6036 = vmatpush1.msra.mxu0 0.0
      %6037 = vmatprep.subr.mxu0 0.0
      %6038 = vmatpush1.msra.mxu0 0.0
      %6039 = vmatprep.subr.mxu0 0.0
      %6040 = vmatpush1.msra.mxu0 0.0
      %6041 = vmatprep.subr.mxu0 0.0
      %6042 = vmatpush1.msra.mxu0 0.0
      %6043 = vmatprep.subr.mxu0 0.0
      %6044 = vmatpush1.msra.mxu0 0.0
      %6045 = vmatprep.subr.mxu0 0.0
      %6046 = vmatpush1.msra.mxu0 0.0
      %6047 = vmatprep.subr.mxu0 0.0
      %6048 = vmatpush1.msra.mxu0 0.0
      %6049 = vmatprep.subr.mxu0 0.0
      %6050 = vmatpush1.msra.mxu0 0.0
      %6051 = vmatprep.subr.mxu0 0.0
      %6052 = vmatpush1.msra.mxu0 0.0
      %6053 = vmatprep.mubr.f32.mxu0 0.0
      %6054 = vmatmul.mubr.f32.gmra.mrb[0].mxu0 %v5391
      %v6055 = vpop.f32.mrb[0].mxu0
      %v6056 = vadd.f32 0.0, %v6055
      %v6057 = vpop.f32.mrb[0].mxu0
      %6058 = vmatprep.mubr.f32.mxu0 0.0
      %6059 = vmatmul.mubr.f32.gmra.mrb[0].mxu0 %v5394
      %v6060 = vpop.f32.mrb[0].mxu0
      %v6061 = vadd.f32 0.0, %v6060
      %v6062 = vpop.f32.mrb[0].mxu0
      %6063 = vmatprep.mubr.f32.mxu0 0.0
      %6064 = vmatmul.mubr.f32.gmra.mrb[0].mxu0 %v5401
      %v6065 = vpop.f32.mrb[0].mxu0
      %v6066 = vadd.f32 0.0, %v6065
      %v6067 = vpop.f32.mrb[0].mxu0
      %6068 = vmatprep.mubr.f32.mxu0 0.0
      %6069 = vmatmul.mubr.f32.gmra.mrb[0].mxu0 %v5404
      %v6070 = vpop.f32.mrb[0].mxu0
      %v6071 = vadd.f32 0.0, %v6070
      %v6072 = vpop.f32.mrb[0].mxu0
      %6073 = vmatprep.mubr.f32.mxu0 0.0
      %6074 = vmatmul.mubr.f32.gmra.mrb[0].mxu0 %v5406
      %v6075 = vpop.f32.mrb[0].mxu0
      %v6076 = vadd.f32 0.0, %v6075
      %v6077 = vpop.f32.mrb[0].mxu0
      %6078 = vmatprep.mubr.f32.mxu0 0.0
      %6079 = vmatmul.mubr.f32.gmra.mrb[0].mxu0 %v5409
      %v6080 = vpop.f32.mrb[0].mxu0
      %v6081 = vadd.f32 0.0, %v6080
      %v6082 = vpop.f32.mrb[0].mxu0
      %6083 = vmatprep.mubr.f32.mxu0 0.0
      %6084 = vmatmul.mubr.f32.gmra.mrb[0].mxu0 %v5411
      %v6085 = vpop.f32.mrb[0].mxu0
      %v6086 = vadd.f32 0.0, %v6085
      %v6087 = vpop.f32.mrb[0].mxu0
      %6088 = vmatprep.mubr.f32.mxu0 0.0
      %6089 = vmatmul.mubr.f32.gmra.mrb[0].mxu0 %v5414
      %v6090 = vpop.f32.mrb[0].mxu0
      %v6091 = vadd.f32 0.0, %v6090
      %v6092 = vpop.f32.mrb[0].mxu0
      %6093 = vmatprep.mubr.f32.mxu0 0.0
      %6094 = vmatmul.mubr.f32.gmra.mrb[0].mxu0 %v5416
      %v6095 = vpop.f32.mrb[0].mxu0
      %v6096 = vadd.f32 0.0, %v6095
      %v6097 = vpop.f32.mrb[0].mxu0
      %6098 = vmatprep.mubr.f32.mxu0 0.0
      %6099 = vmatmul.mubr.f32.gmra.mrb[0].mxu0 %v5419
      %v6100 = vpop.f32.mrb[0].mxu0
      %v6101 = vadd.f32 0.0, %v6100
      %v6102 = vpop.f32.mrb[0].mxu0
      %6103 = vmatprep.mubr.f32.mxu0 0.0
      %6104 = vmatmul.mubr.f32.gmra.mrb[0].mxu0 %v5421
      %v6105 = vpop.f32.mrb[0].mxu0
      %v6106 = vadd.f32 0.0, %v6105
      %v6107 = vpop.f32.mrb[0].mxu0
      %6108 = vmatprep.mubr.f32.mxu0 0.0
      %6109 = vmatmul.mubr.f32.gmra.mrb[0].mxu0 %v5424
      %v6110 = vpop.f32.mrb[0].mxu0
      %v6111 = vadd.f32 0.0, %v6110
      %v6112 = vpop.f32.mrb[0].mxu0
      %6113 = vmatprep.mubr.f32.mxu0 0.0
      %6114 = vmatmul.mubr.f32.gmra.mrb[0].mxu0 %v5426
      %v6115 = vpop.f32.mrb[0].mxu0
      %v6116 = vadd.f32 0.0, %v6115
      %v6117 = vpop.f32.mrb[0].mxu0
      %6118 = vmatprep.mubr.f32.mxu0 0.0
      %6119 = vmatmul.mubr.f32.gmra.mrb[0].mxu0 %v5429
      %v6120 = vpop.f32.mrb[0].mxu0
      %v6121 = vadd.f32 0.0, %v6120
      %v6122 = vpop.f32.mrb[0].mxu0
      %6123 = vmatprep.mubr.f32.mxu0 0.0
      %6124 = vmatmul.mubr.f32.gmra.mrb[0].mxu0 %v5431
      %v6125 = vpop.f32.mrb[0].mxu0
      %v6126 = vadd.f32 0.0, %v6125
      %v6127 = vpop.f32.mrb[0].mxu0
      %6128 = vmatprep.mubr.f32.mxu0 0.0
      %6129 = vmatmul.mubr.f32.gmra.mrb[0].mxu0 %v5434
      %v6130 = vpop.f32.mrb[0].mxu0
      %v6131 = vadd.f32 0.0, %v6130
      %v6132 = vpop.f32.mrb[0].mxu0
      %6133 = vmatprep.mubr.f32.mxu0 0.0
      %6134 = vmatmul.mubr.f32.gmra.mrb[0].mxu0 %v5436
      %v6135 = vpop.f32.mrb[0].mxu0
      %v6136 = vadd.f32 0.0, %v6135
      %v6137 = vpop.f32.mrb[0].mxu0
      %6138 = vmatprep.mubr.f32.mxu0 0.0
      %6139 = vmatmul.mubr.f32.gmra.mrb[0].mxu0 %v5439
      %v6140 = vpop.f32.mrb[0].mxu0
      %v6141 = vadd.f32 0.0, %v6140
      %v6142 = vpop.f32.mrb[0].mxu0
      %6143 = vmatprep.mubr.f32.mxu0 0.0
      %6144 = vmatmul.mubr.f32.gmra.mrb[0].mxu0 %v5441
      %v6145 = vpop.f32.mrb[0].mxu0
      %v6146 = vadd.f32 0.0, %v6145
      %v6147 = vpop.f32.mrb[0].mxu0
      %6148 = vmatprep.mubr.f32.mxu0 0.0
      %6149 = vmatmul.mubr.f32.gmra.mrb[0].mxu0 %v5444
      %v6150 = vpop.f32.mrb[0].mxu0
      %v6151 = vadd.f32 0.0, %v6150
      %v6152 = vpop.f32.mrb[0].mxu0
      %6153 = vmatprep.mubr.f32.mxu0 0.0
      %6154 = vmatmul.mubr.f32.gmra.mrb[0].mxu0 %v5446
      %v6155 = vpop.f32.mrb[0].mxu0
      %v6156 = vadd.f32 0.0, %v6155
      %v6157 = vpop.f32.mrb[0].mxu0
      %6158 = vmatprep.mubr.f32.mxu0 0.0
      %6159 = vmatmul.mubr.f32.gmra.mrb[0].mxu0 %v5449
      %v6160 = vpop.f32.mrb[0].mxu0
      %v6161 = vadd.f32 0.0, %v6160
      %v6162 = vpop.f32.mrb[0].mxu0
      %6163 = vmatprep.mubr.f32.mxu0 0.0
      %6164 = vmatmul.mubr.f32.gmra.mrb[0].mxu0 %v5451
      %v6165 = vpop.f32.mrb[0].mxu0
      %v6166 = vadd.f32 0.0, %v6165
      %v6167 = vpop.f32.mrb[0].mxu0
      %6168 = vmatprep.mubr.f32.mxu0 0.0
      %6169 = vmatmul.mubr.f32.gmra.mrb[0].mxu0 %v5454
      %v6170 = vpop.f32.mrb[0].mxu0
      %v6171 = vadd.f32 0.0, %v6170
      %v6172 = vpop.f32.mrb[0].mxu0
      %6173 = vmatprep.mubr.f32.mxu0 0.0
      %6174 = vmatmul.mubr.f32.gmra.mrb[0].mxu0 %v5456
      %v6175 = vpop.f32.mrb[0].mxu0
      %v6176 = vadd.f32 0.0, %v6175
      %v6177 = vpop.f32.mrb[0].mxu0
      %6178 = vmatprep.mubr.f32.mxu0 0.0
      %6179 = vmatmul.mubr.f32.gmra.mrb[0].mxu0 %v5459
      %v6180 = vpop.f32.mrb[0].mxu0
      %v6181 = vadd.f32 0.0, %v6180
      %v6182 = vpop.f32.mrb[0].mxu0
      %6183 = vmatprep.mubr.f32.mxu0 0.0
      %6184 = vmatmul.mubr.f32.gmra.mrb[0].mxu0 %v5461
      %v6185 = vpop.f32.mrb[0].mxu0
      %v6186 = vadd.f32 0.0, %v6185
      %v6187 = vpop.f32.mrb[0].mxu0
      %6188 = vmatprep.mubr.f32.mxu0 0.0
      %6189 = vmatmul.mubr.f32.gmra.mrb[0].mxu0 %v5464
      %v6190 = vpop.f32.mrb[0].mxu0
      %v6191 = vadd.f32 0.0, %v6190
      %v6192 = vpop.f32.mrb[0].mxu0
      %6193 = vmatprep.mubr.f32.mxu0 0.0
      %6194 = vmatmul.mubr.f32.gmra.mrb[0].mxu0 %v5725
      %v6195 = vpop.f32.mrb[0].mxu0
      %v6196 = vadd.f32 0.0, %v6195
      %v6197 = vpop.f32.mrb[0].mxu0
      %6198 = vmatprep.mubr.f32.mxu0 0.0
      %6199 = vmatmul.mubr.f32.gmra.mrb[0].mxu0 %v5728
      %v6200 = vpop.f32.mrb[0].mxu0
      %v6201 = vadd.f32 0.0, %v6200
      %v6202 = vpop.f32.mrb[0].mxu0
      %6203 = vmatprep.mubr.f32.mxu0 0.0
      %6204 = vmatmul.mubr.f32.gmra.mrb[0].mxu0 %v5461
      %v6205 = vpop.f32.mrb[0].mxu0
      %v6206 = vadd.f32 0.0, %v6205
      %v6207 = vpop.f32.mrb[0].mxu0
      %6208 = vmatprep.mubr.f32.mxu0 0.0
      %6209 = vmatmul.mubr.f32.gmra.mrb[0].mxu0 %v5464
      %v6210 = vpop.f32.mrb[0].mxu0
      %v6211 = vadd.f32 0.0, %v6210
      %v6212 = vpop.f32.mrb[0].mxu0
      %6213 = vdwg.mxu0
      %v6214 = vadd.f32 %v5955, %v6056
      %v6215 = vadd.f32 %v5956, %v6061
      %v6216 = vadd.f32 %v5957, %v6066
      %v6217 = vadd.f32 %v5958, %v6071
      %v6218 = vadd.f32 %v5959, %v6076
      %v6219 = vadd.f32 %v5960, %v6081
      %v6220 = vadd.f32 %v5961, %v6086
      %v6221 = vadd.f32 %v5962, %v6091
      %v6222 = vadd.f32 %v5963, %v6096
      %v6223 = vadd.f32 %v5964, %v6101
      %v6224 = vadd.f32 %v5965, %v6106
      %v6225 = vadd.f32 %v5966, %v6111
      %v6226 = vadd.f32 %v5967, %v6116
      %v6227 = vadd.f32 %v5968, %v6121
      %v6228 = vadd.f32 %v5969, %v6126
      %v6229 = vadd.f32 %v5970, %v6131
      %v6230 = vadd.f32 %v5971, %v6136
      %v6231 = vadd.f32 %v5972, %v6141
      %v6232 = vadd.f32 %v5973, %v6146
      %v6233 = vadd.f32 %v5974, %v6151
      %v6234 = vadd.f32 %v5975, %v6156
      %v6235 = vadd.f32 %v5976, %v6161
      %v6236 = vadd.f32 %v5977, %v6166
      %v6237 = vadd.f32 %v5978, %v6171
      %v6238 = vadd.f32 %v5979, %v6176
      %v6239 = vadd.f32 %v5980, %v6181
      %v6240 = vadd.f32 %v5981, %v6186
      %v6241 = vadd.f32 %v5982, %v6191
      %v6242 = vadd.f32 %v5983, %v6196
      %v6243 = vadd.f32 %v5984, %v6201
      %v6244 = vadd.f32 %v5985, %v6206
      %v6245 = vadd.f32 %v5986, %v6211
      %v6246 = vld [vmem:[%s5] sm:$0x1]
      %v6248 = vlaneseq
      %v6249 = vshrl.u32 %v6248, 7
      %v6250 = vsub.s32 0, %v6249
      %v6251 = vrot.slane %v6246, %v6250
      %v6253 = vmul.f32 %v6214, %v6251
      %v6254 = vmul.f32 %v6215, %v6251
      %v6255 = vmul.f32 %v6216, %v6251
      %v6256 = vmul.f32 %v6217, %v6251
      %v6257 = vmul.f32 %v6218, %v6251
      %v6258 = vmul.f32 %v6219, %v6251
      %v6259 = vmul.f32 %v6220, %v6251
      %v6260 = vmul.f32 %v6221, %v6251
      %v6261 = vmul.f32 %v6222, %v6251
      %v6262 = vmul.f32 %v6223, %v6251
      %v6263 = vmul.f32 %v6224, %v6251
      %v6264 = vmul.f32 %v6225, %v6251
      %v6265 = vmul.f32 %v6226, %v6251
      %v6266 = vmul.f32 %v6227, %v6251
      %v6267 = vmul.f32 %v6228, %v6251
      %v6268 = vmul.f32 %v6229, %v6251
      %v6269 = vmul.f32 %v6230, %v6251
      %v6270 = vmul.f32 %v6231, %v6251
      %v6271 = vmul.f32 %v6232, %v6251
      %v6272 = vmul.f32 %v6233, %v6251
      %v6273 = vmul.f32 %v6234, %v6251
      %v6274 = vmul.f32 %v6235, %v6251
      %v6275 = vmul.f32 %v6236, %v6251
      %v6276 = vmul.f32 %v6237, %v6251
      %v6277 = vmul.f32 %v6238, %v6251
      %v6278 = vmul.f32 %v6239, %v6251
      %v6279 = vmul.f32 %v6240, %v6251
      %v6280 = vmul.f32 %v6241, %v6251
      %v6281 = vmul.f32 %v6242, %v6251
      %v6282 = vmul.f32 %v6243, %v6251
      %v6283 = vmul.f32 %v6244, %v6251
      %v6284 = vmul.f32 %v6245, %v6251
      %v6285 = vld [vmem:[%s6] sm:$0x1]
      %v6287 = vlaneseq
      %v6288 = vshrl.u32 %v6287, 7
      %v6289 = vsub.s32 0, %v6288
      %v6290 = vrot.slane %v6285, %v6289
      %v6292 = vadd.f32 %v6253, %v6290
      %v6293 = vadd.f32 %v6254, %v6290
      %v6294 = vadd.f32 %v6255, %v6290
      %v6295 = vadd.f32 %v6256, %v6290
      %v6296 = vadd.f32 %v6257, %v6290
      %v6297 = vadd.f32 %v6258, %v6290
      %v6298 = vadd.f32 %v6259, %v6290
      %v6299 = vadd.f32 %v6260, %v6290
      %v6300 = vadd.f32 %v6261, %v6290
      %v6301 = vadd.f32 %v6262, %v6290
      %v6302 = vadd.f32 %v6263, %v6290
      %v6303 = vadd.f32 %v6264, %v6290
      %v6304 = vadd.f32 %v6265, %v6290
      %v6305 = vadd.f32 %v6266, %v6290
      %v6306 = vadd.f32 %v6267, %v6290
      %v6307 = vadd.f32 %v6268, %v6290
      %v6308 = vadd.f32 %v6269, %v6290
      %v6309 = vadd.f32 %v6270, %v6290
      %v6310 = vadd.f32 %v6271, %v6290
      %v6311 = vadd.f32 %v6272, %v6290
      %v6312 = vadd.f32 %v6273, %v6290
      %v6313 = vadd.f32 %v6274, %v6290
      %v6314 = vadd.f32 %v6275, %v6290
      %v6315 = vadd.f32 %v6276, %v6290
      %v6316 = vadd.f32 %v6277, %v6290
      %v6317 = vadd.f32 %v6278, %v6290
      %v6318 = vadd.f32 %v6279, %v6290
      %v6319 = vadd.f32 %v6280, %v6290
      %v6320 = vadd.f32 %v6281, %v6290
      %v6321 = vadd.f32 %v6282, %v6290
      %v6322 = vadd.f32 %v6283, %v6290
      %v6323 = vadd.f32 %v6284, %v6290
      %vm6324 = vcmp.gt.f32.partialorder %v6292, 0.0
      %vm6325 = vcmp.gt.f32.partialorder %v6293, 0.0
      %vm6326 = vcmp.gt.f32.partialorder %v6294, 0.0
      %vm6327 = vcmp.gt.f32.partialorder %v6295, 0.0
      %vm6328 = vcmp.gt.f32.partialorder %v6296, 0.0
      %vm6329 = vcmp.gt.f32.partialorder %v6297, 0.0
      %vm6330 = vcmp.gt.f32.partialorder %v6298, 0.0
      %vm6331 = vcmp.gt.f32.partialorder %v6299, 0.0
      %vm6332 = vcmp.gt.f32.partialorder %v6300, 0.0
      %vm6333 = vcmp.gt.f32.partialorder %v6301, 0.0
      %vm6334 = vcmp.gt.f32.partialorder %v6302, 0.0
      %vm6335 = vcmp.gt.f32.partialorder %v6303, 0.0
      %vm6336 = vcmp.gt.f32.partialorder %v6304, 0.0
      %vm6337 = vcmp.gt.f32.partialorder %v6305, 0.0
      %vm6338 = vcmp.gt.f32.partialorder %v6306, 0.0
      %vm6339 = vcmp.gt.f32.partialorder %v6307, 0.0
      %vm6340 = vcmp.gt.f32.partialorder %v6308, 0.0
      %vm6341 = vcmp.gt.f32.partialorder %v6309, 0.0
      %vm6342 = vcmp.gt.f32.partialorder %v6310, 0.0
      %vm6343 = vcmp.gt.f32.partialorder %v6311, 0.0
      %vm6344 = vcmp.gt.f32.partialorder %v6312, 0.0
      %vm6345 = vcmp.gt.f32.partialorder %v6313, 0.0
      %vm6346 = vcmp.gt.f32.partialorder %v6314, 0.0
      %vm6347 = vcmp.gt.f32.partialorder %v6315, 0.0
      %vm6348 = vcmp.gt.f32.partialorder %v6316, 0.0
      %vm6349 = vcmp.gt.f32.partialorder %v6317, 0.0
      %vm6350 = vcmp.gt.f32.partialorder %v6318, 0.0
      %vm6351 = vcmp.gt.f32.partialorder %v6319, 0.0
      %vm6352 = vcmp.gt.f32.partialorder %v6320, 0.0
      %vm6353 = vcmp.gt.f32.partialorder %v6321, 0.0
      %vm6354 = vcmp.gt.f32.partialorder %v6322, 0.0
      %vm6355 = vcmp.gt.f32.partialorder %v6323, 0.0
      %v6356 = vmul.f32 %v6292, 0.3
      %v6357 = vmul.f32 %v6293, 0.3
      %v6358 = vmul.f32 %v6294, 0.3
      %v6359 = vmul.f32 %v6295, 0.3
      %v6360 = vmul.f32 %v6296, 0.3
      %v6361 = vmul.f32 %v6297, 0.3
      %v6362 = vmul.f32 %v6298, 0.3
      %v6363 = vmul.f32 %v6299, 0.3
      %v6364 = vmul.f32 %v6300, 0.3
      %v6365 = vmul.f32 %v6301, 0.3
      %v6366 = vmul.f32 %v6302, 0.3
      %v6367 = vmul.f32 %v6303, 0.3
      %v6368 = vmul.f32 %v6304, 0.3
      %v6369 = vmul.f32 %v6305, 0.3
      %v6370 = vmul.f32 %v6306, 0.3
      %v6371 = vmul.f32 %v6307, 0.3
      %v6372 = vmul.f32 %v6308, 0.3
      %v6373 = vmul.f32 %v6309, 0.3
      %v6374 = vmul.f32 %v6310, 0.3
      %v6375 = vmul.f32 %v6311, 0.3
      %v6376 = vmul.f32 %v6312, 0.3
      %v6377 = vmul.f32 %v6313, 0.3
      %v6378 = vmul.f32 %v6314, 0.3
      %v6379 = vmul.f32 %v6315, 0.3
      %v6380 = vmul.f32 %v6316, 0.3
      %v6381 = vmul.f32 %v6317, 0.3
      %v6382 = vmul.f32 %v6318, 0.3
      %v6383 = vmul.f32 %v6319, 0.3
      %v6384 = vmul.f32 %v6320, 0.3
      %v6385 = vmul.f32 %v6321, 0.3
      %v6386 = vmul.f32 %v6322, 0.3
      %v6387 = vmul.f32 %v6323, 0.3
      %v6388 = vsel %vm6324, %v6292, %v6356
      %v6389 = vsel %vm6325, %v6293, %v6357
      %v6390 = vsel %vm6326, %v6294, %v6358
      %v6391 = vsel %vm6327, %v6295, %v6359
      %v6392 = vsel %vm6328, %v6296, %v6360
      %v6393 = vsel %vm6329, %v6297, %v6361
      %v6394 = vsel %vm6330, %v6298, %v6362
      %v6395 = vsel %vm6331, %v6299, %v6363
      %v6396 = vsel %vm6332, %v6300, %v6364
      %v6397 = vsel %vm6333, %v6301, %v6365
      %v6398 = vsel %vm6334, %v6302, %v6366
      %v6399 = vsel %vm6335, %v6303, %v6367
      %v6400 = vsel %vm6336, %v6304, %v6368
      %v6401 = vsel %vm6337, %v6305, %v6369
      %v6402 = vsel %vm6338, %v6306, %v6370
      %v6403 = vsel %vm6339, %v6307, %v6371
      %v6404 = vsel %vm6340, %v6308, %v6372
      %v6405 = vsel %vm6341, %v6309, %v6373
      %v6406 = vsel %vm6342, %v6310, %v6374
      %v6407 = vsel %vm6343, %v6311, %v6375
      %v6408 = vsel %vm6344, %v6312, %v6376
      %v6409 = vsel %vm6345, %v6313, %v6377
      %v6410 = vsel %vm6346, %v6314, %v6378
      %v6411 = vsel %vm6347, %v6315, %v6379
      %v6412 = vsel %vm6348, %v6316, %v6380
      %v6413 = vsel %vm6349, %v6317, %v6381
      %v6414 = vsel %vm6350, %v6318, %v6382
      %v6415 = vsel %vm6351, %v6319, %v6383
      %v6416 = vsel %vm6352, %v6320, %v6384
      %v6417 = vsel %vm6353, %v6321, %v6385
      %v6418 = vsel %vm6354, %v6322, %v6386
      %v6419 = vsel %vm6355, %v6323, %v6387
      %v6420 = vsel %vm3662, %v6388, 0.0
      %v6421 = vsel %vm3662, %v6390, 0.0
      %v6422 = vadd.f32 %v6420, %v6421
      %v6423 = vsel %vm3662, %v6392, 0.0
      %v6424 = vadd.f32 %v6422, %v6423
      %v6425 = vsel %vm3662, %v6394, 0.0
      %v6426 = vadd.f32 %v6424, %v6425
      %v6427 = vsel %vm3662, %v6396, 0.0
      %v6428 = vadd.f32 %v6426, %v6427
      %v6429 = vsel %vm3662, %v6398, 0.0
      %v6430 = vadd.f32 %v6428, %v6429
      %v6431 = vsel %vm3662, %v6400, 0.0
      %v6432 = vadd.f32 %v6430, %v6431
      %v6433 = vsel %vm3662, %v6402, 0.0
      %v6434 = vadd.f32 %v6432, %v6433
      %v6435 = vsel %vm3662, %v6404, 0.0
      %v6436 = vadd.f32 %v6434, %v6435
      %v6437 = vsel %vm3662, %v6406, 0.0
      %v6438 = vadd.f32 %v6436, %v6437
      %v6439 = vsel %vm3662, %v6408, 0.0
      %v6440 = vadd.f32 %v6438, %v6439
      %v6441 = vsel %vm3662, %v6410, 0.0
      %v6442 = vadd.f32 %v6440, %v6441
      %v6443 = vsel %vm3662, %v6412, 0.0
      %v6444 = vadd.f32 %v6442, %v6443
      %v6445 = vsel %vm3662, %v6414, 0.0
      %v6446 = vadd.f32 %v6444, %v6445
      %v6447 = vsel %vm3662, %v6416, 0.0
      %v6448 = vadd.f32 %v6446, %v6447
      %v6449 = vsel %vm3662, %v6418, 0.0
      %v6450 = vadd.f32 %v6448, %v6449
      %v6451 = vsel %vm3662, %v6389, 0.0
      %v6452 = vsel %vm3662, %v6391, 0.0
      %v6453 = vadd.f32 %v6451, %v6452
      %v6454 = vsel %vm3662, %v6393, 0.0
      %v6455 = vadd.f32 %v6453, %v6454
      %v6456 = vsel %vm3662, %v6395, 0.0
      %v6457 = vadd.f32 %v6455, %v6456
      %v6458 = vsel %vm3662, %v6397, 0.0
      %v6459 = vadd.f32 %v6457, %v6458
      %v6460 = vsel %vm3662, %v6399, 0.0
      %v6461 = vadd.f32 %v6459, %v6460
      %v6462 = vsel %vm3662, %v6401, 0.0
      %v6463 = vadd.f32 %v6461, %v6462
      %v6464 = vsel %vm3662, %v6403, 0.0
      %v6465 = vadd.f32 %v6463, %v6464
      %v6466 = vsel %vm3662, %v6405, 0.0
      %v6467 = vadd.f32 %v6465, %v6466
      %v6468 = vsel %vm3662, %v6407, 0.0
      %v6469 = vadd.f32 %v6467, %v6468
      %v6470 = vsel %vm3662, %v6409, 0.0
      %v6471 = vadd.f32 %v6469, %v6470
      %v6472 = vsel %vm3662, %v6411, 0.0
      %v6473 = vadd.f32 %v6471, %v6472
      %v6474 = vsel %vm3662, %v6413, 0.0
      %v6475 = vadd.f32 %v6473, %v6474
      %v6476 = vsel %vm3662, %v6415, 0.0
      %v6477 = vadd.f32 %v6475, %v6476
      %v6478 = vsel %vm3662, %v6417, 0.0
      %v6479 = vadd.f32 %v6477, %v6478
      %v6480 = vsel %vm3662, %v6419, 0.0
      %v6481 = vadd.f32 %v6479, %v6480
      %v6482 = vrcp.pop 16.0
      %v6483 = vmul.f32 %v6450, %v6482
      %v6484 = vmul.f32 %v6481, %v6482
      %v6485 = vadd.f32 %v6420, %v6451
      %v6486 = vrot.slane %v6485, 4
      %v6487 = vadd.f32 %v6485, %v6486
      %v6488 = vrot.slane %v6487, 2
      %v6489 = vadd.f32 %v6487, %v6488
      %v6490 = vrot.slane %v6489, 1
      %v6491 = vadd.f32 %v6489, %v6490
      %v6492 = vadd.f32 %v6421, %v6452
      %v6493 = vrot.slane %v6492, 4
      %v6494 = vadd.f32 %v6492, %v6493
      %v6495 = vrot.slane %v6494, 2
      %v6496 = vadd.f32 %v6494, %v6495
      %v6497 = vrot.slane %v6496, 1
      %v6498 = vadd.f32 %v6496, %v6497
      %v6499 = vadd.f32 %v6423, %v6454
      %v6500 = vrot.slane %v6499, 4
      %v6501 = vadd.f32 %v6499, %v6500
      %v6502 = vrot.slane %v6501, 2
      %v6503 = vadd.f32 %v6501, %v6502
      %v6504 = vrot.slane %v6503, 1
      %v6505 = vadd.f32 %v6503, %v6504
      %v6506 = vadd.f32 %v6425, %v6456
      %v6507 = vrot.slane %v6506, 4
      %v6508 = vadd.f32 %v6506, %v6507
      %v6509 = vrot.slane %v6508, 2
      %v6510 = vadd.f32 %v6508, %v6509
      %v6511 = vrot.slane %v6510, 1
      %v6512 = vadd.f32 %v6510, %v6511
      %v6513 = vadd.f32 %v6427, %v6458
      %v6514 = vrot.slane %v6513, 4
      %v6515 = vadd.f32 %v6513, %v6514
      %v6516 = vrot.slane %v6515, 2
      %v6517 = vadd.f32 %v6515, %v6516
      %v6518 = vrot.slane %v6517, 1
      %v6519 = vadd.f32 %v6517, %v6518
      %v6520 = vadd.f32 %v6429, %v6460
      %v6521 = vrot.slane %v6520, 4
      %v6522 = vadd.f32 %v6520, %v6521
      %v6523 = vrot.slane %v6522, 2
      %v6524 = vadd.f32 %v6522, %v6523
      %v6525 = vrot.slane %v6524, 1
      %v6526 = vadd.f32 %v6524, %v6525
      %v6527 = vadd.f32 %v6431, %v6462
      %v6528 = vrot.slane %v6527, 4
      %v6529 = vadd.f32 %v6527, %v6528
      %v6530 = vrot.slane %v6529, 2
      %v6531 = vadd.f32 %v6529, %v6530
      %v6532 = vrot.slane %v6531, 1
      %v6533 = vadd.f32 %v6531, %v6532
      %v6534 = vadd.f32 %v6433, %v6464
      %v6535 = vrot.slane %v6534, 4
      %v6536 = vadd.f32 %v6534, %v6535
      %v6537 = vrot.slane %v6536, 2
      %v6538 = vadd.f32 %v6536, %v6537
      %v6539 = vrot.slane %v6538, 1
      %v6540 = vadd.f32 %v6538, %v6539
      %v6541 = vadd.f32 %v6435, %v6466
      %v6542 = vrot.slane %v6541, 4
      %v6543 = vadd.f32 %v6541, %v6542
      %v6544 = vrot.slane %v6543, 2
      %v6545 = vadd.f32 %v6543, %v6544
      %v6546 = vrot.slane %v6545, 1
      %v6547 = vadd.f32 %v6545, %v6546
      %v6548 = vadd.f32 %v6437, %v6468
      %v6549 = vrot.slane %v6548, 4
      %v6550 = vadd.f32 %v6548, %v6549
      %v6551 = vrot.slane %v6550, 2
      %v6552 = vadd.f32 %v6550, %v6551
      %v6553 = vrot.slane %v6552, 1
      %v6554 = vadd.f32 %v6552, %v6553
      %v6555 = vadd.f32 %v6439, %v6470
      %v6556 = vrot.slane %v6555, 4
      %v6557 = vadd.f32 %v6555, %v6556
      %v6558 = vrot.slane %v6557, 2
      %v6559 = vadd.f32 %v6557, %v6558
      %v6560 = vrot.slane %v6559, 1
      %v6561 = vadd.f32 %v6559, %v6560
      %v6562 = vadd.f32 %v6441, %v6472
      %v6563 = vrot.slane %v6562, 4
      %v6564 = vadd.f32 %v6562, %v6563
      %v6565 = vrot.slane %v6564, 2
      %v6566 = vadd.f32 %v6564, %v6565
      %v6567 = vrot.slane %v6566, 1
      %v6568 = vadd.f32 %v6566, %v6567
      %v6569 = vadd.f32 %v6443, %v6474
      %v6570 = vrot.slane %v6569, 4
      %v6571 = vadd.f32 %v6569, %v6570
      %v6572 = vrot.slane %v6571, 2
      %v6573 = vadd.f32 %v6571, %v6572
      %v6574 = vrot.slane %v6573, 1
      %v6575 = vadd.f32 %v6573, %v6574
      %v6576 = vadd.f32 %v6445, %v6476
      %v6577 = vrot.slane %v6576, 4
      %v6578 = vadd.f32 %v6576, %v6577
      %v6579 = vrot.slane %v6578, 2
      %v6580 = vadd.f32 %v6578, %v6579
      %v6581 = vrot.slane %v6580, 1
      %v6582 = vadd.f32 %v6580, %v6581
      %v6583 = vadd.f32 %v6447, %v6478
      %v6584 = vrot.slane %v6583, 4
      %v6585 = vadd.f32 %v6583, %v6584
      %v6586 = vrot.slane %v6585, 2
      %v6587 = vadd.f32 %v6585, %v6586
      %v6588 = vrot.slane %v6587, 1
      %v6589 = vadd.f32 %v6587, %v6588
      %v6590 = vadd.f32 %v6449, %v6480
      %v6591 = vrot.slane %v6590, 4
      %v6592 = vadd.f32 %v6590, %v6591
      %v6593 = vrot.slane %v6592, 2
      %v6594 = vadd.f32 %v6592, %v6593
      %v6595 = vrot.slane %v6594, 1
      %v6596 = vadd.f32 %v6594, %v6595
      %v6597 = vmul.f32 %v6491, %v6482
      %v6598 = vmul.f32 %v6498, %v6482
      %v6599 = vmul.f32 %v6505, %v6482
      %v6600 = vmul.f32 %v6512, %v6482
      %v6601 = vmul.f32 %v6519, %v6482
      %v6602 = vmul.f32 %v6526, %v6482
      %v6603 = vmul.f32 %v6533, %v6482
      %v6604 = vmul.f32 %v6540, %v6482
      %v6605 = vmul.f32 %v6547, %v6482
      %v6606 = vmul.f32 %v6554, %v6482
      %v6607 = vmul.f32 %v6561, %v6482
      %v6608 = vmul.f32 %v6568, %v6482
      %v6609 = vmul.f32 %v6575, %v6482
      %v6610 = vmul.f32 %v6582, %v6482
      %v6611 = vmul.f32 %v6589, %v6482
      %v6612 = vmul.f32 %v6596, %v6482
      %v6613 = vld [vmem:[%s7] sm:$0xff]
      %v6614 = vld [vmem:[#allocation2] sm:$0x1]
      %v6616 = vlaneseq
      %v6617 = vshrl.u32 %v6616, 7
      %v6618 = vsub.s32 0, %v6617
      %v6619 = vrot.slane %v6614, %v6618
      %v6622 = vsel %vm3662, %v6483, 0
      %v6625 = vsel %vm3662, %v6484, 0
      %6627 = vmatprep.subr.mxu0 0.0
      %6628 = vmatpush1.msra.mxu0 %v6613
      %6629 = vmatprep.subr.mxu0 0.0
      %6630 = vmatpush1.msra.mxu0 0.0
      %6631 = vmatprep.subr.mxu0 0.0
      %6632 = vmatpush1.msra.mxu0 0.0
      %6633 = vmatprep.subr.mxu0 0.0
      %6634 = vmatpush1.msra.mxu0 0.0
      %6635 = vmatprep.subr.mxu0 0.0
      %6636 = vmatpush1.msra.mxu0 0.0
      %6637 = vmatprep.subr.mxu0 0.0
      %6638 = vmatpush1.msra.mxu0 0.0
      %6639 = vmatprep.subr.mxu0 0.0
      %6640 = vmatpush1.msra.mxu0 0.0
      %6641 = vmatprep.subr.mxu0 0.0
      %6642 = vmatpush1.msra.mxu0 0.0
      %6643 = vmatprep.subr.mxu0 0.0
      %6644 = vmatpush1.msra.mxu0 0.0
      %6645 = vmatprep.subr.mxu0 0.0
      %6646 = vmatpush1.msra.mxu0 0.0
      %6647 = vmatprep.subr.mxu0 0.0
      %6648 = vmatpush1.msra.mxu0 0.0
      %6649 = vmatprep.subr.mxu0 0.0
      %6650 = vmatpush1.msra.mxu0 0.0
      %6651 = vmatprep.subr.mxu0 0.0
      %6652 = vmatpush1.msra.mxu0 0.0
      %6653 = vmatprep.subr.mxu0 0.0
      %6654 = vmatpush1.msra.mxu0 0.0
      %6655 = vmatprep.subr.mxu0 0.0
      %6656 = vmatpush1.msra.mxu0 0.0
      %6657 = vmatprep.subr.mxu0 0.0
      %6658 = vmatpush1.msra.mxu0 0.0
      %6659 = vmatprep.subr.mxu0 0.0
      %6660 = vmatpush1.msra.mxu0 0.0
      %6661 = vmatprep.subr.mxu0 0.0
      %6662 = vmatpush1.msra.mxu0 0.0
      %6663 = vmatprep.subr.mxu0 0.0
      %6664 = vmatpush1.msra.mxu0 0.0
      %6665 = vmatprep.subr.mxu0 0.0
      %6666 = vmatpush1.msra.mxu0 0.0
      %6667 = vmatprep.subr.mxu0 0.0
      %6668 = vmatpush1.msra.mxu0 0.0
      %6669 = vmatprep.subr.mxu0 0.0
      %6670 = vmatpush1.msra.mxu0 0.0
      %6671 = vmatprep.subr.mxu0 0.0
      %6672 = vmatpush1.msra.mxu0 0.0
      %6673 = vmatprep.subr.mxu0 0.0
      %6674 = vmatpush1.msra.mxu0 0.0
      %6675 = vmatprep.subr.mxu0 0.0
      %6676 = vmatpush1.msra.mxu0 0.0
      %6677 = vmatprep.subr.mxu0 0.0
      %6678 = vmatpush1.msra.mxu0 0.0
      %6679 = vmatprep.subr.mxu0 0.0
      %6680 = vmatpush1.msra.mxu0 0.0
      %6681 = vmatprep.subr.mxu0 0.0
      %6682 = vmatpush1.msra.mxu0 0.0
      %6683 = vmatprep.subr.mxu0 0.0
      %6684 = vmatpush1.msra.mxu0 0.0
      %6685 = vmatprep.subr.mxu0 0.0
      %6686 = vmatpush1.msra.mxu0 0.0
      %6687 = vmatprep.subr.mxu0 0.0
      %6688 = vmatpush1.msra.mxu0 0.0
      %6689 = vmatprep.subr.mxu0 0.0
      %6690 = vmatpush1.msra.mxu0 0.0
      %6691 = vmatprep.mubr.f32.mxu0 0.0
      %6692 = vmatmul.mubr.f32.gmra.mrb[0].mxu0 %v6622
      %v6693 = vpop.f32.mrb[0].mxu0
      %v6694 = vadd.f32 %v6619, %v6693
      %v6695 = vpop.f32.mrb[0].mxu0
      %6696 = vmatprep.mubr.f32.mxu0 0.0
      %6697 = vmatmul.mubr.f32.gmra.mrb[0].mxu0 %v6625
      %v6698 = vpop.f32.mrb[0].mxu0
      %v6699 = vadd.f32 %v6619, %v6698
      %v6700 = vpop.f32.mrb[0].mxu0
      %6701 = vdwg.mxu0
      %v6702 = vmax.f32 %v6694, 0.0
      %v6703 = vmax.f32 %v6699, 0.0
      %v6704 = vld [vmem:[%s9] sm:$0x1]
      %v6705 = vld [vmem:[%s10] sm:$0x1]
      %v6707 = vlaneseq
      %v6708 = vshrl.u32 %v6707, 7
      %v6709 = vsub.s32 0, %v6708
      %v6710 = vrot.slane %v6705, %v6709
      %vm6712 = vcmask 7168
      %v6714 = vsel %vm6712, %v6702, 0
      %v6717 = vsel %vm6712, %v6703, 0
      %v6720 = vsel %vm676, %v6704, 0
      %6722 = vmatprep.subr.mxu0 0.0
      %6723 = vmatpush1.msra.mxu0 %v6720
      %6724 = vmatprep.subr.mxu0 0.0
      %6725 = vmatpush1.msra.mxu0 0.0
      %6726 = vmatprep.subr.mxu0 0.0
      %6727 = vmatpush1.msra.mxu0 0.0
      %6728 = vmatprep.subr.mxu0 0.0
      %6729 = vmatpush1.msra.mxu0 0.0
      %6730 = vmatprep.subr.mxu0 0.0
      %6731 = vmatpush1.msra.mxu0 0.0
      %6732 = vmatprep.subr.mxu0 0.0
      %6733 = vmatpush1.msra.mxu0 0.0
      %6734 = vmatprep.subr.mxu0 0.0
      %6735 = vmatpush1.msra.mxu0 0.0
      %6736 = vmatprep.subr.mxu0 0.0
      %6737 = vmatpush1.msra.mxu0 0.0
      %6738 = vmatprep.subr.mxu0 0.0
      %6739 = vmatpush1.msra.mxu0 0.0
      %6740 = vmatprep.subr.mxu0 0.0
      %6741 = vmatpush1.msra.mxu0 0.0
      %6742 = vmatprep.subr.mxu0 0.0
      %6743 = vmatpush1.msra.mxu0 0.0
      %6744 = vmatprep.subr.mxu0 0.0
      %6745 = vmatpush1.msra.mxu0 0.0
      %6746 = vmatprep.subr.mxu0 0.0
      %6747 = vmatpush1.msra.mxu0 0.0
      %6748 = vmatprep.subr.mxu0 0.0
      %6749 = vmatpush1.msra.mxu0 0.0
      %6750 = vmatprep.subr.mxu0 0.0
      %6751 = vmatpush1.msra.mxu0 0.0
      %6752 = vmatprep.subr.mxu0 0.0
      %6753 = vmatpush1.msra.mxu0 0.0
      %6754 = vmatprep.subr.mxu0 0.0
      %6755 = vmatpush1.msra.mxu0 0.0
      %6756 = vmatprep.subr.mxu0 0.0
      %6757 = vmatpush1.msra.mxu0 0.0
      %6758 = vmatprep.subr.mxu0 0.0
      %6759 = vmatpush1.msra.mxu0 0.0
      %6760 = vmatprep.subr.mxu0 0.0
      %6761 = vmatpush1.msra.mxu0 0.0
      %6762 = vmatprep.subr.mxu0 0.0
      %6763 = vmatpush1.msra.mxu0 0.0
      %6764 = vmatprep.subr.mxu0 0.0
      %6765 = vmatpush1.msra.mxu0 0.0
      %6766 = vmatprep.subr.mxu0 0.0
      %6767 = vmatpush1.msra.mxu0 0.0
      %6768 = vmatprep.subr.mxu0 0.0
      %6769 = vmatpush1.msra.mxu0 0.0
      %6770 = vmatprep.subr.mxu0 0.0
      %6771 = vmatpush1.msra.mxu0 0.0
      %6772 = vmatprep.subr.mxu0 0.0
      %6773 = vmatpush1.msra.mxu0 0.0
      %6774 = vmatprep.subr.mxu0 0.0
      %6775 = vmatpush1.msra.mxu0 0.0
      %6776 = vmatprep.subr.mxu0 0.0
      %6777 = vmatpush1.msra.mxu0 0.0
      %6778 = vmatprep.subr.mxu0 0.0
      %6779 = vmatpush1.msra.mxu0 0.0
      %6780 = vmatprep.subr.mxu0 0.0
      %6781 = vmatpush1.msra.mxu0 0.0
      %6782 = vmatprep.subr.mxu0 0.0
      %6783 = vmatpush1.msra.mxu0 0.0
      %6784 = vmatprep.subr.mxu0 0.0
      %6785 = vmatpush1.msra.mxu0 0.0
      %6786 = vmatprep.mubr.f32.mxu0 0.0
      %6787 = vmatmul.mubr.f32.gmra.mrb[0].mxu0 %v6714
      %v6788 = vpop.f32.mrb[0].mxu0
      %v6789 = vadd.f32 %v6710, %v6788
      %v6790 = vpop.f32.mrb[0].mxu0
      %6791 = vmatprep.mubr.f32.mxu0 0.0
      %6792 = vmatmul.mubr.f32.gmra.mrb[0].mxu0 %v6717
      %v6793 = vpop.f32.mrb[0].mxu0
      %v6794 = vadd.f32 %v6710, %v6793
      %v6795 = vpop.f32.mrb[0].mxu0
      %6796 = vdwg.mxu0
      %v6797 = vxor.u32 %v6789, 2147483648
      %v6798 = vxor.u32 %v6794, 2147483648
      %v6799 = vmul.f32 %v6797, 1.442695
      %v6800 = vpow.pop %v6799
      %v6801 = vmul.f32 %v6798, 1.442695
      %v6802 = vpow.pop %v6801
      %v6803 = vadd.f32 %v6800, 1.0
      %v6804 = vadd.f32 %v6802, 1.0
      %v6805 = vrcp.pop %v6803
      %v6806 = vmul.f32 1.0, %v6805
      %v6807 = vrcp.pop %v6804
      %v6808 = vmul.f32 1.0, %v6807
      %v6809 = vld [vmem:[%s11] sm:$0xff]
      %v6810 = vld [vmem:[#allocation3] sm:$0x1]
      %v6812 = vlaneseq
      %v6813 = vshrl.u32 %v6812, 7
      %v6814 = vsub.s32 0, %v6813
      %v6815 = vrot.slane %v6810, %v6814
      %vm6833 = vcmask 1041409
      %v6834 = vsel %vm6833, %v6598, %v6597
      %vm6835 = vcmask 1042434
      %v6836 = vsel %vm6835, %v6599, %v6834
      %vm6837 = vcmask 1043459
      %v6838 = vsel %vm6837, %v6600, %v6836
      %vm6839 = vcmask 1044484
      %v6840 = vsel %vm6839, %v6601, %v6838
      %vm6841 = vcmask 1045509
      %v6842 = vsel %vm6841, %v6602, %v6840
      %vm6843 = vcmask 1046534
      %v6844 = vsel %vm6843, %v6603, %v6842
      %vm6845 = vcmask 1047559
      %v6846 = vsel %vm6845, %v6604, %v6844
      %v6847 = vsel %vm6833, %v6606, %v6605
      %v6848 = vsel %vm6835, %v6607, %v6847
      %v6849 = vsel %vm6837, %v6608, %v6848
      %v6850 = vsel %vm6839, %v6609, %v6849
      %v6851 = vsel %vm6841, %v6610, %v6850
      %v6852 = vsel %vm6843, %v6611, %v6851
      %v6853 = vsel %vm6845, %v6612, %v6852
      %v6854 = vsel %vm3662, %v6846, 0
      %v6856 = vsel %vm3662, %v6853, 0
      %6858 = vmatprep.subr.mxu0 0.0
      %6859 = vmatpush1.msra.mxu0 %v6809
      %6860 = vmatprep.subr.mxu0 0.0
      %6861 = vmatpush1.msra.mxu0 0.0
      %6862 = vmatprep.subr.mxu0 0.0
      %6863 = vmatpush1.msra.mxu0 0.0
      %6864 = vmatprep.subr.mxu0 0.0
      %6865 = vmatpush1.msra.mxu0 0.0
      %6866 = vmatprep.subr.mxu0 0.0
      %6867 = vmatpush1.msra.mxu0 0.0
      %6868 = vmatprep.subr.mxu0 0.0
      %6869 = vmatpush1.msra.mxu0 0.0
      %6870 = vmatprep.subr.mxu0 0.0
      %6871 = vmatpush1.msra.mxu0 0.0
      %6872 = vmatprep.subr.mxu0 0.0
      %6873 = vmatpush1.msra.mxu0 0.0
      %6874 = vmatprep.subr.mxu0 0.0
      %6875 = vmatpush1.msra.mxu0 0.0
      %6876 = vmatprep.subr.mxu0 0.0
      %6877 = vmatpush1.msra.mxu0 0.0
      %6878 = vmatprep.subr.mxu0 0.0
      %6879 = vmatpush1.msra.mxu0 0.0
      %6880 = vmatprep.subr.mxu0 0.0
      %6881 = vmatpush1.msra.mxu0 0.0
      %6882 = vmatprep.subr.mxu0 0.0
      %6883 = vmatpush1.msra.mxu0 0.0
      %6884 = vmatprep.subr.mxu0 0.0
      %6885 = vmatpush1.msra.mxu0 0.0
      %6886 = vmatprep.subr.mxu0 0.0
      %6887 = vmatpush1.msra.mxu0 0.0
      %6888 = vmatprep.subr.mxu0 0.0
      %6889 = vmatpush1.msra.mxu0 0.0
      %6890 = vmatprep.subr.mxu0 0.0
      %6891 = vmatpush1.msra.mxu0 0.0
      %6892 = vmatprep.subr.mxu0 0.0
      %6893 = vmatpush1.msra.mxu0 0.0
      %6894 = vmatprep.subr.mxu0 0.0
      %6895 = vmatpush1.msra.mxu0 0.0
      %6896 = vmatprep.subr.mxu0 0.0
      %6897 = vmatpush1.msra.mxu0 0.0
      %6898 = vmatprep.subr.mxu0 0.0
      %6899 = vmatpush1.msra.mxu0 0.0
      %6900 = vmatprep.subr.mxu0 0.0
      %6901 = vmatpush1.msra.mxu0 0.0
      %6902 = vmatprep.subr.mxu0 0.0
      %6903 = vmatpush1.msra.mxu0 0.0
      %6904 = vmatprep.subr.mxu0 0.0
      %6905 = vmatpush1.msra.mxu0 0.0
      %6906 = vmatprep.subr.mxu0 0.0
      %6907 = vmatpush1.msra.mxu0 0.0
      %6908 = vmatprep.subr.mxu0 0.0
      %6909 = vmatpush1.msra.mxu0 0.0
      %6910 = vmatprep.subr.mxu0 0.0
      %6911 = vmatpush1.msra.mxu0 0.0
      %6912 = vmatprep.subr.mxu0 0.0
      %6913 = vmatpush1.msra.mxu0 0.0
      %6914 = vmatprep.subr.mxu0 0.0
      %6915 = vmatpush1.msra.mxu0 0.0
      %6916 = vmatprep.subr.mxu0 0.0
      %6917 = vmatpush1.msra.mxu0 0.0
      %6918 = vmatprep.subr.mxu0 0.0
      %6919 = vmatpush1.msra.mxu0 0.0
      %6920 = vmatprep.subr.mxu0 0.0
      %6921 = vmatpush1.msra.mxu0 0.0
      %6922 = vmatprep.mubr.f32.mxu0 0.0
      %6923 = vmatmul.mubr.f32.gmra.mrb[0].mxu0 %v6854
      %v6924 = vpop.f32.mrb[0].mxu0
      %v6925 = vadd.f32 %v6815, %v6924
      %v6926 = vpop.f32.mrb[0].mxu0
      %6927 = vmatprep.mubr.f32.mxu0 0.0
      %6928 = vmatmul.mubr.f32.gmra.mrb[0].mxu0 %v6856
      %v6929 = vpop.f32.mrb[0].mxu0
      %v6930 = vadd.f32 %v6815, %v6929
      %v6931 = vpop.f32.mrb[0].mxu0
      %6932 = vdwg.mxu0
      %v6933 = vmax.f32 %v6925, 0.0
      %v6934 = vmax.f32 %v6930, 0.0
      %v6935 = vld [vmem:[%s13] sm:$0x1]
      %v6936 = vld [vmem:[%s14] sm:$0x1]
      %v6938 = vlaneseq
      %v6939 = vshrl.u32 %v6938, 7
      %v6940 = vsub.s32 0, %v6939
      %v6941 = vrot.slane %v6936, %v6940
      %v6944 = vsel %vm6712, %v6933, 0
      %v6947 = vsel %vm6712, %v6934, 0
      %v6950 = vsel %vm676, %v6935, 0
      %6952 = vmatprep.subr.mxu0 0.0
      %6953 = vmatpush1.msra.mxu0 %v6950
      %6954 = vmatprep.subr.mxu0 0.0
      %6955 = vmatpush1.msra.mxu0 0.0
      %6956 = vmatprep.subr.mxu0 0.0
      %6957 = vmatpush1.msra.mxu0 0.0
      %6958 = vmatprep.subr.mxu0 0.0
      %6959 = vmatpush1.msra.mxu0 0.0
      %6960 = vmatprep.subr.mxu0 0.0
      %6961 = vmatpush1.msra.mxu0 0.0
      %6962 = vmatprep.subr.mxu0 0.0
      %6963 = vmatpush1.msra.mxu0 0.0
      %6964 = vmatprep.subr.mxu0 0.0
      %6965 = vmatpush1.msra.mxu0 0.0
      %6966 = vmatprep.subr.mxu0 0.0
      %6967 = vmatpush1.msra.mxu0 0.0
      %6968 = vmatprep.subr.mxu0 0.0
      %6969 = vmatpush1.msra.mxu0 0.0
      %6970 = vmatprep.subr.mxu0 0.0
      %6971 = vmatpush1.msra.mxu0 0.0
      %6972 = vmatprep.subr.mxu0 0.0
      %6973 = vmatpush1.msra.mxu0 0.0
      %6974 = vmatprep.subr.mxu0 0.0
      %6975 = vmatpush1.msra.mxu0 0.0
      %6976 = vmatprep.subr.mxu0 0.0
      %6977 = vmatpush1.msra.mxu0 0.0
      %6978 = vmatprep.subr.mxu0 0.0
      %6979 = vmatpush1.msra.mxu0 0.0
      %6980 = vmatprep.subr.mxu0 0.0
      %6981 = vmatpush1.msra.mxu0 0.0
      %6982 = vmatprep.subr.mxu0 0.0
      %6983 = vmatpush1.msra.mxu0 0.0
      %6984 = vmatprep.subr.mxu0 0.0
      %6985 = vmatpush1.msra.mxu0 0.0
      %6986 = vmatprep.subr.mxu0 0.0
      %6987 = vmatpush1.msra.mxu0 0.0
      %6988 = vmatprep.subr.mxu0 0.0
      %6989 = vmatpush1.msra.mxu0 0.0
      %6990 = vmatprep.subr.mxu0 0.0
      %6991 = vmatpush1.msra.mxu0 0.0
      %6992 = vmatprep.subr.mxu0 0.0
      %6993 = vmatpush1.msra.mxu0 0.0
      %6994 = vmatprep.subr.mxu0 0.0
      %6995 = vmatpush1.msra.mxu0 0.0
      %6996 = vmatprep.subr.mxu0 0.0
      %6997 = vmatpush1.msra.mxu0 0.0
      %6998 = vmatprep.subr.mxu0 0.0
      %6999 = vmatpush1.msra.mxu0 0.0
      %7000 = vmatprep.subr.mxu0 0.0
      %7001 = vmatpush1.msra.mxu0 0.0
      %7002 = vmatprep.subr.mxu0 0.0
      %7003 = vmatpush1.msra.mxu0 0.0
      %7004 = vmatprep.subr.mxu0 0.0
      %7005 = vmatpush1.msra.mxu0 0.0
      %7006 = vmatprep.subr.mxu0 0.0
      %7007 = vmatpush1.msra.mxu0 0.0
      %7008 = vmatprep.subr.mxu0 0.0
      %7009 = vmatpush1.msra.mxu0 0.0
      %7010 = vmatprep.subr.mxu0 0.0
      %7011 = vmatpush1.msra.mxu0 0.0
      %7012 = vmatprep.subr.mxu0 0.0
      %7013 = vmatpush1.msra.mxu0 0.0
      %7014 = vmatprep.subr.mxu0 0.0
      %7015 = vmatpush1.msra.mxu0 0.0
      %7016 = vmatprep.mubr.f32.mxu0 0.0
      %7017 = vmatmul.mubr.f32.gmra.mrb[0].mxu0 %v6944
      %v7018 = vpop.f32.mrb[0].mxu0
      %v7019 = vadd.f32 %v6941, %v7018
      %v7020 = vpop.f32.mrb[0].mxu0
      %7021 = vmatprep.mubr.f32.mxu0 0.0
      %7022 = vmatmul.mubr.f32.gmra.mrb[0].mxu0 %v6947
      %v7023 = vpop.f32.mrb[0].mxu0
      %v7024 = vadd.f32 %v6941, %v7023
      %v7025 = vpop.f32.mrb[0].mxu0
      %7026 = vdwg.mxu0
      %v7027 = vxor.u32 %v7019, 2147483648
      %v7028 = vxor.u32 %v7024, 2147483648
      %v7029 = vmul.f32 %v7027, 1.442695
      %v7030 = vpow.pop %v7029
      %v7031 = vmul.f32 %v7028, 1.442695
      %v7032 = vpow.pop %v7031
      %v7033 = vadd.f32 %v7030, 1.0
      %v7034 = vadd.f32 %v7032, 1.0
      %v7035 = vrcp.pop %v7033
      %v7036 = vmul.f32 1.0, %v7035
      %v7037 = vrcp.pop %v7034
      %v7038 = vmul.f32 1.0, %v7037
      %v7039 = vld [vmem:[%s15] sm:$0xf]
      %v7041 = vsel %vm825, %v7039, 0
      %7043 = vmatprep.subr.mxu0 0.0
      %7044 = vmatpush1.msra.mxu0 %v7041
      %7045 = vmatprep.subr.mxu0 0.0
      %7046 = vmatpush1.msra.mxu0 0.0
      %7047 = vmatprep.subr.mxu0 0.0
      %7048 = vmatpush1.msra.mxu0 0.0
      %7049 = vmatprep.subr.mxu0 0.0
      %7050 = vmatpush1.msra.mxu0 0.0
      %7051 = vmatprep.subr.mxu0 0.0
      %7052 = vmatpush1.msra.mxu0 0.0
      %7053 = vmatprep.subr.mxu0 0.0
      %7054 = vmatpush1.msra.mxu0 0.0
      %7055 = vmatprep.subr.mxu0 0.0
      %7056 = vmatpush1.msra.mxu0 0.0
      %7057 = vmatprep.subr.mxu0 0.0
      %7058 = vmatpush1.msra.mxu0 0.0
      %7059 = vmatprep.subr.mxu0 0.0
      %7060 = vmatpush1.msra.mxu0 0.0
      %7061 = vmatprep.subr.mxu0 0.0
      %7062 = vmatpush1.msra.mxu0 0.0
      %7063 = vmatprep.subr.mxu0 0.0
      %7064 = vmatpush1.msra.mxu0 0.0
      %7065 = vmatprep.subr.mxu0 0.0
      %7066 = vmatpush1.msra.mxu0 0.0
      %7067 = vmatprep.subr.mxu0 0.0
      %7068 = vmatpush1.msra.mxu0 0.0
      %7069 = vmatprep.subr.mxu0 0.0
      %7070 = vmatpush1.msra.mxu0 0.0
      %7071 = vmatprep.subr.mxu0 0.0
      %7072 = vmatpush1.msra.mxu0 0.0
      %7073 = vmatprep.subr.mxu0 0.0
      %7074 = vmatpush1.msra.mxu0 0.0
      %7075 = vmatprep.subr.mxu0 0.0
      %7076 = vmatpush1.msra.mxu0 0.0
      %7077 = vmatprep.subr.mxu0 0.0
      %7078 = vmatpush1.msra.mxu0 0.0
      %7079 = vmatprep.subr.mxu0 0.0
      %7080 = vmatpush1.msra.mxu0 0.0
      %7081 = vmatprep.subr.mxu0 0.0
      %7082 = vmatpush1.msra.mxu0 0.0
      %7083 = vmatprep.subr.mxu0 0.0
      %7084 = vmatpush1.msra.mxu0 0.0
      %7085 = vmatprep.subr.mxu0 0.0
      %7086 = vmatpush1.msra.mxu0 0.0
      %7087 = vmatprep.subr.mxu0 0.0
      %7088 = vmatpush1.msra.mxu0 0.0
      %7089 = vmatprep.subr.mxu0 0.0
      %7090 = vmatpush1.msra.mxu0 0.0
      %7091 = vmatprep.subr.mxu0 0.0
      %7092 = vmatpush1.msra.mxu0 0.0
      %7093 = vmatprep.subr.mxu0 0.0
      %7094 = vmatpush1.msra.mxu0 0.0
      %7095 = vmatprep.subr.mxu0 0.0
      %7096 = vmatpush1.msra.mxu0 0.0
      %7097 = vmatprep.subr.mxu0 0.0
      %7098 = vmatpush1.msra.mxu0 0.0
      %7099 = vmatprep.subr.mxu0 0.0
      %7100 = vmatpush1.msra.mxu0 0.0
      %7101 = vmatprep.subr.mxu0 0.0
      %7102 = vmatpush1.msra.mxu0 0.0
      %7103 = vmatprep.subr.mxu0 0.0
      %7104 = vmatpush1.msra.mxu0 0.0
      %7105 = vmatprep.subr.mxu0 0.0
      %7106 = vmatpush1.msra.mxu0 0.0
      %7107 = vmatprep.mubr.f32.mxu0 0.0
      %7108 = vmatmul.mubr.f32.gmra.mrb[0].mxu0 %v1550
      %v7109 = vpop.f32.mrb[0].mxu0
      %v7110 = vadd.f32 0.0, %v7109
      %v7111 = vpop.f32.mrb[0].mxu0
      %7112 = vmatprep.mubr.f32.mxu0 0.0
      %7113 = vmatmul.mubr.f32.gmra.mrb[0].mxu0 %v1552
      %v7114 = vpop.f32.mrb[0].mxu0
      %v7115 = vadd.f32 0.0, %v7114
      %v7116 = vpop.f32.mrb[0].mxu0
      %7117 = vmatprep.mubr.f32.mxu0 0.0
      %7118 = vmatmul.mubr.f32.gmra.mrb[0].mxu0 %v1546
      %v7119 = vpop.f32.mrb[0].mxu0
      %v7120 = vadd.f32 0.0, %v7119
      %v7121 = vpop.f32.mrb[0].mxu0
      %7122 = vmatprep.mubr.f32.mxu0 0.0
      %7123 = vmatmul.mubr.f32.gmra.mrb[0].mxu0 %v1548
      %v7124 = vpop.f32.mrb[0].mxu0
      %v7125 = vadd.f32 0.0, %v7124
      %v7126 = vpop.f32.mrb[0].mxu0
      %7127 = vmatprep.mubr.f32.mxu0 0.0
      %7128 = vmatmul.mubr.f32.gmra.mrb[0].mxu0 %v1554
      %v7129 = vpop.f32.mrb[0].mxu0
      %v7130 = vadd.f32 0.0, %v7129
      %v7131 = vpop.f32.mrb[0].mxu0
      %7132 = vmatprep.mubr.f32.mxu0 0.0
      %7133 = vmatmul.mubr.f32.gmra.mrb[0].mxu0 %v1556
      %v7134 = vpop.f32.mrb[0].mxu0
      %v7135 = vadd.f32 0.0, %v7134
      %v7136 = vpop.f32.mrb[0].mxu0
      %7137 = vmatprep.mubr.f32.mxu0 0.0
      %7138 = vmatmul.mubr.f32.gmra.mrb[0].mxu0 %v1558
      %v7139 = vpop.f32.mrb[0].mxu0
      %v7140 = vadd.f32 0.0, %v7139
      %v7141 = vpop.f32.mrb[0].mxu0
      %7142 = vmatprep.mubr.f32.mxu0 0.0
      %7143 = vmatmul.mubr.f32.gmra.mrb[0].mxu0 %v1560
      %v7144 = vpop.f32.mrb[0].mxu0
      %v7145 = vadd.f32 0.0, %v7144
      %v7146 = vpop.f32.mrb[0].mxu0
      %7147 = vmatprep.mubr.f32.mxu0 0.0
      %7148 = vmatmul.mubr.f32.gmra.mrb[0].mxu0 %v1562
      %v7149 = vpop.f32.mrb[0].mxu0
      %v7150 = vadd.f32 0.0, %v7149
      %v7151 = vpop.f32.mrb[0].mxu0
      %7152 = vmatprep.mubr.f32.mxu0 0.0
      %7153 = vmatmul.mubr.f32.gmra.mrb[0].mxu0 %v1564
      %v7154 = vpop.f32.mrb[0].mxu0
      %v7155 = vadd.f32 0.0, %v7154
      %v7156 = vpop.f32.mrb[0].mxu0
      %7157 = vmatprep.mubr.f32.mxu0 0.0
      %7158 = vmatmul.mubr.f32.gmra.mrb[0].mxu0 %v1566
      %v7159 = vpop.f32.mrb[0].mxu0
      %v7160 = vadd.f32 0.0, %v7159
      %v7161 = vpop.f32.mrb[0].mxu0
      %7162 = vmatprep.mubr.f32.mxu0 0.0
      %7163 = vmatmul.mubr.f32.gmra.mrb[0].mxu0 %v1568
      %v7164 = vpop.f32.mrb[0].mxu0
      %v7165 = vadd.f32 0.0, %v7164
      %v7166 = vpop.f32.mrb[0].mxu0
      %7167 = vmatprep.mubr.f32.mxu0 0.0
      %7168 = vmatmul.mubr.f32.gmra.mrb[0].mxu0 %v1570
      %v7169 = vpop.f32.mrb[0].mxu0
      %v7170 = vadd.f32 0.0, %v7169
      %v7171 = vpop.f32.mrb[0].mxu0
      %7172 = vmatprep.mubr.f32.mxu0 0.0
      %7173 = vmatmul.mubr.f32.gmra.mrb[0].mxu0 %v1572
      %v7174 = vpop.f32.mrb[0].mxu0
      %v7175 = vadd.f32 0.0, %v7174
      %v7176 = vpop.f32.mrb[0].mxu0
      %7177 = vmatprep.mubr.f32.mxu0 0.0
      %7178 = vmatmul.mubr.f32.gmra.mrb[0].mxu0 %v1574
      %v7179 = vpop.f32.mrb[0].mxu0
      %v7180 = vadd.f32 0.0, %v7179
      %v7181 = vpop.f32.mrb[0].mxu0
      %7182 = vmatprep.mubr.f32.mxu0 0.0
      %7183 = vmatmul.mubr.f32.gmra.mrb[0].mxu0 %v1576
      %v7184 = vpop.f32.mrb[0].mxu0
      %v7185 = vadd.f32 0.0, %v7184
      %v7186 = vpop.f32.mrb[0].mxu0
      %7187 = vmatprep.mubr.f32.mxu0 0.0
      %7188 = vmatmul.mubr.f32.gmra.mrb[0].mxu0 %v1578
      %v7189 = vpop.f32.mrb[0].mxu0
      %v7190 = vadd.f32 0.0, %v7189
      %v7191 = vpop.f32.mrb[0].mxu0
      %7192 = vmatprep.mubr.f32.mxu0 0.0
      %7193 = vmatmul.mubr.f32.gmra.mrb[0].mxu0 %v1580
      %v7194 = vpop.f32.mrb[0].mxu0
      %v7195 = vadd.f32 0.0, %v7194
      %v7196 = vpop.f32.mrb[0].mxu0
      %7197 = vmatprep.mubr.f32.mxu0 0.0
      %7198 = vmatmul.mubr.f32.gmra.mrb[0].mxu0 %v1582
      %v7199 = vpop.f32.mrb[0].mxu0
      %v7200 = vadd.f32 0.0, %v7199
      %v7201 = vpop.f32.mrb[0].mxu0
      %7202 = vmatprep.mubr.f32.mxu0 0.0
      %7203 = vmatmul.mubr.f32.gmra.mrb[0].mxu0 %v1584
      %v7204 = vpop.f32.mrb[0].mxu0
      %v7205 = vadd.f32 0.0, %v7204
      %v7206 = vpop.f32.mrb[0].mxu0
      %7207 = vmatprep.mubr.f32.mxu0 0.0
      %7208 = vmatmul.mubr.f32.gmra.mrb[0].mxu0 %v1586
      %v7209 = vpop.f32.mrb[0].mxu0
      %v7210 = vadd.f32 0.0, %v7209
      %v7211 = vpop.f32.mrb[0].mxu0
      %7212 = vmatprep.mubr.f32.mxu0 0.0
      %7213 = vmatmul.mubr.f32.gmra.mrb[0].mxu0 %v1588
      %v7214 = vpop.f32.mrb[0].mxu0
      %v7215 = vadd.f32 0.0, %v7214
      %v7216 = vpop.f32.mrb[0].mxu0
      %7217 = vmatprep.mubr.f32.mxu0 0.0
      %7218 = vmatmul.mubr.f32.gmra.mrb[0].mxu0 %v1590
      %v7219 = vpop.f32.mrb[0].mxu0
      %v7220 = vadd.f32 0.0, %v7219
      %v7221 = vpop.f32.mrb[0].mxu0
      %7222 = vmatprep.mubr.f32.mxu0 0.0
      %7223 = vmatmul.mubr.f32.gmra.mrb[0].mxu0 %v1592
      %v7224 = vpop.f32.mrb[0].mxu0
      %v7225 = vadd.f32 0.0, %v7224
      %v7226 = vpop.f32.mrb[0].mxu0
      %7227 = vmatprep.mubr.f32.mxu0 0.0
      %7228 = vmatmul.mubr.f32.gmra.mrb[0].mxu0 %v1594
      %v7229 = vpop.f32.mrb[0].mxu0
      %v7230 = vadd.f32 0.0, %v7229
      %v7231 = vpop.f32.mrb[0].mxu0
      %7232 = vmatprep.mubr.f32.mxu0 0.0
      %7233 = vmatmul.mubr.f32.gmra.mrb[0].mxu0 %v1596
      %v7234 = vpop.f32.mrb[0].mxu0
      %v7235 = vadd.f32 0.0, %v7234
      %v7236 = vpop.f32.mrb[0].mxu0
      %7237 = vmatprep.mubr.f32.mxu0 0.0
      %7238 = vmatmul.mubr.f32.gmra.mrb[0].mxu0 %v1598
      %v7239 = vpop.f32.mrb[0].mxu0
      %v7240 = vadd.f32 0.0, %v7239
      %v7241 = vpop.f32.mrb[0].mxu0
      %7242 = vmatprep.mubr.f32.mxu0 0.0
      %7243 = vmatmul.mubr.f32.gmra.mrb[0].mxu0 %v1600
      %v7244 = vpop.f32.mrb[0].mxu0
      %v7245 = vadd.f32 0.0, %v7244
      %v7246 = vpop.f32.mrb[0].mxu0
      %7247 = vmatprep.mubr.f32.mxu0 0.0
      %7248 = vmatmul.mubr.f32.gmra.mrb[0].mxu0 %v1602
      %v7249 = vpop.f32.mrb[0].mxu0
      %v7250 = vadd.f32 0.0, %v7249
      %v7251 = vpop.f32.mrb[0].mxu0
      %7252 = vmatprep.mubr.f32.mxu0 0.0
      %7253 = vmatmul.mubr.f32.gmra.mrb[0].mxu0 %v1604
      %v7254 = vpop.f32.mrb[0].mxu0
      %v7255 = vadd.f32 0.0, %v7254
      %v7256 = vpop.f32.mrb[0].mxu0
      %7257 = vmatprep.mubr.f32.mxu0 0.0
      %7258 = vmatmul.mubr.f32.gmra.mrb[0].mxu0 %v1868
      %v7259 = vpop.f32.mrb[0].mxu0
      %v7260 = vadd.f32 0.0, %v7259
      %v7261 = vpop.f32.mrb[0].mxu0
      %7262 = vmatprep.mubr.f32.mxu0 0.0
      %7263 = vmatmul.mubr.f32.gmra.mrb[0].mxu0 %v1870
      %v7264 = vpop.f32.mrb[0].mxu0
      %v7265 = vadd.f32 0.0, %v7264
      %v7266 = vpop.f32.mrb[0].mxu0
      %7267 = vdwg.mxu0
      %v7268 = vld [vmem:[%s16] sm:$0x1]
      %v7270 = vlaneseq
      %v7271 = vshrl.u32 %v7270, 7
      %v7272 = vsub.s32 0, %v7271
      %v7273 = vrot.slane %v7268, %v7272
      %v7275 = vmul.f32 %v7110, %v7273
      %v7276 = vmul.f32 %v7115, %v7273
      %v7277 = vmul.f32 %v7120, %v7273
      %v7278 = vmul.f32 %v7125, %v7273
      %v7279 = vmul.f32 %v7130, %v7273
      %v7280 = vmul.f32 %v7135, %v7273
      %v7281 = vmul.f32 %v7140, %v7273
      %v7282 = vmul.f32 %v7145, %v7273
      %v7283 = vmul.f32 %v7150, %v7273
      %v7284 = vmul.f32 %v7155, %v7273
      %v7285 = vmul.f32 %v7160, %v7273
      %v7286 = vmul.f32 %v7165, %v7273
      %v7287 = vmul.f32 %v7170, %v7273
      %v7288 = vmul.f32 %v7175, %v7273
      %v7289 = vmul.f32 %v7180, %v7273
      %v7290 = vmul.f32 %v7185, %v7273
      %v7291 = vmul.f32 %v7190, %v7273
      %v7292 = vmul.f32 %v7195, %v7273
      %v7293 = vmul.f32 %v7200, %v7273
      %v7294 = vmul.f32 %v7205, %v7273
      %v7295 = vmul.f32 %v7210, %v7273
      %v7296 = vmul.f32 %v7215, %v7273
      %v7297 = vmul.f32 %v7220, %v7273
      %v7298 = vmul.f32 %v7225, %v7273
      %v7299 = vmul.f32 %v7230, %v7273
      %v7300 = vmul.f32 %v7235, %v7273
      %v7301 = vmul.f32 %v7240, %v7273
      %v7302 = vmul.f32 %v7245, %v7273
      %v7303 = vmul.f32 %v7250, %v7273
      %v7304 = vmul.f32 %v7255, %v7273
      %v7305 = vmul.f32 %v7260, %v7273
      %v7306 = vmul.f32 %v7265, %v7273
      %v7307 = vld [vmem:[%s17] sm:$0x1]
      %v7309 = vlaneseq
      %v7310 = vshrl.u32 %v7309, 7
      %v7311 = vsub.s32 0, %v7310
      %v7312 = vrot.slane %v7307, %v7311
      %v7314 = vadd.f32 %v7275, %v7312
      %v7315 = vadd.f32 %v7276, %v7312
      %v7316 = vadd.f32 %v7277, %v7312
      %v7317 = vadd.f32 %v7278, %v7312
      %v7318 = vadd.f32 %v7279, %v7312
      %v7319 = vadd.f32 %v7280, %v7312
      %v7320 = vadd.f32 %v7281, %v7312
      %v7321 = vadd.f32 %v7282, %v7312
      %v7322 = vadd.f32 %v7283, %v7312
      %v7323 = vadd.f32 %v7284, %v7312
      %v7324 = vadd.f32 %v7285, %v7312
      %v7325 = vadd.f32 %v7286, %v7312
      %v7326 = vadd.f32 %v7287, %v7312
      %v7327 = vadd.f32 %v7288, %v7312
      %v7328 = vadd.f32 %v7289, %v7312
      %v7329 = vadd.f32 %v7290, %v7312
      %v7330 = vadd.f32 %v7291, %v7312
      %v7331 = vadd.f32 %v7292, %v7312
      %v7332 = vadd.f32 %v7293, %v7312
      %v7333 = vadd.f32 %v7294, %v7312
      %v7334 = vadd.f32 %v7295, %v7312
      %v7335 = vadd.f32 %v7296, %v7312
      %v7336 = vadd.f32 %v7297, %v7312
      %v7337 = vadd.f32 %v7298, %v7312
      %v7338 = vadd.f32 %v7299, %v7312
      %v7339 = vadd.f32 %v7300, %v7312
      %v7340 = vadd.f32 %v7301, %v7312
      %v7341 = vadd.f32 %v7302, %v7312
      %v7342 = vadd.f32 %v7303, %v7312
      %v7343 = vadd.f32 %v7304, %v7312
      %v7344 = vadd.f32 %v7305, %v7312
      %v7345 = vadd.f32 %v7306, %v7312
      %v7346 = vmul.f32 %v6388, %v6806
      %v7347 = vmul.f32 %v6389, %v6808
      %v7348 = vmul.f32 %v6390, %v6806
      %v7349 = vmul.f32 %v6391, %v6808
      %v7350 = vmul.f32 %v6392, %v6806
      %v7351 = vmul.f32 %v6393, %v6808
      %v7352 = vmul.f32 %v6394, %v6806
      %v7353 = vmul.f32 %v6395, %v6808
      %v7354 = vmul.f32 %v6396, %v6806
      %v7355 = vmul.f32 %v6397, %v6808
      %v7356 = vmul.f32 %v6398, %v6806
      %v7357 = vmul.f32 %v6399, %v6808
      %v7358 = vmul.f32 %v6400, %v6806
      %v7359 = vmul.f32 %v6401, %v6808
      %v7360 = vmul.f32 %v6402, %v6806
      %v7361 = vmul.f32 %v6403, %v6808
      %v7362 = vmul.f32 %v6404, %v6806
      %v7363 = vmul.f32 %v6405, %v6808
      %v7364 = vmul.f32 %v6406, %v6806
      %v7365 = vmul.f32 %v6407, %v6808
      %v7366 = vmul.f32 %v6408, %v6806
      %v7367 = vmul.f32 %v6409, %v6808
      %v7368 = vmul.f32 %v6410, %v6806
      %v7369 = vmul.f32 %v6411, %v6808
      %v7370 = vmul.f32 %v6412, %v6806
      %v7371 = vmul.f32 %v6413, %v6808
      %v7372 = vmul.f32 %v6414, %v6806
      %v7373 = vmul.f32 %v6415, %v6808
      %v7374 = vmul.f32 %v6416, %v6806
      %v7375 = vmul.f32 %v6417, %v6808
      %v7376 = vmul.f32 %v6418, %v6806
      %v7377 = vmul.f32 %v6419, %v6808
      %v7380 = vcombine.high %v7036, %v7036
      %v7382 = vunpack.c.l.s4 1966171168
      %v7383 = vunpack.c.0.s8 %v7382
      %v7384 = vlaneseq
      %v7385 = vshrl.u32 %v7384, 7
      %v7386 = vsub.s32 %v7383, %v7385
      %v7387 = vrot.slane %v7036, %v7386
      %v7389 = vunpack.c.l.s4 1966171168
      %v7390 = vunpack.c.0.s8 %v7389
      %v7391 = vlaneseq
      %v7392 = vshrl.u32 %v7391, 7
      %v7393 = vsub.s32 %v7390, %v7392
      %v7394 = vrot.slane %v7380, %v7393
      %v7395 = vcombine.high %v7387, %v7387
      %v7396 = vcombine.high %v7394, %v7394
      %v7398 = vunpack.c.l.s4 1966171168
      %v7399 = vunpack.c.0.s8 %v7398
      %v7400 = vlaneseq
      %v7401 = vshrl.u32 %v7400, 7
      %v7402 = vsub.s32 %v7399, %v7401
      %v7403 = vrot.slane %v7387, %v7402
      %v7405 = vunpack.c.l.s4 1966171168
      %v7406 = vunpack.c.0.s8 %v7405
      %v7407 = vlaneseq
      %v7408 = vshrl.u32 %v7407, 7
      %v7409 = vsub.s32 %v7406, %v7408
      %v7410 = vrot.slane %v7394, %v7409
      %v7412 = vunpack.c.l.s4 1966171168
      %v7413 = vunpack.c.0.s8 %v7412
      %v7414 = vlaneseq
      %v7415 = vshrl.u32 %v7414, 7
      %v7416 = vsub.s32 %v7413, %v7415
      %v7417 = vrot.slane %v7395, %v7416
      %v7419 = vunpack.c.l.s4 1966171168
      %v7420 = vunpack.c.0.s8 %v7419
      %v7421 = vlaneseq
      %v7422 = vshrl.u32 %v7421, 7
      %v7423 = vsub.s32 %v7420, %v7422
      %v7424 = vrot.slane %v7396, %v7423
      %v7425 = vcombine.high %v7403, %v7403
      %v7426 = vcombine.high %v7410, %v7410
      %v7427 = vcombine.high %v7417, %v7417
      %v7428 = vcombine.high %v7424, %v7424
      %v7429 = vcombine.high %v7038, %v7038
      %v7431 = vunpack.c.l.s4 1966171168
      %v7432 = vunpack.c.0.s8 %v7431
      %v7433 = vlaneseq
      %v7434 = vshrl.u32 %v7433, 7
      %v7435 = vsub.s32 %v7432, %v7434
      %v7436 = vrot.slane %v7038, %v7435
      %v7438 = vunpack.c.l.s4 1966171168
      %v7439 = vunpack.c.0.s8 %v7438
      %v7440 = vlaneseq
      %v7441 = vshrl.u32 %v7440, 7
      %v7442 = vsub.s32 %v7439, %v7441
      %v7443 = vrot.slane %v7429, %v7442
      %v7444 = vcombine.high %v7436, %v7436
      %v7445 = vcombine.high %v7443, %v7443
      %v7447 = vunpack.c.l.s4 1966171168
      %v7448 = vunpack.c.0.s8 %v7447
      %v7449 = vlaneseq
      %v7450 = vshrl.u32 %v7449, 7
      %v7451 = vsub.s32 %v7448, %v7450
      %v7452 = vrot.slane %v7436, %v7451
      %v7454 = vunpack.c.l.s4 1966171168
      %v7455 = vunpack.c.0.s8 %v7454
      %v7456 = vlaneseq
      %v7457 = vshrl.u32 %v7456, 7
      %v7458 = vsub.s32 %v7455, %v7457
      %v7459 = vrot.slane %v7443, %v7458
      %v7461 = vunpack.c.l.s4 1966171168
      %v7462 = vunpack.c.0.s8 %v7461
      %v7463 = vlaneseq
      %v7464 = vshrl.u32 %v7463, 7
      %v7465 = vsub.s32 %v7462, %v7464
      %v7466 = vrot.slane %v7444, %v7465
      %v7468 = vunpack.c.l.s4 1966171168
      %v7469 = vunpack.c.0.s8 %v7468
      %v7470 = vlaneseq
      %v7471 = vshrl.u32 %v7470, 7
      %v7472 = vsub.s32 %v7469, %v7471
      %v7473 = vrot.slane %v7445, %v7472
      %v7474 = vcombine.high %v7452, %v7452
      %v7475 = vcombine.high %v7459, %v7459
      %v7476 = vcombine.high %v7466, %v7466
      %v7477 = vcombine.high %v7473, %v7473
      %v7478 = vlaneseq
      %v7479 = vshrl.u32 %v7478, 7
      %v7480 = vsub.s32 0, %v7479
      %v7481 = vrot.slane %v7403, %v7480
      %v7482 = vlaneseq
      %v7483 = vshrl.u32 %v7482, 7
      %v7484 = vsub.s32 0, %v7483
      %v7485 = vrot.slane %v7417, %v7484
      %v7486 = vlaneseq
      %v7487 = vshrl.u32 %v7486, 7
      %v7488 = vsub.s32 0, %v7487
      %v7489 = vrot.slane %v7425, %v7488
      %v7490 = vlaneseq
      %v7491 = vshrl.u32 %v7490, 7
      %v7492 = vsub.s32 0, %v7491
      %v7493 = vrot.slane %v7427, %v7492
      %v7494 = vlaneseq
      %v7495 = vshrl.u32 %v7494, 7
      %v7496 = vsub.s32 0, %v7495
      %v7497 = vrot.slane %v7410, %v7496
      %v7498 = vlaneseq
      %v7499 = vshrl.u32 %v7498, 7
      %v7500 = vsub.s32 0, %v7499
      %v7501 = vrot.slane %v7424, %v7500
      %v7502 = vlaneseq
      %v7503 = vshrl.u32 %v7502, 7
      %v7504 = vsub.s32 0, %v7503
      %v7505 = vrot.slane %v7426, %v7504
      %v7506 = vlaneseq
      %v7507 = vshrl.u32 %v7506, 7
      %v7508 = vsub.s32 0, %v7507
      %v7509 = vrot.slane %v7428, %v7508
      %v7510 = vlaneseq
      %v7511 = vshrl.u32 %v7510, 7
      %v7512 = vsub.s32 0, %v7511
      %v7513 = vrot.slane %v7452, %v7512
      %v7514 = vlaneseq
      %v7515 = vshrl.u32 %v7514, 7
      %v7516 = vsub.s32 0, %v7515
      %v7517 = vrot.slane %v7466, %v7516
      %v7518 = vlaneseq
      %v7519 = vshrl.u32 %v7518, 7
      %v7520 = vsub.s32 0, %v7519
      %v7521 = vrot.slane %v7474, %v7520
      %v7522 = vlaneseq
      %v7523 = vshrl.u32 %v7522, 7
      %v7524 = vsub.s32 0, %v7523
      %v7525 = vrot.slane %v7476, %v7524
      %v7526 = vlaneseq
      %v7527 = vshrl.u32 %v7526, 7
      %v7528 = vsub.s32 0, %v7527
      %v7529 = vrot.slane %v7459, %v7528
      %v7530 = vlaneseq
      %v7531 = vshrl.u32 %v7530, 7
      %v7532 = vsub.s32 0, %v7531
      %v7533 = vrot.slane %v7473, %v7532
      %v7534 = vlaneseq
      %v7535 = vshrl.u32 %v7534, 7
      %v7536 = vsub.s32 0, %v7535
      %v7537 = vrot.slane %v7475, %v7536
      %v7538 = vlaneseq
      %v7539 = vshrl.u32 %v7538, 7
      %v7540 = vsub.s32 0, %v7539
      %v7541 = vrot.slane %v7477, %v7540
      %v7558 = vmul.f32 %v7346, %v7481
      %v7559 = vmul.f32 %v7347, %v7481
      %v7560 = vmul.f32 %v7348, %v7485
      %v7561 = vmul.f32 %v7349, %v7485
      %v7562 = vmul.f32 %v7350, %v7489
      %v7563 = vmul.f32 %v7351, %v7489
      %v7564 = vmul.f32 %v7352, %v7493
      %v7565 = vmul.f32 %v7353, %v7493
      %v7566 = vmul.f32 %v7354, %v7497
      %v7567 = vmul.f32 %v7355, %v7497
      %v7568 = vmul.f32 %v7356, %v7501
      %v7569 = vmul.f32 %v7357, %v7501
      %v7570 = vmul.f32 %v7358, %v7505
      %v7571 = vmul.f32 %v7359, %v7505
      %v7572 = vmul.f32 %v7360, %v7509
      %v7573 = vmul.f32 %v7361, %v7509
      %v7574 = vmul.f32 %v7362, %v7513
      %v7575 = vmul.f32 %v7363, %v7513
      %v7576 = vmul.f32 %v7364, %v7517
      %v7577 = vmul.f32 %v7365, %v7517
      %v7578 = vmul.f32 %v7366, %v7521
      %v7579 = vmul.f32 %v7367, %v7521
      %v7580 = vmul.f32 %v7368, %v7525
      %v7581 = vmul.f32 %v7369, %v7525
      %v7582 = vmul.f32 %v7370, %v7529
      %v7583 = vmul.f32 %v7371, %v7529
      %v7584 = vmul.f32 %v7372, %v7533
      %v7585 = vmul.f32 %v7373, %v7533
      %v7586 = vmul.f32 %v7374, %v7537
      %v7587 = vmul.f32 %v7375, %v7537
      %v7588 = vmul.f32 %v7376, %v7541
      %v7589 = vmul.f32 %v7377, %v7541
      %v7590 = vadd.f32 %v7558, %v7314
      %v7591 = vadd.f32 %v7559, %v7315
      %v7592 = vadd.f32 %v7560, %v7316
      %v7593 = vadd.f32 %v7561, %v7317
      %v7594 = vadd.f32 %v7562, %v7318
      %v7595 = vadd.f32 %v7563, %v7319
      %v7596 = vadd.f32 %v7564, %v7320
      %v7597 = vadd.f32 %v7565, %v7321
      %v7598 = vadd.f32 %v7566, %v7322
      %v7599 = vadd.f32 %v7567, %v7323
      %v7600 = vadd.f32 %v7568, %v7324
      %v7601 = vadd.f32 %v7569, %v7325
      %v7602 = vadd.f32 %v7570, %v7326
      %v7603 = vadd.f32 %v7571, %v7327
      %v7604 = vadd.f32 %v7572, %v7328
      %v7605 = vadd.f32 %v7573, %v7329
      %v7606 = vadd.f32 %v7574, %v7330
      %v7607 = vadd.f32 %v7575, %v7331
      %v7608 = vadd.f32 %v7576, %v7332
      %v7609 = vadd.f32 %v7577, %v7333
      %v7610 = vadd.f32 %v7578, %v7334
      %v7611 = vadd.f32 %v7579, %v7335
      %v7612 = vadd.f32 %v7580, %v7336
      %v7613 = vadd.f32 %v7581, %v7337
      %v7614 = vadd.f32 %v7582, %v7338
      %v7615 = vadd.f32 %v7583, %v7339
      %v7616 = vadd.f32 %v7584, %v7340
      %v7617 = vadd.f32 %v7585, %v7341
      %v7618 = vadd.f32 %v7586, %v7342
      %v7619 = vadd.f32 %v7587, %v7343
      %v7620 = vadd.f32 %v7588, %v7344
      %v7621 = vadd.f32 %v7589, %v7345
      %7622 = vst.msk [vmem:[%s579] sm:$0xff] %vm3662, %v7590
      %7623 = vst.msk [vmem:[%s579 + $0x8] sm:$0xff] %vm3662, %v7591
      %7624 = vst.msk [vmem:[%s579 + $0x10] sm:$0xff] %vm3662, %v7592
      %7625 = vst.msk [vmem:[%s579 + $0x18] sm:$0xff] %vm3662, %v7593
      %7626 = vst.msk [vmem:[%s579 + $0x20] sm:$0xff] %vm3662, %v7594
      %7627 = vst.msk [vmem:[%s579 + $0x28] sm:$0xff] %vm3662, %v7595
      %7628 = vst.msk [vmem:[%s579 + $0x30] sm:$0xff] %vm3662, %v7596
      %7629 = vst.msk [vmem:[%s579 + $0x38] sm:$0xff] %vm3662, %v7597
      %7630 = vst.msk [vmem:[%s579 + $0x40] sm:$0xff] %vm3662, %v7598
      %7631 = vst.msk [vmem:[%s579 + $0x48] sm:$0xff] %vm3662, %v7599
      %7632 = vst.msk [vmem:[%s579 + $0x50] sm:$0xff] %vm3662, %v7600
      %7633 = vst.msk [vmem:[%s579 + $0x58] sm:$0xff] %vm3662, %v7601
      %7634 = vst.msk [vmem:[%s579 + $0x60] sm:$0xff] %vm3662, %v7602
      %7635 = vst.msk [vmem:[%s579 + $0x68] sm:$0xff] %vm3662, %v7603
      %7636 = vst.msk [vmem:[%s579 + $0x70] sm:$0xff] %vm3662, %v7604
      %7637 = vst.msk [vmem:[%s579 + $0x78] sm:$0xff] %vm3662, %v7605
      %7638 = vst.msk [vmem:[%s579 + $0x80] sm:$0xff] %vm3662, %v7606
      %7639 = vst.msk [vmem:[%s579 + $0x88] sm:$0xff] %vm3662, %v7607
      %7640 = vst.msk [vmem:[%s579 + $0x90] sm:$0xff] %vm3662, %v7608
      %7641 = vst.msk [vmem:[%s579 + $0x98] sm:$0xff] %vm3662, %v7609
      %7642 = vst.msk [vmem:[%s579 + $0xa0] sm:$0xff] %vm3662, %v7610
      %7643 = vst.msk [vmem:[%s579 + $0xa8] sm:$0xff] %vm3662, %v7611
      %7644 = vst.msk [vmem:[%s579 + $0xb0] sm:$0xff] %vm3662, %v7612
      %7645 = vst.msk [vmem:[%s579 + $0xb8] sm:$0xff] %vm3662, %v7613
      %7646 = vst.msk [vmem:[%s579 + $0xc0] sm:$0xff] %vm3662, %v7614
      %7647 = vst.msk [vmem:[%s579 + $0xc8] sm:$0xff] %vm3662, %v7615
      %7648 = vst.msk [vmem:[%s579 + $0xd0] sm:$0xff] %vm3662, %v7616
      %7649 = vst.msk [vmem:[%s579 + $0xd8] sm:$0xff] %vm3662, %v7617
      %7650 = vst.msk [vmem:[%s579 + $0xe0] sm:$0xff] %vm3662, %v7618
      %7651 = vst.msk [vmem:[%s579 + $0xe8] sm:$0xff] %vm3662, %v7619
      %7652 = vst.msk [vmem:[%s579 + $0xf0] sm:$0xff] %vm3662, %v7620
      %7653 = vst.msk [vmem:[%s579 + $0xf8] sm:$0xff] %vm3662, %v7621
      %p7654 = scmp.lt.s32.totalorder %s33, 1
      %s7655 = scalar_select %p7654, %s33, 1
      %s7656 = smul.addr %s7655, 32
      %s7657 = smul.addr %s7656, 8
      %s7658 = scalar_lea.vmem %s18, %s7657
      // Predicated region
      $region93: #{tpu_custom_call.1} parent=91 // pred_check
        %p7659 = pneg %p434
      $region94: #{tpu_custom_call.1} parent=91 // pred_check_branch
        %7661 = sbr.rel (%p7659) target = $region96
      $region95: #{tpu_custom_call.1} parent=91 // pred_region
        _
      $region96: #{tpu_custom_call.1} parent=91 // pred_fallthru
        _
    $region92: #{tpu_custom_call.1} parent=5 // pred_fallthru
      _
    %p7662 = scmp.le.s32.totalorder 2, %s28
    // Predicated region
    $region97: #{tpu_custom_call.1} parent=5 // pred_check
      %p7663 = pneg %p7662
    $region98: #{tpu_custom_call.1} parent=5 // pred_check_branch
      %7665 = sbr.rel (%p7663) target = $region100
    $region99: #{tpu_custom_call.1} parent=5 // pred_region
      %s7666 = ssub.s32 %s28, 2
      // Predicated region
      $region101: #{tpu_custom_call.1} parent=99 // pred_check
        %p7667 = pneg %p440
      $region102: #{tpu_custom_call.1} parent=99 // pred_check_branch
        %7669 = sbr.rel (%p7667) target = $region104
      $region103: #{tpu_custom_call.1} parent=99 // pred_region
        %p7670 = scmp.lt.s32.totalorder %s34, 1
        %s7671 = scalar_select %p7670, %s34, 1
        %s7672 = smul.addr %s7671, 32
        %s7673 = smul.addr %s7672, 8
        %s7674 = scalar_lea.vmem %s18, %s7673
      $region104: #{tpu_custom_call.1} parent=99 // pred_fallthru
        _
    $region100: #{tpu_custom_call.1} parent=5 // pred_fallthru
      _
  $region6: #{tpu_custom_call.1} parent=0 // loop_footer
    %s32 = sadd.s32 1, %s28
  $region7: #{tpu_custom_call.1} parent=0 // loop_footer_branch
    %27 = sbr.rel target = $region3
  $region8: #{tpu_custom_call.1} parent=0 // loop_exit
    _

</llo_original>
